<compile_context>
chip_gen: v5e
topology: v5e:2x2
jax: 0.10.0
libtpu: 0.0.40
codegen_flags: <defaults>
</compile_context>

<pallas_src>
import numpy as np

import jax
import jax.numpy as jnp
from jax import lax
from jax.experimental import pallas as pl
from jax.experimental.pallas import tpu as pltpu

# ----------------------------- model dimensions -----------------------------
B, T = 2, 3                       # batch, time steps
CIN, H, W, D = 1, 8, 8, 8         # in_channels=1, small 3-D volume
COUT, K = 8, 3                    # conv3d out_channels, kernel_size=3
HO, WO, DO = H - K + 1, W - K + 1, D - K + 1     # 6, 6, 6
HP, WP, DP = HO // 2, WO // 2, DO // 2           # 3, 3, 3  (MaxPool3d k=2, s=2)
S = HP * WP * DP                                 # 27 pooled voxels per frame
FEAT = COUT * S                                  # 216 flattened features
HID = 10                                         # LSTM hidden_size
HID_PAD = 16                                     # padded gate width (aligned slices)
GCOLS = 4 * HID_PAD                              # 64 gate columns [i|f|g|o]
TAPS = K * K * K                                 # 27 conv taps
N = B * T                                        # 6 frames (t-major: n = t*B + b)
NPAD = 8                                         # frames padded 6 -> 8 per w-block
NROWS = 8 * NPAD                                 # 64 conv-output rows (w*8 + n)
KCOLS = S * TAPS                                 # 729 conv contraction columns
OUTL = 128                                       # lane-dense output width


def _sigmoid(z):
    # tanh form: one EUP op + 2 VPU ops, no f32 divide on the serial path.
    return 0.5 * jnp.tanh(0.5 * z) + 0.5


# -------------------- single fused Pallas kernel (whole forward) -------------
def fused_kernel(pm_ref, wbd_ref, bc_ref, wih_ref, bl_ref, whh_ref, wfc_ref,
                 bfc_ref, o_ref):
    # pm_ref : (64, 729)  im2col patches; rows = w*8 + frame (frames t-major,
    #                     padded 6->8), lanes = s*27 + tap
    # wbd_ref: (729, 216) block-diagonal conv weight [s*27+tap, s*8+c] = wc[c,tap]
    # bc_ref : (1, 216)   conv bias broadcast over lanes (s*8+c)
    # wih_ref: (216, 64)  LSTM input weights, rows = s*8+c, cols = gate*16 + h
    # bl_ref : (1, 64)    b_ih + b_hh, gate-padded
    # whh_ref: (16, 64)   recurrent weights, rows = h_in, cols = gate*16 + h_out
    # wfc_ref: (16, 128)  fc weight in column 0;  bfc_ref: (1, 128)
    # o_ref  : (2, 128)   sigmoid(logit) in column 0

    # --- conv3d: one block-diagonal MXU matmul over all frames / pool offsets ---
    conv = jnp.dot(pm_ref[...], wbd_ref[...],
                   preferred_element_type=jnp.float32,
                   precision="highest")                          # (64, 216)
    # TODO(synk): nn.Conv3d(..., activation='relu') is not a valid PyTorch arg
    # (it would raise in __init__); matching real nn.Conv3d, no activation here.

    # --- maxpool3d(2,2): max over the 8 window offsets = 8 aligned 8-row blocks --
    feat = conv[0:NPAD, :]
    for w in range(1, 8):
        feat = jnp.maximum(feat, conv[w * NPAD:(w + 1) * NPAD, :])
    # per-channel conv bias is constant over the pool window, so it commutes
    # with the max and is added once to the (8, 216) pooled block.
    feat = feat + bc_ref[...]            # rows 0..5 = frames, lanes = s*8 + c

    # --- LSTM input projection: all gates x all timesteps in ONE matmul ---------
    gx = jnp.dot(feat, wih_ref[...],
                 preferred_element_type=jnp.float32,
                 precision="highest") + bl_ref[...]              # (8, 64)

    # --- LSTM recurrence: one (2,16)@(16,64) matmul per step, T=3 unrolled ------
    whh = whh_ref[...]
    h = jnp.zeros((B, HID_PAD), jnp.float32)
    c = jnp.zeros((B, HID_PAD), jnp.float32)
    for t in range(T):                   # compile-time trip count -> fully unrolled
        g_all = gx[t * B:(t + 1) * B, :] + jnp.dot(
            h, whh, preferred_element_type=jnp.float32)          # (2, 64)
        i_g = _sigmoid(g_all[:, 0 * HID_PAD:1 * HID_PAD])
        f_g = _sigmoid(g_all[:, 1 * HID_PAD:2 * HID_PAD])
        g_g = jnp.tanh(g_all[:, 2 * HID_PAD:3 * HID_PAD])
        o_g = _sigmoid(g_all[:, 3 * HID_PAD:4 * HID_PAD])
        c = f_g * c + i_g * g_g
        h = o_g * jnp.tanh(c)
        # padded gate columns carry exact zeros -> padded h/c stay zero, and the
        # padded rows of whh/wfc are zero, so padding never leaks into real lanes.

    # --- fc + sigmoid (dropout=0.3 is a no-op for a 1-layer LSTM) ---------------
    logit = jnp.dot(h, wfc_ref[...],
                    preferred_element_type=jnp.float32,
                    precision="highest") + bfc_ref[...]          # (2, 128)
    o_ref[...] = _sigmoid(logit)


def fused_forward_pallas(pm, wbd, bconv, wih, bl, whh, wfc, bfc):
    def full(shape):
        return pl.BlockSpec(shape, lambda i, _n=len(shape): (0,) * _n)

    return pl.pallas_call(
        fused_kernel,
        out_shape=jax.ShapeDtypeStruct((B, OUTL), jnp.float32),
        grid=(1,),                       # single resident grid step at toy shapes
        in_specs=[full(pm.shape), full(wbd.shape), full(bconv.shape),
                  full(wih.shape), full(bl.shape), full(whh.shape),
                  full(wfc.shape), full(bfc.shape)],
        out_specs=pl.BlockSpec((B, OUTL), lambda i: (0, 0)),
        compiler_params=pltpu.CompilerParams(dimension_semantics=("arbitrary",)),
    )(pm, wbd, bconv, wih, bl, whh, wfc, bfc)


# --------------------------------- glue --------------------------------------
def forward(x, params):
    # x: (B, T, C=1, H, W, D) — same axis convention as the PyTorch module.
    # Frames laid out t-major so each LSTM time step is a contiguous row block.
    xr = x.transpose(1, 0, 2, 3, 4, 5).reshape(N, CIN, H, W, D)[:, 0]   # (6,8,8,8)
    xf = xr.reshape(N, H * W * D)                                        # (6, 512)
    xf = jnp.pad(xf, ((0, NPAD - N), (0, 0)))                            # (8, 512)

    # im2col as ONE gather (indices are trace-time numpy constants):
    #   pm[w*8 + n, s*27 + tap] = x[n, 2*ip+a1+d1, 2*jp+a2+d2, 2*kp+a3+d3]
    w_i, s_i, t_i = np.arange(8), np.arange(S), np.arange(TAPS)
    a1, a2, a3 = w_i // 4, (w_i // 2) % 2, w_i % 2              # pool-window offset
    ip_, jp_, kp_ = s_i // 9, (s_i // 3) % 3, s_i % 3           # pooled voxel
    d1, d2, d3 = t_i // 9, (t_i // 3) % 3, t_i % 3              # conv tap
    ih = 2 * ip_[None, :, None] + a1[:, None, None] + d1[None, None, :]   # (8,27,27)
    iw = 2 * jp_[None, :, None] + a2[:, None, None] + d2[None, None, :]
    idd = 2 * kp_[None, :, None] + a3[:, None, None] + d3[None, None, :]
    flat = jnp.asarray(ih * (W * D) + iw * D + idd, dtype=jnp.int32)      # (8,27,27)
    pm = xf[:, flat]                                   # (8, 8, 27, 27) [n, w, s, tap]
    pm = pm.transpose(1, 0, 2, 3).reshape(NROWS, KCOLS)                   # (64, 729)

    # Block-diagonal conv weight: 27 copies of the (27-tap, 8-channel) kernel.
    wc = params["conv_w"].reshape(COUT, TAPS)                    # (8, 27) [c, tap]
    eye_s = jnp.eye(S, dtype=jnp.float32)
    wbd = (eye_s[:, None, :, None] * wc.T[None, :, None, :]      # [s, tap, s2, c]
           ).reshape(KCOLS, FEAT)                                # (729, 216)
    bconv = jnp.tile(params["conv_b"], S).reshape(1, FEAT)       # (1, 216)

    # LSTM input weights: PyTorch feature order (c*27+s) -> lane order (s*8+c),
    # hidden padded 10 -> 16 so gate columns sit at offsets 0/16/32/48.
    wih = (params["w_ih"].reshape(4, HID, COUT, S)               # [g, hh, c, s]
           .transpose(3, 2, 0, 1))                               # [s, c, g, hh]
    wih = jnp.pad(wih, ((0, 0), (0, 0), (0, 0), (0, HID_PAD - HID)))
    wih = wih.reshape(FEAT, GCOLS)                               # (216, 64)
    bl = jnp.pad((params["b_ih"] + params["b_hh"]).reshape(4, HID),
                 ((0, 0), (0, HID_PAD - HID))).reshape(1, GCOLS)

    whh = (params["w_hh"].reshape(4, HID, HID)                   # [g, h_out, h_in]
           .transpose(2, 0, 1))                                  # [h_in, g, h_out]
    whh = jnp.pad(whh, ((0, HID_PAD - HID), (0, 0), (0, HID_PAD - HID)))
    whh = whh.reshape(HID_PAD, GCOLS)                            # (16, 64)

    wfc = jnp.zeros((HID_PAD, OUTL), jnp.float32).at[:HID, 0].set(params["w_fc"][0])
    bfc = jnp.zeros((1, OUTL), jnp.float32).at[0, 0].set(params["b_fc"][0])

    out = fused_forward_pallas(pm, wbd, bconv, wih, bl, whh, wfc, bfc)
    return out[:, 0]                                             # (B,)


# ------------------------------ pure-JAX reference ---------------------------
def reference(x, params):
    bsz, tsz = x.shape[0], x.shape[1]
    n = bsz * tsz
    xr = x.reshape(n, CIN, H, W, D)
    conv = lax.conv_general_dilated(
        xr, params["conv_w"], window_strides=(1, 1, 1), padding="VALID",
        dimension_numbers=("NCDHW", "OIDHW", "NCDHW"),
        precision=lax.Precision.HIGHEST)
    conv = conv + params["conv_b"].reshape(1, COUT, 1, 1, 1)
    pooled = lax.reduce_window(conv, -jnp.inf, lax.max,
                               (1, 1, 2, 2, 2), (1, 1, 2, 2, 2), "VALID")
    feat = pooled.reshape(bsz, tsz, FEAT)
    h = jnp.zeros((bsz, HID), jnp.float32)
    c = jnp.zeros((bsz, HID), jnp.float32)
    for t in range(tsz):
        gates = (jnp.dot(feat[:, t], params["w_ih"].T, precision="highest")
                 + jnp.dot(h, params["w_hh"].T, precision="highest")
                 + params["b_ih"] + params["b_hh"])
        i_g = jax.nn.sigmoid(gates[:, :HID])
        f_g = jax.nn.sigmoid(gates[:, HID:2 * HID])
        g_g = jnp.tanh(gates[:, 2 * HID:3 * HID])
        o_g = jax.nn.sigmoid(gates[:, 3 * HID:4 * HID])
        c = f_g * c + i_g * g_g
        h = o_g * jnp.tanh(c)
    logit = jnp.dot(h, params["w_fc"].T, precision="highest") + params["b_fc"]
    return jax.nn.sigmoid(logit)[:, 0]


# ------------------------------ params / main --------------------------------
def init_params(key):
    ks = jax.random.split(key, 8)

    def u(k, shape, fan_in):
        bound = 1.0 / (fan_in ** 0.5)
        return jax.random.uniform(k, shape, jnp.float32, -bound, bound)

    return {
        "conv_w": u(ks[0], (COUT, CIN, K, K, K), CIN * K * K * K),
        "conv_b": u(ks[1], (COUT,), CIN * K * K * K),
        "w_ih": u(ks[2], (4 * HID, FEAT), HID),     # gate order [i, f, g, o]
        "w_hh": u(ks[3], (4 * HID, HID), HID),
        "b_ih": u(ks[4], (4 * HID,), HID),
        "b_hh": u(ks[5], (4 * HID,), HID),
        "w_fc": u(ks[6], (1, HID), HID),
        "b_fc": u(ks[7], (1,), HID),
    }


if __name__ == "__main__":
    key = jax.random.PRNGKey(0)
    k_x, k_p = jax.random.split(key)
    x = jax.random.normal(k_x, (B, T, CIN, H, W, D), jnp.float32)
    params = init_params(k_p)

    out = jax.block_until_ready(jax.jit(forward)(x, params))
    ref = jax.block_until_ready(reference(x, params))

    assert out.shape == (B,), out.shape
    assert jnp.allclose(out, ref, rtol=1e-3, atol=1e-3), (out, ref)
    print("KERNEL_OK")
</pallas_src>

<mosaic_0001>
module attributes {stable_mosaic.version = 11 : i64} {
  func.func @fused_kernel(%arg0: i32, %arg1: memref<64x729xf32, #tpu.memory_space<vmem>>, %arg2: memref<729x216xf32, #tpu.memory_space<vmem>>, %arg3: memref<1x216xf32, #tpu.memory_space<vmem>>, %arg4: memref<216x64xf32, #tpu.memory_space<vmem>>, %arg5: memref<1x64xf32, #tpu.memory_space<vmem>>, %arg6: memref<16x64xf32, #tpu.memory_space<vmem>>, %arg7: memref<16x128xf32, #tpu.memory_space<vmem>>, %arg8: memref<1x128xf32, #tpu.memory_space<vmem>>, %arg9: memref<2x128xf32, #tpu.memory_space<vmem>>) attributes {dimension_semantics = [#tpu.dimension_semantics<arbitrary>], iteration_bounds = array<i64: 1>, scalar_prefetch = 0 : i64, scratch_operands = 0 : i64, tpu.core_type = #tpu.core_type<tc>, window_params = [{pipeline_mode = #tpu.pipeline_mode<synchronous>, transform_indices = @transform_0, window_bounds = array<i64: 64, 729>}, {pipeline_mode = #tpu.pipeline_mode<synchronous>, transform_indices = @transform_1, window_bounds = array<i64: 729, 216>}, {pipeline_mode = #tpu.pipeline_mode<synchronous>, transform_indices = @transform_2, window_bounds = array<i64: 1, 216>}, {pipeline_mode = #tpu.pipeline_mode<synchronous>, transform_indices = @transform_3, window_bounds = array<i64: 216, 64>}, {pipeline_mode = #tpu.pipeline_mode<synchronous>, transform_indices = @transform_4, window_bounds = array<i64: 1, 64>}, {pipeline_mode = #tpu.pipeline_mode<synchronous>, transform_indices = @transform_5, window_bounds = array<i64: 16, 64>}, {pipeline_mode = #tpu.pipeline_mode<synchronous>, transform_indices = @transform_6, window_bounds = array<i64: 16, 128>}, {pipeline_mode = #tpu.pipeline_mode<synchronous>, transform_indices = @transform_7, window_bounds = array<i64: 1, 128>}, {pipeline_mode = #tpu.pipeline_mode<synchronous>, transform_indices = @transform_8, window_bounds = array<i64: 2, 128>}]} {
    %c0 = arith.constant 0 : index
    %c0_0 = arith.constant 0 : index
    %0 = vector.load %arg1[%c0, %c0_0] : memref<64x729xf32, #tpu.memory_space<vmem>>, vector<64x729xf32>
    %c0_1 = arith.constant 0 : index
    %c0_2 = arith.constant 0 : index
    %1 = vector.load %arg2[%c0_1, %c0_2] : memref<729x216xf32, #tpu.memory_space<vmem>>, vector<729x216xf32>
    %cst = arith.constant dense<0.000000e+00> : vector<64x216xf32>
    %2 = tpu.matmul %0, %1, %cst {dimension_numbers = #tpu.dot_dimension_numbers<[1], [0], [0], [1], [0, 0, 1, 1], [], []>, precision = #tpu.contract_precision<fp32>} : vector<64x729xf32>, vector<729x216xf32>, vector<64x216xf32> -> vector<64x216xf32>
    %3 = vector.extract_strided_slice %2 {offsets = [0, 0], sizes = [8, 216], strides = [1, 1]} : vector<64x216xf32> to vector<8x216xf32>
    %4 = vector.extract_strided_slice %2 {offsets = [8, 0], sizes = [8, 216], strides = [1, 1]} : vector<64x216xf32> to vector<8x216xf32>
    %5 = arith.maximumf %3, %4 : vector<8x216xf32>
    %6 = vector.extract_strided_slice %2 {offsets = [16, 0], sizes = [8, 216], strides = [1, 1]} : vector<64x216xf32> to vector<8x216xf32>
    %7 = arith.maximumf %5, %6 : vector<8x216xf32>
    %8 = vector.extract_strided_slice %2 {offsets = [24, 0], sizes = [8, 216], strides = [1, 1]} : vector<64x216xf32> to vector<8x216xf32>
    %9 = arith.maximumf %7, %8 : vector<8x216xf32>
    %10 = vector.extract_strided_slice %2 {offsets = [32, 0], sizes = [8, 216], strides = [1, 1]} : vector<64x216xf32> to vector<8x216xf32>
    %11 = arith.maximumf %9, %10 : vector<8x216xf32>
    %12 = vector.extract_strided_slice %2 {offsets = [40, 0], sizes = [8, 216], strides = [1, 1]} : vector<64x216xf32> to vector<8x216xf32>
    %13 = arith.maximumf %11, %12 : vector<8x216xf32>
    %14 = vector.extract_strided_slice %2 {offsets = [48, 0], sizes = [8, 216], strides = [1, 1]} : vector<64x216xf32> to vector<8x216xf32>
    %15 = arith.maximumf %13, %14 : vector<8x216xf32>
    %16 = vector.extract_strided_slice %2 {offsets = [56, 0], sizes = [8, 216], strides = [1, 1]} : vector<64x216xf32> to vector<8x216xf32>
    %17 = arith.maximumf %15, %16 : vector<8x216xf32>
    %c0_3 = arith.constant 0 : index
    %c0_4 = arith.constant 0 : index
    %18 = vector.load %arg3[%c0_3, %c0_4] : memref<1x216xf32, #tpu.memory_space<vmem>>, vector<1x216xf32>
    %19 = vector.broadcast %18 : vector<1x216xf32> to vector<8x216xf32>
    %20 = arith.addf %17, %19 : vector<8x216xf32>
    %c0_5 = arith.constant 0 : index
    %c0_6 = arith.constant 0 : index
    %21 = vector.load %arg4[%c0_5, %c0_6] : memref<216x64xf32, #tpu.memory_space<vmem>>, vector<216x64xf32>
    %cst_7 = arith.constant dense<0.000000e+00> : vector<8x64xf32>
    %22 = tpu.matmul %20, %21, %cst_7 {dimension_numbers = #tpu.dot_dimension_numbers<[1], [0], [0], [1], [0, 0, 1, 1], [], []>, precision = #tpu.contract_precision<fp32>} : vector<8x216xf32>, vector<216x64xf32>, vector<8x64xf32> -> vector<8x64xf32>
    %c0_8 = arith.constant 0 : index
    %c0_9 = arith.constant 0 : index
    %23 = vector.load %arg5[%c0_8, %c0_9] : memref<1x64xf32, #tpu.memory_space<vmem>>, vector<1x64xf32>
    %24 = vector.broadcast %23 : vector<1x64xf32> to vector<8x64xf32>
    %25 = arith.addf %22, %24 : vector<8x64xf32>
    %c0_10 = arith.constant 0 : index
    %c0_11 = arith.constant 0 : index
    %26 = vector.load %arg6[%c0_10, %c0_11] : memref<16x64xf32, #tpu.memory_space<vmem>>, vector<16x64xf32>
    %cst_12 = arith.constant 0.000000e+00 : f32
    %27 = vector.broadcast %cst_12 : f32 to vector<2x16xf32>
    %cst_13 = arith.constant 0.000000e+00 : f32
    %28 = vector.broadcast %cst_13 : f32 to vector<2x16xf32>
    %29 = vector.extract_strided_slice %25 {offsets = [0, 0], sizes = [2, 64], strides = [1, 1]} : vector<8x64xf32> to vector<2x64xf32>
    %cst_14 = arith.constant dense<0.000000e+00> : vector<2x64xf32>
    %30 = tpu.matmul %27, %26, %cst_14 {dimension_numbers = #tpu.dot_dimension_numbers<[1], [0], [0], [1], [0, 0, 1, 1], [], []>} : vector<2x16xf32>, vector<16x64xf32>, vector<2x64xf32> -> vector<2x64xf32>
    %31 = arith.addf %29, %30 : vector<2x64xf32>
    %32 = vector.extract_strided_slice %31 {offsets = [0, 0], sizes = [2, 16], strides = [1, 1]} : vector<2x64xf32> to vector<2x16xf32>
    %cst_15 = arith.constant 5.000000e-01 : f32
    %33 = vector.broadcast %cst_15 : f32 to vector<2x16xf32>
    %34 = arith.mulf %33, %32 : vector<2x16xf32>
    %35 = math.tanh %34 : vector<2x16xf32>
    %cst_16 = arith.constant 5.000000e-01 : f32
    %36 = vector.broadcast %cst_16 : f32 to vector<2x16xf32>
    %37 = arith.mulf %36, %35 : vector<2x16xf32>
    %cst_17 = arith.constant 5.000000e-01 : f32
    %38 = vector.broadcast %cst_17 : f32 to vector<2x16xf32>
    %39 = arith.addf %37, %38 : vector<2x16xf32>
    %40 = vector.extract_strided_slice %31 {offsets = [0, 16], sizes = [2, 16], strides = [1, 1]} : vector<2x64xf32> to vector<2x16xf32>
    %cst_18 = arith.constant 5.000000e-01 : f32
    %41 = vector.broadcast %cst_18 : f32 to vector<2x16xf32>
    %42 = arith.mulf %41, %40 : vector<2x16xf32>
    %43 = math.tanh %42 : vector<2x16xf32>
    %cst_19 = arith.constant 5.000000e-01 : f32
    %44 = vector.broadcast %cst_19 : f32 to vector<2x16xf32>
    %45 = arith.mulf %44, %43 : vector<2x16xf32>
    %cst_20 = arith.constant 5.000000e-01 : f32
    %46 = vector.broadcast %cst_20 : f32 to vector<2x16xf32>
    %47 = arith.addf %45, %46 : vector<2x16xf32>
    %48 = vector.extract_strided_slice %31 {offsets = [0, 32], sizes = [2, 16], strides = [1, 1]} : vector<2x64xf32> to vector<2x16xf32>
    %49 = math.tanh %48 : vector<2x16xf32>
    %50 = vector.extract_strided_slice %31 {offsets = [0, 48], sizes = [2, 16], strides = [1, 1]} : vector<2x64xf32> to vector<2x16xf32>
    %cst_21 = arith.constant 5.000000e-01 : f32
    %51 = vector.broadcast %cst_21 : f32 to vector<2x16xf32>
    %52 = arith.mulf %51, %50 : vector<2x16xf32>
    %53 = math.tanh %52 : vector<2x16xf32>
    %cst_22 = arith.constant 5.000000e-01 : f32
    %54 = vector.broadcast %cst_22 : f32 to vector<2x16xf32>
    %55 = arith.mulf %54, %53 : vector<2x16xf32>
    %cst_23 = arith.constant 5.000000e-01 : f32
    %56 = vector.broadcast %cst_23 : f32 to vector<2x16xf32>
    %57 = arith.addf %55, %56 : vector<2x16xf32>
    %58 = arith.mulf %47, %28 : vector<2x16xf32>
    %59 = arith.mulf %39, %49 : vector<2x16xf32>
    %60 = arith.addf %58, %59 : vector<2x16xf32>
    %61 = math.tanh %60 : vector<2x16xf32>
    %62 = arith.mulf %57, %61 : vector<2x16xf32>
    %63 = vector.extract_strided_slice %25 {offsets = [2, 0], sizes = [2, 64], strides = [1, 1]} : vector<8x64xf32> to vector<2x64xf32>
    %cst_24 = arith.constant dense<0.000000e+00> : vector<2x64xf32>
    %64 = tpu.matmul %62, %26, %cst_24 {dimension_numbers = #tpu.dot_dimension_numbers<[1], [0], [0], [1], [0, 0, 1, 1], [], []>} : vector<2x16xf32>, vector<16x64xf32>, vector<2x64xf32> -> vector<2x64xf32>
    %65 = arith.addf %63, %64 : vector<2x64xf32>
    %66 = vector.extract_strided_slice %65 {offsets = [0, 0], sizes = [2, 16], strides = [1, 1]} : vector<2x64xf32> to vector<2x16xf32>
    %cst_25 = arith.constant 5.000000e-01 : f32
    %67 = vector.broadcast %cst_25 : f32 to vector<2x16xf32>
    %68 = arith.mulf %67, %66 : vector<2x16xf32>
    %69 = math.tanh %68 : vector<2x16xf32>
    %cst_26 = arith.constant 5.000000e-01 : f32
    %70 = vector.broadcast %cst_26 : f32 to vector<2x16xf32>
    %71 = arith.mulf %70, %69 : vector<2x16xf32>
    %cst_27 = arith.constant 5.000000e-01 : f32
    %72 = vector.broadcast %cst_27 : f32 to vector<2x16xf32>
    %73 = arith.addf %71, %72 : vector<2x16xf32>
    %74 = vector.extract_strided_slice %65 {offsets = [0, 16], sizes = [2, 16], strides = [1, 1]} : vector<2x64xf32> to vector<2x16xf32>
    %cst_28 = arith.constant 5.000000e-01 : f32
    %75 = vector.broadcast %cst_28 : f32 to vector<2x16xf32>
    %76 = arith.mulf %75, %74 : vector<2x16xf32>
    %77 = math.tanh %76 : vector<2x16xf32>
    %cst_29 = arith.constant 5.000000e-01 : f32
    %78 = vector.broadcast %cst_29 : f32 to vector<2x16xf32>
    %79 = arith.mulf %78, %77 : vector<2x16xf32>
    %cst_30 = arith.constant 5.000000e-01 : f32
    %80 = vector.broadcast %cst_30 : f32 to vector<2x16xf32>
    %81 = arith.addf %79, %80 : vector<2x16xf32>
    %82 = vector.extract_strided_slice %65 {offsets = [0, 32], sizes = [2, 16], strides = [1, 1]} : vector<2x64xf32> to vector<2x16xf32>
    %83 = math.tanh %82 : vector<2x16xf32>
    %84 = vector.extract_strided_slice %65 {offsets = [0, 48], sizes = [2, 16], strides = [1, 1]} : vector<2x64xf32> to vector<2x16xf32>
    %cst_31 = arith.constant 5.000000e-01 : f32
    %85 = vector.broadcast %cst_31 : f32 to vector<2x16xf32>
    %86 = arith.mulf %85, %84 : vector<2x16xf32>
    %87 = math.tanh %86 : vector<2x16xf32>
    %cst_32 = arith.constant 5.000000e-01 : f32
    %88 = vector.broadcast %cst_32 : f32 to vector<2x16xf32>
    %89 = arith.mulf %88, %87 : vector<2x16xf32>
    %cst_33 = arith.constant 5.000000e-01 : f32
    %90 = vector.broadcast %cst_33 : f32 to vector<2x16xf32>
    %91 = arith.addf %89, %90 : vector<2x16xf32>
    %92 = arith.mulf %81, %60 : vector<2x16xf32>
    %93 = arith.mulf %73, %83 : vector<2x16xf32>
    %94 = arith.addf %92, %93 : vector<2x16xf32>
    %95 = math.tanh %94 : vector<2x16xf32>
    %96 = arith.mulf %91, %95 : vector<2x16xf32>
    %97 = vector.extract_strided_slice %25 {offsets = [4, 0], sizes = [2, 64], strides = [1, 1]} : vector<8x64xf32> to vector<2x64xf32>
    %cst_34 = arith.constant dense<0.000000e+00> : vector<2x64xf32>
    %98 = tpu.matmul %96, %26, %cst_34 {dimension_numbers = #tpu.dot_dimension_numbers<[1], [0], [0], [1], [0, 0, 1, 1], [], []>} : vector<2x16xf32>, vector<16x64xf32>, vector<2x64xf32> -> vector<2x64xf32>
    %99 = arith.addf %97, %98 : vector<2x64xf32>
    %100 = vector.extract_strided_slice %99 {offsets = [0, 0], sizes = [2, 16], strides = [1, 1]} : vector<2x64xf32> to vector<2x16xf32>
    %cst_35 = arith.constant 5.000000e-01 : f32
    %101 = vector.broadcast %cst_35 : f32 to vector<2x16xf32>
    %102 = arith.mulf %101, %100 : vector<2x16xf32>
    %103 = math.tanh %102 : vector<2x16xf32>
    %cst_36 = arith.constant 5.000000e-01 : f32
    %104 = vector.broadcast %cst_36 : f32 to vector<2x16xf32>
    %105 = arith.mulf %104, %103 : vector<2x16xf32>
    %cst_37 = arith.constant 5.000000e-01 : f32
    %106 = vector.broadcast %cst_37 : f32 to vector<2x16xf32>
    %107 = arith.addf %105, %106 : vector<2x16xf32>
    %108 = vector.extract_strided_slice %99 {offsets = [0, 16], sizes = [2, 16], strides = [1, 1]} : vector<2x64xf32> to vector<2x16xf32>
    %cst_38 = arith.constant 5.000000e-01 : f32
    %109 = vector.broadcast %cst_38 : f32 to vector<2x16xf32>
    %110 = arith.mulf %109, %108 : vector<2x16xf32>
    %111 = math.tanh %110 : vector<2x16xf32>
    %cst_39 = arith.constant 5.000000e-01 : f32
    %112 = vector.broadcast %cst_39 : f32 to vector<2x16xf32>
    %113 = arith.mulf %112, %111 : vector<2x16xf32>
    %cst_40 = arith.constant 5.000000e-01 : f32
    %114 = vector.broadcast %cst_40 : f32 to vector<2x16xf32>
    %115 = arith.addf %113, %114 : vector<2x16xf32>
    %116 = vector.extract_strided_slice %99 {offsets = [0, 32], sizes = [2, 16], strides = [1, 1]} : vector<2x64xf32> to vector<2x16xf32>
    %117 = math.tanh %116 : vector<2x16xf32>
    %118 = vector.extract_strided_slice %99 {offsets = [0, 48], sizes = [2, 16], strides = [1, 1]} : vector<2x64xf32> to vector<2x16xf32>
    %cst_41 = arith.constant 5.000000e-01 : f32
    %119 = vector.broadcast %cst_41 : f32 to vector<2x16xf32>
    %120 = arith.mulf %119, %118 : vector<2x16xf32>
    %121 = math.tanh %120 : vector<2x16xf32>
    %cst_42 = arith.constant 5.000000e-01 : f32
    %122 = vector.broadcast %cst_42 : f32 to vector<2x16xf32>
    %123 = arith.mulf %122, %121 : vector<2x16xf32>
    %cst_43 = arith.constant 5.000000e-01 : f32
    %124 = vector.broadcast %cst_43 : f32 to vector<2x16xf32>
    %125 = arith.addf %123, %124 : vector<2x16xf32>
    %126 = arith.mulf %115, %94 : vector<2x16xf32>
    %127 = arith.mulf %107, %117 : vector<2x16xf32>
    %128 = arith.addf %126, %127 : vector<2x16xf32>
    %129 = math.tanh %128 : vector<2x16xf32>
    %130 = arith.mulf %125, %129 : vector<2x16xf32>
    %c0_44 = arith.constant 0 : index
    %c0_45 = arith.constant 0 : index
    %131 = vector.load %arg7[%c0_44, %c0_45] : memref<16x128xf32, #tpu.memory_space<vmem>>, vector<16x128xf32>
    %cst_46 = arith.constant dense<0.000000e+00> : vector<2x128xf32>
    %132 = tpu.matmul %130, %131, %cst_46 {dimension_numbers = #tpu.dot_dimension_numbers<[1], [0], [0], [1], [0, 0, 1, 1], [], []>, precision = #tpu.contract_precision<fp32>} : vector<2x16xf32>, vector<16x128xf32>, vector<2x128xf32> -> vector<2x128xf32>
    %c0_47 = arith.constant 0 : index
    %c0_48 = arith.constant 0 : index
    %133 = vector.load %arg8[%c0_47, %c0_48] : memref<1x128xf32, #tpu.memory_space<vmem>>, vector<1x128xf32>
    %134 = vector.broadcast %133 : vector<1x128xf32> to vector<2x128xf32>
    %135 = arith.addf %132, %134 : vector<2x128xf32>
    %cst_49 = arith.constant 5.000000e-01 : f32
    %136 = vector.broadcast %cst_49 : f32 to vector<2x128xf32>
    %137 = arith.mulf %136, %135 : vector<2x128xf32>
    %138 = math.tanh %137 : vector<2x128xf32>
    %cst_50 = arith.constant 5.000000e-01 : f32
    %139 = vector.broadcast %cst_50 : f32 to vector<2x128xf32>
    %140 = arith.mulf %139, %138 : vector<2x128xf32>
    %cst_51 = arith.constant 5.000000e-01 : f32
    %141 = vector.broadcast %cst_51 : f32 to vector<2x128xf32>
    %142 = arith.addf %140, %141 : vector<2x128xf32>
    %c0_52 = arith.constant 0 : index
    %c0_53 = arith.constant 0 : index
    %143 = vector.load %arg9[%c0_52, %c0_53] : memref<2x128xf32, #tpu.memory_space<vmem>>, vector<2x128xf32>
    tpu.vector_store %arg9[%c0_52, %c0_53], %142 {strides = array<i32>} : memref<2x128xf32, #tpu.memory_space<vmem>>, vector<2x128xf32>,
    return
  }
  func.func @transform_0(%arg0: i32) -> (i32, i32) {
    %c0_i32 = arith.constant 0 : i32
    %c0_i32_0 = arith.constant 0 : i32
    %c0_i32_1 = arith.constant 0 : i32
    return %c0_i32, %c0_i32_0 : i32, i32
  }
  func.func @transform_1(%arg0: i32) -> (i32, i32) {
    %c0_i32 = arith.constant 0 : i32
    %c0_i32_0 = arith.constant 0 : i32
    %c0_i32_1 = arith.constant 0 : i32
    return %c0_i32, %c0_i32_0 : i32, i32
  }
  func.func @transform_2(%arg0: i32) -> (i32, i32) {
    %c0_i32 = arith.constant 0 : i32
    %c0_i32_0 = arith.constant 0 : i32
    %c0_i32_1 = arith.constant 0 : i32
    return %c0_i32, %c0_i32_0 : i32, i32
  }
  func.func @transform_3(%arg0: i32) -> (i32, i32) {
    %c0_i32 = arith.constant 0 : i32
    %c0_i32_0 = arith.constant 0 : i32
    %c0_i32_1 = arith.constant 0 : i32
    return %c0_i32, %c0_i32_0 : i32, i32
  }
  func.func @transform_4(%arg0: i32) -> (i32, i32) {
    %c0_i32 = arith.constant 0 : i32
    %c0_i32_0 = arith.constant 0 : i32
    %c0_i32_1 = arith.constant 0 : i32
    return %c0_i32, %c0_i32_0 : i32, i32
  }
  func.func @transform_5(%arg0: i32) -> (i32, i32) {
    %c0_i32 = arith.constant 0 : i32
    %c0_i32_0 = arith.constant 0 : i32
    %c0_i32_1 = arith.constant 0 : i32
    return %c0_i32, %c0_i32_0 : i32, i32
  }
  func.func @transform_6(%arg0: i32) -> (i32, i32) {
    %c0_i32 = arith.constant 0 : i32
    %c0_i32_0 = arith.constant 0 : i32
    %c0_i32_1 = arith.constant 0 : i32
    return %c0_i32, %c0_i32_0 : i32, i32
  }
  func.func @transform_7(%arg0: i32) -> (i32, i32) {
    %c0_i32 = arith.constant 0 : i32
    %c0_i32_0 = arith.constant 0 : i32
    %c0_i32_1 = arith.constant 0 : i32
    return %c0_i32, %c0_i32_0 : i32, i32
  }
  func.func @transform_8(%arg0: i32) -> (i32, i32) {
    %c0_i32 = arith.constant 0 : i32
    %c0_i32_0 = arith.constant 0 : i32
    %c0_i32_1 = arith.constant 0 : i32
    return %c0_i32, %c0_i32_0 : i32, i32
  }
}

</mosaic_0001>

<llo_original>
// kernel: tile.8
$region0: #{tile.8}
  #allocation0 [shape = 's32[1]{0}', space=sflag, size = 0x4, scoped, tag = 'scoped memory for tile.8']
  %s0 = inlined_call_operand.vmem [shape: f32[8], index: 0, kind: input, shape index: {}]
  %s1 = inlined_call_operand.vmem [shape: f32[27,8], index: 1, kind: output, shape index: {}]
  // Predicated region
  $region2: #{tile.8} parent=0 // pred_check
    _
  $region3: #{tile.8} parent=0 // pred_check_branch
    %3 = sbr.rel (0) target = $region5
  $region4: #{tile.8} parent=0 // pred_region
    _
  $region5: #{tile.8} parent=0 // pred_fallthru
    _
  %v4 = vld [vmem:[%s0] ss:$0 sm:$0xff]
  %5 = vst [vmem:[%s1] sm:$0xff] %v4
  %s6 = scalar_lea.vmem %s1, 8
  %7 = vst [vmem:[%s6] sm:$0xff] %v4
  %s8 = scalar_lea.vmem %s1, 16
  %9 = vst [vmem:[%s8] sm:$0xff] %v4
  %s10 = scalar_lea.vmem %s1, 24
  %11 = vst [vmem:[%s10] sm:$0xff] %v4

// kernel: tile.9
$region0: #{tile.9}
  %s0 = inlined_call_operand.vmem [shape: f32[27,8], index: 0, kind: input, shape index: {}]
  %s1 = inlined_call_operand.vmem [shape: f32[1,216], index: 1, kind: output, shape index: {}]
  $region1: #{tile.9} parent=0
    #allocation0 [shape = 'u8[8192]{0}', space=vmem, size = 0x2000, scoped, tag = 'scoped mem for output reshape']
    %s2 = smov 3
    %v3 = vld [vmem:[%s0] ss:$16 sm:%s2]
    %vm4 = vcmask 64512
    %5 = vst.msk [vmem:[#allocation0] ss:$8 sm:$0x3] %vm4, %v3
    %s6 = scalar_lea.vmem %s0, 15
    %v7 = vld [vmem:[%s6] sm:$0x1]
    %8 = vrot.lane.b32.xlu0 %v7, 120
    %v9 = vpop.permute.xlu0 %8
    %vm10 = vcmask 1048512
    %11 = vst.msk [vmem:[#allocation0] sm:$0x1] %vm10, %v9
    %s12 = scalar_lea.vmem %s0, 14
    %v13 = vld [vmem:[%s12] sm:$0x1]
    %14 = vrot.lane.b32.xlu0 %v13, 112
    %v15 = vpop.permute.xlu0 %14
    %vm16 = vcmask 982912
    %17 = vst.msk [vmem:[#allocation0] sm:$0x1] %vm16, %v15
    %s18 = scalar_lea.vmem %s0, 13
    %v19 = vld [vmem:[%s18] sm:$0x1]
    %20 = vrot.lane.b32.xlu0 %v19, 104
    %v21 = vpop.permute.xlu0 %20
    %vm22 = vcmask 917312
    %23 = vst.msk [vmem:[#allocation0] sm:$0x1] %vm22, %v21
    %s24 = scalar_lea.vmem %s0, 12
    %v25 = vld [vmem:[%s24] sm:$0x1]
    %26 = vrot.lane.b32.xlu0 %v25, 96
    %v27 = vpop.permute.xlu0 %26
    %vm28 = vcmask 851712
    %29 = vst.msk [vmem:[#allocation0] sm:$0x1] %vm28, %v27
    %s30 = scalar_lea.vmem %s0, 11
    %v31 = vld [vmem:[%s30] sm:$0x1]
    %32 = vrot.lane.b32.xlu0 %v31, 88
    %v33 = vpop.permute.xlu0 %32
    %vm34 = vcmask 786112
    %35 = vst.msk [vmem:[#allocation0] sm:$0x1] %vm34, %v33
    %s36 = scalar_lea.vmem %s0, 10
    %s37 = smov 3
    %v38 = vld [vmem:[%s36] ss:$16 sm:%s37]
    %39 = vrot.lane.b32.xlu0 %v38, 80
    %v40 = vpop.permute.xlu0 %39
    %vm41 = vcmask 720512
    %42 = vst.msk [vmem:[#allocation0] ss:$8 sm:$0x3] %vm41, %v40
    %s43 = scalar_lea.vmem %s0, 9
    %s44 = smov 3
    %v45 = vld [vmem:[%s43] ss:$16 sm:%s44]
    %46 = vrot.lane.b32.xlu0 %v45, 72
    %v47 = vpop.permute.xlu0 %46
    %vm48 = vcmask 654912
    %49 = vst.msk [vmem:[#allocation0] ss:$8 sm:$0x3] %vm48, %v47
    %s50 = scalar_lea.vmem %s0, 8
    %s51 = smov 3
    %v52 = vld [vmem:[%s50] ss:$16 sm:%s51]
    %53 = vrot.lane.b32.xlu0 %v52, 64
    %v54 = vpop.permute.xlu0 %53
    %vm55 = vcmask 589312
    %56 = vst.msk [vmem:[#allocation0] ss:$8 sm:$0x3] %vm55, %v54
    %s57 = scalar_lea.vmem %s0, 7
    %s58 = smov 3
    %v59 = vld [vmem:[%s57] ss:$16 sm:%s58]
    %60 = vrot.lane.b32.xlu0 %v59, 56
    %v61 = vpop.permute.xlu0 %60
    %vm62 = vcmask 523712
    %63 = vst.msk [vmem:[#allocation0] ss:$8 sm:$0x3] %vm62, %v61
    %s64 = scalar_lea.vmem %s0, 6
    %s65 = smov 3
    %v66 = vld [vmem:[%s64] ss:$16 sm:%s65]
    %67 = vrot.lane.b32.xlu0 %v66, 48
    %v68 = vpop.permute.xlu0 %67
    %vm69 = vcmask 458112
    %70 = vst.msk [vmem:[#allocation0] ss:$8 sm:$0x3] %vm69, %v68
    %s71 = scalar_lea.vmem %s0, 5
    %s72 = smov 3
    %v73 = vld [vmem:[%s71] ss:$16 sm:%s72]
    %74 = vrot.lane.b32.xlu0 %v73, 40
    %v75 = vpop.permute.xlu0 %74
    %vm76 = vcmask 392512
    %77 = vst.msk [vmem:[#allocation0] ss:$8 sm:$0x3] %vm76, %v75
    %s78 = scalar_lea.vmem %s0, 4
    %s79 = smov 3
    %v80 = vld [vmem:[%s78] ss:$16 sm:%s79]
    %81 = vrot.lane.b32.xlu0 %v80, 32
    %v82 = vpop.permute.xlu0 %81
    %vm83 = vcmask 326912
    %84 = vst.msk [vmem:[#allocation0] ss:$8 sm:$0x3] %vm83, %v82
    %s85 = scalar_lea.vmem %s0, 3
    %s86 = smov 3
    %v87 = vld [vmem:[%s85] ss:$16 sm:%s86]
    %88 = vrot.lane.b32.xlu0 %v87, 24
    %v89 = vpop.permute.xlu0 %88
    %vm90 = vcmask 261312
    %91 = vst.msk [vmem:[#allocation0] ss:$8 sm:$0x3] %vm90, %v89
    %s92 = scalar_lea.vmem %s0, 2
    %s93 = smov 3
    %v94 = vld [vmem:[%s92] ss:$16 sm:%s93]
    %95 = vrot.lane.b32.xlu0 %v94, 16
    %v96 = vpop.permute.xlu0 %95
    %vm97 = vcmask 195712
    %98 = vst.msk [vmem:[#allocation0] ss:$8 sm:$0x3] %vm97, %v96
    %s99 = scalar_lea.vmem %s0, 1
    %s100 = smov 3
    %v101 = vld [vmem:[%s99] ss:$16 sm:%s100]
    %102 = vrot.lane.b32.xlu0 %v101, 8
    %v103 = vpop.permute.xlu0 %102
    %vm104 = vcmask 130112
    %105 = vst.msk [vmem:[#allocation0] ss:$8 sm:$0x3] %vm104, %v103
    %s107 = ssub.s32 2, 1
    %v108 = vld [vmem:[#allocation0] sm:%s107]
    %s110 = ssub.s32 2, 1
    %111 = vst [vmem:[%s1] sm:%s110] %v108
    %s112 = scalar_lea.vmem [#allocation0], 8
    %v113 = vld [vmem:[%s112] sm:%s107]
    %s115 = ssub.s32 2, 1
    %s116 = scalar_lea.vmem %s1, 1
    %117 = vst [vmem:[%s116] sm:%s115] %v113

// kernel: forward.1
$region0: #{forward.1}
  #allocation0 [shape = 'u32[]', space=smem, size = 0x4, offset = 0x4, fixed_abs, tag = 'smem constant byte address 0x4 - core index']
  #allocation1 [shape = 'u32[72,128]{1,0:T(1,128)}', space=vmem, size = 0x9000, scoped, tag = 'internal scratch']
  %s0 = inlined_call_operand.vmem [shape: f32[64,729], index: 0, kind: input, shape index: {}]
  %s1 = inlined_call_operand.vmem [shape: f32[729,216], index: 1, kind: input, shape index: {}]
  %s2 = inlined_call_operand.vmem [shape: f32[1,216], index: 2, kind: input, shape index: {}]
  %s3 = inlined_call_operand.vmem [shape: f32[216,64], index: 3, kind: input, shape index: {}]
  %s4 = inlined_call_operand.vmem [shape: f32[1,64], index: 4, kind: input, shape index: {}]
  %s5 = inlined_call_operand.vmem [shape: f32[16,64], index: 5, kind: input, shape index: {}]
  %s6 = inlined_call_operand.vmem [shape: f32[16,128], index: 6, kind: input, shape index: {}]
  %s7 = inlined_call_operand.vmem [shape: f32[1,128], index: 7, kind: input, shape index: {}]
  %s8 = inlined_call_operand.vmem [shape: f32[2,128], index: 8, kind: output, shape index: {}]
  %s9 = sld [smem:[#allocation0]]
  $region42: #{forward.1} parent=0
    _
  %s11 = ssub.s32 1, %s9
  %s12 = scalar_select 0, %s11, %s9
  // Predicated region
  $region2: #{forward.1} parent=0 // pred_check
    _
  $region3: #{forward.1} parent=0 // pred_check_branch
    %14 = sbr.rel (0) target = $region5
  $region4: #{forward.1} parent=0 // pred_region
    _
  $region5: #{forward.1} parent=0 // pred_fallthru
    _
  // Predicated region
  $region6: #{forward.1} parent=0 // pred_check
    _
  $region7: #{forward.1} parent=0 // pred_check_branch
    %16 = sbr.rel (0) target = $region9
  $region8: #{forward.1} parent=0 // pred_region
    _
  $region9: #{forward.1} parent=0 // pred_fallthru
    _
  // Predicated region
  $region10: #{forward.1} parent=0 // pred_check
    _
  $region11: #{forward.1} parent=0 // pred_check_branch
    %18 = sbr.rel (0) target = $region13
  $region12: #{forward.1} parent=0 // pred_region
    _
  $region13: #{forward.1} parent=0 // pred_fallthru
    _
  // Predicated region
  $region14: #{forward.1} parent=0 // pred_check
    _
  $region15: #{forward.1} parent=0 // pred_check_branch
    %20 = sbr.rel (0) target = $region17
  $region16: #{forward.1} parent=0 // pred_region
    _
  $region17: #{forward.1} parent=0 // pred_fallthru
    _
  // Predicated region
  $region18: #{forward.1} parent=0 // pred_check
    _
  $region19: #{forward.1} parent=0 // pred_check_branch
    %22 = sbr.rel (0) target = $region21
  $region20: #{forward.1} parent=0 // pred_region
    _
  $region21: #{forward.1} parent=0 // pred_fallthru
    _
  // Predicated region
  $region22: #{forward.1} parent=0 // pred_check
    _
  $region23: #{forward.1} parent=0 // pred_check_branch
    %24 = sbr.rel (0) target = $region25
  $region24: #{forward.1} parent=0 // pred_region
    _
  $region25: #{forward.1} parent=0 // pred_fallthru
    _
  // Predicated region
  $region26: #{forward.1} parent=0 // pred_check
    _
  $region27: #{forward.1} parent=0 // pred_check_branch
    %26 = sbr.rel (0) target = $region29
  $region28: #{forward.1} parent=0 // pred_region
    _
  $region29: #{forward.1} parent=0 // pred_fallthru
    _
  // Predicated region
  $region30: #{forward.1} parent=0 // pred_check
    _
  $region31: #{forward.1} parent=0 // pred_check_branch
    %28 = sbr.rel (0) target = $region33
  $region32: #{forward.1} parent=0 // pred_region
    _
  $region33: #{forward.1} parent=0 // pred_fallthru
    _
  %v29 = vld [vmem:[%s0] sm:$0xff]
  %v30 = vld [vmem:[%s0 + $0x8] sm:$0xff]
  %v31 = vld [vmem:[%s0 + $0x10] sm:$0xff]
  %v32 = vld [vmem:[%s0 + $0x18] sm:$0xff]
  %v33 = vld [vmem:[%s0 + $0x20] sm:$0xff]
  %v34 = vld [vmem:[%s0 + $0x28] sm:$0xff]
  %v35 = vld [vmem:[%s0 + $0x30] sm:$0xff]
  %v36 = vld [vmem:[%s0 + $0x38] sm:$0xff]
  %v37 = vld [vmem:[%s0 + $0x40] sm:$0xff]
  %v38 = vld [vmem:[%s0 + $0x48] sm:$0xff]
  %v39 = vld [vmem:[%s0 + $0x50] sm:$0xff]
  %v40 = vld [vmem:[%s0 + $0x58] sm:$0xff]
  %v41 = vld [vmem:[%s0 + $0x60] sm:$0xff]
  %v42 = vld [vmem:[%s0 + $0x68] sm:$0xff]
  %v43 = vld [vmem:[%s0 + $0x70] sm:$0xff]
  %v44 = vld [vmem:[%s0 + $0x78] sm:$0xff]
  %v45 = vld [vmem:[%s0 + $0x80] sm:$0xff]
  %v46 = vld [vmem:[%s0 + $0x88] sm:$0xff]
  %v47 = vld [vmem:[%s0 + $0x90] sm:$0xff]
  %v48 = vld [vmem:[%s0 + $0x98] sm:$0xff]
  %v49 = vld [vmem:[%s0 + $0xa0] sm:$0xff]
  %v50 = vld [vmem:[%s0 + $0xa8] sm:$0xff]
  %v51 = vld [vmem:[%s0 + $0xb0] sm:$0xff]
  %v52 = vld [vmem:[%s0 + $0xb8] sm:$0xff]
  %v53 = vld [vmem:[%s0 + $0xc0] sm:$0xff]
  %v54 = vld [vmem:[%s0 + $0xc8] sm:$0xff]
  %v55 = vld [vmem:[%s0 + $0xd0] sm:$0xff]
  %v56 = vld [vmem:[%s0 + $0xd8] sm:$0xff]
  %v57 = vld [vmem:[%s0 + $0xe0] sm:$0xff]
  %v58 = vld [vmem:[%s0 + $0xe8] sm:$0xff]
  %v59 = vld [vmem:[%s0 + $0xf0] sm:$0xff]
  %v60 = vld [vmem:[%s0 + $0xf8] sm:$0xff]
  %v61 = vld [vmem:[%s0 + $0x100] sm:$0xff]
  %v62 = vld [vmem:[%s0 + $0x108] sm:$0xff]
  %v63 = vld [vmem:[%s0 + $0x110] sm:$0xff]
  %v64 = vld [vmem:[%s0 + $0x118] sm:$0xff]
  %v65 = vld [vmem:[%s0 + $0x120] sm:$0xff]
  %v66 = vld [vmem:[%s0 + $0x128] sm:$0xff]
  %v67 = vld [vmem:[%s0 + $0x130] sm:$0xff]
  %v68 = vld [vmem:[%s0 + $0x138] sm:$0xff]
  %v69 = vld [vmem:[%s0 + $0x140] sm:$0xff]
  %v70 = vld [vmem:[%s0 + $0x148] sm:$0xff]
  %v71 = vld [vmem:[%s0 + $0x150] sm:$0xff]
  %v72 = vld [vmem:[%s0 + $0x158] sm:$0xff]
  %v73 = vld [vmem:[%s0 + $0x160] sm:$0xff]
  %v74 = vld [vmem:[%s0 + $0x168] sm:$0xff]
  %v75 = vld [vmem:[%s0 + $0x170] sm:$0xff]
  %v76 = vld [vmem:[%s0 + $0x178] sm:$0xff]
  %v77 = vld [vmem:[%s1] sm:$0xff]
  %v78 = vld [vmem:[%s1 + $0x8] sm:$0xff]
  %v79 = vld [vmem:[%s1 + $0x10] sm:$0xff]
  %v80 = vld [vmem:[%s1 + $0x18] sm:$0xff]
  %v81 = vld [vmem:[%s1 + $0x20] sm:$0xff]
  %v82 = vld [vmem:[%s1 + $0x28] sm:$0xff]
  %v83 = vld [vmem:[%s1 + $0x30] sm:$0xff]
  %v84 = vld [vmem:[%s1 + $0x38] sm:$0xff]
  %v85 = vld [vmem:[%s1 + $0x40] sm:$0xff]
  %v86 = vld [vmem:[%s1 + $0x48] sm:$0xff]
  %v87 = vld [vmem:[%s1 + $0x50] sm:$0xff]
  %v88 = vld [vmem:[%s1 + $0x58] sm:$0xff]
  %v89 = vld [vmem:[%s1 + $0x60] sm:$0xff]
  %v90 = vld [vmem:[%s1 + $0x68] sm:$0xff]
  %v91 = vld [vmem:[%s1 + $0x70] sm:$0xff]
  %v92 = vld [vmem:[%s1 + $0x78] sm:$0xff]
  %v93 = vld [vmem:[%s1 + $0x80] sm:$0xff]
  %v94 = vld [vmem:[%s1 + $0x88] sm:$0xff]
  %v95 = vld [vmem:[%s1 + $0x90] sm:$0xff]
  %v96 = vld [vmem:[%s1 + $0x98] sm:$0xff]
  %v97 = vld [vmem:[%s1 + $0xa0] sm:$0xff]
  %v98 = vld [vmem:[%s1 + $0xa8] sm:$0xff]
  %v99 = vld [vmem:[%s1 + $0xb0] sm:$0xff]
  %v100 = vld [vmem:[%s1 + $0xb8] sm:$0xff]
  %v101 = vld [vmem:[%s1 + $0xc0] sm:$0xff]
  %v102 = vld [vmem:[%s1 + $0xc8] sm:$0xff]
  %v103 = vld [vmem:[%s1 + $0xd0] sm:$0xff]
  %v104 = vld [vmem:[%s1 + $0xd8] sm:$0xff]
  %v105 = vld [vmem:[%s1 + $0xe0] sm:$0xff]
  %v106 = vld [vmem:[%s1 + $0xe8] sm:$0xff]
  %v107 = vld [vmem:[%s1 + $0xf0] sm:$0xff]
  %v108 = vld [vmem:[%s1 + $0xf8] sm:$0xff]
  %v109 = vld [vmem:[%s1 + $0x100] sm:$0xff]
  %v110 = vld [vmem:[%s1 + $0x108] sm:$0xff]
  %v111 = vld [vmem:[%s1 + $0x110] sm:$0xff]
  %v112 = vld [vmem:[%s1 + $0x118] sm:$0xff]
  %v113 = vld [vmem:[%s1 + $0x120] sm:$0xff]
  %v114 = vld [vmem:[%s1 + $0x128] sm:$0xff]
  %v115 = vld [vmem:[%s1 + $0x130] sm:$0xff]
  %v116 = vld [vmem:[%s1 + $0x138] sm:$0xff]
  %v117 = vld [vmem:[%s1 + $0x140] sm:$0xff]
  %v118 = vld [vmem:[%s1 + $0x148] sm:$0xff]
  %v119 = vld [vmem:[%s1 + $0x150] sm:$0xff]
  %v120 = vld [vmem:[%s1 + $0x158] sm:$0xff]
  %v121 = vld [vmem:[%s1 + $0x160] sm:$0xff]
  %v122 = vld [vmem:[%s1 + $0x168] sm:$0xff]
  %v123 = vld [vmem:[%s1 + $0x170] sm:$0xff]
  %v124 = vld [vmem:[%s1 + $0x178] sm:$0xff]
  %v125 = vld [vmem:[%s1 + $0x180] sm:$0xff]
  %v126 = vld [vmem:[%s1 + $0x188] sm:$0xff]
  %v127 = vld [vmem:[%s1 + $0x190] sm:$0xff]
  %v128 = vld [vmem:[%s1 + $0x198] sm:$0xff]
  %v129 = vld [vmem:[%s1 + $0x1a0] sm:$0xff]
  %v130 = vld [vmem:[%s1 + $0x1a8] sm:$0xff]
  %v131 = vld [vmem:[%s1 + $0x1b0] sm:$0xff]
  %v132 = vld [vmem:[%s1 + $0x1b8] sm:$0xff]
  %v133 = vld [vmem:[%s1 + $0x1c0] sm:$0xff]
  %v134 = vld [vmem:[%s1 + $0x1c8] sm:$0xff]
  %v135 = vld [vmem:[%s1 + $0x1d0] sm:$0xff]
  %v136 = vld [vmem:[%s1 + $0x1d8] sm:$0xff]
  %v137 = vld [vmem:[%s1 + $0x1e0] sm:$0xff]
  %v138 = vld [vmem:[%s1 + $0x1e8] sm:$0xff]
  %v139 = vld [vmem:[%s1 + $0x1f0] sm:$0xff]
  %v140 = vld [vmem:[%s1 + $0x1f8] sm:$0xff]
  %v141 = vld [vmem:[%s1 + $0x200] sm:$0xff]
  %v142 = vld [vmem:[%s1 + $0x208] sm:$0xff]
  %v143 = vld [vmem:[%s1 + $0x210] sm:$0xff]
  %v144 = vld [vmem:[%s1 + $0x218] sm:$0xff]
  %v145 = vld [vmem:[%s1 + $0x220] sm:$0xff]
  %v146 = vld [vmem:[%s1 + $0x228] sm:$0xff]
  %v147 = vld [vmem:[%s1 + $0x230] sm:$0xff]
  %v148 = vld [vmem:[%s1 + $0x238] sm:$0xff]
  %v149 = vld [vmem:[%s1 + $0x240] sm:$0xff]
  %v150 = vld [vmem:[%s1 + $0x248] sm:$0xff]
  %v151 = vld [vmem:[%s1 + $0x250] sm:$0xff]
  %v152 = vld [vmem:[%s1 + $0x258] sm:$0xff]
  %v153 = vld [vmem:[%s1 + $0x260] sm:$0xff]
  %v154 = vld [vmem:[%s1 + $0x268] sm:$0xff]
  %v155 = vld [vmem:[%s1 + $0x270] sm:$0xff]
  %v156 = vld [vmem:[%s1 + $0x278] sm:$0xff]
  %v157 = vld [vmem:[%s1 + $0x280] sm:$0xff]
  %v158 = vld [vmem:[%s1 + $0x288] sm:$0xff]
  %v159 = vld [vmem:[%s1 + $0x290] sm:$0xff]
  %v160 = vld [vmem:[%s1 + $0x298] sm:$0xff]
  %v161 = vld [vmem:[%s1 + $0x2a0] sm:$0xff]
  %v162 = vld [vmem:[%s1 + $0x2a8] sm:$0xff]
  %v163 = vld [vmem:[%s1 + $0x2b0] sm:$0xff]
  %v164 = vld [vmem:[%s1 + $0x2b8] sm:$0xff]
  %v165 = vld [vmem:[%s1 + $0x2c0] sm:$0xff]
  %v166 = vld [vmem:[%s1 + $0x2c8] sm:$0xff]
  %v167 = vld [vmem:[%s1 + $0x2d0] sm:$0xff]
  %v168 = vld [vmem:[%s1 + $0x2d8] sm:$0xff]
  %v169 = vld [vmem:[%s1 + $0x2e0] sm:$0xff]
  %v170 = vld [vmem:[%s1 + $0x2e8] sm:$0xff]
  %v171 = vld [vmem:[%s1 + $0x2f0] sm:$0xff]
  %v172 = vld [vmem:[%s1 + $0x2f8] sm:$0xff]
  %v173 = vld [vmem:[%s1 + $0x300] sm:$0xff]
  %v174 = vld [vmem:[%s1 + $0x308] sm:$0xff]
  %v175 = vld [vmem:[%s1 + $0x310] sm:$0xff]
  %v176 = vld [vmem:[%s1 + $0x318] sm:$0xff]
  %v177 = vld [vmem:[%s1 + $0x320] sm:$0xff]
  %v178 = vld [vmem:[%s1 + $0x328] sm:$0xff]
  %v179 = vld [vmem:[%s1 + $0x330] sm:$0xff]
  %v180 = vld [vmem:[%s1 + $0x338] sm:$0xff]
  %v181 = vld [vmem:[%s1 + $0x340] sm:$0xff]
  %v182 = vld [vmem:[%s1 + $0x348] sm:$0xff]
  %v183 = vld [vmem:[%s1 + $0x350] sm:$0xff]
  %v184 = vld [vmem:[%s1 + $0x358] sm:$0xff]
  %v185 = vld [vmem:[%s1 + $0x360] sm:$0xff]
  %v186 = vld [vmem:[%s1 + $0x368] sm:$0xff]
  %v187 = vld [vmem:[%s1 + $0x370] sm:$0xff]
  %v188 = vld [vmem:[%s1 + $0x378] sm:$0xff]
  %v189 = vld [vmem:[%s1 + $0x380] sm:$0xff]
  %v190 = vld [vmem:[%s1 + $0x388] sm:$0xff]
  %v191 = vld [vmem:[%s1 + $0x390] sm:$0xff]
  %v192 = vld [vmem:[%s1 + $0x398] sm:$0xff]
  %v193 = vld [vmem:[%s1 + $0x3a0] sm:$0xff]
  %v194 = vld [vmem:[%s1 + $0x3a8] sm:$0xff]
  %v195 = vld [vmem:[%s1 + $0x3b0] sm:$0xff]
  %v196 = vld [vmem:[%s1 + $0x3b8] sm:$0xff]
  %v197 = vld [vmem:[%s1 + $0x3c0] sm:$0xff]
  %v198 = vld [vmem:[%s1 + $0x3c8] sm:$0xff]
  %v199 = vld [vmem:[%s1 + $0x3d0] sm:$0xff]
  %v200 = vld [vmem:[%s1 + $0x3d8] sm:$0xff]
  %v201 = vld [vmem:[%s1 + $0x3e0] sm:$0xff]
  %v202 = vld [vmem:[%s1 + $0x3e8] sm:$0xff]
  %v203 = vld [vmem:[%s1 + $0x3f0] sm:$0xff]
  %v204 = vld [vmem:[%s1 + $0x3f8] sm:$0xff]
  %v205 = vld [vmem:[%s1 + $0x400] sm:$0xff]
  %v206 = vld [vmem:[%s1 + $0x408] sm:$0xff]
  %v207 = vld [vmem:[%s1 + $0x410] sm:$0xff]
  %v208 = vld [vmem:[%s1 + $0x418] sm:$0xff]
  %v209 = vld [vmem:[%s1 + $0x420] sm:$0xff]
  %v210 = vld [vmem:[%s1 + $0x428] sm:$0xff]
  %v211 = vld [vmem:[%s1 + $0x430] sm:$0xff]
  %v212 = vld [vmem:[%s1 + $0x438] sm:$0xff]
  %v213 = vld [vmem:[%s1 + $0x440] sm:$0xff]
  %v214 = vld [vmem:[%s1 + $0x448] sm:$0xff]
  %v215 = vld [vmem:[%s1 + $0x450] sm:$0xff]
  %v216 = vld [vmem:[%s1 + $0x458] sm:$0xff]
  %v217 = vld [vmem:[%s1 + $0x460] sm:$0xff]
  %v218 = vld [vmem:[%s1 + $0x468] sm:$0xff]
  %v219 = vld [vmem:[%s1 + $0x470] sm:$0xff]
  %v220 = vld [vmem:[%s1 + $0x478] sm:$0xff]
  %v221 = vld [vmem:[%s1 + $0x480] sm:$0xff]
  %v222 = vld [vmem:[%s1 + $0x488] sm:$0xff]
  %v223 = vld [vmem:[%s1 + $0x490] sm:$0xff]
  %v224 = vld [vmem:[%s1 + $0x498] sm:$0xff]
  %v225 = vld [vmem:[%s1 + $0x4a0] sm:$0xff]
  %v226 = vld [vmem:[%s1 + $0x4a8] sm:$0xff]
  %v227 = vld [vmem:[%s1 + $0x4b0] sm:$0xff]
  %v228 = vld [vmem:[%s1 + $0x4b8] sm:$0xff]
  %v229 = vld [vmem:[%s1 + $0x4c0] sm:$0xff]
  %v230 = vld [vmem:[%s1 + $0x4c8] sm:$0xff]
  %v231 = vld [vmem:[%s1 + $0x4d0] sm:$0xff]
  %v232 = vld [vmem:[%s1 + $0x4d8] sm:$0xff]
  %v233 = vld [vmem:[%s1 + $0x4e0] sm:$0xff]
  %v234 = vld [vmem:[%s1 + $0x4e8] sm:$0xff]
  %v235 = vld [vmem:[%s1 + $0x4f0] sm:$0xff]
  %v236 = vld [vmem:[%s1 + $0x4f8] sm:$0xff]
  %v237 = vld [vmem:[%s1 + $0x500] sm:$0xff]
  %v238 = vld [vmem:[%s1 + $0x508] sm:$0xff]
  %v239 = vld [vmem:[%s1 + $0x510] sm:$0xff]
  %v240 = vld [vmem:[%s1 + $0x518] sm:$0xff]
  %v241 = vld [vmem:[%s1 + $0x520] sm:$0xff]
  %v242 = vld [vmem:[%s1 + $0x528] sm:$0xff]
  %v243 = vld [vmem:[%s1 + $0x530] sm:$0xff]
  %v244 = vld [vmem:[%s1 + $0x538] sm:$0xff]
  %v245 = vld [vmem:[%s1 + $0x540] sm:$0xff]
  %v246 = vld [vmem:[%s1 + $0x548] sm:$0xff]
  %v247 = vld [vmem:[%s1 + $0x550] sm:$0xff]
  %v248 = vld [vmem:[%s1 + $0x558] sm:$0xff]
  %v249 = vld [vmem:[%s1 + $0x560] sm:$0xff]
  %v250 = vld [vmem:[%s1 + $0x568] sm:$0xff]
  %v251 = vld [vmem:[%s1 + $0x570] sm:$0xff]
  %v252 = vld [vmem:[%s1 + $0x578] sm:$0xff]
  %v253 = vld [vmem:[%s1 + $0x580] sm:$0xff]
  %v254 = vld [vmem:[%s1 + $0x588] sm:$0xff]
  %v255 = vld [vmem:[%s1 + $0x590] sm:$0xff]
  %v256 = vld [vmem:[%s1 + $0x598] sm:$0xff]
  %v257 = vld [vmem:[%s1 + $0x5a0] sm:$0xff]
  %v258 = vld [vmem:[%s1 + $0x5a8] sm:$0xff]
  %v259 = vld [vmem:[%s1 + $0x5b0] sm:$0x1]
  %v260 = vld [vmem:[%s1 + $0x5b8] sm:$0x1]
  %vm261 = vcmask 728064
  %v263 = vsel %vm261, %v34, 0
  %v266 = vsel %vm261, %v40, 0
  %v269 = vsel %vm261, %v46, 0
  %v272 = vsel %vm261, %v52, 0
  %v275 = vsel %vm261, %v58, 0
  %v278 = vsel %vm261, %v64, 0
  %v281 = vsel %vm261, %v70, 0
  %v284 = vsel %vm261, %v76, 0
  %vm286 = vcmask 1040384
  %v288 = vsel %vm286, %v259, 0
  %v291 = vsel %vm286, %v260, 0
  %v293 = vand.u32 %v107, 4294901760
  %294 = vmatpush.msra.mxu0 %v293
  %v295 = vand.u32 %v105, 4294901760
  %296 = vmatpush.msra.mxu0 %v295
  %v297 = vand.u32 %v103, 4294901760
  %298 = vmatpush.msra.mxu0 %v297
  %v299 = vand.u32 %v101, 4294901760
  %300 = vmatpush.msra.mxu0 %v299
  %v301 = vand.u32 %v99, 4294901760
  %302 = vmatpush.msra.mxu0 %v301
  %v303 = vand.u32 %v97, 4294901760
  %304 = vmatpush.msra.mxu0 %v303
  %v305 = vand.u32 %v95, 4294901760
  %306 = vmatpush.msra.mxu0 %v305
  %v307 = vand.u32 %v93, 4294901760
  %308 = vmatpush.msra.mxu0 %v307
  %v309 = vand.u32 %v91, 4294901760
  %310 = vmatpush.msra.mxu0 %v309
  %v311 = vand.u32 %v89, 4294901760
  %312 = vmatpush.msra.mxu0 %v311
  %v313 = vand.u32 %v87, 4294901760
  %314 = vmatpush.msra.mxu0 %v313
  %v315 = vand.u32 %v85, 4294901760
  %316 = vmatpush.msra.mxu0 %v315
  %v317 = vand.u32 %v83, 4294901760
  %318 = vmatpush.msra.mxu0 %v317
  %v319 = vand.u32 %v81, 4294901760
  %320 = vmatpush.msra.mxu0 %v319
  %v321 = vand.u32 %v79, 4294901760
  %322 = vmatpush.msra.mxu0 %v321
  %v323 = vand.u32 %v77, 4294901760
  %324 = vmatpush.msra.mxu0 %v323
  %v325 = vand.u32 %v29, 4294901760
  %v326 = vsub.f32 %v29, %v325
  %v327 = vand.u32 %v326, 4294901760
  %v328 = vsub.f32 %v326, %v327
  %v329 = vand.u32 %v328, 4294901760
  %330 = vmatmul.f32.gmra.mxu0 %v329
  %v331 = vpop.f32.mrf.mxu0
  %v332 = vadd.f32 0.0, %v331
  %v333 = vand.u32 %v35, 4294901760
  %v334 = vsub.f32 %v35, %v333
  %v335 = vand.u32 %v334, 4294901760
  %v336 = vsub.f32 %v334, %v335
  %v337 = vand.u32 %v336, 4294901760
  %338 = vmatmul.f32.gmra.mxu0 %v337
  %v339 = vpop.f32.mrf.mxu0
  %v340 = vadd.f32 0.0, %v339
  %v341 = vand.u32 %v41, 4294901760
  %v342 = vsub.f32 %v41, %v341
  %v343 = vand.u32 %v342, 4294901760
  %v344 = vsub.f32 %v342, %v343
  %v345 = vand.u32 %v344, 4294901760
  %346 = vmatmul.f32.gmra.mxu0 %v345
  %v347 = vpop.f32.mrf.mxu0
  %v348 = vadd.f32 0.0, %v347
  %v349 = vand.u32 %v47, 4294901760
  %v350 = vsub.f32 %v47, %v349
  %v351 = vand.u32 %v350, 4294901760
  %v352 = vsub.f32 %v350, %v351
  %v353 = vand.u32 %v352, 4294901760
  %354 = vmatmul.f32.gmra.mxu0 %v353
  %v355 = vpop.f32.mrf.mxu0
  %v356 = vadd.f32 0.0, %v355
  %v357 = vand.u32 %v53, 4294901760
  %v358 = vsub.f32 %v53, %v357
  %v359 = vand.u32 %v358, 4294901760
  %v360 = vsub.f32 %v358, %v359
  %v361 = vand.u32 %v360, 4294901760
  %362 = vmatmul.f32.gmra.mxu0 %v361
  %v363 = vpop.f32.mrf.mxu0
  %v364 = vadd.f32 0.0, %v363
  %v365 = vand.u32 %v59, 4294901760
  %v366 = vsub.f32 %v59, %v365
  %v367 = vand.u32 %v366, 4294901760
  %v368 = vsub.f32 %v366, %v367
  %v369 = vand.u32 %v368, 4294901760
  %370 = vmatmul.f32.gmra.mxu0 %v369
  %v371 = vpop.f32.mrf.mxu0
  %v372 = vadd.f32 0.0, %v371
  %v373 = vand.u32 %v65, 4294901760
  %v374 = vsub.f32 %v65, %v373
  %v375 = vand.u32 %v374, 4294901760
  %v376 = vsub.f32 %v374, %v375
  %v377 = vand.u32 %v376, 4294901760
  %378 = vmatmul.f32.gmra.mxu0 %v377
  %v379 = vpop.f32.mrf.mxu0
  %v380 = vadd.f32 0.0, %v379
  %v381 = vand.u32 %v71, 4294901760
  %v382 = vsub.f32 %v71, %v381
  %v383 = vand.u32 %v382, 4294901760
  %v384 = vsub.f32 %v382, %v383
  %v385 = vand.u32 %v384, 4294901760
  %386 = vmatmul.f32.gmra.mxu0 %v385
  %v387 = vpop.f32.mrf.mxu0
  %v388 = vadd.f32 0.0, %v387
  %389 = vdwg.mxu0
  %v390 = vand.u32 %v107, 4294901760
  %v391 = vsub.f32 %v107, %v390
  %v392 = vand.u32 %v391, 4294901760
  %v393 = vsub.f32 %v391, %v392
  %v394 = vand.u32 %v393, 4294901760
  %395 = vmatpush.msra.mxu0 %v394
  %v396 = vand.u32 %v105, 4294901760
  %v397 = vsub.f32 %v105, %v396
  %v398 = vand.u32 %v397, 4294901760
  %v399 = vsub.f32 %v397, %v398
  %v400 = vand.u32 %v399, 4294901760
  %401 = vmatpush.msra.mxu0 %v400
  %v402 = vand.u32 %v103, 4294901760
  %v403 = vsub.f32 %v103, %v402
  %v404 = vand.u32 %v403, 4294901760
  %v405 = vsub.f32 %v403, %v404
  %v406 = vand.u32 %v405, 4294901760
  %407 = vmatpush.msra.mxu0 %v406
  %v408 = vand.u32 %v101, 4294901760
  %v409 = vsub.f32 %v101, %v408
  %v410 = vand.u32 %v409, 4294901760
  %v411 = vsub.f32 %v409, %v410
  %v412 = vand.u32 %v411, 4294901760
  %413 = vmatpush.msra.mxu0 %v412
  %v414 = vand.u32 %v99, 4294901760
  %v415 = vsub.f32 %v99, %v414
  %v416 = vand.u32 %v415, 4294901760
  %v417 = vsub.f32 %v415, %v416
  %v418 = vand.u32 %v417, 4294901760
  %419 = vmatpush.msra.mxu0 %v418
  %v420 = vand.u32 %v97, 4294901760
  %v421 = vsub.f32 %v97, %v420
  %v422 = vand.u32 %v421, 4294901760
  %v423 = vsub.f32 %v421, %v422
  %v424 = vand.u32 %v423, 4294901760
  %425 = vmatpush.msra.mxu0 %v424
  %v426 = vand.u32 %v95, 4294901760
  %v427 = vsub.f32 %v95, %v426
  %v428 = vand.u32 %v427, 4294901760
  %v429 = vsub.f32 %v427, %v428
  %v430 = vand.u32 %v429, 4294901760
  %431 = vmatpush.msra.mxu0 %v430
  %v432 = vand.u32 %v93, 4294901760
  %v433 = vsub.f32 %v93, %v432
  %v434 = vand.u32 %v433, 4294901760
  %v435 = vsub.f32 %v433, %v434
  %v436 = vand.u32 %v435, 4294901760
  %437 = vmatpush.msra.mxu0 %v436
  %v438 = vand.u32 %v91, 4294901760
  %v439 = vsub.f32 %v91, %v438
  %v440 = vand.u32 %v439, 4294901760
  %v441 = vsub.f32 %v439, %v440
  %v442 = vand.u32 %v441, 4294901760
  %443 = vmatpush.msra.mxu0 %v442
  %v444 = vand.u32 %v89, 4294901760
  %v445 = vsub.f32 %v89, %v444
  %v446 = vand.u32 %v445, 4294901760
  %v447 = vsub.f32 %v445, %v446
  %v448 = vand.u32 %v447, 4294901760
  %449 = vmatpush.msra.mxu0 %v448
  %v450 = vand.u32 %v87, 4294901760
  %v451 = vsub.f32 %v87, %v450
  %v452 = vand.u32 %v451, 4294901760
  %v453 = vsub.f32 %v451, %v452
  %v454 = vand.u32 %v453, 4294901760
  %455 = vmatpush.msra.mxu0 %v454
  %v456 = vand.u32 %v85, 4294901760
  %v457 = vsub.f32 %v85, %v456
  %v458 = vand.u32 %v457, 4294901760
  %v459 = vsub.f32 %v457, %v458
  %v460 = vand.u32 %v459, 4294901760
  %461 = vmatpush.msra.mxu0 %v460
  %v462 = vand.u32 %v83, 4294901760
  %v463 = vsub.f32 %v83, %v462
  %v464 = vand.u32 %v463, 4294901760
  %v465 = vsub.f32 %v463, %v464
  %v466 = vand.u32 %v465, 4294901760
  %467 = vmatpush.msra.mxu0 %v466
  %v468 = vand.u32 %v81, 4294901760
  %v469 = vsub.f32 %v81, %v468
  %v470 = vand.u32 %v469, 4294901760
  %v471 = vsub.f32 %v469, %v470
  %v472 = vand.u32 %v471, 4294901760
  %473 = vmatpush.msra.mxu0 %v472
  %v474 = vand.u32 %v79, 4294901760
  %v475 = vsub.f32 %v79, %v474
  %v476 = vand.u32 %v475, 4294901760
  %v477 = vsub.f32 %v475, %v476
  %v478 = vand.u32 %v477, 4294901760
  %479 = vmatpush.msra.mxu0 %v478
  %v480 = vand.u32 %v77, 4294901760
  %v481 = vsub.f32 %v77, %v480
  %v482 = vand.u32 %v481, 4294901760
  %v483 = vsub.f32 %v481, %v482
  %v484 = vand.u32 %v483, 4294901760
  %485 = vmatpush.msra.mxu0 %v484
  %v486 = vand.u32 %v29, 4294901760
  %487 = vmatmul.f32.gmra.mxu0 %v486
  %v488 = vpop.f32.mrf.mxu0
  %v489 = vadd.f32 %v332, %v488
  %v490 = vand.u32 %v35, 4294901760
  %491 = vmatmul.f32.gmra.mxu0 %v490
  %v492 = vpop.f32.mrf.mxu0
  %v493 = vadd.f32 %v340, %v492
  %v494 = vand.u32 %v41, 4294901760
  %495 = vmatmul.f32.gmra.mxu0 %v494
  %v496 = vpop.f32.mrf.mxu0
  %v497 = vadd.f32 %v348, %v496
  %v498 = vand.u32 %v47, 4294901760
  %499 = vmatmul.f32.gmra.mxu0 %v498
  %v500 = vpop.f32.mrf.mxu0
  %v501 = vadd.f32 %v356, %v500
  %v502 = vand.u32 %v53, 4294901760
  %503 = vmatmul.f32.gmra.mxu0 %v502
  %v504 = vpop.f32.mrf.mxu0
  %v505 = vadd.f32 %v364, %v504
  %v506 = vand.u32 %v59, 4294901760
  %507 = vmatmul.f32.gmra.mxu0 %v506
  %v508 = vpop.f32.mrf.mxu0
  %v509 = vadd.f32 %v372, %v508
  %v510 = vand.u32 %v65, 4294901760
  %511 = vmatmul.f32.gmra.mxu0 %v510
  %v512 = vpop.f32.mrf.mxu0
  %v513 = vadd.f32 %v380, %v512
  %v514 = vand.u32 %v71, 4294901760
  %515 = vmatmul.f32.gmra.mxu0 %v514
  %v516 = vpop.f32.mrf.mxu0
  %v517 = vadd.f32 %v388, %v516
  %518 = vdwg.mxu0
  %v519 = vand.u32 %v107, 4294901760
  %v520 = vsub.f32 %v107, %v519
  %521 = vmatpush.msra.mxu0 %v520
  %v522 = vand.u32 %v105, 4294901760
  %v523 = vsub.f32 %v105, %v522
  %524 = vmatpush.msra.mxu0 %v523
  %v525 = vand.u32 %v103, 4294901760
  %v526 = vsub.f32 %v103, %v525
  %527 = vmatpush.msra.mxu0 %v526
  %v528 = vand.u32 %v101, 4294901760
  %v529 = vsub.f32 %v101, %v528
  %530 = vmatpush.msra.mxu0 %v529
  %v531 = vand.u32 %v99, 4294901760
  %v532 = vsub.f32 %v99, %v531
  %533 = vmatpush.msra.mxu0 %v532
  %v534 = vand.u32 %v97, 4294901760
  %v535 = vsub.f32 %v97, %v534
  %536 = vmatpush.msra.mxu0 %v535
  %v537 = vand.u32 %v95, 4294901760
  %v538 = vsub.f32 %v95, %v537
  %539 = vmatpush.msra.mxu0 %v538
  %v540 = vand.u32 %v93, 4294901760
  %v541 = vsub.f32 %v93, %v540
  %542 = vmatpush.msra.mxu0 %v541
  %v543 = vand.u32 %v91, 4294901760
  %v544 = vsub.f32 %v91, %v543
  %545 = vmatpush.msra.mxu0 %v544
  %v546 = vand.u32 %v89, 4294901760
  %v547 = vsub.f32 %v89, %v546
  %548 = vmatpush.msra.mxu0 %v547
  %v549 = vand.u32 %v87, 4294901760
  %v550 = vsub.f32 %v87, %v549
  %551 = vmatpush.msra.mxu0 %v550
  %v552 = vand.u32 %v85, 4294901760
  %v553 = vsub.f32 %v85, %v552
  %554 = vmatpush.msra.mxu0 %v553
  %v555 = vand.u32 %v83, 4294901760
  %v556 = vsub.f32 %v83, %v555
  %557 = vmatpush.msra.mxu0 %v556
  %v558 = vand.u32 %v81, 4294901760
  %v559 = vsub.f32 %v81, %v558
  %560 = vmatpush.msra.mxu0 %v559
  %v561 = vand.u32 %v79, 4294901760
  %v562 = vsub.f32 %v79, %v561
  %563 = vmatpush.msra.mxu0 %v562
  %v564 = vand.u32 %v77, 4294901760
  %v565 = vsub.f32 %v77, %v564
  %566 = vmatpush.msra.mxu0 %v565
  %v567 = vand.u32 %v29, 4294901760
  %v568 = vsub.f32 %v29, %v567
  %569 = vmatmul.f32.gmra.mxu0 %v568
  %v570 = vpop.f32.mrf.mxu0
  %v571 = vadd.f32 %v489, %v570
  %v572 = vand.u32 %v35, 4294901760
  %v573 = vsub.f32 %v35, %v572
  %574 = vmatmul.f32.gmra.mxu0 %v573
  %v575 = vpop.f32.mrf.mxu0
  %v576 = vadd.f32 %v493, %v575
  %v577 = vand.u32 %v41, 4294901760
  %v578 = vsub.f32 %v41, %v577
  %579 = vmatmul.f32.gmra.mxu0 %v578
  %v580 = vpop.f32.mrf.mxu0
  %v581 = vadd.f32 %v497, %v580
  %v582 = vand.u32 %v47, 4294901760
  %v583 = vsub.f32 %v47, %v582
  %584 = vmatmul.f32.gmra.mxu0 %v583
  %v585 = vpop.f32.mrf.mxu0
  %v586 = vadd.f32 %v501, %v585
  %v587 = vand.u32 %v53, 4294901760
  %v588 = vsub.f32 %v53, %v587
  %589 = vmatmul.f32.gmra.mxu0 %v588
  %v590 = vpop.f32.mrf.mxu0
  %v591 = vadd.f32 %v505, %v590
  %v592 = vand.u32 %v59, 4294901760
  %v593 = vsub.f32 %v59, %v592
  %594 = vmatmul.f32.gmra.mxu0 %v593
  %v595 = vpop.f32.mrf.mxu0
  %v596 = vadd.f32 %v509, %v595
  %v597 = vand.u32 %v65, 4294901760
  %v598 = vsub.f32 %v65, %v597
  %599 = vmatmul.f32.gmra.mxu0 %v598
  %v600 = vpop.f32.mrf.mxu0
  %v601 = vadd.f32 %v513, %v600
  %v602 = vand.u32 %v71, 4294901760
  %v603 = vsub.f32 %v71, %v602
  %604 = vmatmul.f32.gmra.mxu0 %v603
  %v605 = vpop.f32.mrf.mxu0
  %v606 = vadd.f32 %v517, %v605
  %607 = vdwg.mxu0
  %v608 = vand.u32 %v107, 4294901760
  %609 = vmatpush.msra.mxu0 %v608
  %v610 = vand.u32 %v105, 4294901760
  %611 = vmatpush.msra.mxu0 %v610
  %v612 = vand.u32 %v103, 4294901760
  %613 = vmatpush.msra.mxu0 %v612
  %v614 = vand.u32 %v101, 4294901760
  %615 = vmatpush.msra.mxu0 %v614
  %v616 = vand.u32 %v99, 4294901760
  %617 = vmatpush.msra.mxu0 %v616
  %v618 = vand.u32 %v97, 4294901760
  %619 = vmatpush.msra.mxu0 %v618
  %v620 = vand.u32 %v95, 4294901760
  %621 = vmatpush.msra.mxu0 %v620
  %v622 = vand.u32 %v93, 4294901760
  %623 = vmatpush.msra.mxu0 %v622
  %v624 = vand.u32 %v91, 4294901760
  %625 = vmatpush.msra.mxu0 %v624
  %v626 = vand.u32 %v89, 4294901760
  %627 = vmatpush.msra.mxu0 %v626
  %v628 = vand.u32 %v87, 4294901760
  %629 = vmatpush.msra.mxu0 %v628
  %v630 = vand.u32 %v85, 4294901760
  %631 = vmatpush.msra.mxu0 %v630
  %v632 = vand.u32 %v83, 4294901760
  %633 = vmatpush.msra.mxu0 %v632
  %v634 = vand.u32 %v81, 4294901760
  %635 = vmatpush.msra.mxu0 %v634
  %v636 = vand.u32 %v79, 4294901760
  %637 = vmatpush.msra.mxu0 %v636
  %v638 = vand.u32 %v77, 4294901760
  %639 = vmatpush.msra.mxu0 %v638
  %v640 = vand.u32 %v29, 4294901760
  %v641 = vsub.f32 %v29, %v640
  %v642 = vand.u32 %v641, 4294901760
  %643 = vmatmul.f32.gmra.mxu0 %v642
  %v644 = vpop.f32.mrf.mxu0
  %v645 = vadd.f32 %v571, %v644
  %v646 = vand.u32 %v35, 4294901760
  %v647 = vsub.f32 %v35, %v646
  %v648 = vand.u32 %v647, 4294901760
  %649 = vmatmul.f32.gmra.mxu0 %v648
  %v650 = vpop.f32.mrf.mxu0
  %v651 = vadd.f32 %v576, %v650
  %v652 = vand.u32 %v41, 4294901760
  %v653 = vsub.f32 %v41, %v652
  %v654 = vand.u32 %v653, 4294901760
  %655 = vmatmul.f32.gmra.mxu0 %v654
  %v656 = vpop.f32.mrf.mxu0
  %v657 = vadd.f32 %v581, %v656
  %v658 = vand.u32 %v47, 4294901760
  %v659 = vsub.f32 %v47, %v658
  %v660 = vand.u32 %v659, 4294901760
  %661 = vmatmul.f32.gmra.mxu0 %v660
  %v662 = vpop.f32.mrf.mxu0
  %v663 = vadd.f32 %v586, %v662
  %v664 = vand.u32 %v53, 4294901760
  %v665 = vsub.f32 %v53, %v664
  %v666 = vand.u32 %v665, 4294901760
  %667 = vmatmul.f32.gmra.mxu0 %v666
  %v668 = vpop.f32.mrf.mxu0
  %v669 = vadd.f32 %v591, %v668
  %v670 = vand.u32 %v59, 4294901760
  %v671 = vsub.f32 %v59, %v670
  %v672 = vand.u32 %v671, 4294901760
  %673 = vmatmul.f32.gmra.mxu0 %v672
  %v674 = vpop.f32.mrf.mxu0
  %v675 = vadd.f32 %v596, %v674
  %v676 = vand.u32 %v65, 4294901760
  %v677 = vsub.f32 %v65, %v676
  %v678 = vand.u32 %v677, 4294901760
  %679 = vmatmul.f32.gmra.mxu0 %v678
  %v680 = vpop.f32.mrf.mxu0
  %v681 = vadd.f32 %v601, %v680
  %v682 = vand.u32 %v71, 4294901760
  %v683 = vsub.f32 %v71, %v682
  %v684 = vand.u32 %v683, 4294901760
  %685 = vmatmul.f32.gmra.mxu0 %v684
  %v686 = vpop.f32.mrf.mxu0
  %v687 = vadd.f32 %v606, %v686
  %688 = vdwg.mxu0
  %v689 = vand.u32 %v107, 4294901760
  %v690 = vsub.f32 %v107, %v689
  %v691 = vand.u32 %v690, 4294901760
  %692 = vmatpush.msra.mxu0 %v691
  %v693 = vand.u32 %v105, 4294901760
  %v694 = vsub.f32 %v105, %v693
  %v695 = vand.u32 %v694, 4294901760
  %696 = vmatpush.msra.mxu0 %v695
  %v697 = vand.u32 %v103, 4294901760
  %v698 = vsub.f32 %v103, %v697
  %v699 = vand.u32 %v698, 4294901760
  %700 = vmatpush.msra.mxu0 %v699
  %v701 = vand.u32 %v101, 4294901760
  %v702 = vsub.f32 %v101, %v701
  %v703 = vand.u32 %v702, 4294901760
  %704 = vmatpush.msra.mxu0 %v703
  %v705 = vand.u32 %v99, 4294901760
  %v706 = vsub.f32 %v99, %v705
  %v707 = vand.u32 %v706, 4294901760
  %708 = vmatpush.msra.mxu0 %v707
  %v709 = vand.u32 %v97, 4294901760
  %v710 = vsub.f32 %v97, %v709
  %v711 = vand.u32 %v710, 4294901760
  %712 = vmatpush.msra.mxu0 %v711
  %v713 = vand.u32 %v95, 4294901760
  %v714 = vsub.f32 %v95, %v713
  %v715 = vand.u32 %v714, 4294901760
  %716 = vmatpush.msra.mxu0 %v715
  %v717 = vand.u32 %v93, 4294901760
  %v718 = vsub.f32 %v93, %v717
  %v719 = vand.u32 %v718, 4294901760
  %720 = vmatpush.msra.mxu0 %v719
  %v721 = vand.u32 %v91, 4294901760
  %v722 = vsub.f32 %v91, %v721
  %v723 = vand.u32 %v722, 4294901760
  %724 = vmatpush.msra.mxu0 %v723
  %v725 = vand.u32 %v89, 4294901760
  %v726 = vsub.f32 %v89, %v725
  %v727 = vand.u32 %v726, 4294901760
  %728 = vmatpush.msra.mxu0 %v727
  %v729 = vand.u32 %v87, 4294901760
  %v730 = vsub.f32 %v87, %v729
  %v731 = vand.u32 %v730, 4294901760
  %732 = vmatpush.msra.mxu0 %v731
  %v733 = vand.u32 %v85, 4294901760
  %v734 = vsub.f32 %v85, %v733
  %v735 = vand.u32 %v734, 4294901760
  %736 = vmatpush.msra.mxu0 %v735
  %v737 = vand.u32 %v83, 4294901760
  %v738 = vsub.f32 %v83, %v737
  %v739 = vand.u32 %v738, 4294901760
  %740 = vmatpush.msra.mxu0 %v739
  %v741 = vand.u32 %v81, 4294901760
  %v742 = vsub.f32 %v81, %v741
  %v743 = vand.u32 %v742, 4294901760
  %744 = vmatpush.msra.mxu0 %v743
  %v745 = vand.u32 %v79, 4294901760
  %v746 = vsub.f32 %v79, %v745
  %v747 = vand.u32 %v746, 4294901760
  %748 = vmatpush.msra.mxu0 %v747
  %v749 = vand.u32 %v77, 4294901760
  %v750 = vsub.f32 %v77, %v749
  %v751 = vand.u32 %v750, 4294901760
  %752 = vmatpush.msra.mxu0 %v751
  %v753 = vand.u32 %v29, 4294901760
  %754 = vmatmul.f32.gmra.mxu0 %v753
  %v755 = vpop.f32.mrf.mxu0
  %v756 = vadd.f32 %v645, %v755
  %v757 = vand.u32 %v35, 4294901760
  %758 = vmatmul.f32.gmra.mxu0 %v757
  %v759 = vpop.f32.mrf.mxu0
  %v760 = vadd.f32 %v651, %v759
  %v761 = vand.u32 %v41, 4294901760
  %762 = vmatmul.f32.gmra.mxu0 %v761
  %v763 = vpop.f32.mrf.mxu0
  %v764 = vadd.f32 %v657, %v763
  %v765 = vand.u32 %v47, 4294901760
  %766 = vmatmul.f32.gmra.mxu0 %v765
  %v767 = vpop.f32.mrf.mxu0
  %v768 = vadd.f32 %v663, %v767
  %v769 = vand.u32 %v53, 4294901760
  %770 = vmatmul.f32.gmra.mxu0 %v769
  %v771 = vpop.f32.mrf.mxu0
  %v772 = vadd.f32 %v669, %v771
  %v773 = vand.u32 %v59, 4294901760
  %774 = vmatmul.f32.gmra.mxu0 %v773
  %v775 = vpop.f32.mrf.mxu0
  %v776 = vadd.f32 %v675, %v775
  %v777 = vand.u32 %v65, 4294901760
  %778 = vmatmul.f32.gmra.mxu0 %v777
  %v779 = vpop.f32.mrf.mxu0
  %v780 = vadd.f32 %v681, %v779
  %v781 = vand.u32 %v71, 4294901760
  %782 = vmatmul.f32.gmra.mxu0 %v781
  %v783 = vpop.f32.mrf.mxu0
  %v784 = vadd.f32 %v687, %v783
  %785 = vdwg.mxu0
  %v786 = vand.u32 %v107, 4294901760
  %787 = vmatpush.msra.mxu0 %v786
  %v788 = vand.u32 %v105, 4294901760
  %789 = vmatpush.msra.mxu0 %v788
  %v790 = vand.u32 %v103, 4294901760
  %791 = vmatpush.msra.mxu0 %v790
  %v792 = vand.u32 %v101, 4294901760
  %793 = vmatpush.msra.mxu0 %v792
  %v794 = vand.u32 %v99, 4294901760
  %795 = vmatpush.msra.mxu0 %v794
  %v796 = vand.u32 %v97, 4294901760
  %797 = vmatpush.msra.mxu0 %v796
  %v798 = vand.u32 %v95, 4294901760
  %799 = vmatpush.msra.mxu0 %v798
  %v800 = vand.u32 %v93, 4294901760
  %801 = vmatpush.msra.mxu0 %v800
  %v802 = vand.u32 %v91, 4294901760
  %803 = vmatpush.msra.mxu0 %v802
  %v804 = vand.u32 %v89, 4294901760
  %805 = vmatpush.msra.mxu0 %v804
  %v806 = vand.u32 %v87, 4294901760
  %807 = vmatpush.msra.mxu0 %v806
  %v808 = vand.u32 %v85, 4294901760
  %809 = vmatpush.msra.mxu0 %v808
  %v810 = vand.u32 %v83, 4294901760
  %811 = vmatpush.msra.mxu0 %v810
  %v812 = vand.u32 %v81, 4294901760
  %813 = vmatpush.msra.mxu0 %v812
  %v814 = vand.u32 %v79, 4294901760
  %815 = vmatpush.msra.mxu0 %v814
  %v816 = vand.u32 %v77, 4294901760
  %817 = vmatpush.msra.mxu0 %v816
  %v818 = vand.u32 %v29, 4294901760
  %819 = vmatmul.f32.gmra.mxu0 %v818
  %v820 = vpop.f32.mrf.mxu0
  %v821 = vadd.f32 %v756, %v820
  %v822 = vand.u32 %v35, 4294901760
  %823 = vmatmul.f32.gmra.mxu0 %v822
  %v824 = vpop.f32.mrf.mxu0
  %v825 = vadd.f32 %v760, %v824
  %v826 = vand.u32 %v41, 4294901760
  %827 = vmatmul.f32.gmra.mxu0 %v826
  %v828 = vpop.f32.mrf.mxu0
  %v829 = vadd.f32 %v764, %v828
  %v830 = vand.u32 %v47, 4294901760
  %831 = vmatmul.f32.gmra.mxu0 %v830
  %v832 = vpop.f32.mrf.mxu0
  %v833 = vadd.f32 %v768, %v832
  %v834 = vand.u32 %v53, 4294901760
  %835 = vmatmul.f32.gmra.mxu0 %v834
  %v836 = vpop.f32.mrf.mxu0
  %v837 = vadd.f32 %v772, %v836
  %v838 = vand.u32 %v59, 4294901760
  %839 = vmatmul.f32.gmra.mxu0 %v838
  %v840 = vpop.f32.mrf.mxu0
  %v841 = vadd.f32 %v776, %v840
  %v842 = vand.u32 %v65, 4294901760
  %843 = vmatmul.f32.gmra.mxu0 %v842
  %v844 = vpop.f32.mrf.mxu0
  %v845 = vadd.f32 %v780, %v844
  %v846 = vand.u32 %v71, 4294901760
  %847 = vmatmul.f32.gmra.mxu0 %v846
  %v848 = vpop.f32.mrf.mxu0
  %v849 = vadd.f32 %v784, %v848
  %850 = vdwg.mxu0
  %v851 = vand.u32 %v139, 4294901760
  %852 = vmatpush.msra.mxu0 %v851
  %v853 = vand.u32 %v137, 4294901760
  %854 = vmatpush.msra.mxu0 %v853
  %v855 = vand.u32 %v135, 4294901760
  %856 = vmatpush.msra.mxu0 %v855
  %v857 = vand.u32 %v133, 4294901760
  %858 = vmatpush.msra.mxu0 %v857
  %v859 = vand.u32 %v131, 4294901760
  %860 = vmatpush.msra.mxu0 %v859
  %v861 = vand.u32 %v129, 4294901760
  %862 = vmatpush.msra.mxu0 %v861
  %v863 = vand.u32 %v127, 4294901760
  %864 = vmatpush.msra.mxu0 %v863
  %v865 = vand.u32 %v125, 4294901760
  %866 = vmatpush.msra.mxu0 %v865
  %v867 = vand.u32 %v123, 4294901760
  %868 = vmatpush.msra.mxu0 %v867
  %v869 = vand.u32 %v121, 4294901760
  %870 = vmatpush.msra.mxu0 %v869
  %v871 = vand.u32 %v119, 4294901760
  %872 = vmatpush.msra.mxu0 %v871
  %v873 = vand.u32 %v117, 4294901760
  %874 = vmatpush.msra.mxu0 %v873
  %v875 = vand.u32 %v115, 4294901760
  %876 = vmatpush.msra.mxu0 %v875
  %v877 = vand.u32 %v113, 4294901760
  %878 = vmatpush.msra.mxu0 %v877
  %v879 = vand.u32 %v111, 4294901760
  %880 = vmatpush.msra.mxu0 %v879
  %v881 = vand.u32 %v109, 4294901760
  %882 = vmatpush.msra.mxu0 %v881
  %v883 = vand.u32 %v30, 4294901760
  %v884 = vsub.f32 %v30, %v883
  %v885 = vand.u32 %v884, 4294901760
  %v886 = vsub.f32 %v884, %v885
  %v887 = vand.u32 %v886, 4294901760
  %888 = vmatmul.f32.gmra.mxu0 %v887
  %v889 = vpop.f32.mrf.mxu0
  %v890 = vadd.f32 %v821, %v889
  %v891 = vand.u32 %v36, 4294901760
  %v892 = vsub.f32 %v36, %v891
  %v893 = vand.u32 %v892, 4294901760
  %v894 = vsub.f32 %v892, %v893
  %v895 = vand.u32 %v894, 4294901760
  %896 = vmatmul.f32.gmra.mxu0 %v895
  %v897 = vpop.f32.mrf.mxu0
  %v898 = vadd.f32 %v825, %v897
  %v899 = vand.u32 %v42, 4294901760
  %v900 = vsub.f32 %v42, %v899
  %v901 = vand.u32 %v900, 4294901760
  %v902 = vsub.f32 %v900, %v901
  %v903 = vand.u32 %v902, 4294901760
  %904 = vmatmul.f32.gmra.mxu0 %v903
  %v905 = vpop.f32.mrf.mxu0
  %v906 = vadd.f32 %v829, %v905
  %v907 = vand.u32 %v48, 4294901760
  %v908 = vsub.f32 %v48, %v907
  %v909 = vand.u32 %v908, 4294901760
  %v910 = vsub.f32 %v908, %v909
  %v911 = vand.u32 %v910, 4294901760
  %912 = vmatmul.f32.gmra.mxu0 %v911
  %v913 = vpop.f32.mrf.mxu0
  %v914 = vadd.f32 %v833, %v913
  %v915 = vand.u32 %v54, 4294901760
  %v916 = vsub.f32 %v54, %v915
  %v917 = vand.u32 %v916, 4294901760
  %v918 = vsub.f32 %v916, %v917
  %v919 = vand.u32 %v918, 4294901760
  %920 = vmatmul.f32.gmra.mxu0 %v919
  %v921 = vpop.f32.mrf.mxu0
  %v922 = vadd.f32 %v837, %v921
  %v923 = vand.u32 %v60, 4294901760
  %v924 = vsub.f32 %v60, %v923
  %v925 = vand.u32 %v924, 4294901760
  %v926 = vsub.f32 %v924, %v925
  %v927 = vand.u32 %v926, 4294901760
  %928 = vmatmul.f32.gmra.mxu0 %v927
  %v929 = vpop.f32.mrf.mxu0
  %v930 = vadd.f32 %v841, %v929
  %v931 = vand.u32 %v66, 4294901760
  %v932 = vsub.f32 %v66, %v931
  %v933 = vand.u32 %v932, 4294901760
  %v934 = vsub.f32 %v932, %v933
  %v935 = vand.u32 %v934, 4294901760
  %936 = vmatmul.f32.gmra.mxu0 %v935
  %v937 = vpop.f32.mrf.mxu0
  %v938 = vadd.f32 %v845, %v937
  %v939 = vand.u32 %v72, 4294901760
  %v940 = vsub.f32 %v72, %v939
  %v941 = vand.u32 %v940, 4294901760
  %v942 = vsub.f32 %v940, %v941
  %v943 = vand.u32 %v942, 4294901760
  %944 = vmatmul.f32.gmra.mxu0 %v943
  %v945 = vpop.f32.mrf.mxu0
  %v946 = vadd.f32 %v849, %v945
  %947 = vdwg.mxu0
  %v948 = vand.u32 %v139, 4294901760
  %v949 = vsub.f32 %v139, %v948
  %v950 = vand.u32 %v949, 4294901760
  %v951 = vsub.f32 %v949, %v950
  %v952 = vand.u32 %v951, 4294901760
  %953 = vmatpush.msra.mxu0 %v952
  %v954 = vand.u32 %v137, 4294901760
  %v955 = vsub.f32 %v137, %v954
  %v956 = vand.u32 %v955, 4294901760
  %v957 = vsub.f32 %v955, %v956
  %v958 = vand.u32 %v957, 4294901760
  %959 = vmatpush.msra.mxu0 %v958
  %v960 = vand.u32 %v135, 4294901760
  %v961 = vsub.f32 %v135, %v960
  %v962 = vand.u32 %v961, 4294901760
  %v963 = vsub.f32 %v961, %v962
  %v964 = vand.u32 %v963, 4294901760
  %965 = vmatpush.msra.mxu0 %v964
  %v966 = vand.u32 %v133, 4294901760
  %v967 = vsub.f32 %v133, %v966
  %v968 = vand.u32 %v967, 4294901760
  %v969 = vsub.f32 %v967, %v968
  %v970 = vand.u32 %v969, 4294901760
  %971 = vmatpush.msra.mxu0 %v970
  %v972 = vand.u32 %v131, 4294901760
  %v973 = vsub.f32 %v131, %v972
  %v974 = vand.u32 %v973, 4294901760
  %v975 = vsub.f32 %v973, %v974
  %v976 = vand.u32 %v975, 4294901760
  %977 = vmatpush.msra.mxu0 %v976
  %v978 = vand.u32 %v129, 4294901760
  %v979 = vsub.f32 %v129, %v978
  %v980 = vand.u32 %v979, 4294901760
  %v981 = vsub.f32 %v979, %v980
  %v982 = vand.u32 %v981, 4294901760
  %983 = vmatpush.msra.mxu0 %v982
  %v984 = vand.u32 %v127, 4294901760
  %v985 = vsub.f32 %v127, %v984
  %v986 = vand.u32 %v985, 4294901760
  %v987 = vsub.f32 %v985, %v986
  %v988 = vand.u32 %v987, 4294901760
  %989 = vmatpush.msra.mxu0 %v988
  %v990 = vand.u32 %v125, 4294901760
  %v991 = vsub.f32 %v125, %v990
  %v992 = vand.u32 %v991, 4294901760
  %v993 = vsub.f32 %v991, %v992
  %v994 = vand.u32 %v993, 4294901760
  %995 = vmatpush.msra.mxu0 %v994
  %v996 = vand.u32 %v123, 4294901760
  %v997 = vsub.f32 %v123, %v996
  %v998 = vand.u32 %v997, 4294901760
  %v999 = vsub.f32 %v997, %v998
  %v1000 = vand.u32 %v999, 4294901760
  %1001 = vmatpush.msra.mxu0 %v1000
  %v1002 = vand.u32 %v121, 4294901760
  %v1003 = vsub.f32 %v121, %v1002
  %v1004 = vand.u32 %v1003, 4294901760
  %v1005 = vsub.f32 %v1003, %v1004
  %v1006 = vand.u32 %v1005, 4294901760
  %1007 = vmatpush.msra.mxu0 %v1006
  %v1008 = vand.u32 %v119, 4294901760
  %v1009 = vsub.f32 %v119, %v1008
  %v1010 = vand.u32 %v1009, 4294901760
  %v1011 = vsub.f32 %v1009, %v1010
  %v1012 = vand.u32 %v1011, 4294901760
  %1013 = vmatpush.msra.mxu0 %v1012
  %v1014 = vand.u32 %v117, 4294901760
  %v1015 = vsub.f32 %v117, %v1014
  %v1016 = vand.u32 %v1015, 4294901760
  %v1017 = vsub.f32 %v1015, %v1016
  %v1018 = vand.u32 %v1017, 4294901760
  %1019 = vmatpush.msra.mxu0 %v1018
  %v1020 = vand.u32 %v115, 4294901760
  %v1021 = vsub.f32 %v115, %v1020
  %v1022 = vand.u32 %v1021, 4294901760
  %v1023 = vsub.f32 %v1021, %v1022
  %v1024 = vand.u32 %v1023, 4294901760
  %1025 = vmatpush.msra.mxu0 %v1024
  %v1026 = vand.u32 %v113, 4294901760
  %v1027 = vsub.f32 %v113, %v1026
  %v1028 = vand.u32 %v1027, 4294901760
  %v1029 = vsub.f32 %v1027, %v1028
  %v1030 = vand.u32 %v1029, 4294901760
  %1031 = vmatpush.msra.mxu0 %v1030
  %v1032 = vand.u32 %v111, 4294901760
  %v1033 = vsub.f32 %v111, %v1032
  %v1034 = vand.u32 %v1033, 4294901760
  %v1035 = vsub.f32 %v1033, %v1034
  %v1036 = vand.u32 %v1035, 4294901760
  %1037 = vmatpush.msra.mxu0 %v1036
  %v1038 = vand.u32 %v109, 4294901760
  %v1039 = vsub.f32 %v109, %v1038
  %v1040 = vand.u32 %v1039, 4294901760
  %v1041 = vsub.f32 %v1039, %v1040
  %v1042 = vand.u32 %v1041, 4294901760
  %1043 = vmatpush.msra.mxu0 %v1042
  %v1044 = vand.u32 %v30, 4294901760
  %1045 = vmatmul.f32.gmra.mxu0 %v1044
  %v1046 = vpop.f32.mrf.mxu0
  %v1047 = vadd.f32 %v890, %v1046
  %v1048 = vand.u32 %v36, 4294901760
  %1049 = vmatmul.f32.gmra.mxu0 %v1048
  %v1050 = vpop.f32.mrf.mxu0
  %v1051 = vadd.f32 %v898, %v1050
  %v1052 = vand.u32 %v42, 4294901760
  %1053 = vmatmul.f32.gmra.mxu0 %v1052
  %v1054 = vpop.f32.mrf.mxu0
  %v1055 = vadd.f32 %v906, %v1054
  %v1056 = vand.u32 %v48, 4294901760
  %1057 = vmatmul.f32.gmra.mxu0 %v1056
  %v1058 = vpop.f32.mrf.mxu0
  %v1059 = vadd.f32 %v914, %v1058
  %v1060 = vand.u32 %v54, 4294901760
  %1061 = vmatmul.f32.gmra.mxu0 %v1060
  %v1062 = vpop.f32.mrf.mxu0
  %v1063 = vadd.f32 %v922, %v1062
  %v1064 = vand.u32 %v60, 4294901760
  %1065 = vmatmul.f32.gmra.mxu0 %v1064
  %v1066 = vpop.f32.mrf.mxu0
  %v1067 = vadd.f32 %v930, %v1066
  %v1068 = vand.u32 %v66, 4294901760
  %1069 = vmatmul.f32.gmra.mxu0 %v1068
  %v1070 = vpop.f32.mrf.mxu0
  %v1071 = vadd.f32 %v938, %v1070
  %v1072 = vand.u32 %v72, 4294901760
  %1073 = vmatmul.f32.gmra.mxu0 %v1072
  %v1074 = vpop.f32.mrf.mxu0
  %v1075 = vadd.f32 %v946, %v1074
  %1076 = vdwg.mxu0
  %v1077 = vand.u32 %v139, 4294901760
  %v1078 = vsub.f32 %v139, %v1077
  %1079 = vmatpush.msra.mxu0 %v1078
  %v1080 = vand.u32 %v137, 4294901760
  %v1081 = vsub.f32 %v137, %v1080
  %1082 = vmatpush.msra.mxu0 %v1081
  %v1083 = vand.u32 %v135, 4294901760
  %v1084 = vsub.f32 %v135, %v1083
  %1085 = vmatpush.msra.mxu0 %v1084
  %v1086 = vand.u32 %v133, 4294901760
  %v1087 = vsub.f32 %v133, %v1086
  %1088 = vmatpush.msra.mxu0 %v1087
  %v1089 = vand.u32 %v131, 4294901760
  %v1090 = vsub.f32 %v131, %v1089
  %1091 = vmatpush.msra.mxu0 %v1090
  %v1092 = vand.u32 %v129, 4294901760
  %v1093 = vsub.f32 %v129, %v1092
  %1094 = vmatpush.msra.mxu0 %v1093
  %v1095 = vand.u32 %v127, 4294901760
  %v1096 = vsub.f32 %v127, %v1095
  %1097 = vmatpush.msra.mxu0 %v1096
  %v1098 = vand.u32 %v125, 4294901760
  %v1099 = vsub.f32 %v125, %v1098
  %1100 = vmatpush.msra.mxu0 %v1099
  %v1101 = vand.u32 %v123, 4294901760
  %v1102 = vsub.f32 %v123, %v1101
  %1103 = vmatpush.msra.mxu0 %v1102
  %v1104 = vand.u32 %v121, 4294901760
  %v1105 = vsub.f32 %v121, %v1104
  %1106 = vmatpush.msra.mxu0 %v1105
  %v1107 = vand.u32 %v119, 4294901760
  %v1108 = vsub.f32 %v119, %v1107
  %1109 = vmatpush.msra.mxu0 %v1108
  %v1110 = vand.u32 %v117, 4294901760
  %v1111 = vsub.f32 %v117, %v1110
  %1112 = vmatpush.msra.mxu0 %v1111
  %v1113 = vand.u32 %v115, 4294901760
  %v1114 = vsub.f32 %v115, %v1113
  %1115 = vmatpush.msra.mxu0 %v1114
  %v1116 = vand.u32 %v113, 4294901760
  %v1117 = vsub.f32 %v113, %v1116
  %1118 = vmatpush.msra.mxu0 %v1117
  %v1119 = vand.u32 %v111, 4294901760
  %v1120 = vsub.f32 %v111, %v1119
  %1121 = vmatpush.msra.mxu0 %v1120
  %v1122 = vand.u32 %v109, 4294901760
  %v1123 = vsub.f32 %v109, %v1122
  %1124 = vmatpush.msra.mxu0 %v1123
  %v1125 = vand.u32 %v30, 4294901760
  %v1126 = vsub.f32 %v30, %v1125
  %1127 = vmatmul.f32.gmra.mxu0 %v1126
  %v1128 = vpop.f32.mrf.mxu0
  %v1129 = vadd.f32 %v1047, %v1128
  %v1130 = vand.u32 %v36, 4294901760
  %v1131 = vsub.f32 %v36, %v1130
  %1132 = vmatmul.f32.gmra.mxu0 %v1131
  %v1133 = vpop.f32.mrf.mxu0
  %v1134 = vadd.f32 %v1051, %v1133
  %v1135 = vand.u32 %v42, 4294901760
  %v1136 = vsub.f32 %v42, %v1135
  %1137 = vmatmul.f32.gmra.mxu0 %v1136
  %v1138 = vpop.f32.mrf.mxu0
  %v1139 = vadd.f32 %v1055, %v1138
  %v1140 = vand.u32 %v48, 4294901760
  %v1141 = vsub.f32 %v48, %v1140
  %1142 = vmatmul.f32.gmra.mxu0 %v1141
  %v1143 = vpop.f32.mrf.mxu0
  %v1144 = vadd.f32 %v1059, %v1143
  %v1145 = vand.u32 %v54, 4294901760
  %v1146 = vsub.f32 %v54, %v1145
  %1147 = vmatmul.f32.gmra.mxu0 %v1146
  %v1148 = vpop.f32.mrf.mxu0
  %v1149 = vadd.f32 %v1063, %v1148
  %v1150 = vand.u32 %v60, 4294901760
  %v1151 = vsub.f32 %v60, %v1150
  %1152 = vmatmul.f32.gmra.mxu0 %v1151
  %v1153 = vpop.f32.mrf.mxu0
  %v1154 = vadd.f32 %v1067, %v1153
  %v1155 = vand.u32 %v66, 4294901760
  %v1156 = vsub.f32 %v66, %v1155
  %1157 = vmatmul.f32.gmra.mxu0 %v1156
  %v1158 = vpop.f32.mrf.mxu0
  %v1159 = vadd.f32 %v1071, %v1158
  %v1160 = vand.u32 %v72, 4294901760
  %v1161 = vsub.f32 %v72, %v1160
  %1162 = vmatmul.f32.gmra.mxu0 %v1161
  %v1163 = vpop.f32.mrf.mxu0
  %v1164 = vadd.f32 %v1075, %v1163
  %1165 = vdwg.mxu0
  %v1166 = vand.u32 %v139, 4294901760
  %1167 = vmatpush.msra.mxu0 %v1166
  %v1168 = vand.u32 %v137, 4294901760
  %1169 = vmatpush.msra.mxu0 %v1168
  %v1170 = vand.u32 %v135, 4294901760
  %1171 = vmatpush.msra.mxu0 %v1170
  %v1172 = vand.u32 %v133, 4294901760
  %1173 = vmatpush.msra.mxu0 %v1172
  %v1174 = vand.u32 %v131, 4294901760
  %1175 = vmatpush.msra.mxu0 %v1174
  %v1176 = vand.u32 %v129, 4294901760
  %1177 = vmatpush.msra.mxu0 %v1176
  %v1178 = vand.u32 %v127, 4294901760
  %1179 = vmatpush.msra.mxu0 %v1178
  %v1180 = vand.u32 %v125, 4294901760
  %1181 = vmatpush.msra.mxu0 %v1180
  %v1182 = vand.u32 %v123, 4294901760
  %1183 = vmatpush.msra.mxu0 %v1182
  %v1184 = vand.u32 %v121, 4294901760
  %1185 = vmatpush.msra.mxu0 %v1184
  %v1186 = vand.u32 %v119, 4294901760
  %1187 = vmatpush.msra.mxu0 %v1186
  %v1188 = vand.u32 %v117, 4294901760
  %1189 = vmatpush.msra.mxu0 %v1188
  %v1190 = vand.u32 %v115, 4294901760
  %1191 = vmatpush.msra.mxu0 %v1190
  %v1192 = vand.u32 %v113, 4294901760
  %1193 = vmatpush.msra.mxu0 %v1192
  %v1194 = vand.u32 %v111, 4294901760
  %1195 = vmatpush.msra.mxu0 %v1194
  %v1196 = vand.u32 %v109, 4294901760
  %1197 = vmatpush.msra.mxu0 %v1196
  %v1198 = vand.u32 %v30, 4294901760
  %v1199 = vsub.f32 %v30, %v1198
  %v1200 = vand.u32 %v1199, 4294901760
  %1201 = vmatmul.f32.gmra.mxu0 %v1200
  %v1202 = vpop.f32.mrf.mxu0
  %v1203 = vadd.f32 %v1129, %v1202
  %v1204 = vand.u32 %v36, 4294901760
  %v1205 = vsub.f32 %v36, %v1204
  %v1206 = vand.u32 %v1205, 4294901760
  %1207 = vmatmul.f32.gmra.mxu0 %v1206
  %v1208 = vpop.f32.mrf.mxu0
  %v1209 = vadd.f32 %v1134, %v1208
  %v1210 = vand.u32 %v42, 4294901760
  %v1211 = vsub.f32 %v42, %v1210
  %v1212 = vand.u32 %v1211, 4294901760
  %1213 = vmatmul.f32.gmra.mxu0 %v1212
  %v1214 = vpop.f32.mrf.mxu0
  %v1215 = vadd.f32 %v1139, %v1214
  %v1216 = vand.u32 %v48, 4294901760
  %v1217 = vsub.f32 %v48, %v1216
  %v1218 = vand.u32 %v1217, 4294901760
  %1219 = vmatmul.f32.gmra.mxu0 %v1218
  %v1220 = vpop.f32.mrf.mxu0
  %v1221 = vadd.f32 %v1144, %v1220
  %v1222 = vand.u32 %v54, 4294901760
  %v1223 = vsub.f32 %v54, %v1222
  %v1224 = vand.u32 %v1223, 4294901760
  %1225 = vmatmul.f32.gmra.mxu0 %v1224
  %v1226 = vpop.f32.mrf.mxu0
  %v1227 = vadd.f32 %v1149, %v1226
  %v1228 = vand.u32 %v60, 4294901760
  %v1229 = vsub.f32 %v60, %v1228
  %v1230 = vand.u32 %v1229, 4294901760
  %1231 = vmatmul.f32.gmra.mxu0 %v1230
  %v1232 = vpop.f32.mrf.mxu0
  %v1233 = vadd.f32 %v1154, %v1232
  %v1234 = vand.u32 %v66, 4294901760
  %v1235 = vsub.f32 %v66, %v1234
  %v1236 = vand.u32 %v1235, 4294901760
  %1237 = vmatmul.f32.gmra.mxu0 %v1236
  %v1238 = vpop.f32.mrf.mxu0
  %v1239 = vadd.f32 %v1159, %v1238
  %v1240 = vand.u32 %v72, 4294901760
  %v1241 = vsub.f32 %v72, %v1240
  %v1242 = vand.u32 %v1241, 4294901760
  %1243 = vmatmul.f32.gmra.mxu0 %v1242
  %v1244 = vpop.f32.mrf.mxu0
  %v1245 = vadd.f32 %v1164, %v1244
  %1246 = vdwg.mxu0
  %v1247 = vand.u32 %v139, 4294901760
  %v1248 = vsub.f32 %v139, %v1247
  %v1249 = vand.u32 %v1248, 4294901760
  %1250 = vmatpush.msra.mxu0 %v1249
  %v1251 = vand.u32 %v137, 4294901760
  %v1252 = vsub.f32 %v137, %v1251
  %v1253 = vand.u32 %v1252, 4294901760
  %1254 = vmatpush.msra.mxu0 %v1253
  %v1255 = vand.u32 %v135, 4294901760
  %v1256 = vsub.f32 %v135, %v1255
  %v1257 = vand.u32 %v1256, 4294901760
  %1258 = vmatpush.msra.mxu0 %v1257
  %v1259 = vand.u32 %v133, 4294901760
  %v1260 = vsub.f32 %v133, %v1259
  %v1261 = vand.u32 %v1260, 4294901760
  %1262 = vmatpush.msra.mxu0 %v1261
  %v1263 = vand.u32 %v131, 4294901760
  %v1264 = vsub.f32 %v131, %v1263
  %v1265 = vand.u32 %v1264, 4294901760
  %1266 = vmatpush.msra.mxu0 %v1265
  %v1267 = vand.u32 %v129, 4294901760
  %v1268 = vsub.f32 %v129, %v1267
  %v1269 = vand.u32 %v1268, 4294901760
  %1270 = vmatpush.msra.mxu0 %v1269
  %v1271 = vand.u32 %v127, 4294901760
  %v1272 = vsub.f32 %v127, %v1271
  %v1273 = vand.u32 %v1272, 4294901760
  %1274 = vmatpush.msra.mxu0 %v1273
  %v1275 = vand.u32 %v125, 4294901760
  %v1276 = vsub.f32 %v125, %v1275
  %v1277 = vand.u32 %v1276, 4294901760
  %1278 = vmatpush.msra.mxu0 %v1277
  %v1279 = vand.u32 %v123, 4294901760
  %v1280 = vsub.f32 %v123, %v1279
  %v1281 = vand.u32 %v1280, 4294901760
  %1282 = vmatpush.msra.mxu0 %v1281
  %v1283 = vand.u32 %v121, 4294901760
  %v1284 = vsub.f32 %v121, %v1283
  %v1285 = vand.u32 %v1284, 4294901760
  %1286 = vmatpush.msra.mxu0 %v1285
  %v1287 = vand.u32 %v119, 4294901760
  %v1288 = vsub.f32 %v119, %v1287
  %v1289 = vand.u32 %v1288, 4294901760
  %1290 = vmatpush.msra.mxu0 %v1289
  %v1291 = vand.u32 %v117, 4294901760
  %v1292 = vsub.f32 %v117, %v1291
  %v1293 = vand.u32 %v1292, 4294901760
  %1294 = vmatpush.msra.mxu0 %v1293
  %v1295 = vand.u32 %v115, 4294901760
  %v1296 = vsub.f32 %v115, %v1295
  %v1297 = vand.u32 %v1296, 4294901760
  %1298 = vmatpush.msra.mxu0 %v1297
  %v1299 = vand.u32 %v113, 4294901760
  %v1300 = vsub.f32 %v113, %v1299
  %v1301 = vand.u32 %v1300, 4294901760
  %1302 = vmatpush.msra.mxu0 %v1301
  %v1303 = vand.u32 %v111, 4294901760
  %v1304 = vsub.f32 %v111, %v1303
  %v1305 = vand.u32 %v1304, 4294901760
  %1306 = vmatpush.msra.mxu0 %v1305
  %v1307 = vand.u32 %v109, 4294901760
  %v1308 = vsub.f32 %v109, %v1307
  %v1309 = vand.u32 %v1308, 4294901760
  %1310 = vmatpush.msra.mxu0 %v1309
  %v1311 = vand.u32 %v30, 4294901760
  %1312 = vmatmul.f32.gmra.mxu0 %v1311
  %v1313 = vpop.f32.mrf.mxu0
  %v1314 = vadd.f32 %v1203, %v1313
  %v1315 = vand.u32 %v36, 4294901760
  %1316 = vmatmul.f32.gmra.mxu0 %v1315
  %v1317 = vpop.f32.mrf.mxu0
  %v1318 = vadd.f32 %v1209, %v1317
  %v1319 = vand.u32 %v42, 4294901760
  %1320 = vmatmul.f32.gmra.mxu0 %v1319
  %v1321 = vpop.f32.mrf.mxu0
  %v1322 = vadd.f32 %v1215, %v1321
  %v1323 = vand.u32 %v48, 4294901760
  %1324 = vmatmul.f32.gmra.mxu0 %v1323
  %v1325 = vpop.f32.mrf.mxu0
  %v1326 = vadd.f32 %v1221, %v1325
  %v1327 = vand.u32 %v54, 4294901760
  %1328 = vmatmul.f32.gmra.mxu0 %v1327
  %v1329 = vpop.f32.mrf.mxu0
  %v1330 = vadd.f32 %v1227, %v1329
  %v1331 = vand.u32 %v60, 4294901760
  %1332 = vmatmul.f32.gmra.mxu0 %v1331
  %v1333 = vpop.f32.mrf.mxu0
  %v1334 = vadd.f32 %v1233, %v1333
  %v1335 = vand.u32 %v66, 4294901760
  %1336 = vmatmul.f32.gmra.mxu0 %v1335
  %v1337 = vpop.f32.mrf.mxu0
  %v1338 = vadd.f32 %v1239, %v1337
  %v1339 = vand.u32 %v72, 4294901760
  %1340 = vmatmul.f32.gmra.mxu0 %v1339
  %v1341 = vpop.f32.mrf.mxu0
  %v1342 = vadd.f32 %v1245, %v1341
  %1343 = vdwg.mxu0
  %v1344 = vand.u32 %v139, 4294901760
  %1345 = vmatpush.msra.mxu0 %v1344
  %v1346 = vand.u32 %v137, 4294901760
  %1347 = vmatpush.msra.mxu0 %v1346
  %v1348 = vand.u32 %v135, 4294901760
  %1349 = vmatpush.msra.mxu0 %v1348
  %v1350 = vand.u32 %v133, 4294901760
  %1351 = vmatpush.msra.mxu0 %v1350
  %v1352 = vand.u32 %v131, 4294901760
  %1353 = vmatpush.msra.mxu0 %v1352
  %v1354 = vand.u32 %v129, 4294901760
  %1355 = vmatpush.msra.mxu0 %v1354
  %v1356 = vand.u32 %v127, 4294901760
  %1357 = vmatpush.msra.mxu0 %v1356
  %v1358 = vand.u32 %v125, 4294901760
  %1359 = vmatpush.msra.mxu0 %v1358
  %v1360 = vand.u32 %v123, 4294901760
  %1361 = vmatpush.msra.mxu0 %v1360
  %v1362 = vand.u32 %v121, 4294901760
  %1363 = vmatpush.msra.mxu0 %v1362
  %v1364 = vand.u32 %v119, 4294901760
  %1365 = vmatpush.msra.mxu0 %v1364
  %v1366 = vand.u32 %v117, 4294901760
  %1367 = vmatpush.msra.mxu0 %v1366
  %v1368 = vand.u32 %v115, 4294901760
  %1369 = vmatpush.msra.mxu0 %v1368
  %v1370 = vand.u32 %v113, 4294901760
  %1371 = vmatpush.msra.mxu0 %v1370
  %v1372 = vand.u32 %v111, 4294901760
  %1373 = vmatpush.msra.mxu0 %v1372
  %v1374 = vand.u32 %v109, 4294901760
  %1375 = vmatpush.msra.mxu0 %v1374
  %v1376 = vand.u32 %v30, 4294901760
  %1377 = vmatmul.f32.gmra.mxu0 %v1376
  %v1378 = vpop.f32.mrf.mxu0
  %v1379 = vadd.f32 %v1314, %v1378
  %v1380 = vand.u32 %v36, 4294901760
  %1381 = vmatmul.f32.gmra.mxu0 %v1380
  %v1382 = vpop.f32.mrf.mxu0
  %v1383 = vadd.f32 %v1318, %v1382
  %v1384 = vand.u32 %v42, 4294901760
  %1385 = vmatmul.f32.gmra.mxu0 %v1384
  %v1386 = vpop.f32.mrf.mxu0
  %v1387 = vadd.f32 %v1322, %v1386
  %v1388 = vand.u32 %v48, 4294901760
  %1389 = vmatmul.f32.gmra.mxu0 %v1388
  %v1390 = vpop.f32.mrf.mxu0
  %v1391 = vadd.f32 %v1326, %v1390
  %v1392 = vand.u32 %v54, 4294901760
  %1393 = vmatmul.f32.gmra.mxu0 %v1392
  %v1394 = vpop.f32.mrf.mxu0
  %v1395 = vadd.f32 %v1330, %v1394
  %v1396 = vand.u32 %v60, 4294901760
  %1397 = vmatmul.f32.gmra.mxu0 %v1396
  %v1398 = vpop.f32.mrf.mxu0
  %v1399 = vadd.f32 %v1334, %v1398
  %v1400 = vand.u32 %v66, 4294901760
  %1401 = vmatmul.f32.gmra.mxu0 %v1400
  %v1402 = vpop.f32.mrf.mxu0
  %v1403 = vadd.f32 %v1338, %v1402
  %v1404 = vand.u32 %v72, 4294901760
  %1405 = vmatmul.f32.gmra.mxu0 %v1404
  %v1406 = vpop.f32.mrf.mxu0
  %v1407 = vadd.f32 %v1342, %v1406
  %1408 = vdwg.mxu0
  %v1409 = vand.u32 %v171, 4294901760
  %1410 = vmatpush.msra.mxu0 %v1409
  %v1411 = vand.u32 %v169, 4294901760
  %1412 = vmatpush.msra.mxu0 %v1411
  %v1413 = vand.u32 %v167, 4294901760
  %1414 = vmatpush.msra.mxu0 %v1413
  %v1415 = vand.u32 %v165, 4294901760
  %1416 = vmatpush.msra.mxu0 %v1415
  %v1417 = vand.u32 %v163, 4294901760
  %1418 = vmatpush.msra.mxu0 %v1417
  %v1419 = vand.u32 %v161, 4294901760
  %1420 = vmatpush.msra.mxu0 %v1419
  %v1421 = vand.u32 %v159, 4294901760
  %1422 = vmatpush.msra.mxu0 %v1421
  %v1423 = vand.u32 %v157, 4294901760
  %1424 = vmatpush.msra.mxu0 %v1423
  %v1425 = vand.u32 %v155, 4294901760
  %1426 = vmatpush.msra.mxu0 %v1425
  %v1427 = vand.u32 %v153, 4294901760
  %1428 = vmatpush.msra.mxu0 %v1427
  %v1429 = vand.u32 %v151, 4294901760
  %1430 = vmatpush.msra.mxu0 %v1429
  %v1431 = vand.u32 %v149, 4294901760
  %1432 = vmatpush.msra.mxu0 %v1431
  %v1433 = vand.u32 %v147, 4294901760
  %1434 = vmatpush.msra.mxu0 %v1433
  %v1435 = vand.u32 %v145, 4294901760
  %1436 = vmatpush.msra.mxu0 %v1435
  %v1437 = vand.u32 %v143, 4294901760
  %1438 = vmatpush.msra.mxu0 %v1437
  %v1439 = vand.u32 %v141, 4294901760
  %1440 = vmatpush.msra.mxu0 %v1439
  %v1441 = vand.u32 %v31, 4294901760
  %v1442 = vsub.f32 %v31, %v1441
  %v1443 = vand.u32 %v1442, 4294901760
  %v1444 = vsub.f32 %v1442, %v1443
  %v1445 = vand.u32 %v1444, 4294901760
  %1446 = vmatmul.f32.gmra.mxu0 %v1445
  %v1447 = vpop.f32.mrf.mxu0
  %v1448 = vadd.f32 %v1379, %v1447
  %v1449 = vand.u32 %v37, 4294901760
  %v1450 = vsub.f32 %v37, %v1449
  %v1451 = vand.u32 %v1450, 4294901760
  %v1452 = vsub.f32 %v1450, %v1451
  %v1453 = vand.u32 %v1452, 4294901760
  %1454 = vmatmul.f32.gmra.mxu0 %v1453
  %v1455 = vpop.f32.mrf.mxu0
  %v1456 = vadd.f32 %v1383, %v1455
  %v1457 = vand.u32 %v43, 4294901760
  %v1458 = vsub.f32 %v43, %v1457
  %v1459 = vand.u32 %v1458, 4294901760
  %v1460 = vsub.f32 %v1458, %v1459
  %v1461 = vand.u32 %v1460, 4294901760
  %1462 = vmatmul.f32.gmra.mxu0 %v1461
  %v1463 = vpop.f32.mrf.mxu0
  %v1464 = vadd.f32 %v1387, %v1463
  %v1465 = vand.u32 %v49, 4294901760
  %v1466 = vsub.f32 %v49, %v1465
  %v1467 = vand.u32 %v1466, 4294901760
  %v1468 = vsub.f32 %v1466, %v1467
  %v1469 = vand.u32 %v1468, 4294901760
  %1470 = vmatmul.f32.gmra.mxu0 %v1469
  %v1471 = vpop.f32.mrf.mxu0
  %v1472 = vadd.f32 %v1391, %v1471
  %v1473 = vand.u32 %v55, 4294901760
  %v1474 = vsub.f32 %v55, %v1473
  %v1475 = vand.u32 %v1474, 4294901760
  %v1476 = vsub.f32 %v1474, %v1475
  %v1477 = vand.u32 %v1476, 4294901760
  %1478 = vmatmul.f32.gmra.mxu0 %v1477
  %v1479 = vpop.f32.mrf.mxu0
  %v1480 = vadd.f32 %v1395, %v1479
  %v1481 = vand.u32 %v61, 4294901760
  %v1482 = vsub.f32 %v61, %v1481
  %v1483 = vand.u32 %v1482, 4294901760
  %v1484 = vsub.f32 %v1482, %v1483
  %v1485 = vand.u32 %v1484, 4294901760
  %1486 = vmatmul.f32.gmra.mxu0 %v1485
  %v1487 = vpop.f32.mrf.mxu0
  %v1488 = vadd.f32 %v1399, %v1487
  %v1489 = vand.u32 %v67, 4294901760
  %v1490 = vsub.f32 %v67, %v1489
  %v1491 = vand.u32 %v1490, 4294901760
  %v1492 = vsub.f32 %v1490, %v1491
  %v1493 = vand.u32 %v1492, 4294901760
  %1494 = vmatmul.f32.gmra.mxu0 %v1493
  %v1495 = vpop.f32.mrf.mxu0
  %v1496 = vadd.f32 %v1403, %v1495
  %v1497 = vand.u32 %v73, 4294901760
  %v1498 = vsub.f32 %v73, %v1497
  %v1499 = vand.u32 %v1498, 4294901760
  %v1500 = vsub.f32 %v1498, %v1499
  %v1501 = vand.u32 %v1500, 4294901760
  %1502 = vmatmul.f32.gmra.mxu0 %v1501
  %v1503 = vpop.f32.mrf.mxu0
  %v1504 = vadd.f32 %v1407, %v1503
  %1505 = vdwg.mxu0
  %v1506 = vand.u32 %v171, 4294901760
  %v1507 = vsub.f32 %v171, %v1506
  %v1508 = vand.u32 %v1507, 4294901760
  %v1509 = vsub.f32 %v1507, %v1508
  %v1510 = vand.u32 %v1509, 4294901760
  %1511 = vmatpush.msra.mxu0 %v1510
  %v1512 = vand.u32 %v169, 4294901760
  %v1513 = vsub.f32 %v169, %v1512
  %v1514 = vand.u32 %v1513, 4294901760
  %v1515 = vsub.f32 %v1513, %v1514
  %v1516 = vand.u32 %v1515, 4294901760
  %1517 = vmatpush.msra.mxu0 %v1516
  %v1518 = vand.u32 %v167, 4294901760
  %v1519 = vsub.f32 %v167, %v1518
  %v1520 = vand.u32 %v1519, 4294901760
  %v1521 = vsub.f32 %v1519, %v1520
  %v1522 = vand.u32 %v1521, 4294901760
  %1523 = vmatpush.msra.mxu0 %v1522
  %v1524 = vand.u32 %v165, 4294901760
  %v1525 = vsub.f32 %v165, %v1524
  %v1526 = vand.u32 %v1525, 4294901760
  %v1527 = vsub.f32 %v1525, %v1526
  %v1528 = vand.u32 %v1527, 4294901760
  %1529 = vmatpush.msra.mxu0 %v1528
  %v1530 = vand.u32 %v163, 4294901760
  %v1531 = vsub.f32 %v163, %v1530
  %v1532 = vand.u32 %v1531, 4294901760
  %v1533 = vsub.f32 %v1531, %v1532
  %v1534 = vand.u32 %v1533, 4294901760
  %1535 = vmatpush.msra.mxu0 %v1534
  %v1536 = vand.u32 %v161, 4294901760
  %v1537 = vsub.f32 %v161, %v1536
  %v1538 = vand.u32 %v1537, 4294901760
  %v1539 = vsub.f32 %v1537, %v1538
  %v1540 = vand.u32 %v1539, 4294901760
  %1541 = vmatpush.msra.mxu0 %v1540
  %v1542 = vand.u32 %v159, 4294901760
  %v1543 = vsub.f32 %v159, %v1542
  %v1544 = vand.u32 %v1543, 4294901760
  %v1545 = vsub.f32 %v1543, %v1544
  %v1546 = vand.u32 %v1545, 4294901760
  %1547 = vmatpush.msra.mxu0 %v1546
  %v1548 = vand.u32 %v157, 4294901760
  %v1549 = vsub.f32 %v157, %v1548
  %v1550 = vand.u32 %v1549, 4294901760
  %v1551 = vsub.f32 %v1549, %v1550
  %v1552 = vand.u32 %v1551, 4294901760
  %1553 = vmatpush.msra.mxu0 %v1552
  %v1554 = vand.u32 %v155, 4294901760
  %v1555 = vsub.f32 %v155, %v1554
  %v1556 = vand.u32 %v1555, 4294901760
  %v1557 = vsub.f32 %v1555, %v1556
  %v1558 = vand.u32 %v1557, 4294901760
  %1559 = vmatpush.msra.mxu0 %v1558
  %v1560 = vand.u32 %v153, 4294901760
  %v1561 = vsub.f32 %v153, %v1560
  %v1562 = vand.u32 %v1561, 4294901760
  %v1563 = vsub.f32 %v1561, %v1562
  %v1564 = vand.u32 %v1563, 4294901760
  %1565 = vmatpush.msra.mxu0 %v1564
  %v1566 = vand.u32 %v151, 4294901760
  %v1567 = vsub.f32 %v151, %v1566
  %v1568 = vand.u32 %v1567, 4294901760
  %v1569 = vsub.f32 %v1567, %v1568
  %v1570 = vand.u32 %v1569, 4294901760
  %1571 = vmatpush.msra.mxu0 %v1570
  %v1572 = vand.u32 %v149, 4294901760
  %v1573 = vsub.f32 %v149, %v1572
  %v1574 = vand.u32 %v1573, 4294901760
  %v1575 = vsub.f32 %v1573, %v1574
  %v1576 = vand.u32 %v1575, 4294901760
  %1577 = vmatpush.msra.mxu0 %v1576
  %v1578 = vand.u32 %v147, 4294901760
  %v1579 = vsub.f32 %v147, %v1578
  %v1580 = vand.u32 %v1579, 4294901760
  %v1581 = vsub.f32 %v1579, %v1580
  %v1582 = vand.u32 %v1581, 4294901760
  %1583 = vmatpush.msra.mxu0 %v1582
  %v1584 = vand.u32 %v145, 4294901760
  %v1585 = vsub.f32 %v145, %v1584
  %v1586 = vand.u32 %v1585, 4294901760
  %v1587 = vsub.f32 %v1585, %v1586
  %v1588 = vand.u32 %v1587, 4294901760
  %1589 = vmatpush.msra.mxu0 %v1588
  %v1590 = vand.u32 %v143, 4294901760
  %v1591 = vsub.f32 %v143, %v1590
  %v1592 = vand.u32 %v1591, 4294901760
  %v1593 = vsub.f32 %v1591, %v1592
  %v1594 = vand.u32 %v1593, 4294901760
  %1595 = vmatpush.msra.mxu0 %v1594
  %v1596 = vand.u32 %v141, 4294901760
  %v1597 = vsub.f32 %v141, %v1596
  %v1598 = vand.u32 %v1597, 4294901760
  %v1599 = vsub.f32 %v1597, %v1598
  %v1600 = vand.u32 %v1599, 4294901760
  %1601 = vmatpush.msra.mxu0 %v1600
  %v1602 = vand.u32 %v31, 4294901760
  %1603 = vmatmul.f32.gmra.mxu0 %v1602
  %v1604 = vpop.f32.mrf.mxu0
  %v1605 = vadd.f32 %v1448, %v1604
  %v1606 = vand.u32 %v37, 4294901760
  %1607 = vmatmul.f32.gmra.mxu0 %v1606
  %v1608 = vpop.f32.mrf.mxu0
  %v1609 = vadd.f32 %v1456, %v1608
  %v1610 = vand.u32 %v43, 4294901760
  %1611 = vmatmul.f32.gmra.mxu0 %v1610
  %v1612 = vpop.f32.mrf.mxu0
  %v1613 = vadd.f32 %v1464, %v1612
  %v1614 = vand.u32 %v49, 4294901760
  %1615 = vmatmul.f32.gmra.mxu0 %v1614
  %v1616 = vpop.f32.mrf.mxu0
  %v1617 = vadd.f32 %v1472, %v1616
  %v1618 = vand.u32 %v55, 4294901760
  %1619 = vmatmul.f32.gmra.mxu0 %v1618
  %v1620 = vpop.f32.mrf.mxu0
  %v1621 = vadd.f32 %v1480, %v1620
  %v1622 = vand.u32 %v61, 4294901760
  %1623 = vmatmul.f32.gmra.mxu0 %v1622
  %v1624 = vpop.f32.mrf.mxu0
  %v1625 = vadd.f32 %v1488, %v1624
  %v1626 = vand.u32 %v67, 4294901760
  %1627 = vmatmul.f32.gmra.mxu0 %v1626
  %v1628 = vpop.f32.mrf.mxu0
  %v1629 = vadd.f32 %v1496, %v1628
  %v1630 = vand.u32 %v73, 4294901760
  %1631 = vmatmul.f32.gmra.mxu0 %v1630
  %v1632 = vpop.f32.mrf.mxu0
  %v1633 = vadd.f32 %v1504, %v1632
  %1634 = vdwg.mxu0
  %v1635 = vand.u32 %v171, 4294901760
  %v1636 = vsub.f32 %v171, %v1635
  %1637 = vmatpush.msra.mxu0 %v1636
  %v1638 = vand.u32 %v169, 4294901760
  %v1639 = vsub.f32 %v169, %v1638
  %1640 = vmatpush.msra.mxu0 %v1639
  %v1641 = vand.u32 %v167, 4294901760
  %v1642 = vsub.f32 %v167, %v1641
  %1643 = vmatpush.msra.mxu0 %v1642
  %v1644 = vand.u32 %v165, 4294901760
  %v1645 = vsub.f32 %v165, %v1644
  %1646 = vmatpush.msra.mxu0 %v1645
  %v1647 = vand.u32 %v163, 4294901760
  %v1648 = vsub.f32 %v163, %v1647
  %1649 = vmatpush.msra.mxu0 %v1648
  %v1650 = vand.u32 %v161, 4294901760
  %v1651 = vsub.f32 %v161, %v1650
  %1652 = vmatpush.msra.mxu0 %v1651
  %v1653 = vand.u32 %v159, 4294901760
  %v1654 = vsub.f32 %v159, %v1653
  %1655 = vmatpush.msra.mxu0 %v1654
  %v1656 = vand.u32 %v157, 4294901760
  %v1657 = vsub.f32 %v157, %v1656
  %1658 = vmatpush.msra.mxu0 %v1657
  %v1659 = vand.u32 %v155, 4294901760
  %v1660 = vsub.f32 %v155, %v1659
  %1661 = vmatpush.msra.mxu0 %v1660
  %v1662 = vand.u32 %v153, 4294901760
  %v1663 = vsub.f32 %v153, %v1662
  %1664 = vmatpush.msra.mxu0 %v1663
  %v1665 = vand.u32 %v151, 4294901760
  %v1666 = vsub.f32 %v151, %v1665
  %1667 = vmatpush.msra.mxu0 %v1666
  %v1668 = vand.u32 %v149, 4294901760
  %v1669 = vsub.f32 %v149, %v1668
  %1670 = vmatpush.msra.mxu0 %v1669
  %v1671 = vand.u32 %v147, 4294901760
  %v1672 = vsub.f32 %v147, %v1671
  %1673 = vmatpush.msra.mxu0 %v1672
  %v1674 = vand.u32 %v145, 4294901760
  %v1675 = vsub.f32 %v145, %v1674
  %1676 = vmatpush.msra.mxu0 %v1675
  %v1677 = vand.u32 %v143, 4294901760
  %v1678 = vsub.f32 %v143, %v1677
  %1679 = vmatpush.msra.mxu0 %v1678
  %v1680 = vand.u32 %v141, 4294901760
  %v1681 = vsub.f32 %v141, %v1680
  %1682 = vmatpush.msra.mxu0 %v1681
  %v1683 = vand.u32 %v31, 4294901760
  %v1684 = vsub.f32 %v31, %v1683
  %1685 = vmatmul.f32.gmra.mxu0 %v1684
  %v1686 = vpop.f32.mrf.mxu0
  %v1687 = vadd.f32 %v1605, %v1686
  %v1688 = vand.u32 %v37, 4294901760
  %v1689 = vsub.f32 %v37, %v1688
  %1690 = vmatmul.f32.gmra.mxu0 %v1689
  %v1691 = vpop.f32.mrf.mxu0
  %v1692 = vadd.f32 %v1609, %v1691
  %v1693 = vand.u32 %v43, 4294901760
  %v1694 = vsub.f32 %v43, %v1693
  %1695 = vmatmul.f32.gmra.mxu0 %v1694
  %v1696 = vpop.f32.mrf.mxu0
  %v1697 = vadd.f32 %v1613, %v1696
  %v1698 = vand.u32 %v49, 4294901760
  %v1699 = vsub.f32 %v49, %v1698
  %1700 = vmatmul.f32.gmra.mxu0 %v1699
  %v1701 = vpop.f32.mrf.mxu0
  %v1702 = vadd.f32 %v1617, %v1701
  %v1703 = vand.u32 %v55, 4294901760
  %v1704 = vsub.f32 %v55, %v1703
  %1705 = vmatmul.f32.gmra.mxu0 %v1704
  %v1706 = vpop.f32.mrf.mxu0
  %v1707 = vadd.f32 %v1621, %v1706
  %v1708 = vand.u32 %v61, 4294901760
  %v1709 = vsub.f32 %v61, %v1708
  %1710 = vmatmul.f32.gmra.mxu0 %v1709
  %v1711 = vpop.f32.mrf.mxu0
  %v1712 = vadd.f32 %v1625, %v1711
  %v1713 = vand.u32 %v67, 4294901760
  %v1714 = vsub.f32 %v67, %v1713
  %1715 = vmatmul.f32.gmra.mxu0 %v1714
  %v1716 = vpop.f32.mrf.mxu0
  %v1717 = vadd.f32 %v1629, %v1716
  %v1718 = vand.u32 %v73, 4294901760
  %v1719 = vsub.f32 %v73, %v1718
  %1720 = vmatmul.f32.gmra.mxu0 %v1719
  %v1721 = vpop.f32.mrf.mxu0
  %v1722 = vadd.f32 %v1633, %v1721
  %1723 = vdwg.mxu0
  %v1724 = vand.u32 %v171, 4294901760
  %1725 = vmatpush.msra.mxu0 %v1724
  %v1726 = vand.u32 %v169, 4294901760
  %1727 = vmatpush.msra.mxu0 %v1726
  %v1728 = vand.u32 %v167, 4294901760
  %1729 = vmatpush.msra.mxu0 %v1728
  %v1730 = vand.u32 %v165, 4294901760
  %1731 = vmatpush.msra.mxu0 %v1730
  %v1732 = vand.u32 %v163, 4294901760
  %1733 = vmatpush.msra.mxu0 %v1732
  %v1734 = vand.u32 %v161, 4294901760
  %1735 = vmatpush.msra.mxu0 %v1734
  %v1736 = vand.u32 %v159, 4294901760
  %1737 = vmatpush.msra.mxu0 %v1736
  %v1738 = vand.u32 %v157, 4294901760
  %1739 = vmatpush.msra.mxu0 %v1738
  %v1740 = vand.u32 %v155, 4294901760
  %1741 = vmatpush.msra.mxu0 %v1740
  %v1742 = vand.u32 %v153, 4294901760
  %1743 = vmatpush.msra.mxu0 %v1742
  %v1744 = vand.u32 %v151, 4294901760
  %1745 = vmatpush.msra.mxu0 %v1744
  %v1746 = vand.u32 %v149, 4294901760
  %1747 = vmatpush.msra.mxu0 %v1746
  %v1748 = vand.u32 %v147, 4294901760
  %1749 = vmatpush.msra.mxu0 %v1748
  %v1750 = vand.u32 %v145, 4294901760
  %1751 = vmatpush.msra.mxu0 %v1750
  %v1752 = vand.u32 %v143, 4294901760
  %1753 = vmatpush.msra.mxu0 %v1752
  %v1754 = vand.u32 %v141, 4294901760
  %1755 = vmatpush.msra.mxu0 %v1754
  %v1756 = vand.u32 %v31, 4294901760
  %v1757 = vsub.f32 %v31, %v1756
  %v1758 = vand.u32 %v1757, 4294901760
  %1759 = vmatmul.f32.gmra.mxu0 %v1758
  %v1760 = vpop.f32.mrf.mxu0
  %v1761 = vadd.f32 %v1687, %v1760
  %v1762 = vand.u32 %v37, 4294901760
  %v1763 = vsub.f32 %v37, %v1762
  %v1764 = vand.u32 %v1763, 4294901760
  %1765 = vmatmul.f32.gmra.mxu0 %v1764
  %v1766 = vpop.f32.mrf.mxu0
  %v1767 = vadd.f32 %v1692, %v1766
  %v1768 = vand.u32 %v43, 4294901760
  %v1769 = vsub.f32 %v43, %v1768
  %v1770 = vand.u32 %v1769, 4294901760
  %1771 = vmatmul.f32.gmra.mxu0 %v1770
  %v1772 = vpop.f32.mrf.mxu0
  %v1773 = vadd.f32 %v1697, %v1772
  %v1774 = vand.u32 %v49, 4294901760
  %v1775 = vsub.f32 %v49, %v1774
  %v1776 = vand.u32 %v1775, 4294901760
  %1777 = vmatmul.f32.gmra.mxu0 %v1776
  %v1778 = vpop.f32.mrf.mxu0
  %v1779 = vadd.f32 %v1702, %v1778
  %v1780 = vand.u32 %v55, 4294901760
  %v1781 = vsub.f32 %v55, %v1780
  %v1782 = vand.u32 %v1781, 4294901760
  %1783 = vmatmul.f32.gmra.mxu0 %v1782
  %v1784 = vpop.f32.mrf.mxu0
  %v1785 = vadd.f32 %v1707, %v1784
  %v1786 = vand.u32 %v61, 4294901760
  %v1787 = vsub.f32 %v61, %v1786
  %v1788 = vand.u32 %v1787, 4294901760
  %1789 = vmatmul.f32.gmra.mxu0 %v1788
  %v1790 = vpop.f32.mrf.mxu0
  %v1791 = vadd.f32 %v1712, %v1790
  %v1792 = vand.u32 %v67, 4294901760
  %v1793 = vsub.f32 %v67, %v1792
  %v1794 = vand.u32 %v1793, 4294901760
  %1795 = vmatmul.f32.gmra.mxu0 %v1794
  %v1796 = vpop.f32.mrf.mxu0
  %v1797 = vadd.f32 %v1717, %v1796
  %v1798 = vand.u32 %v73, 4294901760
  %v1799 = vsub.f32 %v73, %v1798
  %v1800 = vand.u32 %v1799, 4294901760
  %1801 = vmatmul.f32.gmra.mxu0 %v1800
  %v1802 = vpop.f32.mrf.mxu0
  %v1803 = vadd.f32 %v1722, %v1802
  %1804 = vdwg.mxu0
  %v1805 = vand.u32 %v171, 4294901760
  %v1806 = vsub.f32 %v171, %v1805
  %v1807 = vand.u32 %v1806, 4294901760
  %1808 = vmatpush.msra.mxu0 %v1807
  %v1809 = vand.u32 %v169, 4294901760
  %v1810 = vsub.f32 %v169, %v1809
  %v1811 = vand.u32 %v1810, 4294901760
  %1812 = vmatpush.msra.mxu0 %v1811
  %v1813 = vand.u32 %v167, 4294901760
  %v1814 = vsub.f32 %v167, %v1813
  %v1815 = vand.u32 %v1814, 4294901760
  %1816 = vmatpush.msra.mxu0 %v1815
  %v1817 = vand.u32 %v165, 4294901760
  %v1818 = vsub.f32 %v165, %v1817
  %v1819 = vand.u32 %v1818, 4294901760
  %1820 = vmatpush.msra.mxu0 %v1819
  %v1821 = vand.u32 %v163, 4294901760
  %v1822 = vsub.f32 %v163, %v1821
  %v1823 = vand.u32 %v1822, 4294901760
  %1824 = vmatpush.msra.mxu0 %v1823
  %v1825 = vand.u32 %v161, 4294901760
  %v1826 = vsub.f32 %v161, %v1825
  %v1827 = vand.u32 %v1826, 4294901760
  %1828 = vmatpush.msra.mxu0 %v1827
  %v1829 = vand.u32 %v159, 4294901760
  %v1830 = vsub.f32 %v159, %v1829
  %v1831 = vand.u32 %v1830, 4294901760
  %1832 = vmatpush.msra.mxu0 %v1831
  %v1833 = vand.u32 %v157, 4294901760
  %v1834 = vsub.f32 %v157, %v1833
  %v1835 = vand.u32 %v1834, 4294901760
  %1836 = vmatpush.msra.mxu0 %v1835
  %v1837 = vand.u32 %v155, 4294901760
  %v1838 = vsub.f32 %v155, %v1837
  %v1839 = vand.u32 %v1838, 4294901760
  %1840 = vmatpush.msra.mxu0 %v1839
  %v1841 = vand.u32 %v153, 4294901760
  %v1842 = vsub.f32 %v153, %v1841
  %v1843 = vand.u32 %v1842, 4294901760
  %1844 = vmatpush.msra.mxu0 %v1843
  %v1845 = vand.u32 %v151, 4294901760
  %v1846 = vsub.f32 %v151, %v1845
  %v1847 = vand.u32 %v1846, 4294901760
  %1848 = vmatpush.msra.mxu0 %v1847
  %v1849 = vand.u32 %v149, 4294901760
  %v1850 = vsub.f32 %v149, %v1849
  %v1851 = vand.u32 %v1850, 4294901760
  %1852 = vmatpush.msra.mxu0 %v1851
  %v1853 = vand.u32 %v147, 4294901760
  %v1854 = vsub.f32 %v147, %v1853
  %v1855 = vand.u32 %v1854, 4294901760
  %1856 = vmatpush.msra.mxu0 %v1855
  %v1857 = vand.u32 %v145, 4294901760
  %v1858 = vsub.f32 %v145, %v1857
  %v1859 = vand.u32 %v1858, 4294901760
  %1860 = vmatpush.msra.mxu0 %v1859
  %v1861 = vand.u32 %v143, 4294901760
  %v1862 = vsub.f32 %v143, %v1861
  %v1863 = vand.u32 %v1862, 4294901760
  %1864 = vmatpush.msra.mxu0 %v1863
  %v1865 = vand.u32 %v141, 4294901760
  %v1866 = vsub.f32 %v141, %v1865
  %v1867 = vand.u32 %v1866, 4294901760
  %1868 = vmatpush.msra.mxu0 %v1867
  %v1869 = vand.u32 %v31, 4294901760
  %1870 = vmatmul.f32.gmra.mxu0 %v1869
  %v1871 = vpop.f32.mrf.mxu0
  %v1872 = vadd.f32 %v1761, %v1871
  %v1873 = vand.u32 %v37, 4294901760
  %1874 = vmatmul.f32.gmra.mxu0 %v1873
  %v1875 = vpop.f32.mrf.mxu0
  %v1876 = vadd.f32 %v1767, %v1875
  %v1877 = vand.u32 %v43, 4294901760
  %1878 = vmatmul.f32.gmra.mxu0 %v1877
  %v1879 = vpop.f32.mrf.mxu0
  %v1880 = vadd.f32 %v1773, %v1879
  %v1881 = vand.u32 %v49, 4294901760
  %1882 = vmatmul.f32.gmra.mxu0 %v1881
  %v1883 = vpop.f32.mrf.mxu0
  %v1884 = vadd.f32 %v1779, %v1883
  %v1885 = vand.u32 %v55, 4294901760
  %1886 = vmatmul.f32.gmra.mxu0 %v1885
  %v1887 = vpop.f32.mrf.mxu0
  %v1888 = vadd.f32 %v1785, %v1887
  %v1889 = vand.u32 %v61, 4294901760
  %1890 = vmatmul.f32.gmra.mxu0 %v1889
  %v1891 = vpop.f32.mrf.mxu0
  %v1892 = vadd.f32 %v1791, %v1891
  %v1893 = vand.u32 %v67, 4294901760
  %1894 = vmatmul.f32.gmra.mxu0 %v1893
  %v1895 = vpop.f32.mrf.mxu0
  %v1896 = vadd.f32 %v1797, %v1895
  %v1897 = vand.u32 %v73, 4294901760
  %1898 = vmatmul.f32.gmra.mxu0 %v1897
  %v1899 = vpop.f32.mrf.mxu0
  %v1900 = vadd.f32 %v1803, %v1899
  %1901 = vdwg.mxu0
  %v1902 = vand.u32 %v171, 4294901760
  %1903 = vmatpush.msra.mxu0 %v1902
  %v1904 = vand.u32 %v169, 4294901760
  %1905 = vmatpush.msra.mxu0 %v1904
  %v1906 = vand.u32 %v167, 4294901760
  %1907 = vmatpush.msra.mxu0 %v1906
  %v1908 = vand.u32 %v165, 4294901760
  %1909 = vmatpush.msra.mxu0 %v1908
  %v1910 = vand.u32 %v163, 4294901760
  %1911 = vmatpush.msra.mxu0 %v1910
  %v1912 = vand.u32 %v161, 4294901760
  %1913 = vmatpush.msra.mxu0 %v1912
  %v1914 = vand.u32 %v159, 4294901760
  %1915 = vmatpush.msra.mxu0 %v1914
  %v1916 = vand.u32 %v157, 4294901760
  %1917 = vmatpush.msra.mxu0 %v1916
  %v1918 = vand.u32 %v155, 4294901760
  %1919 = vmatpush.msra.mxu0 %v1918
  %v1920 = vand.u32 %v153, 4294901760
  %1921 = vmatpush.msra.mxu0 %v1920
  %v1922 = vand.u32 %v151, 4294901760
  %1923 = vmatpush.msra.mxu0 %v1922
  %v1924 = vand.u32 %v149, 4294901760
  %1925 = vmatpush.msra.mxu0 %v1924
  %v1926 = vand.u32 %v147, 4294901760
  %1927 = vmatpush.msra.mxu0 %v1926
  %v1928 = vand.u32 %v145, 4294901760
  %1929 = vmatpush.msra.mxu0 %v1928
  %v1930 = vand.u32 %v143, 4294901760
  %1931 = vmatpush.msra.mxu0 %v1930
  %v1932 = vand.u32 %v141, 4294901760
  %1933 = vmatpush.msra.mxu0 %v1932
  %v1934 = vand.u32 %v31, 4294901760
  %1935 = vmatmul.f32.gmra.mxu0 %v1934
  %v1936 = vpop.f32.mrf.mxu0
  %v1937 = vadd.f32 %v1872, %v1936
  %v1938 = vand.u32 %v37, 4294901760
  %1939 = vmatmul.f32.gmra.mxu0 %v1938
  %v1940 = vpop.f32.mrf.mxu0
  %v1941 = vadd.f32 %v1876, %v1940
  %v1942 = vand.u32 %v43, 4294901760
  %1943 = vmatmul.f32.gmra.mxu0 %v1942
  %v1944 = vpop.f32.mrf.mxu0
  %v1945 = vadd.f32 %v1880, %v1944
  %v1946 = vand.u32 %v49, 4294901760
  %1947 = vmatmul.f32.gmra.mxu0 %v1946
  %v1948 = vpop.f32.mrf.mxu0
  %v1949 = vadd.f32 %v1884, %v1948
  %v1950 = vand.u32 %v55, 4294901760
  %1951 = vmatmul.f32.gmra.mxu0 %v1950
  %v1952 = vpop.f32.mrf.mxu0
  %v1953 = vadd.f32 %v1888, %v1952
  %v1954 = vand.u32 %v61, 4294901760
  %1955 = vmatmul.f32.gmra.mxu0 %v1954
  %v1956 = vpop.f32.mrf.mxu0
  %v1957 = vadd.f32 %v1892, %v1956
  %v1958 = vand.u32 %v67, 4294901760
  %1959 = vmatmul.f32.gmra.mxu0 %v1958
  %v1960 = vpop.f32.mrf.mxu0
  %v1961 = vadd.f32 %v1896, %v1960
  %v1962 = vand.u32 %v73, 4294901760
  %1963 = vmatmul.f32.gmra.mxu0 %v1962
  %v1964 = vpop.f32.mrf.mxu0
  %v1965 = vadd.f32 %v1900, %v1964
  %1966 = vdwg.mxu0
  %v1967 = vand.u32 %v203, 4294901760
  %1968 = vmatpush.msra.mxu0 %v1967
  %v1969 = vand.u32 %v201, 4294901760
  %1970 = vmatpush.msra.mxu0 %v1969
  %v1971 = vand.u32 %v199, 4294901760
  %1972 = vmatpush.msra.mxu0 %v1971
  %v1973 = vand.u32 %v197, 4294901760
  %1974 = vmatpush.msra.mxu0 %v1973
  %v1975 = vand.u32 %v195, 4294901760
  %1976 = vmatpush.msra.mxu0 %v1975
  %v1977 = vand.u32 %v193, 4294901760
  %1978 = vmatpush.msra.mxu0 %v1977
  %v1979 = vand.u32 %v191, 4294901760
  %1980 = vmatpush.msra.mxu0 %v1979
  %v1981 = vand.u32 %v189, 4294901760
  %1982 = vmatpush.msra.mxu0 %v1981
  %v1983 = vand.u32 %v187, 4294901760
  %1984 = vmatpush.msra.mxu0 %v1983
  %v1985 = vand.u32 %v185, 4294901760
  %1986 = vmatpush.msra.mxu0 %v1985
  %v1987 = vand.u32 %v183, 4294901760
  %1988 = vmatpush.msra.mxu0 %v1987
  %v1989 = vand.u32 %v181, 4294901760
  %1990 = vmatpush.msra.mxu0 %v1989
  %v1991 = vand.u32 %v179, 4294901760
  %1992 = vmatpush.msra.mxu0 %v1991
  %v1993 = vand.u32 %v177, 4294901760
  %1994 = vmatpush.msra.mxu0 %v1993
  %v1995 = vand.u32 %v175, 4294901760
  %1996 = vmatpush.msra.mxu0 %v1995
  %v1997 = vand.u32 %v173, 4294901760
  %1998 = vmatpush.msra.mxu0 %v1997
  %v1999 = vand.u32 %v32, 4294901760
  %v2000 = vsub.f32 %v32, %v1999
  %v2001 = vand.u32 %v2000, 4294901760
  %v2002 = vsub.f32 %v2000, %v2001
  %v2003 = vand.u32 %v2002, 4294901760
  %2004 = vmatmul.f32.gmra.mxu0 %v2003
  %v2005 = vpop.f32.mrf.mxu0
  %v2006 = vadd.f32 %v1937, %v2005
  %v2007 = vand.u32 %v38, 4294901760
  %v2008 = vsub.f32 %v38, %v2007
  %v2009 = vand.u32 %v2008, 4294901760
  %v2010 = vsub.f32 %v2008, %v2009
  %v2011 = vand.u32 %v2010, 4294901760
  %2012 = vmatmul.f32.gmra.mxu0 %v2011
  %v2013 = vpop.f32.mrf.mxu0
  %v2014 = vadd.f32 %v1941, %v2013
  %v2015 = vand.u32 %v44, 4294901760
  %v2016 = vsub.f32 %v44, %v2015
  %v2017 = vand.u32 %v2016, 4294901760
  %v2018 = vsub.f32 %v2016, %v2017
  %v2019 = vand.u32 %v2018, 4294901760
  %2020 = vmatmul.f32.gmra.mxu0 %v2019
  %v2021 = vpop.f32.mrf.mxu0
  %v2022 = vadd.f32 %v1945, %v2021
  %v2023 = vand.u32 %v50, 4294901760
  %v2024 = vsub.f32 %v50, %v2023
  %v2025 = vand.u32 %v2024, 4294901760
  %v2026 = vsub.f32 %v2024, %v2025
  %v2027 = vand.u32 %v2026, 4294901760
  %2028 = vmatmul.f32.gmra.mxu0 %v2027
  %v2029 = vpop.f32.mrf.mxu0
  %v2030 = vadd.f32 %v1949, %v2029
  %v2031 = vand.u32 %v56, 4294901760
  %v2032 = vsub.f32 %v56, %v2031
  %v2033 = vand.u32 %v2032, 4294901760
  %v2034 = vsub.f32 %v2032, %v2033
  %v2035 = vand.u32 %v2034, 4294901760
  %2036 = vmatmul.f32.gmra.mxu0 %v2035
  %v2037 = vpop.f32.mrf.mxu0
  %v2038 = vadd.f32 %v1953, %v2037
  %v2039 = vand.u32 %v62, 4294901760
  %v2040 = vsub.f32 %v62, %v2039
  %v2041 = vand.u32 %v2040, 4294901760
  %v2042 = vsub.f32 %v2040, %v2041
  %v2043 = vand.u32 %v2042, 4294901760
  %2044 = vmatmul.f32.gmra.mxu0 %v2043
  %v2045 = vpop.f32.mrf.mxu0
  %v2046 = vadd.f32 %v1957, %v2045
  %v2047 = vand.u32 %v68, 4294901760
  %v2048 = vsub.f32 %v68, %v2047
  %v2049 = vand.u32 %v2048, 4294901760
  %v2050 = vsub.f32 %v2048, %v2049
  %v2051 = vand.u32 %v2050, 4294901760
  %2052 = vmatmul.f32.gmra.mxu0 %v2051
  %v2053 = vpop.f32.mrf.mxu0
  %v2054 = vadd.f32 %v1961, %v2053
  %v2055 = vand.u32 %v74, 4294901760
  %v2056 = vsub.f32 %v74, %v2055
  %v2057 = vand.u32 %v2056, 4294901760
  %v2058 = vsub.f32 %v2056, %v2057
  %v2059 = vand.u32 %v2058, 4294901760
  %2060 = vmatmul.f32.gmra.mxu0 %v2059
  %v2061 = vpop.f32.mrf.mxu0
  %v2062 = vadd.f32 %v1965, %v2061
  %2063 = vdwg.mxu0
  %v2064 = vand.u32 %v203, 4294901760
  %v2065 = vsub.f32 %v203, %v2064
  %v2066 = vand.u32 %v2065, 4294901760
  %v2067 = vsub.f32 %v2065, %v2066
  %v2068 = vand.u32 %v2067, 4294901760
  %2069 = vmatpush.msra.mxu0 %v2068
  %v2070 = vand.u32 %v201, 4294901760
  %v2071 = vsub.f32 %v201, %v2070
  %v2072 = vand.u32 %v2071, 4294901760
  %v2073 = vsub.f32 %v2071, %v2072
  %v2074 = vand.u32 %v2073, 4294901760
  %2075 = vmatpush.msra.mxu0 %v2074
  %v2076 = vand.u32 %v199, 4294901760
  %v2077 = vsub.f32 %v199, %v2076
  %v2078 = vand.u32 %v2077, 4294901760
  %v2079 = vsub.f32 %v2077, %v2078
  %v2080 = vand.u32 %v2079, 4294901760
  %2081 = vmatpush.msra.mxu0 %v2080
  %v2082 = vand.u32 %v197, 4294901760
  %v2083 = vsub.f32 %v197, %v2082
  %v2084 = vand.u32 %v2083, 4294901760
  %v2085 = vsub.f32 %v2083, %v2084
  %v2086 = vand.u32 %v2085, 4294901760
  %2087 = vmatpush.msra.mxu0 %v2086
  %v2088 = vand.u32 %v195, 4294901760
  %v2089 = vsub.f32 %v195, %v2088
  %v2090 = vand.u32 %v2089, 4294901760
  %v2091 = vsub.f32 %v2089, %v2090
  %v2092 = vand.u32 %v2091, 4294901760
  %2093 = vmatpush.msra.mxu0 %v2092
  %v2094 = vand.u32 %v193, 4294901760
  %v2095 = vsub.f32 %v193, %v2094
  %v2096 = vand.u32 %v2095, 4294901760
  %v2097 = vsub.f32 %v2095, %v2096
  %v2098 = vand.u32 %v2097, 4294901760
  %2099 = vmatpush.msra.mxu0 %v2098
  %v2100 = vand.u32 %v191, 4294901760
  %v2101 = vsub.f32 %v191, %v2100
  %v2102 = vand.u32 %v2101, 4294901760
  %v2103 = vsub.f32 %v2101, %v2102
  %v2104 = vand.u32 %v2103, 4294901760
  %2105 = vmatpush.msra.mxu0 %v2104
  %v2106 = vand.u32 %v189, 4294901760
  %v2107 = vsub.f32 %v189, %v2106
  %v2108 = vand.u32 %v2107, 4294901760
  %v2109 = vsub.f32 %v2107, %v2108
  %v2110 = vand.u32 %v2109, 4294901760
  %2111 = vmatpush.msra.mxu0 %v2110
  %v2112 = vand.u32 %v187, 4294901760
  %v2113 = vsub.f32 %v187, %v2112
  %v2114 = vand.u32 %v2113, 4294901760
  %v2115 = vsub.f32 %v2113, %v2114
  %v2116 = vand.u32 %v2115, 4294901760
  %2117 = vmatpush.msra.mxu0 %v2116
  %v2118 = vand.u32 %v185, 4294901760
  %v2119 = vsub.f32 %v185, %v2118
  %v2120 = vand.u32 %v2119, 4294901760
  %v2121 = vsub.f32 %v2119, %v2120
  %v2122 = vand.u32 %v2121, 4294901760
  %2123 = vmatpush.msra.mxu0 %v2122
  %v2124 = vand.u32 %v183, 4294901760
  %v2125 = vsub.f32 %v183, %v2124
  %v2126 = vand.u32 %v2125, 4294901760
  %v2127 = vsub.f32 %v2125, %v2126
  %v2128 = vand.u32 %v2127, 4294901760
  %2129 = vmatpush.msra.mxu0 %v2128
  %v2130 = vand.u32 %v181, 4294901760
  %v2131 = vsub.f32 %v181, %v2130
  %v2132 = vand.u32 %v2131, 4294901760
  %v2133 = vsub.f32 %v2131, %v2132
  %v2134 = vand.u32 %v2133, 4294901760
  %2135 = vmatpush.msra.mxu0 %v2134
  %v2136 = vand.u32 %v179, 4294901760
  %v2137 = vsub.f32 %v179, %v2136
  %v2138 = vand.u32 %v2137, 4294901760
  %v2139 = vsub.f32 %v2137, %v2138
  %v2140 = vand.u32 %v2139, 4294901760
  %2141 = vmatpush.msra.mxu0 %v2140
  %v2142 = vand.u32 %v177, 4294901760
  %v2143 = vsub.f32 %v177, %v2142
  %v2144 = vand.u32 %v2143, 4294901760
  %v2145 = vsub.f32 %v2143, %v2144
  %v2146 = vand.u32 %v2145, 4294901760
  %2147 = vmatpush.msra.mxu0 %v2146
  %v2148 = vand.u32 %v175, 4294901760
  %v2149 = vsub.f32 %v175, %v2148
  %v2150 = vand.u32 %v2149, 4294901760
  %v2151 = vsub.f32 %v2149, %v2150
  %v2152 = vand.u32 %v2151, 4294901760
  %2153 = vmatpush.msra.mxu0 %v2152
  %v2154 = vand.u32 %v173, 4294901760
  %v2155 = vsub.f32 %v173, %v2154
  %v2156 = vand.u32 %v2155, 4294901760
  %v2157 = vsub.f32 %v2155, %v2156
  %v2158 = vand.u32 %v2157, 4294901760
  %2159 = vmatpush.msra.mxu0 %v2158
  %v2160 = vand.u32 %v32, 4294901760
  %2161 = vmatmul.f32.gmra.mxu0 %v2160
  %v2162 = vpop.f32.mrf.mxu0
  %v2163 = vadd.f32 %v2006, %v2162
  %v2164 = vand.u32 %v38, 4294901760
  %2165 = vmatmul.f32.gmra.mxu0 %v2164
  %v2166 = vpop.f32.mrf.mxu0
  %v2167 = vadd.f32 %v2014, %v2166
  %v2168 = vand.u32 %v44, 4294901760
  %2169 = vmatmul.f32.gmra.mxu0 %v2168
  %v2170 = vpop.f32.mrf.mxu0
  %v2171 = vadd.f32 %v2022, %v2170
  %v2172 = vand.u32 %v50, 4294901760
  %2173 = vmatmul.f32.gmra.mxu0 %v2172
  %v2174 = vpop.f32.mrf.mxu0
  %v2175 = vadd.f32 %v2030, %v2174
  %v2176 = vand.u32 %v56, 4294901760
  %2177 = vmatmul.f32.gmra.mxu0 %v2176
  %v2178 = vpop.f32.mrf.mxu0
  %v2179 = vadd.f32 %v2038, %v2178
  %v2180 = vand.u32 %v62, 4294901760
  %2181 = vmatmul.f32.gmra.mxu0 %v2180
  %v2182 = vpop.f32.mrf.mxu0
  %v2183 = vadd.f32 %v2046, %v2182
  %v2184 = vand.u32 %v68, 4294901760
  %2185 = vmatmul.f32.gmra.mxu0 %v2184
  %v2186 = vpop.f32.mrf.mxu0
  %v2187 = vadd.f32 %v2054, %v2186
  %v2188 = vand.u32 %v74, 4294901760
  %2189 = vmatmul.f32.gmra.mxu0 %v2188
  %v2190 = vpop.f32.mrf.mxu0
  %v2191 = vadd.f32 %v2062, %v2190
  %2192 = vdwg.mxu0
  %v2193 = vand.u32 %v203, 4294901760
  %v2194 = vsub.f32 %v203, %v2193
  %2195 = vmatpush.msra.mxu0 %v2194
  %v2196 = vand.u32 %v201, 4294901760
  %v2197 = vsub.f32 %v201, %v2196
  %2198 = vmatpush.msra.mxu0 %v2197
  %v2199 = vand.u32 %v199, 4294901760
  %v2200 = vsub.f32 %v199, %v2199
  %2201 = vmatpush.msra.mxu0 %v2200
  %v2202 = vand.u32 %v197, 4294901760
  %v2203 = vsub.f32 %v197, %v2202
  %2204 = vmatpush.msra.mxu0 %v2203
  %v2205 = vand.u32 %v195, 4294901760
  %v2206 = vsub.f32 %v195, %v2205
  %2207 = vmatpush.msra.mxu0 %v2206
  %v2208 = vand.u32 %v193, 4294901760
  %v2209 = vsub.f32 %v193, %v2208
  %2210 = vmatpush.msra.mxu0 %v2209
  %v2211 = vand.u32 %v191, 4294901760
  %v2212 = vsub.f32 %v191, %v2211
  %2213 = vmatpush.msra.mxu0 %v2212
  %v2214 = vand.u32 %v189, 4294901760
  %v2215 = vsub.f32 %v189, %v2214
  %2216 = vmatpush.msra.mxu0 %v2215
  %v2217 = vand.u32 %v187, 4294901760
  %v2218 = vsub.f32 %v187, %v2217
  %2219 = vmatpush.msra.mxu0 %v2218
  %v2220 = vand.u32 %v185, 4294901760
  %v2221 = vsub.f32 %v185, %v2220
  %2222 = vmatpush.msra.mxu0 %v2221
  %v2223 = vand.u32 %v183, 4294901760
  %v2224 = vsub.f32 %v183, %v2223
  %2225 = vmatpush.msra.mxu0 %v2224
  %v2226 = vand.u32 %v181, 4294901760
  %v2227 = vsub.f32 %v181, %v2226
  %2228 = vmatpush.msra.mxu0 %v2227
  %v2229 = vand.u32 %v179, 4294901760
  %v2230 = vsub.f32 %v179, %v2229
  %2231 = vmatpush.msra.mxu0 %v2230
  %v2232 = vand.u32 %v177, 4294901760
  %v2233 = vsub.f32 %v177, %v2232
  %2234 = vmatpush.msra.mxu0 %v2233
  %v2235 = vand.u32 %v175, 4294901760
  %v2236 = vsub.f32 %v175, %v2235
  %2237 = vmatpush.msra.mxu0 %v2236
  %v2238 = vand.u32 %v173, 4294901760
  %v2239 = vsub.f32 %v173, %v2238
  %2240 = vmatpush.msra.mxu0 %v2239
  %v2241 = vand.u32 %v32, 4294901760
  %v2242 = vsub.f32 %v32, %v2241
  %2243 = vmatmul.f32.gmra.mxu0 %v2242
  %v2244 = vpop.f32.mrf.mxu0
  %v2245 = vadd.f32 %v2163, %v2244
  %v2246 = vand.u32 %v38, 4294901760
  %v2247 = vsub.f32 %v38, %v2246
  %2248 = vmatmul.f32.gmra.mxu0 %v2247
  %v2249 = vpop.f32.mrf.mxu0
  %v2250 = vadd.f32 %v2167, %v2249
  %v2251 = vand.u32 %v44, 4294901760
  %v2252 = vsub.f32 %v44, %v2251
  %2253 = vmatmul.f32.gmra.mxu0 %v2252
  %v2254 = vpop.f32.mrf.mxu0
  %v2255 = vadd.f32 %v2171, %v2254
  %v2256 = vand.u32 %v50, 4294901760
  %v2257 = vsub.f32 %v50, %v2256
  %2258 = vmatmul.f32.gmra.mxu0 %v2257
  %v2259 = vpop.f32.mrf.mxu0
  %v2260 = vadd.f32 %v2175, %v2259
  %v2261 = vand.u32 %v56, 4294901760
  %v2262 = vsub.f32 %v56, %v2261
  %2263 = vmatmul.f32.gmra.mxu0 %v2262
  %v2264 = vpop.f32.mrf.mxu0
  %v2265 = vadd.f32 %v2179, %v2264
  %v2266 = vand.u32 %v62, 4294901760
  %v2267 = vsub.f32 %v62, %v2266
  %2268 = vmatmul.f32.gmra.mxu0 %v2267
  %v2269 = vpop.f32.mrf.mxu0
  %v2270 = vadd.f32 %v2183, %v2269
  %v2271 = vand.u32 %v68, 4294901760
  %v2272 = vsub.f32 %v68, %v2271
  %2273 = vmatmul.f32.gmra.mxu0 %v2272
  %v2274 = vpop.f32.mrf.mxu0
  %v2275 = vadd.f32 %v2187, %v2274
  %v2276 = vand.u32 %v74, 4294901760
  %v2277 = vsub.f32 %v74, %v2276
  %2278 = vmatmul.f32.gmra.mxu0 %v2277
  %v2279 = vpop.f32.mrf.mxu0
  %v2280 = vadd.f32 %v2191, %v2279
  %2281 = vdwg.mxu0
  %v2282 = vand.u32 %v203, 4294901760
  %2283 = vmatpush.msra.mxu0 %v2282
  %v2284 = vand.u32 %v201, 4294901760
  %2285 = vmatpush.msra.mxu0 %v2284
  %v2286 = vand.u32 %v199, 4294901760
  %2287 = vmatpush.msra.mxu0 %v2286
  %v2288 = vand.u32 %v197, 4294901760
  %2289 = vmatpush.msra.mxu0 %v2288
  %v2290 = vand.u32 %v195, 4294901760
  %2291 = vmatpush.msra.mxu0 %v2290
  %v2292 = vand.u32 %v193, 4294901760
  %2293 = vmatpush.msra.mxu0 %v2292
  %v2294 = vand.u32 %v191, 4294901760
  %2295 = vmatpush.msra.mxu0 %v2294
  %v2296 = vand.u32 %v189, 4294901760
  %2297 = vmatpush.msra.mxu0 %v2296
  %v2298 = vand.u32 %v187, 4294901760
  %2299 = vmatpush.msra.mxu0 %v2298
  %v2300 = vand.u32 %v185, 4294901760
  %2301 = vmatpush.msra.mxu0 %v2300
  %v2302 = vand.u32 %v183, 4294901760
  %2303 = vmatpush.msra.mxu0 %v2302
  %v2304 = vand.u32 %v181, 4294901760
  %2305 = vmatpush.msra.mxu0 %v2304
  %v2306 = vand.u32 %v179, 4294901760
  %2307 = vmatpush.msra.mxu0 %v2306
  %v2308 = vand.u32 %v177, 4294901760
  %2309 = vmatpush.msra.mxu0 %v2308
  %v2310 = vand.u32 %v175, 4294901760
  %2311 = vmatpush.msra.mxu0 %v2310
  %v2312 = vand.u32 %v173, 4294901760
  %2313 = vmatpush.msra.mxu0 %v2312
  %v2314 = vand.u32 %v32, 4294901760
  %v2315 = vsub.f32 %v32, %v2314
  %v2316 = vand.u32 %v2315, 4294901760
  %2317 = vmatmul.f32.gmra.mxu0 %v2316
  %v2318 = vpop.f32.mrf.mxu0
  %v2319 = vadd.f32 %v2245, %v2318
  %v2320 = vand.u32 %v38, 4294901760
  %v2321 = vsub.f32 %v38, %v2320
  %v2322 = vand.u32 %v2321, 4294901760
  %2323 = vmatmul.f32.gmra.mxu0 %v2322
  %v2324 = vpop.f32.mrf.mxu0
  %v2325 = vadd.f32 %v2250, %v2324
  %v2326 = vand.u32 %v44, 4294901760
  %v2327 = vsub.f32 %v44, %v2326
  %v2328 = vand.u32 %v2327, 4294901760
  %2329 = vmatmul.f32.gmra.mxu0 %v2328
  %v2330 = vpop.f32.mrf.mxu0
  %v2331 = vadd.f32 %v2255, %v2330
  %v2332 = vand.u32 %v50, 4294901760
  %v2333 = vsub.f32 %v50, %v2332
  %v2334 = vand.u32 %v2333, 4294901760
  %2335 = vmatmul.f32.gmra.mxu0 %v2334
  %v2336 = vpop.f32.mrf.mxu0
  %v2337 = vadd.f32 %v2260, %v2336
  %v2338 = vand.u32 %v56, 4294901760
  %v2339 = vsub.f32 %v56, %v2338
  %v2340 = vand.u32 %v2339, 4294901760
  %2341 = vmatmul.f32.gmra.mxu0 %v2340
  %v2342 = vpop.f32.mrf.mxu0
  %v2343 = vadd.f32 %v2265, %v2342
  %v2344 = vand.u32 %v62, 4294901760
  %v2345 = vsub.f32 %v62, %v2344
  %v2346 = vand.u32 %v2345, 4294901760
  %2347 = vmatmul.f32.gmra.mxu0 %v2346
  %v2348 = vpop.f32.mrf.mxu0
  %v2349 = vadd.f32 %v2270, %v2348
  %v2350 = vand.u32 %v68, 4294901760
  %v2351 = vsub.f32 %v68, %v2350
  %v2352 = vand.u32 %v2351, 4294901760
  %2353 = vmatmul.f32.gmra.mxu0 %v2352
  %v2354 = vpop.f32.mrf.mxu0
  %v2355 = vadd.f32 %v2275, %v2354
  %v2356 = vand.u32 %v74, 4294901760
  %v2357 = vsub.f32 %v74, %v2356
  %v2358 = vand.u32 %v2357, 4294901760
  %2359 = vmatmul.f32.gmra.mxu0 %v2358
  %v2360 = vpop.f32.mrf.mxu0
  %v2361 = vadd.f32 %v2280, %v2360
  %2362 = vdwg.mxu0
  %v2363 = vand.u32 %v203, 4294901760
  %v2364 = vsub.f32 %v203, %v2363
  %v2365 = vand.u32 %v2364, 4294901760
  %2366 = vmatpush.msra.mxu0 %v2365
  %v2367 = vand.u32 %v201, 4294901760
  %v2368 = vsub.f32 %v201, %v2367
  %v2369 = vand.u32 %v2368, 4294901760
  %2370 = vmatpush.msra.mxu0 %v2369
  %v2371 = vand.u32 %v199, 4294901760
  %v2372 = vsub.f32 %v199, %v2371
  %v2373 = vand.u32 %v2372, 4294901760
  %2374 = vmatpush.msra.mxu0 %v2373
  %v2375 = vand.u32 %v197, 4294901760
  %v2376 = vsub.f32 %v197, %v2375
  %v2377 = vand.u32 %v2376, 4294901760
  %2378 = vmatpush.msra.mxu0 %v2377
  %v2379 = vand.u32 %v195, 4294901760
  %v2380 = vsub.f32 %v195, %v2379
  %v2381 = vand.u32 %v2380, 4294901760
  %2382 = vmatpush.msra.mxu0 %v2381
  %v2383 = vand.u32 %v193, 4294901760
  %v2384 = vsub.f32 %v193, %v2383
  %v2385 = vand.u32 %v2384, 4294901760
  %2386 = vmatpush.msra.mxu0 %v2385
  %v2387 = vand.u32 %v191, 4294901760
  %v2388 = vsub.f32 %v191, %v2387
  %v2389 = vand.u32 %v2388, 4294901760
  %2390 = vmatpush.msra.mxu0 %v2389
  %v2391 = vand.u32 %v189, 4294901760
  %v2392 = vsub.f32 %v189, %v2391
  %v2393 = vand.u32 %v2392, 4294901760
  %2394 = vmatpush.msra.mxu0 %v2393
  %v2395 = vand.u32 %v187, 4294901760
  %v2396 = vsub.f32 %v187, %v2395
  %v2397 = vand.u32 %v2396, 4294901760
  %2398 = vmatpush.msra.mxu0 %v2397
  %v2399 = vand.u32 %v185, 4294901760
  %v2400 = vsub.f32 %v185, %v2399
  %v2401 = vand.u32 %v2400, 4294901760
  %2402 = vmatpush.msra.mxu0 %v2401
  %v2403 = vand.u32 %v183, 4294901760
  %v2404 = vsub.f32 %v183, %v2403
  %v2405 = vand.u32 %v2404, 4294901760
  %2406 = vmatpush.msra.mxu0 %v2405
  %v2407 = vand.u32 %v181, 4294901760
  %v2408 = vsub.f32 %v181, %v2407
  %v2409 = vand.u32 %v2408, 4294901760
  %2410 = vmatpush.msra.mxu0 %v2409
  %v2411 = vand.u32 %v179, 4294901760
  %v2412 = vsub.f32 %v179, %v2411
  %v2413 = vand.u32 %v2412, 4294901760
  %2414 = vmatpush.msra.mxu0 %v2413
  %v2415 = vand.u32 %v177, 4294901760
  %v2416 = vsub.f32 %v177, %v2415
  %v2417 = vand.u32 %v2416, 4294901760
  %2418 = vmatpush.msra.mxu0 %v2417
  %v2419 = vand.u32 %v175, 4294901760
  %v2420 = vsub.f32 %v175, %v2419
  %v2421 = vand.u32 %v2420, 4294901760
  %2422 = vmatpush.msra.mxu0 %v2421
  %v2423 = vand.u32 %v173, 4294901760
  %v2424 = vsub.f32 %v173, %v2423
  %v2425 = vand.u32 %v2424, 4294901760
  %2426 = vmatpush.msra.mxu0 %v2425
  %v2427 = vand.u32 %v32, 4294901760
  %2428 = vmatmul.f32.gmra.mxu0 %v2427
  %v2429 = vpop.f32.mrf.mxu0
  %v2430 = vadd.f32 %v2319, %v2429
  %v2431 = vand.u32 %v38, 4294901760
  %2432 = vmatmul.f32.gmra.mxu0 %v2431
  %v2433 = vpop.f32.mrf.mxu0
  %v2434 = vadd.f32 %v2325, %v2433
  %v2435 = vand.u32 %v44, 4294901760
  %2436 = vmatmul.f32.gmra.mxu0 %v2435
  %v2437 = vpop.f32.mrf.mxu0
  %v2438 = vadd.f32 %v2331, %v2437
  %v2439 = vand.u32 %v50, 4294901760
  %2440 = vmatmul.f32.gmra.mxu0 %v2439
  %v2441 = vpop.f32.mrf.mxu0
  %v2442 = vadd.f32 %v2337, %v2441
  %v2443 = vand.u32 %v56, 4294901760
  %2444 = vmatmul.f32.gmra.mxu0 %v2443
  %v2445 = vpop.f32.mrf.mxu0
  %v2446 = vadd.f32 %v2343, %v2445
  %v2447 = vand.u32 %v62, 4294901760
  %2448 = vmatmul.f32.gmra.mxu0 %v2447
  %v2449 = vpop.f32.mrf.mxu0
  %v2450 = vadd.f32 %v2349, %v2449
  %v2451 = vand.u32 %v68, 4294901760
  %2452 = vmatmul.f32.gmra.mxu0 %v2451
  %v2453 = vpop.f32.mrf.mxu0
  %v2454 = vadd.f32 %v2355, %v2453
  %v2455 = vand.u32 %v74, 4294901760
  %2456 = vmatmul.f32.gmra.mxu0 %v2455
  %v2457 = vpop.f32.mrf.mxu0
  %v2458 = vadd.f32 %v2361, %v2457
  %2459 = vdwg.mxu0
  %v2460 = vand.u32 %v203, 4294901760
  %2461 = vmatpush.msra.mxu0 %v2460
  %v2462 = vand.u32 %v201, 4294901760
  %2463 = vmatpush.msra.mxu0 %v2462
  %v2464 = vand.u32 %v199, 4294901760
  %2465 = vmatpush.msra.mxu0 %v2464
  %v2466 = vand.u32 %v197, 4294901760
  %2467 = vmatpush.msra.mxu0 %v2466
  %v2468 = vand.u32 %v195, 4294901760
  %2469 = vmatpush.msra.mxu0 %v2468
  %v2470 = vand.u32 %v193, 4294901760
  %2471 = vmatpush.msra.mxu0 %v2470
  %v2472 = vand.u32 %v191, 4294901760
  %2473 = vmatpush.msra.mxu0 %v2472
  %v2474 = vand.u32 %v189, 4294901760
  %2475 = vmatpush.msra.mxu0 %v2474
  %v2476 = vand.u32 %v187, 4294901760
  %2477 = vmatpush.msra.mxu0 %v2476
  %v2478 = vand.u32 %v185, 4294901760
  %2479 = vmatpush.msra.mxu0 %v2478
  %v2480 = vand.u32 %v183, 4294901760
  %2481 = vmatpush.msra.mxu0 %v2480
  %v2482 = vand.u32 %v181, 4294901760
  %2483 = vmatpush.msra.mxu0 %v2482
  %v2484 = vand.u32 %v179, 4294901760
  %2485 = vmatpush.msra.mxu0 %v2484
  %v2486 = vand.u32 %v177, 4294901760
  %2487 = vmatpush.msra.mxu0 %v2486
  %v2488 = vand.u32 %v175, 4294901760
  %2489 = vmatpush.msra.mxu0 %v2488
  %v2490 = vand.u32 %v173, 4294901760
  %2491 = vmatpush.msra.mxu0 %v2490
  %v2492 = vand.u32 %v32, 4294901760
  %2493 = vmatmul.f32.gmra.mxu0 %v2492
  %v2494 = vpop.f32.mrf.mxu0
  %v2495 = vadd.f32 %v2430, %v2494
  %v2496 = vand.u32 %v38, 4294901760
  %2497 = vmatmul.f32.gmra.mxu0 %v2496
  %v2498 = vpop.f32.mrf.mxu0
  %v2499 = vadd.f32 %v2434, %v2498
  %v2500 = vand.u32 %v44, 4294901760
  %2501 = vmatmul.f32.gmra.mxu0 %v2500
  %v2502 = vpop.f32.mrf.mxu0
  %v2503 = vadd.f32 %v2438, %v2502
  %v2504 = vand.u32 %v50, 4294901760
  %2505 = vmatmul.f32.gmra.mxu0 %v2504
  %v2506 = vpop.f32.mrf.mxu0
  %v2507 = vadd.f32 %v2442, %v2506
  %v2508 = vand.u32 %v56, 4294901760
  %2509 = vmatmul.f32.gmra.mxu0 %v2508
  %v2510 = vpop.f32.mrf.mxu0
  %v2511 = vadd.f32 %v2446, %v2510
  %v2512 = vand.u32 %v62, 4294901760
  %2513 = vmatmul.f32.gmra.mxu0 %v2512
  %v2514 = vpop.f32.mrf.mxu0
  %v2515 = vadd.f32 %v2450, %v2514
  %v2516 = vand.u32 %v68, 4294901760
  %2517 = vmatmul.f32.gmra.mxu0 %v2516
  %v2518 = vpop.f32.mrf.mxu0
  %v2519 = vadd.f32 %v2454, %v2518
  %v2520 = vand.u32 %v74, 4294901760
  %2521 = vmatmul.f32.gmra.mxu0 %v2520
  %v2522 = vpop.f32.mrf.mxu0
  %v2523 = vadd.f32 %v2458, %v2522
  %2524 = vdwg.mxu0
  %v2525 = vand.u32 %v235, 4294901760
  %2526 = vmatpush.msra.mxu0 %v2525
  %v2527 = vand.u32 %v233, 4294901760
  %2528 = vmatpush.msra.mxu0 %v2527
  %v2529 = vand.u32 %v231, 4294901760
  %2530 = vmatpush.msra.mxu0 %v2529
  %v2531 = vand.u32 %v229, 4294901760
  %2532 = vmatpush.msra.mxu0 %v2531
  %v2533 = vand.u32 %v227, 4294901760
  %2534 = vmatpush.msra.mxu0 %v2533
  %v2535 = vand.u32 %v225, 4294901760
  %2536 = vmatpush.msra.mxu0 %v2535
  %v2537 = vand.u32 %v223, 4294901760
  %2538 = vmatpush.msra.mxu0 %v2537
  %v2539 = vand.u32 %v221, 4294901760
  %2540 = vmatpush.msra.mxu0 %v2539
  %v2541 = vand.u32 %v219, 4294901760
  %2542 = vmatpush.msra.mxu0 %v2541
  %v2543 = vand.u32 %v217, 4294901760
  %2544 = vmatpush.msra.mxu0 %v2543
  %v2545 = vand.u32 %v215, 4294901760
  %2546 = vmatpush.msra.mxu0 %v2545
  %v2547 = vand.u32 %v213, 4294901760
  %2548 = vmatpush.msra.mxu0 %v2547
  %v2549 = vand.u32 %v211, 4294901760
  %2550 = vmatpush.msra.mxu0 %v2549
  %v2551 = vand.u32 %v209, 4294901760
  %2552 = vmatpush.msra.mxu0 %v2551
  %v2553 = vand.u32 %v207, 4294901760
  %2554 = vmatpush.msra.mxu0 %v2553
  %v2555 = vand.u32 %v205, 4294901760
  %2556 = vmatpush.msra.mxu0 %v2555
  %v2557 = vand.u32 %v33, 4294901760
  %v2558 = vsub.f32 %v33, %v2557
  %v2559 = vand.u32 %v2558, 4294901760
  %v2560 = vsub.f32 %v2558, %v2559
  %v2561 = vand.u32 %v2560, 4294901760
  %2562 = vmatmul.f32.gmra.mxu0 %v2561
  %v2563 = vpop.f32.mrf.mxu0
  %v2564 = vadd.f32 %v2495, %v2563
  %v2565 = vand.u32 %v39, 4294901760
  %v2566 = vsub.f32 %v39, %v2565
  %v2567 = vand.u32 %v2566, 4294901760
  %v2568 = vsub.f32 %v2566, %v2567
  %v2569 = vand.u32 %v2568, 4294901760
  %2570 = vmatmul.f32.gmra.mxu0 %v2569
  %v2571 = vpop.f32.mrf.mxu0
  %v2572 = vadd.f32 %v2499, %v2571
  %v2573 = vand.u32 %v45, 4294901760
  %v2574 = vsub.f32 %v45, %v2573
  %v2575 = vand.u32 %v2574, 4294901760
  %v2576 = vsub.f32 %v2574, %v2575
  %v2577 = vand.u32 %v2576, 4294901760
  %2578 = vmatmul.f32.gmra.mxu0 %v2577
  %v2579 = vpop.f32.mrf.mxu0
  %v2580 = vadd.f32 %v2503, %v2579
  %v2581 = vand.u32 %v51, 4294901760
  %v2582 = vsub.f32 %v51, %v2581
  %v2583 = vand.u32 %v2582, 4294901760
  %v2584 = vsub.f32 %v2582, %v2583
  %v2585 = vand.u32 %v2584, 4294901760
  %2586 = vmatmul.f32.gmra.mxu0 %v2585
  %v2587 = vpop.f32.mrf.mxu0
  %v2588 = vadd.f32 %v2507, %v2587
  %v2589 = vand.u32 %v57, 4294901760
  %v2590 = vsub.f32 %v57, %v2589
  %v2591 = vand.u32 %v2590, 4294901760
  %v2592 = vsub.f32 %v2590, %v2591
  %v2593 = vand.u32 %v2592, 4294901760
  %2594 = vmatmul.f32.gmra.mxu0 %v2593
  %v2595 = vpop.f32.mrf.mxu0
  %v2596 = vadd.f32 %v2511, %v2595
  %v2597 = vand.u32 %v63, 4294901760
  %v2598 = vsub.f32 %v63, %v2597
  %v2599 = vand.u32 %v2598, 4294901760
  %v2600 = vsub.f32 %v2598, %v2599
  %v2601 = vand.u32 %v2600, 4294901760
  %2602 = vmatmul.f32.gmra.mxu0 %v2601
  %v2603 = vpop.f32.mrf.mxu0
  %v2604 = vadd.f32 %v2515, %v2603
  %v2605 = vand.u32 %v69, 4294901760
  %v2606 = vsub.f32 %v69, %v2605
  %v2607 = vand.u32 %v2606, 4294901760
  %v2608 = vsub.f32 %v2606, %v2607
  %v2609 = vand.u32 %v2608, 4294901760
  %2610 = vmatmul.f32.gmra.mxu0 %v2609
  %v2611 = vpop.f32.mrf.mxu0
  %v2612 = vadd.f32 %v2519, %v2611
  %v2613 = vand.u32 %v75, 4294901760
  %v2614 = vsub.f32 %v75, %v2613
  %v2615 = vand.u32 %v2614, 4294901760
  %v2616 = vsub.f32 %v2614, %v2615
  %v2617 = vand.u32 %v2616, 4294901760
  %2618 = vmatmul.f32.gmra.mxu0 %v2617
  %v2619 = vpop.f32.mrf.mxu0
  %v2620 = vadd.f32 %v2523, %v2619
  %2621 = vdwg.mxu0
  %v2622 = vand.u32 %v235, 4294901760
  %v2623 = vsub.f32 %v235, %v2622
  %v2624 = vand.u32 %v2623, 4294901760
  %v2625 = vsub.f32 %v2623, %v2624
  %v2626 = vand.u32 %v2625, 4294901760
  %2627 = vmatpush.msra.mxu0 %v2626
  %v2628 = vand.u32 %v233, 4294901760
  %v2629 = vsub.f32 %v233, %v2628
  %v2630 = vand.u32 %v2629, 4294901760
  %v2631 = vsub.f32 %v2629, %v2630
  %v2632 = vand.u32 %v2631, 4294901760
  %2633 = vmatpush.msra.mxu0 %v2632
  %v2634 = vand.u32 %v231, 4294901760
  %v2635 = vsub.f32 %v231, %v2634
  %v2636 = vand.u32 %v2635, 4294901760
  %v2637 = vsub.f32 %v2635, %v2636
  %v2638 = vand.u32 %v2637, 4294901760
  %2639 = vmatpush.msra.mxu0 %v2638
  %v2640 = vand.u32 %v229, 4294901760
  %v2641 = vsub.f32 %v229, %v2640
  %v2642 = vand.u32 %v2641, 4294901760
  %v2643 = vsub.f32 %v2641, %v2642
  %v2644 = vand.u32 %v2643, 4294901760
  %2645 = vmatpush.msra.mxu0 %v2644
  %v2646 = vand.u32 %v227, 4294901760
  %v2647 = vsub.f32 %v227, %v2646
  %v2648 = vand.u32 %v2647, 4294901760
  %v2649 = vsub.f32 %v2647, %v2648
  %v2650 = vand.u32 %v2649, 4294901760
  %2651 = vmatpush.msra.mxu0 %v2650
  %v2652 = vand.u32 %v225, 4294901760
  %v2653 = vsub.f32 %v225, %v2652
  %v2654 = vand.u32 %v2653, 4294901760
  %v2655 = vsub.f32 %v2653, %v2654
  %v2656 = vand.u32 %v2655, 4294901760
  %2657 = vmatpush.msra.mxu0 %v2656
  %v2658 = vand.u32 %v223, 4294901760
  %v2659 = vsub.f32 %v223, %v2658
  %v2660 = vand.u32 %v2659, 4294901760
  %v2661 = vsub.f32 %v2659, %v2660
  %v2662 = vand.u32 %v2661, 4294901760
  %2663 = vmatpush.msra.mxu0 %v2662
  %v2664 = vand.u32 %v221, 4294901760
  %v2665 = vsub.f32 %v221, %v2664
  %v2666 = vand.u32 %v2665, 4294901760
  %v2667 = vsub.f32 %v2665, %v2666
  %v2668 = vand.u32 %v2667, 4294901760
  %2669 = vmatpush.msra.mxu0 %v2668
  %v2670 = vand.u32 %v219, 4294901760
  %v2671 = vsub.f32 %v219, %v2670
  %v2672 = vand.u32 %v2671, 4294901760
  %v2673 = vsub.f32 %v2671, %v2672
  %v2674 = vand.u32 %v2673, 4294901760
  %2675 = vmatpush.msra.mxu0 %v2674
  %v2676 = vand.u32 %v217, 4294901760
  %v2677 = vsub.f32 %v217, %v2676
  %v2678 = vand.u32 %v2677, 4294901760
  %v2679 = vsub.f32 %v2677, %v2678
  %v2680 = vand.u32 %v2679, 4294901760
  %2681 = vmatpush.msra.mxu0 %v2680
  %v2682 = vand.u32 %v215, 4294901760
  %v2683 = vsub.f32 %v215, %v2682
  %v2684 = vand.u32 %v2683, 4294901760
  %v2685 = vsub.f32 %v2683, %v2684
  %v2686 = vand.u32 %v2685, 4294901760
  %2687 = vmatpush.msra.mxu0 %v2686
  %v2688 = vand.u32 %v213, 4294901760
  %v2689 = vsub.f32 %v213, %v2688
  %v2690 = vand.u32 %v2689, 4294901760
  %v2691 = vsub.f32 %v2689, %v2690
  %v2692 = vand.u32 %v2691, 4294901760
  %2693 = vmatpush.msra.mxu0 %v2692
  %v2694 = vand.u32 %v211, 4294901760
  %v2695 = vsub.f32 %v211, %v2694
  %v2696 = vand.u32 %v2695, 4294901760
  %v2697 = vsub.f32 %v2695, %v2696
  %v2698 = vand.u32 %v2697, 4294901760
  %2699 = vmatpush.msra.mxu0 %v2698
  %v2700 = vand.u32 %v209, 4294901760
  %v2701 = vsub.f32 %v209, %v2700
  %v2702 = vand.u32 %v2701, 4294901760
  %v2703 = vsub.f32 %v2701, %v2702
  %v2704 = vand.u32 %v2703, 4294901760
  %2705 = vmatpush.msra.mxu0 %v2704
  %v2706 = vand.u32 %v207, 4294901760
  %v2707 = vsub.f32 %v207, %v2706
  %v2708 = vand.u32 %v2707, 4294901760
  %v2709 = vsub.f32 %v2707, %v2708
  %v2710 = vand.u32 %v2709, 4294901760
  %2711 = vmatpush.msra.mxu0 %v2710
  %v2712 = vand.u32 %v205, 4294901760
  %v2713 = vsub.f32 %v205, %v2712
  %v2714 = vand.u32 %v2713, 4294901760
  %v2715 = vsub.f32 %v2713, %v2714
  %v2716 = vand.u32 %v2715, 4294901760
  %2717 = vmatpush.msra.mxu0 %v2716
  %v2718 = vand.u32 %v33, 4294901760
  %2719 = vmatmul.f32.gmra.mxu0 %v2718
  %v2720 = vpop.f32.mrf.mxu0
  %v2721 = vadd.f32 %v2564, %v2720
  %v2722 = vand.u32 %v39, 4294901760
  %2723 = vmatmul.f32.gmra.mxu0 %v2722
  %v2724 = vpop.f32.mrf.mxu0
  %v2725 = vadd.f32 %v2572, %v2724
  %v2726 = vand.u32 %v45, 4294901760
  %2727 = vmatmul.f32.gmra.mxu0 %v2726
  %v2728 = vpop.f32.mrf.mxu0
  %v2729 = vadd.f32 %v2580, %v2728
  %v2730 = vand.u32 %v51, 4294901760
  %2731 = vmatmul.f32.gmra.mxu0 %v2730
  %v2732 = vpop.f32.mrf.mxu0
  %v2733 = vadd.f32 %v2588, %v2732
  %v2734 = vand.u32 %v57, 4294901760
  %2735 = vmatmul.f32.gmra.mxu0 %v2734
  %v2736 = vpop.f32.mrf.mxu0
  %v2737 = vadd.f32 %v2596, %v2736
  %v2738 = vand.u32 %v63, 4294901760
  %2739 = vmatmul.f32.gmra.mxu0 %v2738
  %v2740 = vpop.f32.mrf.mxu0
  %v2741 = vadd.f32 %v2604, %v2740
  %v2742 = vand.u32 %v69, 4294901760
  %2743 = vmatmul.f32.gmra.mxu0 %v2742
  %v2744 = vpop.f32.mrf.mxu0
  %v2745 = vadd.f32 %v2612, %v2744
  %v2746 = vand.u32 %v75, 4294901760
  %2747 = vmatmul.f32.gmra.mxu0 %v2746
  %v2748 = vpop.f32.mrf.mxu0
  %v2749 = vadd.f32 %v2620, %v2748
  %2750 = vdwg.mxu0
  %v2751 = vand.u32 %v235, 4294901760
  %v2752 = vsub.f32 %v235, %v2751
  %2753 = vmatpush.msra.mxu0 %v2752
  %v2754 = vand.u32 %v233, 4294901760
  %v2755 = vsub.f32 %v233, %v2754
  %2756 = vmatpush.msra.mxu0 %v2755
  %v2757 = vand.u32 %v231, 4294901760
  %v2758 = vsub.f32 %v231, %v2757
  %2759 = vmatpush.msra.mxu0 %v2758
  %v2760 = vand.u32 %v229, 4294901760
  %v2761 = vsub.f32 %v229, %v2760
  %2762 = vmatpush.msra.mxu0 %v2761
  %v2763 = vand.u32 %v227, 4294901760
  %v2764 = vsub.f32 %v227, %v2763
  %2765 = vmatpush.msra.mxu0 %v2764
  %v2766 = vand.u32 %v225, 4294901760
  %v2767 = vsub.f32 %v225, %v2766
  %2768 = vmatpush.msra.mxu0 %v2767
  %v2769 = vand.u32 %v223, 4294901760
  %v2770 = vsub.f32 %v223, %v2769
  %2771 = vmatpush.msra.mxu0 %v2770
  %v2772 = vand.u32 %v221, 4294901760
  %v2773 = vsub.f32 %v221, %v2772
  %2774 = vmatpush.msra.mxu0 %v2773
  %v2775 = vand.u32 %v219, 4294901760
  %v2776 = vsub.f32 %v219, %v2775
  %2777 = vmatpush.msra.mxu0 %v2776
  %v2778 = vand.u32 %v217, 4294901760
  %v2779 = vsub.f32 %v217, %v2778
  %2780 = vmatpush.msra.mxu0 %v2779
  %v2781 = vand.u32 %v215, 4294901760
  %v2782 = vsub.f32 %v215, %v2781
  %2783 = vmatpush.msra.mxu0 %v2782
  %v2784 = vand.u32 %v213, 4294901760
  %v2785 = vsub.f32 %v213, %v2784
  %2786 = vmatpush.msra.mxu0 %v2785
  %v2787 = vand.u32 %v211, 4294901760
  %v2788 = vsub.f32 %v211, %v2787
  %2789 = vmatpush.msra.mxu0 %v2788
  %v2790 = vand.u32 %v209, 4294901760
  %v2791 = vsub.f32 %v209, %v2790
  %2792 = vmatpush.msra.mxu0 %v2791
  %v2793 = vand.u32 %v207, 4294901760
  %v2794 = vsub.f32 %v207, %v2793
  %2795 = vmatpush.msra.mxu0 %v2794
  %v2796 = vand.u32 %v205, 4294901760
  %v2797 = vsub.f32 %v205, %v2796
  %2798 = vmatpush.msra.mxu0 %v2797
  %v2799 = vand.u32 %v33, 4294901760
  %v2800 = vsub.f32 %v33, %v2799
  %2801 = vmatmul.f32.gmra.mxu0 %v2800
  %v2802 = vpop.f32.mrf.mxu0
  %v2803 = vadd.f32 %v2721, %v2802
  %v2804 = vand.u32 %v39, 4294901760
  %v2805 = vsub.f32 %v39, %v2804
  %2806 = vmatmul.f32.gmra.mxu0 %v2805
  %v2807 = vpop.f32.mrf.mxu0
  %v2808 = vadd.f32 %v2725, %v2807
  %v2809 = vand.u32 %v45, 4294901760
  %v2810 = vsub.f32 %v45, %v2809
  %2811 = vmatmul.f32.gmra.mxu0 %v2810
  %v2812 = vpop.f32.mrf.mxu0
  %v2813 = vadd.f32 %v2729, %v2812
  %v2814 = vand.u32 %v51, 4294901760
  %v2815 = vsub.f32 %v51, %v2814
  %2816 = vmatmul.f32.gmra.mxu0 %v2815
  %v2817 = vpop.f32.mrf.mxu0
  %v2818 = vadd.f32 %v2733, %v2817
  %v2819 = vand.u32 %v57, 4294901760
  %v2820 = vsub.f32 %v57, %v2819
  %2821 = vmatmul.f32.gmra.mxu0 %v2820
  %v2822 = vpop.f32.mrf.mxu0
  %v2823 = vadd.f32 %v2737, %v2822
  %v2824 = vand.u32 %v63, 4294901760
  %v2825 = vsub.f32 %v63, %v2824
  %2826 = vmatmul.f32.gmra.mxu0 %v2825
  %v2827 = vpop.f32.mrf.mxu0
  %v2828 = vadd.f32 %v2741, %v2827
  %v2829 = vand.u32 %v69, 4294901760
  %v2830 = vsub.f32 %v69, %v2829
  %2831 = vmatmul.f32.gmra.mxu0 %v2830
  %v2832 = vpop.f32.mrf.mxu0
  %v2833 = vadd.f32 %v2745, %v2832
  %v2834 = vand.u32 %v75, 4294901760
  %v2835 = vsub.f32 %v75, %v2834
  %2836 = vmatmul.f32.gmra.mxu0 %v2835
  %v2837 = vpop.f32.mrf.mxu0
  %v2838 = vadd.f32 %v2749, %v2837
  %2839 = vdwg.mxu0
  %v2840 = vand.u32 %v235, 4294901760
  %2841 = vmatpush.msra.mxu0 %v2840
  %v2842 = vand.u32 %v233, 4294901760
  %2843 = vmatpush.msra.mxu0 %v2842
  %v2844 = vand.u32 %v231, 4294901760
  %2845 = vmatpush.msra.mxu0 %v2844
  %v2846 = vand.u32 %v229, 4294901760
  %2847 = vmatpush.msra.mxu0 %v2846
  %v2848 = vand.u32 %v227, 4294901760
  %2849 = vmatpush.msra.mxu0 %v2848
  %v2850 = vand.u32 %v225, 4294901760
  %2851 = vmatpush.msra.mxu0 %v2850
  %v2852 = vand.u32 %v223, 4294901760
  %2853 = vmatpush.msra.mxu0 %v2852
  %v2854 = vand.u32 %v221, 4294901760
  %2855 = vmatpush.msra.mxu0 %v2854
  %v2856 = vand.u32 %v219, 4294901760
  %2857 = vmatpush.msra.mxu0 %v2856
  %v2858 = vand.u32 %v217, 4294901760
  %2859 = vmatpush.msra.mxu0 %v2858
  %v2860 = vand.u32 %v215, 4294901760
  %2861 = vmatpush.msra.mxu0 %v2860
  %v2862 = vand.u32 %v213, 4294901760
  %2863 = vmatpush.msra.mxu0 %v2862
  %v2864 = vand.u32 %v211, 4294901760
  %2865 = vmatpush.msra.mxu0 %v2864
  %v2866 = vand.u32 %v209, 4294901760
  %2867 = vmatpush.msra.mxu0 %v2866
  %v2868 = vand.u32 %v207, 4294901760
  %2869 = vmatpush.msra.mxu0 %v2868
  %v2870 = vand.u32 %v205, 4294901760
  %2871 = vmatpush.msra.mxu0 %v2870
  %v2872 = vand.u32 %v33, 4294901760
  %v2873 = vsub.f32 %v33, %v2872
  %v2874 = vand.u32 %v2873, 4294901760
  %2875 = vmatmul.f32.gmra.mxu0 %v2874
  %v2876 = vpop.f32.mrf.mxu0
  %v2877 = vadd.f32 %v2803, %v2876
  %v2878 = vand.u32 %v39, 4294901760
  %v2879 = vsub.f32 %v39, %v2878
  %v2880 = vand.u32 %v2879, 4294901760
  %2881 = vmatmul.f32.gmra.mxu0 %v2880
  %v2882 = vpop.f32.mrf.mxu0
  %v2883 = vadd.f32 %v2808, %v2882
  %v2884 = vand.u32 %v45, 4294901760
  %v2885 = vsub.f32 %v45, %v2884
  %v2886 = vand.u32 %v2885, 4294901760
  %2887 = vmatmul.f32.gmra.mxu0 %v2886
  %v2888 = vpop.f32.mrf.mxu0
  %v2889 = vadd.f32 %v2813, %v2888
  %v2890 = vand.u32 %v51, 4294901760
  %v2891 = vsub.f32 %v51, %v2890
  %v2892 = vand.u32 %v2891, 4294901760
  %2893 = vmatmul.f32.gmra.mxu0 %v2892
  %v2894 = vpop.f32.mrf.mxu0
  %v2895 = vadd.f32 %v2818, %v2894
  %v2896 = vand.u32 %v57, 4294901760
  %v2897 = vsub.f32 %v57, %v2896
  %v2898 = vand.u32 %v2897, 4294901760
  %2899 = vmatmul.f32.gmra.mxu0 %v2898
  %v2900 = vpop.f32.mrf.mxu0
  %v2901 = vadd.f32 %v2823, %v2900
  %v2902 = vand.u32 %v63, 4294901760
  %v2903 = vsub.f32 %v63, %v2902
  %v2904 = vand.u32 %v2903, 4294901760
  %2905 = vmatmul.f32.gmra.mxu0 %v2904
  %v2906 = vpop.f32.mrf.mxu0
  %v2907 = vadd.f32 %v2828, %v2906
  %v2908 = vand.u32 %v69, 4294901760
  %v2909 = vsub.f32 %v69, %v2908
  %v2910 = vand.u32 %v2909, 4294901760
  %2911 = vmatmul.f32.gmra.mxu0 %v2910
  %v2912 = vpop.f32.mrf.mxu0
  %v2913 = vadd.f32 %v2833, %v2912
  %v2914 = vand.u32 %v75, 4294901760
  %v2915 = vsub.f32 %v75, %v2914
  %v2916 = vand.u32 %v2915, 4294901760
  %2917 = vmatmul.f32.gmra.mxu0 %v2916
  %v2918 = vpop.f32.mrf.mxu0
  %v2919 = vadd.f32 %v2838, %v2918
  %2920 = vdwg.mxu0
  %v2921 = vand.u32 %v235, 4294901760
  %v2922 = vsub.f32 %v235, %v2921
  %v2923 = vand.u32 %v2922, 4294901760
  %2924 = vmatpush.msra.mxu0 %v2923
  %v2925 = vand.u32 %v233, 4294901760
  %v2926 = vsub.f32 %v233, %v2925
  %v2927 = vand.u32 %v2926, 4294901760
  %2928 = vmatpush.msra.mxu0 %v2927
  %v2929 = vand.u32 %v231, 4294901760
  %v2930 = vsub.f32 %v231, %v2929
  %v2931 = vand.u32 %v2930, 4294901760
  %2932 = vmatpush.msra.mxu0 %v2931
  %v2933 = vand.u32 %v229, 4294901760
  %v2934 = vsub.f32 %v229, %v2933
  %v2935 = vand.u32 %v2934, 4294901760
  %2936 = vmatpush.msra.mxu0 %v2935
  %v2937 = vand.u32 %v227, 4294901760
  %v2938 = vsub.f32 %v227, %v2937
  %v2939 = vand.u32 %v2938, 4294901760
  %2940 = vmatpush.msra.mxu0 %v2939
  %v2941 = vand.u32 %v225, 4294901760
  %v2942 = vsub.f32 %v225, %v2941
  %v2943 = vand.u32 %v2942, 4294901760
  %2944 = vmatpush.msra.mxu0 %v2943
  %v2945 = vand.u32 %v223, 4294901760
  %v2946 = vsub.f32 %v223, %v2945
  %v2947 = vand.u32 %v2946, 4294901760
  %2948 = vmatpush.msra.mxu0 %v2947
  %v2949 = vand.u32 %v221, 4294901760
  %v2950 = vsub.f32 %v221, %v2949
  %v2951 = vand.u32 %v2950, 4294901760
  %2952 = vmatpush.msra.mxu0 %v2951
  %v2953 = vand.u32 %v219, 4294901760
  %v2954 = vsub.f32 %v219, %v2953
  %v2955 = vand.u32 %v2954, 4294901760
  %2956 = vmatpush.msra.mxu0 %v2955
  %v2957 = vand.u32 %v217, 4294901760
  %v2958 = vsub.f32 %v217, %v2957
  %v2959 = vand.u32 %v2958, 4294901760
  %2960 = vmatpush.msra.mxu0 %v2959
  %v2961 = vand.u32 %v215, 4294901760
  %v2962 = vsub.f32 %v215, %v2961
  %v2963 = vand.u32 %v2962, 4294901760
  %2964 = vmatpush.msra.mxu0 %v2963
  %v2965 = vand.u32 %v213, 4294901760
  %v2966 = vsub.f32 %v213, %v2965
  %v2967 = vand.u32 %v2966, 4294901760
  %2968 = vmatpush.msra.mxu0 %v2967
  %v2969 = vand.u32 %v211, 4294901760
  %v2970 = vsub.f32 %v211, %v2969
  %v2971 = vand.u32 %v2970, 4294901760
  %2972 = vmatpush.msra.mxu0 %v2971
  %v2973 = vand.u32 %v209, 4294901760
  %v2974 = vsub.f32 %v209, %v2973
  %v2975 = vand.u32 %v2974, 4294901760
  %2976 = vmatpush.msra.mxu0 %v2975
  %v2977 = vand.u32 %v207, 4294901760
  %v2978 = vsub.f32 %v207, %v2977
  %v2979 = vand.u32 %v2978, 4294901760
  %2980 = vmatpush.msra.mxu0 %v2979
  %v2981 = vand.u32 %v205, 4294901760
  %v2982 = vsub.f32 %v205, %v2981
  %v2983 = vand.u32 %v2982, 4294901760
  %2984 = vmatpush.msra.mxu0 %v2983
  %v2985 = vand.u32 %v33, 4294901760
  %2986 = vmatmul.f32.gmra.mxu0 %v2985
  %v2987 = vpop.f32.mrf.mxu0
  %v2988 = vadd.f32 %v2877, %v2987
  %v2989 = vand.u32 %v39, 4294901760
  %2990 = vmatmul.f32.gmra.mxu0 %v2989
  %v2991 = vpop.f32.mrf.mxu0
  %v2992 = vadd.f32 %v2883, %v2991
  %v2993 = vand.u32 %v45, 4294901760
  %2994 = vmatmul.f32.gmra.mxu0 %v2993
  %v2995 = vpop.f32.mrf.mxu0
  %v2996 = vadd.f32 %v2889, %v2995
  %v2997 = vand.u32 %v51, 4294901760
  %2998 = vmatmul.f32.gmra.mxu0 %v2997
  %v2999 = vpop.f32.mrf.mxu0
  %v3000 = vadd.f32 %v2895, %v2999
  %v3001 = vand.u32 %v57, 4294901760
  %3002 = vmatmul.f32.gmra.mxu0 %v3001
  %v3003 = vpop.f32.mrf.mxu0
  %v3004 = vadd.f32 %v2901, %v3003
  %v3005 = vand.u32 %v63, 4294901760
  %3006 = vmatmul.f32.gmra.mxu0 %v3005
  %v3007 = vpop.f32.mrf.mxu0
  %v3008 = vadd.f32 %v2907, %v3007
  %v3009 = vand.u32 %v69, 4294901760
  %3010 = vmatmul.f32.gmra.mxu0 %v3009
  %v3011 = vpop.f32.mrf.mxu0
  %v3012 = vadd.f32 %v2913, %v3011
  %v3013 = vand.u32 %v75, 4294901760
  %3014 = vmatmul.f32.gmra.mxu0 %v3013
  %v3015 = vpop.f32.mrf.mxu0
  %v3016 = vadd.f32 %v2919, %v3015
  %3017 = vdwg.mxu0
  %v3018 = vand.u32 %v235, 4294901760
  %3019 = vmatpush.msra.mxu0 %v3018
  %v3020 = vand.u32 %v233, 4294901760
  %3021 = vmatpush.msra.mxu0 %v3020
  %v3022 = vand.u32 %v231, 4294901760
  %3023 = vmatpush.msra.mxu0 %v3022
  %v3024 = vand.u32 %v229, 4294901760
  %3025 = vmatpush.msra.mxu0 %v3024
  %v3026 = vand.u32 %v227, 4294901760
  %3027 = vmatpush.msra.mxu0 %v3026
  %v3028 = vand.u32 %v225, 4294901760
  %3029 = vmatpush.msra.mxu0 %v3028
  %v3030 = vand.u32 %v223, 4294901760
  %3031 = vmatpush.msra.mxu0 %v3030
  %v3032 = vand.u32 %v221, 4294901760
  %3033 = vmatpush.msra.mxu0 %v3032
  %v3034 = vand.u32 %v219, 4294901760
  %3035 = vmatpush.msra.mxu0 %v3034
  %v3036 = vand.u32 %v217, 4294901760
  %3037 = vmatpush.msra.mxu0 %v3036
  %v3038 = vand.u32 %v215, 4294901760
  %3039 = vmatpush.msra.mxu0 %v3038
  %v3040 = vand.u32 %v213, 4294901760
  %3041 = vmatpush.msra.mxu0 %v3040
  %v3042 = vand.u32 %v211, 4294901760
  %3043 = vmatpush.msra.mxu0 %v3042
  %v3044 = vand.u32 %v209, 4294901760
  %3045 = vmatpush.msra.mxu0 %v3044
  %v3046 = vand.u32 %v207, 4294901760
  %3047 = vmatpush.msra.mxu0 %v3046
  %v3048 = vand.u32 %v205, 4294901760
  %3049 = vmatpush.msra.mxu0 %v3048
  %v3050 = vand.u32 %v33, 4294901760
  %3051 = vmatmul.f32.gmra.mxu0 %v3050
  %v3052 = vpop.f32.mrf.mxu0
  %v3053 = vadd.f32 %v2988, %v3052
  %v3054 = vand.u32 %v39, 4294901760
  %3055 = vmatmul.f32.gmra.mxu0 %v3054
  %v3056 = vpop.f32.mrf.mxu0
  %v3057 = vadd.f32 %v2992, %v3056
  %v3058 = vand.u32 %v45, 4294901760
  %3059 = vmatmul.f32.gmra.mxu0 %v3058
  %v3060 = vpop.f32.mrf.mxu0
  %v3061 = vadd.f32 %v2996, %v3060
  %v3062 = vand.u32 %v51, 4294901760
  %3063 = vmatmul.f32.gmra.mxu0 %v3062
  %v3064 = vpop.f32.mrf.mxu0
  %v3065 = vadd.f32 %v3000, %v3064
  %v3066 = vand.u32 %v57, 4294901760
  %3067 = vmatmul.f32.gmra.mxu0 %v3066
  %v3068 = vpop.f32.mrf.mxu0
  %v3069 = vadd.f32 %v3004, %v3068
  %v3070 = vand.u32 %v63, 4294901760
  %3071 = vmatmul.f32.gmra.mxu0 %v3070
  %v3072 = vpop.f32.mrf.mxu0
  %v3073 = vadd.f32 %v3008, %v3072
  %v3074 = vand.u32 %v69, 4294901760
  %3075 = vmatmul.f32.gmra.mxu0 %v3074
  %v3076 = vpop.f32.mrf.mxu0
  %v3077 = vadd.f32 %v3012, %v3076
  %v3078 = vand.u32 %v75, 4294901760
  %3079 = vmatmul.f32.gmra.mxu0 %v3078
  %v3080 = vpop.f32.mrf.mxu0
  %v3081 = vadd.f32 %v3016, %v3080
  %3082 = vdwg.mxu0
  %3083 = vmatpush.msra.mxu0 0.0
  %3084 = vmatpush.msra.mxu0 0.0
  %3085 = vmatpush.msra.mxu0 0.0
  %3086 = vmatpush.msra.mxu0 0.0
  %v3087 = vand.u32 %v288, 4294901760
  %3088 = vmatpush.msra.mxu0 %v3087
  %v3089 = vand.u32 %v257, 4294901760
  %3090 = vmatpush.msra.mxu0 %v3089
  %v3091 = vand.u32 %v255, 4294901760
  %3092 = vmatpush.msra.mxu0 %v3091
  %v3093 = vand.u32 %v253, 4294901760
  %3094 = vmatpush.msra.mxu0 %v3093
  %v3095 = vand.u32 %v251, 4294901760
  %3096 = vmatpush.msra.mxu0 %v3095
  %v3097 = vand.u32 %v249, 4294901760
  %3098 = vmatpush.msra.mxu0 %v3097
  %v3099 = vand.u32 %v247, 4294901760
  %3100 = vmatpush.msra.mxu0 %v3099
  %v3101 = vand.u32 %v245, 4294901760
  %3102 = vmatpush.msra.mxu0 %v3101
  %v3103 = vand.u32 %v243, 4294901760
  %3104 = vmatpush.msra.mxu0 %v3103
  %v3105 = vand.u32 %v241, 4294901760
  %3106 = vmatpush.msra.mxu0 %v3105
  %v3107 = vand.u32 %v239, 4294901760
  %3108 = vmatpush.msra.mxu0 %v3107
  %v3109 = vand.u32 %v237, 4294901760
  %3110 = vmatpush.msra.mxu0 %v3109
  %v3111 = vand.u32 %v263, 4294901760
  %v3112 = vsub.f32 %v263, %v3111
  %v3113 = vand.u32 %v3112, 4294901760
  %v3114 = vsub.f32 %v3112, %v3113
  %v3115 = vand.u32 %v3114, 4294901760
  %3116 = vmatmul.f32.gmra.mxu0 %v3115
  %v3117 = vpop.f32.mrf.mxu0
  %v3118 = vadd.f32 %v3053, %v3117
  %v3119 = vand.u32 %v266, 4294901760
  %v3120 = vsub.f32 %v266, %v3119
  %v3121 = vand.u32 %v3120, 4294901760
  %v3122 = vsub.f32 %v3120, %v3121
  %v3123 = vand.u32 %v3122, 4294901760
  %3124 = vmatmul.f32.gmra.mxu0 %v3123
  %v3125 = vpop.f32.mrf.mxu0
  %v3126 = vadd.f32 %v3057, %v3125
  %v3127 = vand.u32 %v269, 4294901760
  %v3128 = vsub.f32 %v269, %v3127
  %v3129 = vand.u32 %v3128, 4294901760
  %v3130 = vsub.f32 %v3128, %v3129
  %v3131 = vand.u32 %v3130, 4294901760
  %3132 = vmatmul.f32.gmra.mxu0 %v3131
  %v3133 = vpop.f32.mrf.mxu0
  %v3134 = vadd.f32 %v3061, %v3133
  %v3135 = vand.u32 %v272, 4294901760
  %v3136 = vsub.f32 %v272, %v3135
  %v3137 = vand.u32 %v3136, 4294901760
  %v3138 = vsub.f32 %v3136, %v3137
  %v3139 = vand.u32 %v3138, 4294901760
  %3140 = vmatmul.f32.gmra.mxu0 %v3139
  %v3141 = vpop.f32.mrf.mxu0
  %v3142 = vadd.f32 %v3065, %v3141
  %v3143 = vand.u32 %v275, 4294901760
  %v3144 = vsub.f32 %v275, %v3143
  %v3145 = vand.u32 %v3144, 4294901760
  %v3146 = vsub.f32 %v3144, %v3145
  %v3147 = vand.u32 %v3146, 4294901760
  %3148 = vmatmul.f32.gmra.mxu0 %v3147
  %v3149 = vpop.f32.mrf.mxu0
  %v3150 = vadd.f32 %v3069, %v3149
  %v3151 = vand.u32 %v278, 4294901760
  %v3152 = vsub.f32 %v278, %v3151
  %v3153 = vand.u32 %v3152, 4294901760
  %v3154 = vsub.f32 %v3152, %v3153
  %v3155 = vand.u32 %v3154, 4294901760
  %3156 = vmatmul.f32.gmra.mxu0 %v3155
  %v3157 = vpop.f32.mrf.mxu0
  %v3158 = vadd.f32 %v3073, %v3157
  %v3159 = vand.u32 %v281, 4294901760
  %v3160 = vsub.f32 %v281, %v3159
  %v3161 = vand.u32 %v3160, 4294901760
  %v3162 = vsub.f32 %v3160, %v3161
  %v3163 = vand.u32 %v3162, 4294901760
  %3164 = vmatmul.f32.gmra.mxu0 %v3163
  %v3165 = vpop.f32.mrf.mxu0
  %v3166 = vadd.f32 %v3077, %v3165
  %v3167 = vand.u32 %v284, 4294901760
  %v3168 = vsub.f32 %v284, %v3167
  %v3169 = vand.u32 %v3168, 4294901760
  %v3170 = vsub.f32 %v3168, %v3169
  %v3171 = vand.u32 %v3170, 4294901760
  %3172 = vmatmul.f32.gmra.mxu0 %v3171
  %v3173 = vpop.f32.mrf.mxu0
  %v3174 = vadd.f32 %v3081, %v3173
  %3175 = vdwg.mxu0
  %3176 = vmatpush.msra.mxu0 0.0
  %3177 = vmatpush.msra.mxu0 0.0
  %3178 = vmatpush.msra.mxu0 0.0
  %3179 = vmatpush.msra.mxu0 0.0
  %v3180 = vand.u32 %v288, 4294901760
  %v3181 = vsub.f32 %v288, %v3180
  %v3182 = vand.u32 %v3181, 4294901760
  %v3183 = vsub.f32 %v3181, %v3182
  %v3184 = vand.u32 %v3183, 4294901760
  %3185 = vmatpush.msra.mxu0 %v3184
  %v3186 = vand.u32 %v257, 4294901760
  %v3187 = vsub.f32 %v257, %v3186
  %v3188 = vand.u32 %v3187, 4294901760
  %v3189 = vsub.f32 %v3187, %v3188
  %v3190 = vand.u32 %v3189, 4294901760
  %3191 = vmatpush.msra.mxu0 %v3190
  %v3192 = vand.u32 %v255, 4294901760
  %v3193 = vsub.f32 %v255, %v3192
  %v3194 = vand.u32 %v3193, 4294901760
  %v3195 = vsub.f32 %v3193, %v3194
  %v3196 = vand.u32 %v3195, 4294901760
  %3197 = vmatpush.msra.mxu0 %v3196
  %v3198 = vand.u32 %v253, 4294901760
  %v3199 = vsub.f32 %v253, %v3198
  %v3200 = vand.u32 %v3199, 4294901760
  %v3201 = vsub.f32 %v3199, %v3200
  %v3202 = vand.u32 %v3201, 4294901760
  %3203 = vmatpush.msra.mxu0 %v3202
  %v3204 = vand.u32 %v251, 4294901760
  %v3205 = vsub.f32 %v251, %v3204
  %v3206 = vand.u32 %v3205, 4294901760
  %v3207 = vsub.f32 %v3205, %v3206
  %v3208 = vand.u32 %v3207, 4294901760
  %3209 = vmatpush.msra.mxu0 %v3208
  %v3210 = vand.u32 %v249, 4294901760
  %v3211 = vsub.f32 %v249, %v3210
  %v3212 = vand.u32 %v3211, 4294901760
  %v3213 = vsub.f32 %v3211, %v3212
  %v3214 = vand.u32 %v3213, 4294901760
  %3215 = vmatpush.msra.mxu0 %v3214
  %v3216 = vand.u32 %v247, 4294901760
  %v3217 = vsub.f32 %v247, %v3216
  %v3218 = vand.u32 %v3217, 4294901760
  %v3219 = vsub.f32 %v3217, %v3218
  %v3220 = vand.u32 %v3219, 4294901760
  %3221 = vmatpush.msra.mxu0 %v3220
  %v3222 = vand.u32 %v245, 4294901760
  %v3223 = vsub.f32 %v245, %v3222
  %v3224 = vand.u32 %v3223, 4294901760
  %v3225 = vsub.f32 %v3223, %v3224
  %v3226 = vand.u32 %v3225, 4294901760
  %3227 = vmatpush.msra.mxu0 %v3226
  %v3228 = vand.u32 %v243, 4294901760
  %v3229 = vsub.f32 %v243, %v3228
  %v3230 = vand.u32 %v3229, 4294901760
  %v3231 = vsub.f32 %v3229, %v3230
  %v3232 = vand.u32 %v3231, 4294901760
  %3233 = vmatpush.msra.mxu0 %v3232
  %v3234 = vand.u32 %v241, 4294901760
  %v3235 = vsub.f32 %v241, %v3234
  %v3236 = vand.u32 %v3235, 4294901760
  %v3237 = vsub.f32 %v3235, %v3236
  %v3238 = vand.u32 %v3237, 4294901760
  %3239 = vmatpush.msra.mxu0 %v3238
  %v3240 = vand.u32 %v239, 4294901760
  %v3241 = vsub.f32 %v239, %v3240
  %v3242 = vand.u32 %v3241, 4294901760
  %v3243 = vsub.f32 %v3241, %v3242
  %v3244 = vand.u32 %v3243, 4294901760
  %3245 = vmatpush.msra.mxu0 %v3244
  %v3246 = vand.u32 %v237, 4294901760
  %v3247 = vsub.f32 %v237, %v3246
  %v3248 = vand.u32 %v3247, 4294901760
  %v3249 = vsub.f32 %v3247, %v3248
  %v3250 = vand.u32 %v3249, 4294901760
  %3251 = vmatpush.msra.mxu0 %v3250
  %v3252 = vand.u32 %v263, 4294901760
  %3253 = vmatmul.f32.gmra.mxu0 %v3252
  %v3254 = vpop.f32.mrf.mxu0
  %v3255 = vadd.f32 %v3118, %v3254
  %v3256 = vand.u32 %v266, 4294901760
  %3257 = vmatmul.f32.gmra.mxu0 %v3256
  %v3258 = vpop.f32.mrf.mxu0
  %v3259 = vadd.f32 %v3126, %v3258
  %v3260 = vand.u32 %v269, 4294901760
  %3261 = vmatmul.f32.gmra.mxu0 %v3260
  %v3262 = vpop.f32.mrf.mxu0
  %v3263 = vadd.f32 %v3134, %v3262
  %v3264 = vand.u32 %v272, 4294901760
  %3265 = vmatmul.f32.gmra.mxu0 %v3264
  %v3266 = vpop.f32.mrf.mxu0
  %v3267 = vadd.f32 %v3142, %v3266
  %v3268 = vand.u32 %v275, 4294901760
  %3269 = vmatmul.f32.gmra.mxu0 %v3268
  %v3270 = vpop.f32.mrf.mxu0
  %v3271 = vadd.f32 %v3150, %v3270
  %v3272 = vand.u32 %v278, 4294901760
  %3273 = vmatmul.f32.gmra.mxu0 %v3272
  %v3274 = vpop.f32.mrf.mxu0
  %v3275 = vadd.f32 %v3158, %v3274
  %v3276 = vand.u32 %v281, 4294901760
  %3277 = vmatmul.f32.gmra.mxu0 %v3276
  %v3278 = vpop.f32.mrf.mxu0
  %v3279 = vadd.f32 %v3166, %v3278
  %v3280 = vand.u32 %v284, 4294901760
  %3281 = vmatmul.f32.gmra.mxu0 %v3280
  %v3282 = vpop.f32.mrf.mxu0
  %v3283 = vadd.f32 %v3174, %v3282
  %3284 = vdwg.mxu0
  %3285 = vmatpush.msra.mxu0 0.0
  %3286 = vmatpush.msra.mxu0 0.0
  %3287 = vmatpush.msra.mxu0 0.0
  %3288 = vmatpush.msra.mxu0 0.0
  %v3289 = vand.u32 %v288, 4294901760
  %v3290 = vsub.f32 %v288, %v3289
  %3291 = vmatpush.msra.mxu0 %v3290
  %v3292 = vand.u32 %v257, 4294901760
  %v3293 = vsub.f32 %v257, %v3292
  %3294 = vmatpush.msra.mxu0 %v3293
  %v3295 = vand.u32 %v255, 4294901760
  %v3296 = vsub.f32 %v255, %v3295
  %3297 = vmatpush.msra.mxu0 %v3296
  %v3298 = vand.u32 %v253, 4294901760
  %v3299 = vsub.f32 %v253, %v3298
  %3300 = vmatpush.msra.mxu0 %v3299
  %v3301 = vand.u32 %v251, 4294901760
  %v3302 = vsub.f32 %v251, %v3301
  %3303 = vmatpush.msra.mxu0 %v3302
  %v3304 = vand.u32 %v249, 4294901760
  %v3305 = vsub.f32 %v249, %v3304
  %3306 = vmatpush.msra.mxu0 %v3305
  %v3307 = vand.u32 %v247, 4294901760
  %v3308 = vsub.f32 %v247, %v3307
  %3309 = vmatpush.msra.mxu0 %v3308
  %v3310 = vand.u32 %v245, 4294901760
  %v3311 = vsub.f32 %v245, %v3310
  %3312 = vmatpush.msra.mxu0 %v3311
  %v3313 = vand.u32 %v243, 4294901760
  %v3314 = vsub.f32 %v243, %v3313
  %3315 = vmatpush.msra.mxu0 %v3314
  %v3316 = vand.u32 %v241, 4294901760
  %v3317 = vsub.f32 %v241, %v3316
  %3318 = vmatpush.msra.mxu0 %v3317
  %v3319 = vand.u32 %v239, 4294901760
  %v3320 = vsub.f32 %v239, %v3319
  %3321 = vmatpush.msra.mxu0 %v3320
  %v3322 = vand.u32 %v237, 4294901760
  %v3323 = vsub.f32 %v237, %v3322
  %3324 = vmatpush.msra.mxu0 %v3323
  %v3325 = vand.u32 %v263, 4294901760
  %v3326 = vsub.f32 %v263, %v3325
  %3327 = vmatmul.f32.gmra.mxu0 %v3326
  %v3328 = vpop.f32.mrf.mxu0
  %v3329 = vadd.f32 %v3255, %v3328
  %v3330 = vand.u32 %v266, 4294901760
  %v3331 = vsub.f32 %v266, %v3330
  %3332 = vmatmul.f32.gmra.mxu0 %v3331
  %v3333 = vpop.f32.mrf.mxu0
  %v3334 = vadd.f32 %v3259, %v3333
  %v3335 = vand.u32 %v269, 4294901760
  %v3336 = vsub.f32 %v269, %v3335
  %3337 = vmatmul.f32.gmra.mxu0 %v3336
  %v3338 = vpop.f32.mrf.mxu0
  %v3339 = vadd.f32 %v3263, %v3338
  %v3340 = vand.u32 %v272, 4294901760
  %v3341 = vsub.f32 %v272, %v3340
  %3342 = vmatmul.f32.gmra.mxu0 %v3341
  %v3343 = vpop.f32.mrf.mxu0
  %v3344 = vadd.f32 %v3267, %v3343
  %v3345 = vand.u32 %v275, 4294901760
  %v3346 = vsub.f32 %v275, %v3345
  %3347 = vmatmul.f32.gmra.mxu0 %v3346
  %v3348 = vpop.f32.mrf.mxu0
  %v3349 = vadd.f32 %v3271, %v3348
  %v3350 = vand.u32 %v278, 4294901760
  %v3351 = vsub.f32 %v278, %v3350
  %3352 = vmatmul.f32.gmra.mxu0 %v3351
  %v3353 = vpop.f32.mrf.mxu0
  %v3354 = vadd.f32 %v3275, %v3353
  %v3355 = vand.u32 %v281, 4294901760
  %v3356 = vsub.f32 %v281, %v3355
  %3357 = vmatmul.f32.gmra.mxu0 %v3356
  %v3358 = vpop.f32.mrf.mxu0
  %v3359 = vadd.f32 %v3279, %v3358
  %v3360 = vand.u32 %v284, 4294901760
  %v3361 = vsub.f32 %v284, %v3360
  %3362 = vmatmul.f32.gmra.mxu0 %v3361
  %v3363 = vpop.f32.mrf.mxu0
  %v3364 = vadd.f32 %v3283, %v3363
  %3365 = vdwg.mxu0
  %3366 = vmatpush.msra.mxu0 0.0
  %3367 = vmatpush.msra.mxu0 0.0
  %3368 = vmatpush.msra.mxu0 0.0
  %3369 = vmatpush.msra.mxu0 0.0
  %v3370 = vand.u32 %v288, 4294901760
  %3371 = vmatpush.msra.mxu0 %v3370
  %v3372 = vand.u32 %v257, 4294901760
  %3373 = vmatpush.msra.mxu0 %v3372
  %v3374 = vand.u32 %v255, 4294901760
  %3375 = vmatpush.msra.mxu0 %v3374
  %v3376 = vand.u32 %v253, 4294901760
  %3377 = vmatpush.msra.mxu0 %v3376
  %v3378 = vand.u32 %v251, 4294901760
  %3379 = vmatpush.msra.mxu0 %v3378
  %v3380 = vand.u32 %v249, 4294901760
  %3381 = vmatpush.msra.mxu0 %v3380
  %v3382 = vand.u32 %v247, 4294901760
  %3383 = vmatpush.msra.mxu0 %v3382
  %v3384 = vand.u32 %v245, 4294901760
  %3385 = vmatpush.msra.mxu0 %v3384
  %v3386 = vand.u32 %v243, 4294901760
  %3387 = vmatpush.msra.mxu0 %v3386
  %v3388 = vand.u32 %v241, 4294901760
  %3389 = vmatpush.msra.mxu0 %v3388
  %v3390 = vand.u32 %v239, 4294901760
  %3391 = vmatpush.msra.mxu0 %v3390
  %v3392 = vand.u32 %v237, 4294901760
  %3393 = vmatpush.msra.mxu0 %v3392
  %v3394 = vand.u32 %v263, 4294901760
  %v3395 = vsub.f32 %v263, %v3394
  %v3396 = vand.u32 %v3395, 4294901760
  %3397 = vmatmul.f32.gmra.mxu0 %v3396
  %v3398 = vpop.f32.mrf.mxu0
  %v3399 = vadd.f32 %v3329, %v3398
  %v3400 = vand.u32 %v266, 4294901760
  %v3401 = vsub.f32 %v266, %v3400
  %v3402 = vand.u32 %v3401, 4294901760
  %3403 = vmatmul.f32.gmra.mxu0 %v3402
  %v3404 = vpop.f32.mrf.mxu0
  %v3405 = vadd.f32 %v3334, %v3404
  %v3406 = vand.u32 %v269, 4294901760
  %v3407 = vsub.f32 %v269, %v3406
  %v3408 = vand.u32 %v3407, 4294901760
  %3409 = vmatmul.f32.gmra.mxu0 %v3408
  %v3410 = vpop.f32.mrf.mxu0
  %v3411 = vadd.f32 %v3339, %v3410
  %v3412 = vand.u32 %v272, 4294901760
  %v3413 = vsub.f32 %v272, %v3412
  %v3414 = vand.u32 %v3413, 4294901760
  %3415 = vmatmul.f32.gmra.mxu0 %v3414
  %v3416 = vpop.f32.mrf.mxu0
  %v3417 = vadd.f32 %v3344, %v3416
  %v3418 = vand.u32 %v275, 4294901760
  %v3419 = vsub.f32 %v275, %v3418
  %v3420 = vand.u32 %v3419, 4294901760
  %3421 = vmatmul.f32.gmra.mxu0 %v3420
  %v3422 = vpop.f32.mrf.mxu0
  %v3423 = vadd.f32 %v3349, %v3422
  %v3424 = vand.u32 %v278, 4294901760
  %v3425 = vsub.f32 %v278, %v3424
  %v3426 = vand.u32 %v3425, 4294901760
  %3427 = vmatmul.f32.gmra.mxu0 %v3426
  %v3428 = vpop.f32.mrf.mxu0
  %v3429 = vadd.f32 %v3354, %v3428
  %v3430 = vand.u32 %v281, 4294901760
  %v3431 = vsub.f32 %v281, %v3430
  %v3432 = vand.u32 %v3431, 4294901760
  %3433 = vmatmul.f32.gmra.mxu0 %v3432
  %v3434 = vpop.f32.mrf.mxu0
  %v3435 = vadd.f32 %v3359, %v3434
  %v3436 = vand.u32 %v284, 4294901760
  %v3437 = vsub.f32 %v284, %v3436
  %v3438 = vand.u32 %v3437, 4294901760
  %3439 = vmatmul.f32.gmra.mxu0 %v3438
  %v3440 = vpop.f32.mrf.mxu0
  %v3441 = vadd.f32 %v3364, %v3440
  %3442 = vdwg.mxu0
  %3443 = vmatpush.msra.mxu0 0.0
  %3444 = vmatpush.msra.mxu0 0.0
  %3445 = vmatpush.msra.mxu0 0.0
  %3446 = vmatpush.msra.mxu0 0.0
  %v3447 = vand.u32 %v288, 4294901760
  %v3448 = vsub.f32 %v288, %v3447
  %v3449 = vand.u32 %v3448, 4294901760
  %3450 = vmatpush.msra.mxu0 %v3449
  %v3451 = vand.u32 %v257, 4294901760
  %v3452 = vsub.f32 %v257, %v3451
  %v3453 = vand.u32 %v3452, 4294901760
  %3454 = vmatpush.msra.mxu0 %v3453
  %v3455 = vand.u32 %v255, 4294901760
  %v3456 = vsub.f32 %v255, %v3455
  %v3457 = vand.u32 %v3456, 4294901760
  %3458 = vmatpush.msra.mxu0 %v3457
  %v3459 = vand.u32 %v253, 4294901760
  %v3460 = vsub.f32 %v253, %v3459
  %v3461 = vand.u32 %v3460, 4294901760
  %3462 = vmatpush.msra.mxu0 %v3461
  %v3463 = vand.u32 %v251, 4294901760
  %v3464 = vsub.f32 %v251, %v3463
  %v3465 = vand.u32 %v3464, 4294901760
  %3466 = vmatpush.msra.mxu0 %v3465
  %v3467 = vand.u32 %v249, 4294901760
  %v3468 = vsub.f32 %v249, %v3467
  %v3469 = vand.u32 %v3468, 4294901760
  %3470 = vmatpush.msra.mxu0 %v3469
  %v3471 = vand.u32 %v247, 4294901760
  %v3472 = vsub.f32 %v247, %v3471
  %v3473 = vand.u32 %v3472, 4294901760
  %3474 = vmatpush.msra.mxu0 %v3473
  %v3475 = vand.u32 %v245, 4294901760
  %v3476 = vsub.f32 %v245, %v3475
  %v3477 = vand.u32 %v3476, 4294901760
  %3478 = vmatpush.msra.mxu0 %v3477
  %v3479 = vand.u32 %v243, 4294901760
  %v3480 = vsub.f32 %v243, %v3479
  %v3481 = vand.u32 %v3480, 4294901760
  %3482 = vmatpush.msra.mxu0 %v3481
  %v3483 = vand.u32 %v241, 4294901760
  %v3484 = vsub.f32 %v241, %v3483
  %v3485 = vand.u32 %v3484, 4294901760
  %3486 = vmatpush.msra.mxu0 %v3485
  %v3487 = vand.u32 %v239, 4294901760
  %v3488 = vsub.f32 %v239, %v3487
  %v3489 = vand.u32 %v3488, 4294901760
  %3490 = vmatpush.msra.mxu0 %v3489
  %v3491 = vand.u32 %v237, 4294901760
  %v3492 = vsub.f32 %v237, %v3491
  %v3493 = vand.u32 %v3492, 4294901760
  %3494 = vmatpush.msra.mxu0 %v3493
  %v3495 = vand.u32 %v263, 4294901760
  %3496 = vmatmul.f32.gmra.mxu0 %v3495
  %v3497 = vpop.f32.mrf.mxu0
  %v3498 = vadd.f32 %v3399, %v3497
  %v3499 = vand.u32 %v266, 4294901760
  %3500 = vmatmul.f32.gmra.mxu0 %v3499
  %v3501 = vpop.f32.mrf.mxu0
  %v3502 = vadd.f32 %v3405, %v3501
  %v3503 = vand.u32 %v269, 4294901760
  %3504 = vmatmul.f32.gmra.mxu0 %v3503
  %v3505 = vpop.f32.mrf.mxu0
  %v3506 = vadd.f32 %v3411, %v3505
  %v3507 = vand.u32 %v272, 4294901760
  %3508 = vmatmul.f32.gmra.mxu0 %v3507
  %v3509 = vpop.f32.mrf.mxu0
  %v3510 = vadd.f32 %v3417, %v3509
  %v3511 = vand.u32 %v275, 4294901760
  %3512 = vmatmul.f32.gmra.mxu0 %v3511
  %v3513 = vpop.f32.mrf.mxu0
  %v3514 = vadd.f32 %v3423, %v3513
  %v3515 = vand.u32 %v278, 4294901760
  %3516 = vmatmul.f32.gmra.mxu0 %v3515
  %v3517 = vpop.f32.mrf.mxu0
  %v3518 = vadd.f32 %v3429, %v3517
  %v3519 = vand.u32 %v281, 4294901760
  %3520 = vmatmul.f32.gmra.mxu0 %v3519
  %v3521 = vpop.f32.mrf.mxu0
  %v3522 = vadd.f32 %v3435, %v3521
  %v3523 = vand.u32 %v284, 4294901760
  %3524 = vmatmul.f32.gmra.mxu0 %v3523
  %v3525 = vpop.f32.mrf.mxu0
  %v3526 = vadd.f32 %v3441, %v3525
  %3527 = vdwg.mxu0
  %3528 = vmatpush.msra.mxu0 0.0
  %3529 = vmatpush.msra.mxu0 0.0
  %3530 = vmatpush.msra.mxu0 0.0
  %3531 = vmatpush.msra.mxu0 0.0
  %v3532 = vand.u32 %v288, 4294901760
  %3533 = vmatpush.msra.mxu0 %v3532
  %v3534 = vand.u32 %v257, 4294901760
  %3535 = vmatpush.msra.mxu0 %v3534
  %v3536 = vand.u32 %v255, 4294901760
  %3537 = vmatpush.msra.mxu0 %v3536
  %v3538 = vand.u32 %v253, 4294901760
  %3539 = vmatpush.msra.mxu0 %v3538
  %v3540 = vand.u32 %v251, 4294901760
  %3541 = vmatpush.msra.mxu0 %v3540
  %v3542 = vand.u32 %v249, 4294901760
  %3543 = vmatpush.msra.mxu0 %v3542
  %v3544 = vand.u32 %v247, 4294901760
  %3545 = vmatpush.msra.mxu0 %v3544
  %v3546 = vand.u32 %v245, 4294901760
  %3547 = vmatpush.msra.mxu0 %v3546
  %v3548 = vand.u32 %v243, 4294901760
  %3549 = vmatpush.msra.mxu0 %v3548
  %v3550 = vand.u32 %v241, 4294901760
  %3551 = vmatpush.msra.mxu0 %v3550
  %v3552 = vand.u32 %v239, 4294901760
  %3553 = vmatpush.msra.mxu0 %v3552
  %v3554 = vand.u32 %v237, 4294901760
  %3555 = vmatpush.msra.mxu0 %v3554
  %v3556 = vand.u32 %v263, 4294901760
  %3557 = vmatmul.f32.gmra.mxu0 %v3556
  %v3558 = vpop.f32.mrf.mxu0
  %v3559 = vadd.f32 %v3498, %v3558
  %v3560 = vand.u32 %v266, 4294901760
  %3561 = vmatmul.f32.gmra.mxu0 %v3560
  %v3562 = vpop.f32.mrf.mxu0
  %v3563 = vadd.f32 %v3502, %v3562
  %v3564 = vand.u32 %v269, 4294901760
  %3565 = vmatmul.f32.gmra.mxu0 %v3564
  %v3566 = vpop.f32.mrf.mxu0
  %v3567 = vadd.f32 %v3506, %v3566
  %v3568 = vand.u32 %v272, 4294901760
  %3569 = vmatmul.f32.gmra.mxu0 %v3568
  %v3570 = vpop.f32.mrf.mxu0
  %v3571 = vadd.f32 %v3510, %v3570
  %v3572 = vand.u32 %v275, 4294901760
  %3573 = vmatmul.f32.gmra.mxu0 %v3572
  %v3574 = vpop.f32.mrf.mxu0
  %v3575 = vadd.f32 %v3514, %v3574
  %v3576 = vand.u32 %v278, 4294901760
  %3577 = vmatmul.f32.gmra.mxu0 %v3576
  %v3578 = vpop.f32.mrf.mxu0
  %v3579 = vadd.f32 %v3518, %v3578
  %v3580 = vand.u32 %v281, 4294901760
  %3581 = vmatmul.f32.gmra.mxu0 %v3580
  %v3582 = vpop.f32.mrf.mxu0
  %v3583 = vadd.f32 %v3522, %v3582
  %v3584 = vand.u32 %v284, 4294901760
  %3585 = vmatmul.f32.gmra.mxu0 %v3584
  %v3586 = vpop.f32.mrf.mxu0
  %v3587 = vadd.f32 %v3526, %v3586
  %3588 = vdwg.mxu0
  %v3589 = vand.u32 %v108, 4294901760
  %3590 = vmatpush.msra.mxu0 %v3589
  %v3591 = vand.u32 %v106, 4294901760
  %3592 = vmatpush.msra.mxu0 %v3591
  %v3593 = vand.u32 %v104, 4294901760
  %3594 = vmatpush.msra.mxu0 %v3593
  %v3595 = vand.u32 %v102, 4294901760
  %3596 = vmatpush.msra.mxu0 %v3595
  %v3597 = vand.u32 %v100, 4294901760
  %3598 = vmatpush.msra.mxu0 %v3597
  %v3599 = vand.u32 %v98, 4294901760
  %3600 = vmatpush.msra.mxu0 %v3599
  %v3601 = vand.u32 %v96, 4294901760
  %3602 = vmatpush.msra.mxu0 %v3601
  %v3603 = vand.u32 %v94, 4294901760
  %3604 = vmatpush.msra.mxu0 %v3603
  %v3605 = vand.u32 %v92, 4294901760
  %3606 = vmatpush.msra.mxu0 %v3605
  %v3607 = vand.u32 %v90, 4294901760
  %3608 = vmatpush.msra.mxu0 %v3607
  %v3609 = vand.u32 %v88, 4294901760
  %3610 = vmatpush.msra.mxu0 %v3609
  %v3611 = vand.u32 %v86, 4294901760
  %3612 = vmatpush.msra.mxu0 %v3611
  %v3613 = vand.u32 %v84, 4294901760
  %3614 = vmatpush.msra.mxu0 %v3613
  %v3615 = vand.u32 %v82, 4294901760
  %3616 = vmatpush.msra.mxu0 %v3615
  %v3617 = vand.u32 %v80, 4294901760
  %3618 = vmatpush.msra.mxu0 %v3617
  %v3619 = vand.u32 %v78, 4294901760
  %3620 = vmatpush.msra.mxu0 %v3619
  %v3621 = vand.u32 %v29, 4294901760
  %v3622 = vsub.f32 %v29, %v3621
  %v3623 = vand.u32 %v3622, 4294901760
  %v3624 = vsub.f32 %v3622, %v3623
  %v3625 = vand.u32 %v3624, 4294901760
  %3626 = vmatmul.f32.gmra.mxu0 %v3625
  %v3627 = vpop.f32.mrf.mxu0
  %v3628 = vadd.f32 0.0, %v3627
  %v3629 = vand.u32 %v35, 4294901760
  %v3630 = vsub.f32 %v35, %v3629
  %v3631 = vand.u32 %v3630, 4294901760
  %v3632 = vsub.f32 %v3630, %v3631
  %v3633 = vand.u32 %v3632, 4294901760
  %3634 = vmatmul.f32.gmra.mxu0 %v3633
  %v3635 = vpop.f32.mrf.mxu0
  %v3636 = vadd.f32 0.0, %v3635
  %v3637 = vand.u32 %v41, 4294901760
  %v3638 = vsub.f32 %v41, %v3637
  %v3639 = vand.u32 %v3638, 4294901760
  %v3640 = vsub.f32 %v3638, %v3639
  %v3641 = vand.u32 %v3640, 4294901760
  %3642 = vmatmul.f32.gmra.mxu0 %v3641
  %v3643 = vpop.f32.mrf.mxu0
  %v3644 = vadd.f32 0.0, %v3643
  %v3645 = vand.u32 %v47, 4294901760
  %v3646 = vsub.f32 %v47, %v3645
  %v3647 = vand.u32 %v3646, 4294901760
  %v3648 = vsub.f32 %v3646, %v3647
  %v3649 = vand.u32 %v3648, 4294901760
  %3650 = vmatmul.f32.gmra.mxu0 %v3649
  %v3651 = vpop.f32.mrf.mxu0
  %v3652 = vadd.f32 0.0, %v3651
  %v3653 = vand.u32 %v53, 4294901760
  %v3654 = vsub.f32 %v53, %v3653
  %v3655 = vand.u32 %v3654, 4294901760
  %v3656 = vsub.f32 %v3654, %v3655
  %v3657 = vand.u32 %v3656, 4294901760
  %3658 = vmatmul.f32.gmra.mxu0 %v3657
  %v3659 = vpop.f32.mrf.mxu0
  %v3660 = vadd.f32 0.0, %v3659
  %v3661 = vand.u32 %v59, 4294901760
  %v3662 = vsub.f32 %v59, %v3661
  %v3663 = vand.u32 %v3662, 4294901760
  %v3664 = vsub.f32 %v3662, %v3663
  %v3665 = vand.u32 %v3664, 4294901760
  %3666 = vmatmul.f32.gmra.mxu0 %v3665
  %v3667 = vpop.f32.mrf.mxu0
  %v3668 = vadd.f32 0.0, %v3667
  %v3669 = vand.u32 %v65, 4294901760
  %v3670 = vsub.f32 %v65, %v3669
  %v3671 = vand.u32 %v3670, 4294901760
  %v3672 = vsub.f32 %v3670, %v3671
  %v3673 = vand.u32 %v3672, 4294901760
  %3674 = vmatmul.f32.gmra.mxu0 %v3673
  %v3675 = vpop.f32.mrf.mxu0
  %v3676 = vadd.f32 0.0, %v3675
  %v3677 = vand.u32 %v71, 4294901760
  %v3678 = vsub.f32 %v71, %v3677
  %v3679 = vand.u32 %v3678, 4294901760
  %v3680 = vsub.f32 %v3678, %v3679
  %v3681 = vand.u32 %v3680, 4294901760
  %3682 = vmatmul.f32.gmra.mxu0 %v3681
  %v3683 = vpop.f32.mrf.mxu0
  %v3684 = vadd.f32 0.0, %v3683
  %3685 = vdwg.mxu0
  %v3686 = vand.u32 %v108, 4294901760
  %v3687 = vsub.f32 %v108, %v3686
  %v3688 = vand.u32 %v3687, 4294901760
  %v3689 = vsub.f32 %v3687, %v3688
  %v3690 = vand.u32 %v3689, 4294901760
  %3691 = vmatpush.msra.mxu0 %v3690
  %v3692 = vand.u32 %v106, 4294901760
  %v3693 = vsub.f32 %v106, %v3692
  %v3694 = vand.u32 %v3693, 4294901760
  %v3695 = vsub.f32 %v3693, %v3694
  %v3696 = vand.u32 %v3695, 4294901760
  %3697 = vmatpush.msra.mxu0 %v3696
  %v3698 = vand.u32 %v104, 4294901760
  %v3699 = vsub.f32 %v104, %v3698
  %v3700 = vand.u32 %v3699, 4294901760
  %v3701 = vsub.f32 %v3699, %v3700
  %v3702 = vand.u32 %v3701, 4294901760
  %3703 = vmatpush.msra.mxu0 %v3702
  %v3704 = vand.u32 %v102, 4294901760
  %v3705 = vsub.f32 %v102, %v3704
  %v3706 = vand.u32 %v3705, 4294901760
  %v3707 = vsub.f32 %v3705, %v3706
  %v3708 = vand.u32 %v3707, 4294901760
  %3709 = vmatpush.msra.mxu0 %v3708
  %v3710 = vand.u32 %v100, 4294901760
  %v3711 = vsub.f32 %v100, %v3710
  %v3712 = vand.u32 %v3711, 4294901760
  %v3713 = vsub.f32 %v3711, %v3712
  %v3714 = vand.u32 %v3713, 4294901760
  %3715 = vmatpush.msra.mxu0 %v3714
  %v3716 = vand.u32 %v98, 4294901760
  %v3717 = vsub.f32 %v98, %v3716
  %v3718 = vand.u32 %v3717, 4294901760
  %v3719 = vsub.f32 %v3717, %v3718
  %v3720 = vand.u32 %v3719, 4294901760
  %3721 = vmatpush.msra.mxu0 %v3720
  %v3722 = vand.u32 %v96, 4294901760
  %v3723 = vsub.f32 %v96, %v3722
  %v3724 = vand.u32 %v3723, 4294901760
  %v3725 = vsub.f32 %v3723, %v3724
  %v3726 = vand.u32 %v3725, 4294901760
  %3727 = vmatpush.msra.mxu0 %v3726
  %v3728 = vand.u32 %v94, 4294901760
  %v3729 = vsub.f32 %v94, %v3728
  %v3730 = vand.u32 %v3729, 4294901760
  %v3731 = vsub.f32 %v3729, %v3730
  %v3732 = vand.u32 %v3731, 4294901760
  %3733 = vmatpush.msra.mxu0 %v3732
  %v3734 = vand.u32 %v92, 4294901760
  %v3735 = vsub.f32 %v92, %v3734
  %v3736 = vand.u32 %v3735, 4294901760
  %v3737 = vsub.f32 %v3735, %v3736
  %v3738 = vand.u32 %v3737, 4294901760
  %3739 = vmatpush.msra.mxu0 %v3738
  %v3740 = vand.u32 %v90, 4294901760
  %v3741 = vsub.f32 %v90, %v3740
  %v3742 = vand.u32 %v3741, 4294901760
  %v3743 = vsub.f32 %v3741, %v3742
  %v3744 = vand.u32 %v3743, 4294901760
  %3745 = vmatpush.msra.mxu0 %v3744
  %v3746 = vand.u32 %v88, 4294901760
  %v3747 = vsub.f32 %v88, %v3746
  %v3748 = vand.u32 %v3747, 4294901760
  %v3749 = vsub.f32 %v3747, %v3748
  %v3750 = vand.u32 %v3749, 4294901760
  %3751 = vmatpush.msra.mxu0 %v3750
  %v3752 = vand.u32 %v86, 4294901760
  %v3753 = vsub.f32 %v86, %v3752
  %v3754 = vand.u32 %v3753, 4294901760
  %v3755 = vsub.f32 %v3753, %v3754
  %v3756 = vand.u32 %v3755, 4294901760
  %3757 = vmatpush.msra.mxu0 %v3756
  %v3758 = vand.u32 %v84, 4294901760
  %v3759 = vsub.f32 %v84, %v3758
  %v3760 = vand.u32 %v3759, 4294901760
  %v3761 = vsub.f32 %v3759, %v3760
  %v3762 = vand.u32 %v3761, 4294901760
  %3763 = vmatpush.msra.mxu0 %v3762
  %v3764 = vand.u32 %v82, 4294901760
  %v3765 = vsub.f32 %v82, %v3764
  %v3766 = vand.u32 %v3765, 4294901760
  %v3767 = vsub.f32 %v3765, %v3766
  %v3768 = vand.u32 %v3767, 4294901760
  %3769 = vmatpush.msra.mxu0 %v3768
  %v3770 = vand.u32 %v80, 4294901760
  %v3771 = vsub.f32 %v80, %v3770
  %v3772 = vand.u32 %v3771, 4294901760
  %v3773 = vsub.f32 %v3771, %v3772
  %v3774 = vand.u32 %v3773, 4294901760
  %3775 = vmatpush.msra.mxu0 %v3774
  %v3776 = vand.u32 %v78, 4294901760
  %v3777 = vsub.f32 %v78, %v3776
  %v3778 = vand.u32 %v3777, 4294901760
  %v3779 = vsub.f32 %v3777, %v3778
  %v3780 = vand.u32 %v3779, 4294901760
  %3781 = vmatpush.msra.mxu0 %v3780
  %v3782 = vand.u32 %v29, 4294901760
  %3783 = vmatmul.f32.gmra.mxu0 %v3782
  %v3784 = vpop.f32.mrf.mxu0
  %v3785 = vadd.f32 %v3628, %v3784
  %v3786 = vand.u32 %v35, 4294901760
  %3787 = vmatmul.f32.gmra.mxu0 %v3786
  %v3788 = vpop.f32.mrf.mxu0
  %v3789 = vadd.f32 %v3636, %v3788
  %v3790 = vand.u32 %v41, 4294901760
  %3791 = vmatmul.f32.gmra.mxu0 %v3790
  %v3792 = vpop.f32.mrf.mxu0
  %v3793 = vadd.f32 %v3644, %v3792
  %v3794 = vand.u32 %v47, 4294901760
  %3795 = vmatmul.f32.gmra.mxu0 %v3794
  %v3796 = vpop.f32.mrf.mxu0
  %v3797 = vadd.f32 %v3652, %v3796
  %v3798 = vand.u32 %v53, 4294901760
  %3799 = vmatmul.f32.gmra.mxu0 %v3798
  %v3800 = vpop.f32.mrf.mxu0
  %v3801 = vadd.f32 %v3660, %v3800
  %v3802 = vand.u32 %v59, 4294901760
  %3803 = vmatmul.f32.gmra.mxu0 %v3802
  %v3804 = vpop.f32.mrf.mxu0
  %v3805 = vadd.f32 %v3668, %v3804
  %v3806 = vand.u32 %v65, 4294901760
  %3807 = vmatmul.f32.gmra.mxu0 %v3806
  %v3808 = vpop.f32.mrf.mxu0
  %v3809 = vadd.f32 %v3676, %v3808
  %v3810 = vand.u32 %v71, 4294901760
  %3811 = vmatmul.f32.gmra.mxu0 %v3810
  %v3812 = vpop.f32.mrf.mxu0
  %v3813 = vadd.f32 %v3684, %v3812
  %3814 = vdwg.mxu0
  %v3815 = vand.u32 %v108, 4294901760
  %v3816 = vsub.f32 %v108, %v3815
  %3817 = vmatpush.msra.mxu0 %v3816
  %v3818 = vand.u32 %v106, 4294901760
  %v3819 = vsub.f32 %v106, %v3818
  %3820 = vmatpush.msra.mxu0 %v3819
  %v3821 = vand.u32 %v104, 4294901760
  %v3822 = vsub.f32 %v104, %v3821
  %3823 = vmatpush.msra.mxu0 %v3822
  %v3824 = vand.u32 %v102, 4294901760
  %v3825 = vsub.f32 %v102, %v3824
  %3826 = vmatpush.msra.mxu0 %v3825
  %v3827 = vand.u32 %v100, 4294901760
  %v3828 = vsub.f32 %v100, %v3827
  %3829 = vmatpush.msra.mxu0 %v3828
  %v3830 = vand.u32 %v98, 4294901760
  %v3831 = vsub.f32 %v98, %v3830
  %3832 = vmatpush.msra.mxu0 %v3831
  %v3833 = vand.u32 %v96, 4294901760
  %v3834 = vsub.f32 %v96, %v3833
  %3835 = vmatpush.msra.mxu0 %v3834
  %v3836 = vand.u32 %v94, 4294901760
  %v3837 = vsub.f32 %v94, %v3836
  %3838 = vmatpush.msra.mxu0 %v3837
  %v3839 = vand.u32 %v92, 4294901760
  %v3840 = vsub.f32 %v92, %v3839
  %3841 = vmatpush.msra.mxu0 %v3840
  %v3842 = vand.u32 %v90, 4294901760
  %v3843 = vsub.f32 %v90, %v3842
  %3844 = vmatpush.msra.mxu0 %v3843
  %v3845 = vand.u32 %v88, 4294901760
  %v3846 = vsub.f32 %v88, %v3845
  %3847 = vmatpush.msra.mxu0 %v3846
  %v3848 = vand.u32 %v86, 4294901760
  %v3849 = vsub.f32 %v86, %v3848
  %3850 = vmatpush.msra.mxu0 %v3849
  %v3851 = vand.u32 %v84, 4294901760
  %v3852 = vsub.f32 %v84, %v3851
  %3853 = vmatpush.msra.mxu0 %v3852
  %v3854 = vand.u32 %v82, 4294901760
  %v3855 = vsub.f32 %v82, %v3854
  %3856 = vmatpush.msra.mxu0 %v3855
  %v3857 = vand.u32 %v80, 4294901760
  %v3858 = vsub.f32 %v80, %v3857
  %3859 = vmatpush.msra.mxu0 %v3858
  %v3860 = vand.u32 %v78, 4294901760
  %v3861 = vsub.f32 %v78, %v3860
  %3862 = vmatpush.msra.mxu0 %v3861
  %v3863 = vand.u32 %v29, 4294901760
  %v3864 = vsub.f32 %v29, %v3863
  %3865 = vmatmul.f32.gmra.mxu0 %v3864
  %v3866 = vpop.f32.mrf.mxu0
  %v3867 = vadd.f32 %v3785, %v3866
  %v3868 = vand.u32 %v35, 4294901760
  %v3869 = vsub.f32 %v35, %v3868
  %3870 = vmatmul.f32.gmra.mxu0 %v3869
  %v3871 = vpop.f32.mrf.mxu0
  %v3872 = vadd.f32 %v3789, %v3871
  %v3873 = vand.u32 %v41, 4294901760
  %v3874 = vsub.f32 %v41, %v3873
  %3875 = vmatmul.f32.gmra.mxu0 %v3874
  %v3876 = vpop.f32.mrf.mxu0
  %v3877 = vadd.f32 %v3793, %v3876
  %v3878 = vand.u32 %v47, 4294901760
  %v3879 = vsub.f32 %v47, %v3878
  %3880 = vmatmul.f32.gmra.mxu0 %v3879
  %v3881 = vpop.f32.mrf.mxu0
  %v3882 = vadd.f32 %v3797, %v3881
  %v3883 = vand.u32 %v53, 4294901760
  %v3884 = vsub.f32 %v53, %v3883
  %3885 = vmatmul.f32.gmra.mxu0 %v3884
  %v3886 = vpop.f32.mrf.mxu0
  %v3887 = vadd.f32 %v3801, %v3886
  %v3888 = vand.u32 %v59, 4294901760
  %v3889 = vsub.f32 %v59, %v3888
  %3890 = vmatmul.f32.gmra.mxu0 %v3889
  %v3891 = vpop.f32.mrf.mxu0
  %v3892 = vadd.f32 %v3805, %v3891
  %v3893 = vand.u32 %v65, 4294901760
  %v3894 = vsub.f32 %v65, %v3893
  %3895 = vmatmul.f32.gmra.mxu0 %v3894
  %v3896 = vpop.f32.mrf.mxu0
  %v3897 = vadd.f32 %v3809, %v3896
  %v3898 = vand.u32 %v71, 4294901760
  %v3899 = vsub.f32 %v71, %v3898
  %3900 = vmatmul.f32.gmra.mxu0 %v3899
  %v3901 = vpop.f32.mrf.mxu0
  %v3902 = vadd.f32 %v3813, %v3901
  %3903 = vdwg.mxu0
  %v3904 = vand.u32 %v108, 4294901760
  %3905 = vmatpush.msra.mxu0 %v3904
  %v3906 = vand.u32 %v106, 4294901760
  %3907 = vmatpush.msra.mxu0 %v3906
  %v3908 = vand.u32 %v104, 4294901760
  %3909 = vmatpush.msra.mxu0 %v3908
  %v3910 = vand.u32 %v102, 4294901760
  %3911 = vmatpush.msra.mxu0 %v3910
  %v3912 = vand.u32 %v100, 4294901760
  %3913 = vmatpush.msra.mxu0 %v3912
  %v3914 = vand.u32 %v98, 4294901760
  %3915 = vmatpush.msra.mxu0 %v3914
  %v3916 = vand.u32 %v96, 4294901760
  %3917 = vmatpush.msra.mxu0 %v3916
  %v3918 = vand.u32 %v94, 4294901760
  %3919 = vmatpush.msra.mxu0 %v3918
  %v3920 = vand.u32 %v92, 4294901760
  %3921 = vmatpush.msra.mxu0 %v3920
  %v3922 = vand.u32 %v90, 4294901760
  %3923 = vmatpush.msra.mxu0 %v3922
  %v3924 = vand.u32 %v88, 4294901760
  %3925 = vmatpush.msra.mxu0 %v3924
  %v3926 = vand.u32 %v86, 4294901760
  %3927 = vmatpush.msra.mxu0 %v3926
  %v3928 = vand.u32 %v84, 4294901760
  %3929 = vmatpush.msra.mxu0 %v3928
  %v3930 = vand.u32 %v82, 4294901760
  %3931 = vmatpush.msra.mxu0 %v3930
  %v3932 = vand.u32 %v80, 4294901760
  %3933 = vmatpush.msra.mxu0 %v3932
  %v3934 = vand.u32 %v78, 4294901760
  %3935 = vmatpush.msra.mxu0 %v3934
  %v3936 = vand.u32 %v29, 4294901760
  %v3937 = vsub.f32 %v29, %v3936
  %v3938 = vand.u32 %v3937, 4294901760
  %3939 = vmatmul.f32.gmra.mxu0 %v3938
  %v3940 = vpop.f32.mrf.mxu0
  %v3941 = vadd.f32 %v3867, %v3940
  %v3942 = vand.u32 %v35, 4294901760
  %v3943 = vsub.f32 %v35, %v3942
  %v3944 = vand.u32 %v3943, 4294901760
  %3945 = vmatmul.f32.gmra.mxu0 %v3944
  %v3946 = vpop.f32.mrf.mxu0
  %v3947 = vadd.f32 %v3872, %v3946
  %v3948 = vand.u32 %v41, 4294901760
  %v3949 = vsub.f32 %v41, %v3948
  %v3950 = vand.u32 %v3949, 4294901760
  %3951 = vmatmul.f32.gmra.mxu0 %v3950
  %v3952 = vpop.f32.mrf.mxu0
  %v3953 = vadd.f32 %v3877, %v3952
  %v3954 = vand.u32 %v47, 4294901760
  %v3955 = vsub.f32 %v47, %v3954
  %v3956 = vand.u32 %v3955, 4294901760
  %3957 = vmatmul.f32.gmra.mxu0 %v3956
  %v3958 = vpop.f32.mrf.mxu0
  %v3959 = vadd.f32 %v3882, %v3958
  %v3960 = vand.u32 %v53, 4294901760
  %v3961 = vsub.f32 %v53, %v3960
  %v3962 = vand.u32 %v3961, 4294901760
  %3963 = vmatmul.f32.gmra.mxu0 %v3962
  %v3964 = vpop.f32.mrf.mxu0
  %v3965 = vadd.f32 %v3887, %v3964
  %v3966 = vand.u32 %v59, 4294901760
  %v3967 = vsub.f32 %v59, %v3966
  %v3968 = vand.u32 %v3967, 4294901760
  %3969 = vmatmul.f32.gmra.mxu0 %v3968
  %v3970 = vpop.f32.mrf.mxu0
  %v3971 = vadd.f32 %v3892, %v3970
  %v3972 = vand.u32 %v65, 4294901760
  %v3973 = vsub.f32 %v65, %v3972
  %v3974 = vand.u32 %v3973, 4294901760
  %3975 = vmatmul.f32.gmra.mxu0 %v3974
  %v3976 = vpop.f32.mrf.mxu0
  %v3977 = vadd.f32 %v3897, %v3976
  %v3978 = vand.u32 %v71, 4294901760
  %v3979 = vsub.f32 %v71, %v3978
  %v3980 = vand.u32 %v3979, 4294901760
  %3981 = vmatmul.f32.gmra.mxu0 %v3980
  %v3982 = vpop.f32.mrf.mxu0
  %v3983 = vadd.f32 %v3902, %v3982
  %3984 = vdwg.mxu0
  %v3985 = vand.u32 %v108, 4294901760
  %v3986 = vsub.f32 %v108, %v3985
  %v3987 = vand.u32 %v3986, 4294901760
  %3988 = vmatpush.msra.mxu0 %v3987
  %v3989 = vand.u32 %v106, 4294901760
  %v3990 = vsub.f32 %v106, %v3989
  %v3991 = vand.u32 %v3990, 4294901760
  %3992 = vmatpush.msra.mxu0 %v3991
  %v3993 = vand.u32 %v104, 4294901760
  %v3994 = vsub.f32 %v104, %v3993
  %v3995 = vand.u32 %v3994, 4294901760
  %3996 = vmatpush.msra.mxu0 %v3995
  %v3997 = vand.u32 %v102, 4294901760
  %v3998 = vsub.f32 %v102, %v3997
  %v3999 = vand.u32 %v3998, 4294901760
  %4000 = vmatpush.msra.mxu0 %v3999
  %v4001 = vand.u32 %v100, 4294901760
  %v4002 = vsub.f32 %v100, %v4001
  %v4003 = vand.u32 %v4002, 4294901760
  %4004 = vmatpush.msra.mxu0 %v4003
  %v4005 = vand.u32 %v98, 4294901760
  %v4006 = vsub.f32 %v98, %v4005
  %v4007 = vand.u32 %v4006, 4294901760
  %4008 = vmatpush.msra.mxu0 %v4007
  %v4009 = vand.u32 %v96, 4294901760
  %v4010 = vsub.f32 %v96, %v4009
  %v4011 = vand.u32 %v4010, 4294901760
  %4012 = vmatpush.msra.mxu0 %v4011
  %v4013 = vand.u32 %v94, 4294901760
  %v4014 = vsub.f32 %v94, %v4013
  %v4015 = vand.u32 %v4014, 4294901760
  %4016 = vmatpush.msra.mxu0 %v4015
  %v4017 = vand.u32 %v92, 4294901760
  %v4018 = vsub.f32 %v92, %v4017
  %v4019 = vand.u32 %v4018, 4294901760
  %4020 = vmatpush.msra.mxu0 %v4019
  %v4021 = vand.u32 %v90, 4294901760
  %v4022 = vsub.f32 %v90, %v4021
  %v4023 = vand.u32 %v4022, 4294901760
  %4024 = vmatpush.msra.mxu0 %v4023
  %v4025 = vand.u32 %v88, 4294901760
  %v4026 = vsub.f32 %v88, %v4025
  %v4027 = vand.u32 %v4026, 4294901760
  %4028 = vmatpush.msra.mxu0 %v4027
  %v4029 = vand.u32 %v86, 4294901760
  %v4030 = vsub.f32 %v86, %v4029
  %v4031 = vand.u32 %v4030, 4294901760
  %4032 = vmatpush.msra.mxu0 %v4031
  %v4033 = vand.u32 %v84, 4294901760
  %v4034 = vsub.f32 %v84, %v4033
  %v4035 = vand.u32 %v4034, 4294901760
  %4036 = vmatpush.msra.mxu0 %v4035
  %v4037 = vand.u32 %v82, 4294901760
  %v4038 = vsub.f32 %v82, %v4037
  %v4039 = vand.u32 %v4038, 4294901760
  %4040 = vmatpush.msra.mxu0 %v4039
  %v4041 = vand.u32 %v80, 4294901760
  %v4042 = vsub.f32 %v80, %v4041
  %v4043 = vand.u32 %v4042, 4294901760
  %4044 = vmatpush.msra.mxu0 %v4043
  %v4045 = vand.u32 %v78, 4294901760
  %v4046 = vsub.f32 %v78, %v4045
  %v4047 = vand.u32 %v4046, 4294901760
  %4048 = vmatpush.msra.mxu0 %v4047
  %v4049 = vand.u32 %v29, 4294901760
  %4050 = vmatmul.f32.gmra.mxu0 %v4049
  %v4051 = vpop.f32.mrf.mxu0
  %v4052 = vadd.f32 %v3941, %v4051
  %v4053 = vand.u32 %v35, 4294901760
  %4054 = vmatmul.f32.gmra.mxu0 %v4053
  %v4055 = vpop.f32.mrf.mxu0
  %v4056 = vadd.f32 %v3947, %v4055
  %v4057 = vand.u32 %v41, 4294901760
  %4058 = vmatmul.f32.gmra.mxu0 %v4057
  %v4059 = vpop.f32.mrf.mxu0
  %v4060 = vadd.f32 %v3953, %v4059
  %v4061 = vand.u32 %v47, 4294901760
  %4062 = vmatmul.f32.gmra.mxu0 %v4061
  %v4063 = vpop.f32.mrf.mxu0
  %v4064 = vadd.f32 %v3959, %v4063
  %v4065 = vand.u32 %v53, 4294901760
  %4066 = vmatmul.f32.gmra.mxu0 %v4065
  %v4067 = vpop.f32.mrf.mxu0
  %v4068 = vadd.f32 %v3965, %v4067
  %v4069 = vand.u32 %v59, 4294901760
  %4070 = vmatmul.f32.gmra.mxu0 %v4069
  %v4071 = vpop.f32.mrf.mxu0
  %v4072 = vadd.f32 %v3971, %v4071
  %v4073 = vand.u32 %v65, 4294901760
  %4074 = vmatmul.f32.gmra.mxu0 %v4073
  %v4075 = vpop.f32.mrf.mxu0
  %v4076 = vadd.f32 %v3977, %v4075
  %v4077 = vand.u32 %v71, 4294901760
  %4078 = vmatmul.f32.gmra.mxu0 %v4077
  %v4079 = vpop.f32.mrf.mxu0
  %v4080 = vadd.f32 %v3983, %v4079
  %4081 = vdwg.mxu0
  %v4082 = vand.u32 %v108, 4294901760
  %4083 = vmatpush.msra.mxu0 %v4082
  %v4084 = vand.u32 %v106, 4294901760
  %4085 = vmatpush.msra.mxu0 %v4084
  %v4086 = vand.u32 %v104, 4294901760
  %4087 = vmatpush.msra.mxu0 %v4086
  %v4088 = vand.u32 %v102, 4294901760
  %4089 = vmatpush.msra.mxu0 %v4088
  %v4090 = vand.u32 %v100, 4294901760
  %4091 = vmatpush.msra.mxu0 %v4090
  %v4092 = vand.u32 %v98, 4294901760
  %4093 = vmatpush.msra.mxu0 %v4092
  %v4094 = vand.u32 %v96, 4294901760
  %4095 = vmatpush.msra.mxu0 %v4094
  %v4096 = vand.u32 %v94, 4294901760
  %4097 = vmatpush.msra.mxu0 %v4096
  %v4098 = vand.u32 %v92, 4294901760
  %4099 = vmatpush.msra.mxu0 %v4098
  %v4100 = vand.u32 %v90, 4294901760
  %4101 = vmatpush.msra.mxu0 %v4100
  %v4102 = vand.u32 %v88, 4294901760
  %4103 = vmatpush.msra.mxu0 %v4102
  %v4104 = vand.u32 %v86, 4294901760
  %4105 = vmatpush.msra.mxu0 %v4104
  %v4106 = vand.u32 %v84, 4294901760
  %4107 = vmatpush.msra.mxu0 %v4106
  %v4108 = vand.u32 %v82, 4294901760
  %4109 = vmatpush.msra.mxu0 %v4108
  %v4110 = vand.u32 %v80, 4294901760
  %4111 = vmatpush.msra.mxu0 %v4110
  %v4112 = vand.u32 %v78, 4294901760
  %4113 = vmatpush.msra.mxu0 %v4112
  %v4114 = vand.u32 %v29, 4294901760
  %4115 = vmatmul.f32.gmra.mxu0 %v4114
  %v4116 = vpop.f32.mrf.mxu0
  %v4117 = vadd.f32 %v4052, %v4116
  %v4118 = vand.u32 %v35, 4294901760
  %4119 = vmatmul.f32.gmra.mxu0 %v4118
  %v4120 = vpop.f32.mrf.mxu0
  %v4121 = vadd.f32 %v4056, %v4120
  %v4122 = vand.u32 %v41, 4294901760
  %4123 = vmatmul.f32.gmra.mxu0 %v4122
  %v4124 = vpop.f32.mrf.mxu0
  %v4125 = vadd.f32 %v4060, %v4124
  %v4126 = vand.u32 %v47, 4294901760
  %4127 = vmatmul.f32.gmra.mxu0 %v4126
  %v4128 = vpop.f32.mrf.mxu0
  %v4129 = vadd.f32 %v4064, %v4128
  %v4130 = vand.u32 %v53, 4294901760
  %4131 = vmatmul.f32.gmra.mxu0 %v4130
  %v4132 = vpop.f32.mrf.mxu0
  %v4133 = vadd.f32 %v4068, %v4132
  %v4134 = vand.u32 %v59, 4294901760
  %4135 = vmatmul.f32.gmra.mxu0 %v4134
  %v4136 = vpop.f32.mrf.mxu0
  %v4137 = vadd.f32 %v4072, %v4136
  %v4138 = vand.u32 %v65, 4294901760
  %4139 = vmatmul.f32.gmra.mxu0 %v4138
  %v4140 = vpop.f32.mrf.mxu0
  %v4141 = vadd.f32 %v4076, %v4140
  %v4142 = vand.u32 %v71, 4294901760
  %4143 = vmatmul.f32.gmra.mxu0 %v4142
  %v4144 = vpop.f32.mrf.mxu0
  %v4145 = vadd.f32 %v4080, %v4144
  %4146 = vdwg.mxu0
  %v4147 = vand.u32 %v140, 4294901760
  %4148 = vmatpush.msra.mxu0 %v4147
  %v4149 = vand.u32 %v138, 4294901760
  %4150 = vmatpush.msra.mxu0 %v4149
  %v4151 = vand.u32 %v136, 4294901760
  %4152 = vmatpush.msra.mxu0 %v4151
  %v4153 = vand.u32 %v134, 4294901760
  %4154 = vmatpush.msra.mxu0 %v4153
  %v4155 = vand.u32 %v132, 4294901760
  %4156 = vmatpush.msra.mxu0 %v4155
  %v4157 = vand.u32 %v130, 4294901760
  %4158 = vmatpush.msra.mxu0 %v4157
  %v4159 = vand.u32 %v128, 4294901760
  %4160 = vmatpush.msra.mxu0 %v4159
  %v4161 = vand.u32 %v126, 4294901760
  %4162 = vmatpush.msra.mxu0 %v4161
  %v4163 = vand.u32 %v124, 4294901760
  %4164 = vmatpush.msra.mxu0 %v4163
  %v4165 = vand.u32 %v122, 4294901760
  %4166 = vmatpush.msra.mxu0 %v4165
  %v4167 = vand.u32 %v120, 4294901760
  %4168 = vmatpush.msra.mxu0 %v4167
  %v4169 = vand.u32 %v118, 4294901760
  %4170 = vmatpush.msra.mxu0 %v4169
  %v4171 = vand.u32 %v116, 4294901760
  %4172 = vmatpush.msra.mxu0 %v4171
  %v4173 = vand.u32 %v114, 4294901760
  %4174 = vmatpush.msra.mxu0 %v4173
  %v4175 = vand.u32 %v112, 4294901760
  %4176 = vmatpush.msra.mxu0 %v4175
  %v4177 = vand.u32 %v110, 4294901760
  %4178 = vmatpush.msra.mxu0 %v4177
  %v4179 = vand.u32 %v30, 4294901760
  %v4180 = vsub.f32 %v30, %v4179
  %v4181 = vand.u32 %v4180, 4294901760
  %v4182 = vsub.f32 %v4180, %v4181
  %v4183 = vand.u32 %v4182, 4294901760
  %4184 = vmatmul.f32.gmra.mxu0 %v4183
  %v4185 = vpop.f32.mrf.mxu0
  %v4186 = vadd.f32 %v4117, %v4185
  %v4187 = vand.u32 %v36, 4294901760
  %v4188 = vsub.f32 %v36, %v4187
  %v4189 = vand.u32 %v4188, 4294901760
  %v4190 = vsub.f32 %v4188, %v4189
  %v4191 = vand.u32 %v4190, 4294901760
  %4192 = vmatmul.f32.gmra.mxu0 %v4191
  %v4193 = vpop.f32.mrf.mxu0
  %v4194 = vadd.f32 %v4121, %v4193
  %v4195 = vand.u32 %v42, 4294901760
  %v4196 = vsub.f32 %v42, %v4195
  %v4197 = vand.u32 %v4196, 4294901760
  %v4198 = vsub.f32 %v4196, %v4197
  %v4199 = vand.u32 %v4198, 4294901760
  %4200 = vmatmul.f32.gmra.mxu0 %v4199
  %v4201 = vpop.f32.mrf.mxu0
  %v4202 = vadd.f32 %v4125, %v4201
  %v4203 = vand.u32 %v48, 4294901760
  %v4204 = vsub.f32 %v48, %v4203
  %v4205 = vand.u32 %v4204, 4294901760
  %v4206 = vsub.f32 %v4204, %v4205
  %v4207 = vand.u32 %v4206, 4294901760
  %4208 = vmatmul.f32.gmra.mxu0 %v4207
  %v4209 = vpop.f32.mrf.mxu0
  %v4210 = vadd.f32 %v4129, %v4209
  %v4211 = vand.u32 %v54, 4294901760
  %v4212 = vsub.f32 %v54, %v4211
  %v4213 = vand.u32 %v4212, 4294901760
  %v4214 = vsub.f32 %v4212, %v4213
  %v4215 = vand.u32 %v4214, 4294901760
  %4216 = vmatmul.f32.gmra.mxu0 %v4215
  %v4217 = vpop.f32.mrf.mxu0
  %v4218 = vadd.f32 %v4133, %v4217
  %v4219 = vand.u32 %v60, 4294901760
  %v4220 = vsub.f32 %v60, %v4219
  %v4221 = vand.u32 %v4220, 4294901760
  %v4222 = vsub.f32 %v4220, %v4221
  %v4223 = vand.u32 %v4222, 4294901760
  %4224 = vmatmul.f32.gmra.mxu0 %v4223
  %v4225 = vpop.f32.mrf.mxu0
  %v4226 = vadd.f32 %v4137, %v4225
  %v4227 = vand.u32 %v66, 4294901760
  %v4228 = vsub.f32 %v66, %v4227
  %v4229 = vand.u32 %v4228, 4294901760
  %v4230 = vsub.f32 %v4228, %v4229
  %v4231 = vand.u32 %v4230, 4294901760
  %4232 = vmatmul.f32.gmra.mxu0 %v4231
  %v4233 = vpop.f32.mrf.mxu0
  %v4234 = vadd.f32 %v4141, %v4233
  %v4235 = vand.u32 %v72, 4294901760
  %v4236 = vsub.f32 %v72, %v4235
  %v4237 = vand.u32 %v4236, 4294901760
  %v4238 = vsub.f32 %v4236, %v4237
  %v4239 = vand.u32 %v4238, 4294901760
  %4240 = vmatmul.f32.gmra.mxu0 %v4239
  %v4241 = vpop.f32.mrf.mxu0
  %v4242 = vadd.f32 %v4145, %v4241
  %4243 = vdwg.mxu0
  %v4244 = vand.u32 %v140, 4294901760
  %v4245 = vsub.f32 %v140, %v4244
  %v4246 = vand.u32 %v4245, 4294901760
  %v4247 = vsub.f32 %v4245, %v4246
  %v4248 = vand.u32 %v4247, 4294901760
  %4249 = vmatpush.msra.mxu0 %v4248
  %v4250 = vand.u32 %v138, 4294901760
  %v4251 = vsub.f32 %v138, %v4250
  %v4252 = vand.u32 %v4251, 4294901760
  %v4253 = vsub.f32 %v4251, %v4252
  %v4254 = vand.u32 %v4253, 4294901760
  %4255 = vmatpush.msra.mxu0 %v4254
  %v4256 = vand.u32 %v136, 4294901760
  %v4257 = vsub.f32 %v136, %v4256
  %v4258 = vand.u32 %v4257, 4294901760
  %v4259 = vsub.f32 %v4257, %v4258
  %v4260 = vand.u32 %v4259, 4294901760
  %4261 = vmatpush.msra.mxu0 %v4260
  %v4262 = vand.u32 %v134, 4294901760
  %v4263 = vsub.f32 %v134, %v4262
  %v4264 = vand.u32 %v4263, 4294901760
  %v4265 = vsub.f32 %v4263, %v4264
  %v4266 = vand.u32 %v4265, 4294901760
  %4267 = vmatpush.msra.mxu0 %v4266
  %v4268 = vand.u32 %v132, 4294901760
  %v4269 = vsub.f32 %v132, %v4268
  %v4270 = vand.u32 %v4269, 4294901760
  %v4271 = vsub.f32 %v4269, %v4270
  %v4272 = vand.u32 %v4271, 4294901760
  %4273 = vmatpush.msra.mxu0 %v4272
  %v4274 = vand.u32 %v130, 4294901760
  %v4275 = vsub.f32 %v130, %v4274
  %v4276 = vand.u32 %v4275, 4294901760
  %v4277 = vsub.f32 %v4275, %v4276
  %v4278 = vand.u32 %v4277, 4294901760
  %4279 = vmatpush.msra.mxu0 %v4278
  %v4280 = vand.u32 %v128, 4294901760
  %v4281 = vsub.f32 %v128, %v4280
  %v4282 = vand.u32 %v4281, 4294901760
  %v4283 = vsub.f32 %v4281, %v4282
  %v4284 = vand.u32 %v4283, 4294901760
  %4285 = vmatpush.msra.mxu0 %v4284
  %v4286 = vand.u32 %v126, 4294901760
  %v4287 = vsub.f32 %v126, %v4286
  %v4288 = vand.u32 %v4287, 4294901760
  %v4289 = vsub.f32 %v4287, %v4288
  %v4290 = vand.u32 %v4289, 4294901760
  %4291 = vmatpush.msra.mxu0 %v4290
  %v4292 = vand.u32 %v124, 4294901760
  %v4293 = vsub.f32 %v124, %v4292
  %v4294 = vand.u32 %v4293, 4294901760
  %v4295 = vsub.f32 %v4293, %v4294
  %v4296 = vand.u32 %v4295, 4294901760
  %4297 = vmatpush.msra.mxu0 %v4296
  %v4298 = vand.u32 %v122, 4294901760
  %v4299 = vsub.f32 %v122, %v4298
  %v4300 = vand.u32 %v4299, 4294901760
  %v4301 = vsub.f32 %v4299, %v4300
  %v4302 = vand.u32 %v4301, 4294901760
  %4303 = vmatpush.msra.mxu0 %v4302
  %v4304 = vand.u32 %v120, 4294901760
  %v4305 = vsub.f32 %v120, %v4304
  %v4306 = vand.u32 %v4305, 4294901760
  %v4307 = vsub.f32 %v4305, %v4306
  %v4308 = vand.u32 %v4307, 4294901760
  %4309 = vmatpush.msra.mxu0 %v4308
  %v4310 = vand.u32 %v118, 4294901760
  %v4311 = vsub.f32 %v118, %v4310
  %v4312 = vand.u32 %v4311, 4294901760
  %v4313 = vsub.f32 %v4311, %v4312
  %v4314 = vand.u32 %v4313, 4294901760
  %4315 = vmatpush.msra.mxu0 %v4314
  %v4316 = vand.u32 %v116, 4294901760
  %v4317 = vsub.f32 %v116, %v4316
  %v4318 = vand.u32 %v4317, 4294901760
  %v4319 = vsub.f32 %v4317, %v4318
  %v4320 = vand.u32 %v4319, 4294901760
  %4321 = vmatpush.msra.mxu0 %v4320
  %v4322 = vand.u32 %v114, 4294901760
  %v4323 = vsub.f32 %v114, %v4322
  %v4324 = vand.u32 %v4323, 4294901760
  %v4325 = vsub.f32 %v4323, %v4324
  %v4326 = vand.u32 %v4325, 4294901760
  %4327 = vmatpush.msra.mxu0 %v4326
  %v4328 = vand.u32 %v112, 4294901760
  %v4329 = vsub.f32 %v112, %v4328
  %v4330 = vand.u32 %v4329, 4294901760
  %v4331 = vsub.f32 %v4329, %v4330
  %v4332 = vand.u32 %v4331, 4294901760
  %4333 = vmatpush.msra.mxu0 %v4332
  %v4334 = vand.u32 %v110, 4294901760
  %v4335 = vsub.f32 %v110, %v4334
  %v4336 = vand.u32 %v4335, 4294901760
  %v4337 = vsub.f32 %v4335, %v4336
  %v4338 = vand.u32 %v4337, 4294901760
  %4339 = vmatpush.msra.mxu0 %v4338
  %v4340 = vand.u32 %v30, 4294901760
  %4341 = vmatmul.f32.gmra.mxu0 %v4340
  %v4342 = vpop.f32.mrf.mxu0
  %v4343 = vadd.f32 %v4186, %v4342
  %v4344 = vand.u32 %v36, 4294901760
  %4345 = vmatmul.f32.gmra.mxu0 %v4344
  %v4346 = vpop.f32.mrf.mxu0
  %v4347 = vadd.f32 %v4194, %v4346
  %v4348 = vand.u32 %v42, 4294901760
  %4349 = vmatmul.f32.gmra.mxu0 %v4348
  %v4350 = vpop.f32.mrf.mxu0
  %v4351 = vadd.f32 %v4202, %v4350
  %v4352 = vand.u32 %v48, 4294901760
  %4353 = vmatmul.f32.gmra.mxu0 %v4352
  %v4354 = vpop.f32.mrf.mxu0
  %v4355 = vadd.f32 %v4210, %v4354
  %v4356 = vand.u32 %v54, 4294901760
  %4357 = vmatmul.f32.gmra.mxu0 %v4356
  %v4358 = vpop.f32.mrf.mxu0
  %v4359 = vadd.f32 %v4218, %v4358
  %v4360 = vand.u32 %v60, 4294901760
  %4361 = vmatmul.f32.gmra.mxu0 %v4360
  %v4362 = vpop.f32.mrf.mxu0
  %v4363 = vadd.f32 %v4226, %v4362
  %v4364 = vand.u32 %v66, 4294901760
  %4365 = vmatmul.f32.gmra.mxu0 %v4364
  %v4366 = vpop.f32.mrf.mxu0
  %v4367 = vadd.f32 %v4234, %v4366
  %v4368 = vand.u32 %v72, 4294901760
  %4369 = vmatmul.f32.gmra.mxu0 %v4368
  %v4370 = vpop.f32.mrf.mxu0
  %v4371 = vadd.f32 %v4242, %v4370
  %4372 = vdwg.mxu0
  %v4373 = vand.u32 %v140, 4294901760
  %v4374 = vsub.f32 %v140, %v4373
  %4375 = vmatpush.msra.mxu0 %v4374
  %v4376 = vand.u32 %v138, 4294901760
  %v4377 = vsub.f32 %v138, %v4376
  %4378 = vmatpush.msra.mxu0 %v4377
  %v4379 = vand.u32 %v136, 4294901760
  %v4380 = vsub.f32 %v136, %v4379
  %4381 = vmatpush.msra.mxu0 %v4380
  %v4382 = vand.u32 %v134, 4294901760
  %v4383 = vsub.f32 %v134, %v4382
  %4384 = vmatpush.msra.mxu0 %v4383
  %v4385 = vand.u32 %v132, 4294901760
  %v4386 = vsub.f32 %v132, %v4385
  %4387 = vmatpush.msra.mxu0 %v4386
  %v4388 = vand.u32 %v130, 4294901760
  %v4389 = vsub.f32 %v130, %v4388
  %4390 = vmatpush.msra.mxu0 %v4389
  %v4391 = vand.u32 %v128, 4294901760
  %v4392 = vsub.f32 %v128, %v4391
  %4393 = vmatpush.msra.mxu0 %v4392
  %v4394 = vand.u32 %v126, 4294901760
  %v4395 = vsub.f32 %v126, %v4394
  %4396 = vmatpush.msra.mxu0 %v4395
  %v4397 = vand.u32 %v124, 4294901760
  %v4398 = vsub.f32 %v124, %v4397
  %4399 = vmatpush.msra.mxu0 %v4398
  %v4400 = vand.u32 %v122, 4294901760
  %v4401 = vsub.f32 %v122, %v4400
  %4402 = vmatpush.msra.mxu0 %v4401
  %v4403 = vand.u32 %v120, 4294901760
  %v4404 = vsub.f32 %v120, %v4403
  %4405 = vmatpush.msra.mxu0 %v4404
  %v4406 = vand.u32 %v118, 4294901760
  %v4407 = vsub.f32 %v118, %v4406
  %4408 = vmatpush.msra.mxu0 %v4407
  %v4409 = vand.u32 %v116, 4294901760
  %v4410 = vsub.f32 %v116, %v4409
  %4411 = vmatpush.msra.mxu0 %v4410
  %v4412 = vand.u32 %v114, 4294901760
  %v4413 = vsub.f32 %v114, %v4412
  %4414 = vmatpush.msra.mxu0 %v4413
  %v4415 = vand.u32 %v112, 4294901760
  %v4416 = vsub.f32 %v112, %v4415
  %4417 = vmatpush.msra.mxu0 %v4416
  %v4418 = vand.u32 %v110, 4294901760
  %v4419 = vsub.f32 %v110, %v4418
  %4420 = vmatpush.msra.mxu0 %v4419
  %v4421 = vand.u32 %v30, 4294901760
  %v4422 = vsub.f32 %v30, %v4421
  %4423 = vmatmul.f32.gmra.mxu0 %v4422
  %v4424 = vpop.f32.mrf.mxu0
  %v4425 = vadd.f32 %v4343, %v4424
  %v4426 = vand.u32 %v36, 4294901760
  %v4427 = vsub.f32 %v36, %v4426
  %4428 = vmatmul.f32.gmra.mxu0 %v4427
  %v4429 = vpop.f32.mrf.mxu0
  %v4430 = vadd.f32 %v4347, %v4429
  %v4431 = vand.u32 %v42, 4294901760
  %v4432 = vsub.f32 %v42, %v4431
  %4433 = vmatmul.f32.gmra.mxu0 %v4432
  %v4434 = vpop.f32.mrf.mxu0
  %v4435 = vadd.f32 %v4351, %v4434
  %v4436 = vand.u32 %v48, 4294901760
  %v4437 = vsub.f32 %v48, %v4436
  %4438 = vmatmul.f32.gmra.mxu0 %v4437
  %v4439 = vpop.f32.mrf.mxu0
  %v4440 = vadd.f32 %v4355, %v4439
  %v4441 = vand.u32 %v54, 4294901760
  %v4442 = vsub.f32 %v54, %v4441
  %4443 = vmatmul.f32.gmra.mxu0 %v4442
  %v4444 = vpop.f32.mrf.mxu0
  %v4445 = vadd.f32 %v4359, %v4444
  %v4446 = vand.u32 %v60, 4294901760
  %v4447 = vsub.f32 %v60, %v4446
  %4448 = vmatmul.f32.gmra.mxu0 %v4447
  %v4449 = vpop.f32.mrf.mxu0
  %v4450 = vadd.f32 %v4363, %v4449
  %v4451 = vand.u32 %v66, 4294901760
  %v4452 = vsub.f32 %v66, %v4451
  %4453 = vmatmul.f32.gmra.mxu0 %v4452
  %v4454 = vpop.f32.mrf.mxu0
  %v4455 = vadd.f32 %v4367, %v4454
  %v4456 = vand.u32 %v72, 4294901760
  %v4457 = vsub.f32 %v72, %v4456
  %4458 = vmatmul.f32.gmra.mxu0 %v4457
  %v4459 = vpop.f32.mrf.mxu0
  %v4460 = vadd.f32 %v4371, %v4459
  %4461 = vdwg.mxu0
  %v4462 = vand.u32 %v140, 4294901760
  %4463 = vmatpush.msra.mxu0 %v4462
  %v4464 = vand.u32 %v138, 4294901760
  %4465 = vmatpush.msra.mxu0 %v4464
  %v4466 = vand.u32 %v136, 4294901760
  %4467 = vmatpush.msra.mxu0 %v4466
  %v4468 = vand.u32 %v134, 4294901760
  %4469 = vmatpush.msra.mxu0 %v4468
  %v4470 = vand.u32 %v132, 4294901760
  %4471 = vmatpush.msra.mxu0 %v4470
  %v4472 = vand.u32 %v130, 4294901760
  %4473 = vmatpush.msra.mxu0 %v4472
  %v4474 = vand.u32 %v128, 4294901760
  %4475 = vmatpush.msra.mxu0 %v4474
  %v4476 = vand.u32 %v126, 4294901760
  %4477 = vmatpush.msra.mxu0 %v4476
  %v4478 = vand.u32 %v124, 4294901760
  %4479 = vmatpush.msra.mxu0 %v4478
  %v4480 = vand.u32 %v122, 4294901760
  %4481 = vmatpush.msra.mxu0 %v4480
  %v4482 = vand.u32 %v120, 4294901760
  %4483 = vmatpush.msra.mxu0 %v4482
  %v4484 = vand.u32 %v118, 4294901760
  %4485 = vmatpush.msra.mxu0 %v4484
  %v4486 = vand.u32 %v116, 4294901760
  %4487 = vmatpush.msra.mxu0 %v4486
  %v4488 = vand.u32 %v114, 4294901760
  %4489 = vmatpush.msra.mxu0 %v4488
  %v4490 = vand.u32 %v112, 4294901760
  %4491 = vmatpush.msra.mxu0 %v4490
  %v4492 = vand.u32 %v110, 4294901760
  %4493 = vmatpush.msra.mxu0 %v4492
  %v4494 = vand.u32 %v30, 4294901760
  %v4495 = vsub.f32 %v30, %v4494
  %v4496 = vand.u32 %v4495, 4294901760
  %4497 = vmatmul.f32.gmra.mxu0 %v4496
  %v4498 = vpop.f32.mrf.mxu0
  %v4499 = vadd.f32 %v4425, %v4498
  %v4500 = vand.u32 %v36, 4294901760
  %v4501 = vsub.f32 %v36, %v4500
  %v4502 = vand.u32 %v4501, 4294901760
  %4503 = vmatmul.f32.gmra.mxu0 %v4502
  %v4504 = vpop.f32.mrf.mxu0
  %v4505 = vadd.f32 %v4430, %v4504
  %v4506 = vand.u32 %v42, 4294901760
  %v4507 = vsub.f32 %v42, %v4506
  %v4508 = vand.u32 %v4507, 4294901760
  %4509 = vmatmul.f32.gmra.mxu0 %v4508
  %v4510 = vpop.f32.mrf.mxu0
  %v4511 = vadd.f32 %v4435, %v4510
  %v4512 = vand.u32 %v48, 4294901760
  %v4513 = vsub.f32 %v48, %v4512
  %v4514 = vand.u32 %v4513, 4294901760
  %4515 = vmatmul.f32.gmra.mxu0 %v4514
  %v4516 = vpop.f32.mrf.mxu0
  %v4517 = vadd.f32 %v4440, %v4516
  %v4518 = vand.u32 %v54, 4294901760
  %v4519 = vsub.f32 %v54, %v4518
  %v4520 = vand.u32 %v4519, 4294901760
  %4521 = vmatmul.f32.gmra.mxu0 %v4520
  %v4522 = vpop.f32.mrf.mxu0
  %v4523 = vadd.f32 %v4445, %v4522
  %v4524 = vand.u32 %v60, 4294901760
  %v4525 = vsub.f32 %v60, %v4524
  %v4526 = vand.u32 %v4525, 4294901760
  %4527 = vmatmul.f32.gmra.mxu0 %v4526
  %v4528 = vpop.f32.mrf.mxu0
  %v4529 = vadd.f32 %v4450, %v4528
  %v4530 = vand.u32 %v66, 4294901760
  %v4531 = vsub.f32 %v66, %v4530
  %v4532 = vand.u32 %v4531, 4294901760
  %4533 = vmatmul.f32.gmra.mxu0 %v4532
  %v4534 = vpop.f32.mrf.mxu0
  %v4535 = vadd.f32 %v4455, %v4534
  %v4536 = vand.u32 %v72, 4294901760
  %v4537 = vsub.f32 %v72, %v4536
  %v4538 = vand.u32 %v4537, 4294901760
  %4539 = vmatmul.f32.gmra.mxu0 %v4538
  %v4540 = vpop.f32.mrf.mxu0
  %v4541 = vadd.f32 %v4460, %v4540
  %4542 = vdwg.mxu0
  %v4543 = vand.u32 %v140, 4294901760
  %v4544 = vsub.f32 %v140, %v4543
  %v4545 = vand.u32 %v4544, 4294901760
  %4546 = vmatpush.msra.mxu0 %v4545
  %v4547 = vand.u32 %v138, 4294901760
  %v4548 = vsub.f32 %v138, %v4547
  %v4549 = vand.u32 %v4548, 4294901760
  %4550 = vmatpush.msra.mxu0 %v4549
  %v4551 = vand.u32 %v136, 4294901760
  %v4552 = vsub.f32 %v136, %v4551
  %v4553 = vand.u32 %v4552, 4294901760
  %4554 = vmatpush.msra.mxu0 %v4553
  %v4555 = vand.u32 %v134, 4294901760
  %v4556 = vsub.f32 %v134, %v4555
  %v4557 = vand.u32 %v4556, 4294901760
  %4558 = vmatpush.msra.mxu0 %v4557
  %v4559 = vand.u32 %v132, 4294901760
  %v4560 = vsub.f32 %v132, %v4559
  %v4561 = vand.u32 %v4560, 4294901760
  %4562 = vmatpush.msra.mxu0 %v4561
  %v4563 = vand.u32 %v130, 4294901760
  %v4564 = vsub.f32 %v130, %v4563
  %v4565 = vand.u32 %v4564, 4294901760
  %4566 = vmatpush.msra.mxu0 %v4565
  %v4567 = vand.u32 %v128, 4294901760
  %v4568 = vsub.f32 %v128, %v4567
  %v4569 = vand.u32 %v4568, 4294901760
  %4570 = vmatpush.msra.mxu0 %v4569
  %v4571 = vand.u32 %v126, 4294901760
  %v4572 = vsub.f32 %v126, %v4571
  %v4573 = vand.u32 %v4572, 4294901760
  %4574 = vmatpush.msra.mxu0 %v4573
  %v4575 = vand.u32 %v124, 4294901760
  %v4576 = vsub.f32 %v124, %v4575
  %v4577 = vand.u32 %v4576, 4294901760
  %4578 = vmatpush.msra.mxu0 %v4577
  %v4579 = vand.u32 %v122, 4294901760
  %v4580 = vsub.f32 %v122, %v4579
  %v4581 = vand.u32 %v4580, 4294901760
  %4582 = vmatpush.msra.mxu0 %v4581
  %v4583 = vand.u32 %v120, 4294901760
  %v4584 = vsub.f32 %v120, %v4583
  %v4585 = vand.u32 %v4584, 4294901760
  %4586 = vmatpush.msra.mxu0 %v4585
  %v4587 = vand.u32 %v118, 4294901760
  %v4588 = vsub.f32 %v118, %v4587
  %v4589 = vand.u32 %v4588, 4294901760
  %4590 = vmatpush.msra.mxu0 %v4589
  %v4591 = vand.u32 %v116, 4294901760
  %v4592 = vsub.f32 %v116, %v4591
  %v4593 = vand.u32 %v4592, 4294901760
  %4594 = vmatpush.msra.mxu0 %v4593
  %v4595 = vand.u32 %v114, 4294901760
  %v4596 = vsub.f32 %v114, %v4595
  %v4597 = vand.u32 %v4596, 4294901760
  %4598 = vmatpush.msra.mxu0 %v4597
  %v4599 = vand.u32 %v112, 4294901760
  %v4600 = vsub.f32 %v112, %v4599
  %v4601 = vand.u32 %v4600, 4294901760
  %4602 = vmatpush.msra.mxu0 %v4601
  %v4603 = vand.u32 %v110, 4294901760
  %v4604 = vsub.f32 %v110, %v4603
  %v4605 = vand.u32 %v4604, 4294901760
  %4606 = vmatpush.msra.mxu0 %v4605
  %v4607 = vand.u32 %v30, 4294901760
  %4608 = vmatmul.f32.gmra.mxu0 %v4607
  %v4609 = vpop.f32.mrf.mxu0
  %v4610 = vadd.f32 %v4499, %v4609
  %v4611 = vand.u32 %v36, 4294901760
  %4612 = vmatmul.f32.gmra.mxu0 %v4611
  %v4613 = vpop.f32.mrf.mxu0
  %v4614 = vadd.f32 %v4505, %v4613
  %v4615 = vand.u32 %v42, 4294901760
  %4616 = vmatmul.f32.gmra.mxu0 %v4615
  %v4617 = vpop.f32.mrf.mxu0
  %v4618 = vadd.f32 %v4511, %v4617
  %v4619 = vand.u32 %v48, 4294901760
  %4620 = vmatmul.f32.gmra.mxu0 %v4619
  %v4621 = vpop.f32.mrf.mxu0
  %v4622 = vadd.f32 %v4517, %v4621
  %v4623 = vand.u32 %v54, 4294901760
  %4624 = vmatmul.f32.gmra.mxu0 %v4623
  %v4625 = vpop.f32.mrf.mxu0
  %v4626 = vadd.f32 %v4523, %v4625
  %v4627 = vand.u32 %v60, 4294901760
  %4628 = vmatmul.f32.gmra.mxu0 %v4627
  %v4629 = vpop.f32.mrf.mxu0
  %v4630 = vadd.f32 %v4529, %v4629
  %v4631 = vand.u32 %v66, 4294901760
  %4632 = vmatmul.f32.gmra.mxu0 %v4631
  %v4633 = vpop.f32.mrf.mxu0
  %v4634 = vadd.f32 %v4535, %v4633
  %v4635 = vand.u32 %v72, 4294901760
  %4636 = vmatmul.f32.gmra.mxu0 %v4635
  %v4637 = vpop.f32.mrf.mxu0
  %v4638 = vadd.f32 %v4541, %v4637
  %4639 = vdwg.mxu0
  %v4640 = vand.u32 %v140, 4294901760
  %4641 = vmatpush.msra.mxu0 %v4640
  %v4642 = vand.u32 %v138, 4294901760
  %4643 = vmatpush.msra.mxu0 %v4642
  %v4644 = vand.u32 %v136, 4294901760
  %4645 = vmatpush.msra.mxu0 %v4644
  %v4646 = vand.u32 %v134, 4294901760
  %4647 = vmatpush.msra.mxu0 %v4646
  %v4648 = vand.u32 %v132, 4294901760
  %4649 = vmatpush.msra.mxu0 %v4648
  %v4650 = vand.u32 %v130, 4294901760
  %4651 = vmatpush.msra.mxu0 %v4650
  %v4652 = vand.u32 %v128, 4294901760
  %4653 = vmatpush.msra.mxu0 %v4652
  %v4654 = vand.u32 %v126, 4294901760
  %4655 = vmatpush.msra.mxu0 %v4654
  %v4656 = vand.u32 %v124, 4294901760
  %4657 = vmatpush.msra.mxu0 %v4656
  %v4658 = vand.u32 %v122, 4294901760
  %4659 = vmatpush.msra.mxu0 %v4658
  %v4660 = vand.u32 %v120, 4294901760
  %4661 = vmatpush.msra.mxu0 %v4660
  %v4662 = vand.u32 %v118, 4294901760
  %4663 = vmatpush.msra.mxu0 %v4662
  %v4664 = vand.u32 %v116, 4294901760
  %4665 = vmatpush.msra.mxu0 %v4664
  %v4666 = vand.u32 %v114, 4294901760
  %4667 = vmatpush.msra.mxu0 %v4666
  %v4668 = vand.u32 %v112, 4294901760
  %4669 = vmatpush.msra.mxu0 %v4668
  %v4670 = vand.u32 %v110, 4294901760
  %4671 = vmatpush.msra.mxu0 %v4670
  %v4672 = vand.u32 %v30, 4294901760
  %4673 = vmatmul.f32.gmra.mxu0 %v4672
  %v4674 = vpop.f32.mrf.mxu0
  %v4675 = vadd.f32 %v4610, %v4674
  %v4676 = vand.u32 %v36, 4294901760
  %4677 = vmatmul.f32.gmra.mxu0 %v4676
  %v4678 = vpop.f32.mrf.mxu0
  %v4679 = vadd.f32 %v4614, %v4678
  %v4680 = vand.u32 %v42, 4294901760
  %4681 = vmatmul.f32.gmra.mxu0 %v4680
  %v4682 = vpop.f32.mrf.mxu0
  %v4683 = vadd.f32 %v4618, %v4682
  %v4684 = vand.u32 %v48, 4294901760
  %4685 = vmatmul.f32.gmra.mxu0 %v4684
  %v4686 = vpop.f32.mrf.mxu0
  %v4687 = vadd.f32 %v4622, %v4686
  %v4688 = vand.u32 %v54, 4294901760
  %4689 = vmatmul.f32.gmra.mxu0 %v4688
  %v4690 = vpop.f32.mrf.mxu0
  %v4691 = vadd.f32 %v4626, %v4690
  %v4692 = vand.u32 %v60, 4294901760
  %4693 = vmatmul.f32.gmra.mxu0 %v4692
  %v4694 = vpop.f32.mrf.mxu0
  %v4695 = vadd.f32 %v4630, %v4694
  %v4696 = vand.u32 %v66, 4294901760
  %4697 = vmatmul.f32.gmra.mxu0 %v4696
  %v4698 = vpop.f32.mrf.mxu0
  %v4699 = vadd.f32 %v4634, %v4698
  %v4700 = vand.u32 %v72, 4294901760
  %4701 = vmatmul.f32.gmra.mxu0 %v4700
  %v4702 = vpop.f32.mrf.mxu0
  %v4703 = vadd.f32 %v4638, %v4702
  %4704 = vdwg.mxu0
  %v4705 = vand.u32 %v172, 4294901760
  %4706 = vmatpush.msra.mxu0 %v4705
  %v4707 = vand.u32 %v170, 4294901760
  %4708 = vmatpush.msra.mxu0 %v4707
  %v4709 = vand.u32 %v168, 4294901760
  %4710 = vmatpush.msra.mxu0 %v4709
  %v4711 = vand.u32 %v166, 4294901760
  %4712 = vmatpush.msra.mxu0 %v4711
  %v4713 = vand.u32 %v164, 4294901760
  %4714 = vmatpush.msra.mxu0 %v4713
  %v4715 = vand.u32 %v162, 4294901760
  %4716 = vmatpush.msra.mxu0 %v4715
  %v4717 = vand.u32 %v160, 4294901760
  %4718 = vmatpush.msra.mxu0 %v4717
  %v4719 = vand.u32 %v158, 4294901760
  %4720 = vmatpush.msra.mxu0 %v4719
  %v4721 = vand.u32 %v156, 4294901760
  %4722 = vmatpush.msra.mxu0 %v4721
  %v4723 = vand.u32 %v154, 4294901760
  %4724 = vmatpush.msra.mxu0 %v4723
  %v4725 = vand.u32 %v152, 4294901760
  %4726 = vmatpush.msra.mxu0 %v4725
  %v4727 = vand.u32 %v150, 4294901760
  %4728 = vmatpush.msra.mxu0 %v4727
  %v4729 = vand.u32 %v148, 4294901760
  %4730 = vmatpush.msra.mxu0 %v4729
  %v4731 = vand.u32 %v146, 4294901760
  %4732 = vmatpush.msra.mxu0 %v4731
  %v4733 = vand.u32 %v144, 4294901760
  %4734 = vmatpush.msra.mxu0 %v4733
  %v4735 = vand.u32 %v142, 4294901760
  %4736 = vmatpush.msra.mxu0 %v4735
  %v4737 = vand.u32 %v31, 4294901760
  %v4738 = vsub.f32 %v31, %v4737
  %v4739 = vand.u32 %v4738, 4294901760
  %v4740 = vsub.f32 %v4738, %v4739
  %v4741 = vand.u32 %v4740, 4294901760
  %4742 = vmatmul.f32.gmra.mxu0 %v4741
  %v4743 = vpop.f32.mrf.mxu0
  %v4744 = vadd.f32 %v4675, %v4743
  %v4745 = vand.u32 %v37, 4294901760
  %v4746 = vsub.f32 %v37, %v4745
  %v4747 = vand.u32 %v4746, 4294901760
  %v4748 = vsub.f32 %v4746, %v4747
  %v4749 = vand.u32 %v4748, 4294901760
  %4750 = vmatmul.f32.gmra.mxu0 %v4749
  %v4751 = vpop.f32.mrf.mxu0
  %v4752 = vadd.f32 %v4679, %v4751
  %v4753 = vand.u32 %v43, 4294901760
  %v4754 = vsub.f32 %v43, %v4753
  %v4755 = vand.u32 %v4754, 4294901760
  %v4756 = vsub.f32 %v4754, %v4755
  %v4757 = vand.u32 %v4756, 4294901760
  %4758 = vmatmul.f32.gmra.mxu0 %v4757
  %v4759 = vpop.f32.mrf.mxu0
  %v4760 = vadd.f32 %v4683, %v4759
  %v4761 = vand.u32 %v49, 4294901760
  %v4762 = vsub.f32 %v49, %v4761
  %v4763 = vand.u32 %v4762, 4294901760
  %v4764 = vsub.f32 %v4762, %v4763
  %v4765 = vand.u32 %v4764, 4294901760
  %4766 = vmatmul.f32.gmra.mxu0 %v4765
  %v4767 = vpop.f32.mrf.mxu0
  %v4768 = vadd.f32 %v4687, %v4767
  %v4769 = vand.u32 %v55, 4294901760
  %v4770 = vsub.f32 %v55, %v4769
  %v4771 = vand.u32 %v4770, 4294901760
  %v4772 = vsub.f32 %v4770, %v4771
  %v4773 = vand.u32 %v4772, 4294901760
  %4774 = vmatmul.f32.gmra.mxu0 %v4773
  %v4775 = vpop.f32.mrf.mxu0
  %v4776 = vadd.f32 %v4691, %v4775
  %v4777 = vand.u32 %v61, 4294901760
  %v4778 = vsub.f32 %v61, %v4777
  %v4779 = vand.u32 %v4778, 4294901760
  %v4780 = vsub.f32 %v4778, %v4779
  %v4781 = vand.u32 %v4780, 4294901760
  %4782 = vmatmul.f32.gmra.mxu0 %v4781
  %v4783 = vpop.f32.mrf.mxu0
  %v4784 = vadd.f32 %v4695, %v4783
  %v4785 = vand.u32 %v67, 4294901760
  %v4786 = vsub.f32 %v67, %v4785
  %v4787 = vand.u32 %v4786, 4294901760
  %v4788 = vsub.f32 %v4786, %v4787
  %v4789 = vand.u32 %v4788, 4294901760
  %4790 = vmatmul.f32.gmra.mxu0 %v4789
  %v4791 = vpop.f32.mrf.mxu0
  %v4792 = vadd.f32 %v4699, %v4791
  %v4793 = vand.u32 %v73, 4294901760
  %v4794 = vsub.f32 %v73, %v4793
  %v4795 = vand.u32 %v4794, 4294901760
  %v4796 = vsub.f32 %v4794, %v4795
  %v4797 = vand.u32 %v4796, 4294901760
  %4798 = vmatmul.f32.gmra.mxu0 %v4797
  %v4799 = vpop.f32.mrf.mxu0
  %v4800 = vadd.f32 %v4703, %v4799
  %4801 = vdwg.mxu0
  %v4802 = vand.u32 %v172, 4294901760
  %v4803 = vsub.f32 %v172, %v4802
  %v4804 = vand.u32 %v4803, 4294901760
  %v4805 = vsub.f32 %v4803, %v4804
  %v4806 = vand.u32 %v4805, 4294901760
  %4807 = vmatpush.msra.mxu0 %v4806
  %v4808 = vand.u32 %v170, 4294901760
  %v4809 = vsub.f32 %v170, %v4808
  %v4810 = vand.u32 %v4809, 4294901760
  %v4811 = vsub.f32 %v4809, %v4810
  %v4812 = vand.u32 %v4811, 4294901760
  %4813 = vmatpush.msra.mxu0 %v4812
  %v4814 = vand.u32 %v168, 4294901760
  %v4815 = vsub.f32 %v168, %v4814
  %v4816 = vand.u32 %v4815, 4294901760
  %v4817 = vsub.f32 %v4815, %v4816
  %v4818 = vand.u32 %v4817, 4294901760
  %4819 = vmatpush.msra.mxu0 %v4818
  %v4820 = vand.u32 %v166, 4294901760
  %v4821 = vsub.f32 %v166, %v4820
  %v4822 = vand.u32 %v4821, 4294901760
  %v4823 = vsub.f32 %v4821, %v4822
  %v4824 = vand.u32 %v4823, 4294901760
  %4825 = vmatpush.msra.mxu0 %v4824
  %v4826 = vand.u32 %v164, 4294901760
  %v4827 = vsub.f32 %v164, %v4826
  %v4828 = vand.u32 %v4827, 4294901760
  %v4829 = vsub.f32 %v4827, %v4828
  %v4830 = vand.u32 %v4829, 4294901760
  %4831 = vmatpush.msra.mxu0 %v4830
  %v4832 = vand.u32 %v162, 4294901760
  %v4833 = vsub.f32 %v162, %v4832
  %v4834 = vand.u32 %v4833, 4294901760
  %v4835 = vsub.f32 %v4833, %v4834
  %v4836 = vand.u32 %v4835, 4294901760
  %4837 = vmatpush.msra.mxu0 %v4836
  %v4838 = vand.u32 %v160, 4294901760
  %v4839 = vsub.f32 %v160, %v4838
  %v4840 = vand.u32 %v4839, 4294901760
  %v4841 = vsub.f32 %v4839, %v4840
  %v4842 = vand.u32 %v4841, 4294901760
  %4843 = vmatpush.msra.mxu0 %v4842
  %v4844 = vand.u32 %v158, 4294901760
  %v4845 = vsub.f32 %v158, %v4844
  %v4846 = vand.u32 %v4845, 4294901760
  %v4847 = vsub.f32 %v4845, %v4846
  %v4848 = vand.u32 %v4847, 4294901760
  %4849 = vmatpush.msra.mxu0 %v4848
  %v4850 = vand.u32 %v156, 4294901760
  %v4851 = vsub.f32 %v156, %v4850
  %v4852 = vand.u32 %v4851, 4294901760
  %v4853 = vsub.f32 %v4851, %v4852
  %v4854 = vand.u32 %v4853, 4294901760
  %4855 = vmatpush.msra.mxu0 %v4854
  %v4856 = vand.u32 %v154, 4294901760
  %v4857 = vsub.f32 %v154, %v4856
  %v4858 = vand.u32 %v4857, 4294901760
  %v4859 = vsub.f32 %v4857, %v4858
  %v4860 = vand.u32 %v4859, 4294901760
  %4861 = vmatpush.msra.mxu0 %v4860
  %v4862 = vand.u32 %v152, 4294901760
  %v4863 = vsub.f32 %v152, %v4862
  %v4864 = vand.u32 %v4863, 4294901760
  %v4865 = vsub.f32 %v4863, %v4864
  %v4866 = vand.u32 %v4865, 4294901760
  %4867 = vmatpush.msra.mxu0 %v4866
  %v4868 = vand.u32 %v150, 4294901760
  %v4869 = vsub.f32 %v150, %v4868
  %v4870 = vand.u32 %v4869, 4294901760
  %v4871 = vsub.f32 %v4869, %v4870
  %v4872 = vand.u32 %v4871, 4294901760
  %4873 = vmatpush.msra.mxu0 %v4872
  %v4874 = vand.u32 %v148, 4294901760
  %v4875 = vsub.f32 %v148, %v4874
  %v4876 = vand.u32 %v4875, 4294901760
  %v4877 = vsub.f32 %v4875, %v4876
  %v4878 = vand.u32 %v4877, 4294901760
  %4879 = vmatpush.msra.mxu0 %v4878
  %v4880 = vand.u32 %v146, 4294901760
  %v4881 = vsub.f32 %v146, %v4880
  %v4882 = vand.u32 %v4881, 4294901760
  %v4883 = vsub.f32 %v4881, %v4882
  %v4884 = vand.u32 %v4883, 4294901760
  %4885 = vmatpush.msra.mxu0 %v4884
  %v4886 = vand.u32 %v144, 4294901760
  %v4887 = vsub.f32 %v144, %v4886
  %v4888 = vand.u32 %v4887, 4294901760
  %v4889 = vsub.f32 %v4887, %v4888
  %v4890 = vand.u32 %v4889, 4294901760
  %4891 = vmatpush.msra.mxu0 %v4890
  %v4892 = vand.u32 %v142, 4294901760
  %v4893 = vsub.f32 %v142, %v4892
  %v4894 = vand.u32 %v4893, 4294901760
  %v4895 = vsub.f32 %v4893, %v4894
  %v4896 = vand.u32 %v4895, 4294901760
  %4897 = vmatpush.msra.mxu0 %v4896
  %v4898 = vand.u32 %v31, 4294901760
  %4899 = vmatmul.f32.gmra.mxu0 %v4898
  %v4900 = vpop.f32.mrf.mxu0
  %v4901 = vadd.f32 %v4744, %v4900
  %v4902 = vand.u32 %v37, 4294901760
  %4903 = vmatmul.f32.gmra.mxu0 %v4902
  %v4904 = vpop.f32.mrf.mxu0
  %v4905 = vadd.f32 %v4752, %v4904
  %v4906 = vand.u32 %v43, 4294901760
  %4907 = vmatmul.f32.gmra.mxu0 %v4906
  %v4908 = vpop.f32.mrf.mxu0
  %v4909 = vadd.f32 %v4760, %v4908
  %v4910 = vand.u32 %v49, 4294901760
  %4911 = vmatmul.f32.gmra.mxu0 %v4910
  %v4912 = vpop.f32.mrf.mxu0
  %v4913 = vadd.f32 %v4768, %v4912
  %v4914 = vand.u32 %v55, 4294901760
  %4915 = vmatmul.f32.gmra.mxu0 %v4914
  %v4916 = vpop.f32.mrf.mxu0
  %v4917 = vadd.f32 %v4776, %v4916
  %v4918 = vand.u32 %v61, 4294901760
  %4919 = vmatmul.f32.gmra.mxu0 %v4918
  %v4920 = vpop.f32.mrf.mxu0
  %v4921 = vadd.f32 %v4784, %v4920
  %v4922 = vand.u32 %v67, 4294901760
  %4923 = vmatmul.f32.gmra.mxu0 %v4922
  %v4924 = vpop.f32.mrf.mxu0
  %v4925 = vadd.f32 %v4792, %v4924
  %v4926 = vand.u32 %v73, 4294901760
  %4927 = vmatmul.f32.gmra.mxu0 %v4926
  %v4928 = vpop.f32.mrf.mxu0
  %v4929 = vadd.f32 %v4800, %v4928
  %4930 = vdwg.mxu0
  %v4931 = vand.u32 %v172, 4294901760
  %v4932 = vsub.f32 %v172, %v4931
  %4933 = vmatpush.msra.mxu0 %v4932
  %v4934 = vand.u32 %v170, 4294901760
  %v4935 = vsub.f32 %v170, %v4934
  %4936 = vmatpush.msra.mxu0 %v4935
  %v4937 = vand.u32 %v168, 4294901760
  %v4938 = vsub.f32 %v168, %v4937
  %4939 = vmatpush.msra.mxu0 %v4938
  %v4940 = vand.u32 %v166, 4294901760
  %v4941 = vsub.f32 %v166, %v4940
  %4942 = vmatpush.msra.mxu0 %v4941
  %v4943 = vand.u32 %v164, 4294901760
  %v4944 = vsub.f32 %v164, %v4943
  %4945 = vmatpush.msra.mxu0 %v4944
  %v4946 = vand.u32 %v162, 4294901760
  %v4947 = vsub.f32 %v162, %v4946
  %4948 = vmatpush.msra.mxu0 %v4947
  %v4949 = vand.u32 %v160, 4294901760
  %v4950 = vsub.f32 %v160, %v4949
  %4951 = vmatpush.msra.mxu0 %v4950
  %v4952 = vand.u32 %v158, 4294901760
  %v4953 = vsub.f32 %v158, %v4952
  %4954 = vmatpush.msra.mxu0 %v4953
  %v4955 = vand.u32 %v156, 4294901760
  %v4956 = vsub.f32 %v156, %v4955
  %4957 = vmatpush.msra.mxu0 %v4956
  %v4958 = vand.u32 %v154, 4294901760
  %v4959 = vsub.f32 %v154, %v4958
  %4960 = vmatpush.msra.mxu0 %v4959
  %v4961 = vand.u32 %v152, 4294901760
  %v4962 = vsub.f32 %v152, %v4961
  %4963 = vmatpush.msra.mxu0 %v4962
  %v4964 = vand.u32 %v150, 4294901760
  %v4965 = vsub.f32 %v150, %v4964
  %4966 = vmatpush.msra.mxu0 %v4965
  %v4967 = vand.u32 %v148, 4294901760
  %v4968 = vsub.f32 %v148, %v4967
  %4969 = vmatpush.msra.mxu0 %v4968
  %v4970 = vand.u32 %v146, 4294901760
  %v4971 = vsub.f32 %v146, %v4970
  %4972 = vmatpush.msra.mxu0 %v4971
  %v4973 = vand.u32 %v144, 4294901760
  %v4974 = vsub.f32 %v144, %v4973
  %4975 = vmatpush.msra.mxu0 %v4974
  %v4976 = vand.u32 %v142, 4294901760
  %v4977 = vsub.f32 %v142, %v4976
  %4978 = vmatpush.msra.mxu0 %v4977
  %v4979 = vand.u32 %v31, 4294901760
  %v4980 = vsub.f32 %v31, %v4979
  %4981 = vmatmul.f32.gmra.mxu0 %v4980
  %v4982 = vpop.f32.mrf.mxu0
  %v4983 = vadd.f32 %v4901, %v4982
  %v4984 = vand.u32 %v37, 4294901760
  %v4985 = vsub.f32 %v37, %v4984
  %4986 = vmatmul.f32.gmra.mxu0 %v4985
  %v4987 = vpop.f32.mrf.mxu0
  %v4988 = vadd.f32 %v4905, %v4987
  %v4989 = vand.u32 %v43, 4294901760
  %v4990 = vsub.f32 %v43, %v4989
  %4991 = vmatmul.f32.gmra.mxu0 %v4990
  %v4992 = vpop.f32.mrf.mxu0
  %v4993 = vadd.f32 %v4909, %v4992
  %v4994 = vand.u32 %v49, 4294901760
  %v4995 = vsub.f32 %v49, %v4994
  %4996 = vmatmul.f32.gmra.mxu0 %v4995
  %v4997 = vpop.f32.mrf.mxu0
  %v4998 = vadd.f32 %v4913, %v4997
  %v4999 = vand.u32 %v55, 4294901760
  %v5000 = vsub.f32 %v55, %v4999
  %5001 = vmatmul.f32.gmra.mxu0 %v5000
  %v5002 = vpop.f32.mrf.mxu0
  %v5003 = vadd.f32 %v4917, %v5002
  %v5004 = vand.u32 %v61, 4294901760
  %v5005 = vsub.f32 %v61, %v5004
  %5006 = vmatmul.f32.gmra.mxu0 %v5005
  %v5007 = vpop.f32.mrf.mxu0
  %v5008 = vadd.f32 %v4921, %v5007
  %v5009 = vand.u32 %v67, 4294901760
  %v5010 = vsub.f32 %v67, %v5009
  %5011 = vmatmul.f32.gmra.mxu0 %v5010
  %v5012 = vpop.f32.mrf.mxu0
  %v5013 = vadd.f32 %v4925, %v5012
  %v5014 = vand.u32 %v73, 4294901760
  %v5015 = vsub.f32 %v73, %v5014
  %5016 = vmatmul.f32.gmra.mxu0 %v5015
  %v5017 = vpop.f32.mrf.mxu0
  %v5018 = vadd.f32 %v4929, %v5017
  %5019 = vdwg.mxu0
  %v5020 = vand.u32 %v172, 4294901760
  %5021 = vmatpush.msra.mxu0 %v5020
  %v5022 = vand.u32 %v170, 4294901760
  %5023 = vmatpush.msra.mxu0 %v5022
  %v5024 = vand.u32 %v168, 4294901760
  %5025 = vmatpush.msra.mxu0 %v5024
  %v5026 = vand.u32 %v166, 4294901760
  %5027 = vmatpush.msra.mxu0 %v5026
  %v5028 = vand.u32 %v164, 4294901760
  %5029 = vmatpush.msra.mxu0 %v5028
  %v5030 = vand.u32 %v162, 4294901760
  %5031 = vmatpush.msra.mxu0 %v5030
  %v5032 = vand.u32 %v160, 4294901760
  %5033 = vmatpush.msra.mxu0 %v5032
  %v5034 = vand.u32 %v158, 4294901760
  %5035 = vmatpush.msra.mxu0 %v5034
  %v5036 = vand.u32 %v156, 4294901760
  %5037 = vmatpush.msra.mxu0 %v5036
  %v5038 = vand.u32 %v154, 4294901760
  %5039 = vmatpush.msra.mxu0 %v5038
  %v5040 = vand.u32 %v152, 4294901760
  %5041 = vmatpush.msra.mxu0 %v5040
  %v5042 = vand.u32 %v150, 4294901760
  %5043 = vmatpush.msra.mxu0 %v5042
  %v5044 = vand.u32 %v148, 4294901760
  %5045 = vmatpush.msra.mxu0 %v5044
  %v5046 = vand.u32 %v146, 4294901760
  %5047 = vmatpush.msra.mxu0 %v5046
  %v5048 = vand.u32 %v144, 4294901760
  %5049 = vmatpush.msra.mxu0 %v5048
  %v5050 = vand.u32 %v142, 4294901760
  %5051 = vmatpush.msra.mxu0 %v5050
  %v5052 = vand.u32 %v31, 4294901760
  %v5053 = vsub.f32 %v31, %v5052
  %v5054 = vand.u32 %v5053, 4294901760
  %5055 = vmatmul.f32.gmra.mxu0 %v5054
  %v5056 = vpop.f32.mrf.mxu0
  %v5057 = vadd.f32 %v4983, %v5056
  %v5058 = vand.u32 %v37, 4294901760
  %v5059 = vsub.f32 %v37, %v5058
  %v5060 = vand.u32 %v5059, 4294901760
  %5061 = vmatmul.f32.gmra.mxu0 %v5060
  %v5062 = vpop.f32.mrf.mxu0
  %v5063 = vadd.f32 %v4988, %v5062
  %v5064 = vand.u32 %v43, 4294901760
  %v5065 = vsub.f32 %v43, %v5064
  %v5066 = vand.u32 %v5065, 4294901760
  %5067 = vmatmul.f32.gmra.mxu0 %v5066
  %v5068 = vpop.f32.mrf.mxu0
  %v5069 = vadd.f32 %v4993, %v5068
  %v5070 = vand.u32 %v49, 4294901760
  %v5071 = vsub.f32 %v49, %v5070
  %v5072 = vand.u32 %v5071, 4294901760
  %5073 = vmatmul.f32.gmra.mxu0 %v5072
  %v5074 = vpop.f32.mrf.mxu0
  %v5075 = vadd.f32 %v4998, %v5074
  %v5076 = vand.u32 %v55, 4294901760
  %v5077 = vsub.f32 %v55, %v5076
  %v5078 = vand.u32 %v5077, 4294901760
  %5079 = vmatmul.f32.gmra.mxu0 %v5078
  %v5080 = vpop.f32.mrf.mxu0
  %v5081 = vadd.f32 %v5003, %v5080
  %v5082 = vand.u32 %v61, 4294901760
  %v5083 = vsub.f32 %v61, %v5082
  %v5084 = vand.u32 %v5083, 4294901760
  %5085 = vmatmul.f32.gmra.mxu0 %v5084
  %v5086 = vpop.f32.mrf.mxu0
  %v5087 = vadd.f32 %v5008, %v5086
  %v5088 = vand.u32 %v67, 4294901760
  %v5089 = vsub.f32 %v67, %v5088
  %v5090 = vand.u32 %v5089, 4294901760
  %5091 = vmatmul.f32.gmra.mxu0 %v5090
  %v5092 = vpop.f32.mrf.mxu0
  %v5093 = vadd.f32 %v5013, %v5092
  %v5094 = vand.u32 %v73, 4294901760
  %v5095 = vsub.f32 %v73, %v5094
  %v5096 = vand.u32 %v5095, 4294901760
  %5097 = vmatmul.f32.gmra.mxu0 %v5096
  %v5098 = vpop.f32.mrf.mxu0
  %v5099 = vadd.f32 %v5018, %v5098
  %5100 = vdwg.mxu0
  %v5101 = vand.u32 %v172, 4294901760
  %v5102 = vsub.f32 %v172, %v5101
  %v5103 = vand.u32 %v5102, 4294901760
  %5104 = vmatpush.msra.mxu0 %v5103
  %v5105 = vand.u32 %v170, 4294901760
  %v5106 = vsub.f32 %v170, %v5105
  %v5107 = vand.u32 %v5106, 4294901760
  %5108 = vmatpush.msra.mxu0 %v5107
  %v5109 = vand.u32 %v168, 4294901760
  %v5110 = vsub.f32 %v168, %v5109
  %v5111 = vand.u32 %v5110, 4294901760
  %5112 = vmatpush.msra.mxu0 %v5111
  %v5113 = vand.u32 %v166, 4294901760
  %v5114 = vsub.f32 %v166, %v5113
  %v5115 = vand.u32 %v5114, 4294901760
  %5116 = vmatpush.msra.mxu0 %v5115
  %v5117 = vand.u32 %v164, 4294901760
  %v5118 = vsub.f32 %v164, %v5117
  %v5119 = vand.u32 %v5118, 4294901760
  %5120 = vmatpush.msra.mxu0 %v5119
  %v5121 = vand.u32 %v162, 4294901760
  %v5122 = vsub.f32 %v162, %v5121
  %v5123 = vand.u32 %v5122, 4294901760
  %5124 = vmatpush.msra.mxu0 %v5123
  %v5125 = vand.u32 %v160, 4294901760
  %v5126 = vsub.f32 %v160, %v5125
  %v5127 = vand.u32 %v5126, 4294901760
  %5128 = vmatpush.msra.mxu0 %v5127
  %v5129 = vand.u32 %v158, 4294901760
  %v5130 = vsub.f32 %v158, %v5129
  %v5131 = vand.u32 %v5130, 4294901760
  %5132 = vmatpush.msra.mxu0 %v5131
  %v5133 = vand.u32 %v156, 4294901760
  %v5134 = vsub.f32 %v156, %v5133
  %v5135 = vand.u32 %v5134, 4294901760
  %5136 = vmatpush.msra.mxu0 %v5135
  %v5137 = vand.u32 %v154, 4294901760
  %v5138 = vsub.f32 %v154, %v5137
  %v5139 = vand.u32 %v5138, 4294901760
  %5140 = vmatpush.msra.mxu0 %v5139
  %v5141 = vand.u32 %v152, 4294901760
  %v5142 = vsub.f32 %v152, %v5141
  %v5143 = vand.u32 %v5142, 4294901760
  %5144 = vmatpush.msra.mxu0 %v5143
  %v5145 = vand.u32 %v150, 4294901760
  %v5146 = vsub.f32 %v150, %v5145
  %v5147 = vand.u32 %v5146, 4294901760
  %5148 = vmatpush.msra.mxu0 %v5147
  %v5149 = vand.u32 %v148, 4294901760
  %v5150 = vsub.f32 %v148, %v5149
  %v5151 = vand.u32 %v5150, 4294901760
  %5152 = vmatpush.msra.mxu0 %v5151
  %v5153 = vand.u32 %v146, 4294901760
  %v5154 = vsub.f32 %v146, %v5153
  %v5155 = vand.u32 %v5154, 4294901760
  %5156 = vmatpush.msra.mxu0 %v5155
  %v5157 = vand.u32 %v144, 4294901760
  %v5158 = vsub.f32 %v144, %v5157
  %v5159 = vand.u32 %v5158, 4294901760
  %5160 = vmatpush.msra.mxu0 %v5159
  %v5161 = vand.u32 %v142, 4294901760
  %v5162 = vsub.f32 %v142, %v5161
  %v5163 = vand.u32 %v5162, 4294901760
  %5164 = vmatpush.msra.mxu0 %v5163
  %v5165 = vand.u32 %v31, 4294901760
  %5166 = vmatmul.f32.gmra.mxu0 %v5165
  %v5167 = vpop.f32.mrf.mxu0
  %v5168 = vadd.f32 %v5057, %v5167
  %v5169 = vand.u32 %v37, 4294901760
  %5170 = vmatmul.f32.gmra.mxu0 %v5169
  %v5171 = vpop.f32.mrf.mxu0
  %v5172 = vadd.f32 %v5063, %v5171
  %v5173 = vand.u32 %v43, 4294901760
  %5174 = vmatmul.f32.gmra.mxu0 %v5173
  %v5175 = vpop.f32.mrf.mxu0
  %v5176 = vadd.f32 %v5069, %v5175
  %v5177 = vand.u32 %v49, 4294901760
  %5178 = vmatmul.f32.gmra.mxu0 %v5177
  %v5179 = vpop.f32.mrf.mxu0
  %v5180 = vadd.f32 %v5075, %v5179
  %v5181 = vand.u32 %v55, 4294901760
  %5182 = vmatmul.f32.gmra.mxu0 %v5181
  %v5183 = vpop.f32.mrf.mxu0
  %v5184 = vadd.f32 %v5081, %v5183
  %v5185 = vand.u32 %v61, 4294901760
  %5186 = vmatmul.f32.gmra.mxu0 %v5185
  %v5187 = vpop.f32.mrf.mxu0
  %v5188 = vadd.f32 %v5087, %v5187
  %v5189 = vand.u32 %v67, 4294901760
  %5190 = vmatmul.f32.gmra.mxu0 %v5189
  %v5191 = vpop.f32.mrf.mxu0
  %v5192 = vadd.f32 %v5093, %v5191
  %v5193 = vand.u32 %v73, 4294901760
  %5194 = vmatmul.f32.gmra.mxu0 %v5193
  %v5195 = vpop.f32.mrf.mxu0
  %v5196 = vadd.f32 %v5099, %v5195
  %5197 = vdwg.mxu0
  %v5198 = vand.u32 %v172, 4294901760
  %5199 = vmatpush.msra.mxu0 %v5198
  %v5200 = vand.u32 %v170, 4294901760
  %5201 = vmatpush.msra.mxu0 %v5200
  %v5202 = vand.u32 %v168, 4294901760
  %5203 = vmatpush.msra.mxu0 %v5202
  %v5204 = vand.u32 %v166, 4294901760
  %5205 = vmatpush.msra.mxu0 %v5204
  %v5206 = vand.u32 %v164, 4294901760
  %5207 = vmatpush.msra.mxu0 %v5206
  %v5208 = vand.u32 %v162, 4294901760
  %5209 = vmatpush.msra.mxu0 %v5208
  %v5210 = vand.u32 %v160, 4294901760
  %5211 = vmatpush.msra.mxu0 %v5210
  %v5212 = vand.u32 %v158, 4294901760
  %5213 = vmatpush.msra.mxu0 %v5212
  %v5214 = vand.u32 %v156, 4294901760
  %5215 = vmatpush.msra.mxu0 %v5214
  %v5216 = vand.u32 %v154, 4294901760
  %5217 = vmatpush.msra.mxu0 %v5216
  %v5218 = vand.u32 %v152, 4294901760
  %5219 = vmatpush.msra.mxu0 %v5218
  %v5220 = vand.u32 %v150, 4294901760
  %5221 = vmatpush.msra.mxu0 %v5220
  %v5222 = vand.u32 %v148, 4294901760
  %5223 = vmatpush.msra.mxu0 %v5222
  %v5224 = vand.u32 %v146, 4294901760
  %5225 = vmatpush.msra.mxu0 %v5224
  %v5226 = vand.u32 %v144, 4294901760
  %5227 = vmatpush.msra.mxu0 %v5226
  %v5228 = vand.u32 %v142, 4294901760
  %5229 = vmatpush.msra.mxu0 %v5228
  %v5230 = vand.u32 %v31, 4294901760
  %5231 = vmatmul.f32.gmra.mxu0 %v5230
  %v5232 = vpop.f32.mrf.mxu0
  %v5233 = vadd.f32 %v5168, %v5232
  %v5234 = vand.u32 %v37, 4294901760
  %5235 = vmatmul.f32.gmra.mxu0 %v5234
  %v5236 = vpop.f32.mrf.mxu0
  %v5237 = vadd.f32 %v5172, %v5236
  %v5238 = vand.u32 %v43, 4294901760
  %5239 = vmatmul.f32.gmra.mxu0 %v5238
  %v5240 = vpop.f32.mrf.mxu0
  %v5241 = vadd.f32 %v5176, %v5240
  %v5242 = vand.u32 %v49, 4294901760
  %5243 = vmatmul.f32.gmra.mxu0 %v5242
  %v5244 = vpop.f32.mrf.mxu0
  %v5245 = vadd.f32 %v5180, %v5244
  %v5246 = vand.u32 %v55, 4294901760
  %5247 = vmatmul.f32.gmra.mxu0 %v5246
  %v5248 = vpop.f32.mrf.mxu0
  %v5249 = vadd.f32 %v5184, %v5248
  %v5250 = vand.u32 %v61, 4294901760
  %5251 = vmatmul.f32.gmra.mxu0 %v5250
  %v5252 = vpop.f32.mrf.mxu0
  %v5253 = vadd.f32 %v5188, %v5252
  %v5254 = vand.u32 %v67, 4294901760
  %5255 = vmatmul.f32.gmra.mxu0 %v5254
  %v5256 = vpop.f32.mrf.mxu0
  %v5257 = vadd.f32 %v5192, %v5256
  %v5258 = vand.u32 %v73, 4294901760
  %5259 = vmatmul.f32.gmra.mxu0 %v5258
  %v5260 = vpop.f32.mrf.mxu0
  %v5261 = vadd.f32 %v5196, %v5260
  %5262 = vdwg.mxu0
  %v5263 = vand.u32 %v204, 4294901760
  %5264 = vmatpush.msra.mxu0 %v5263
  %v5265 = vand.u32 %v202, 4294901760
  %5266 = vmatpush.msra.mxu0 %v5265
  %v5267 = vand.u32 %v200, 4294901760
  %5268 = vmatpush.msra.mxu0 %v5267
  %v5269 = vand.u32 %v198, 4294901760
  %5270 = vmatpush.msra.mxu0 %v5269
  %v5271 = vand.u32 %v196, 4294901760
  %5272 = vmatpush.msra.mxu0 %v5271
  %v5273 = vand.u32 %v194, 4294901760
  %5274 = vmatpush.msra.mxu0 %v5273
  %v5275 = vand.u32 %v192, 4294901760
  %5276 = vmatpush.msra.mxu0 %v5275
  %v5277 = vand.u32 %v190, 4294901760
  %5278 = vmatpush.msra.mxu0 %v5277
  %v5279 = vand.u32 %v188, 4294901760
  %5280 = vmatpush.msra.mxu0 %v5279
  %v5281 = vand.u32 %v186, 4294901760
  %5282 = vmatpush.msra.mxu0 %v5281
  %v5283 = vand.u32 %v184, 4294901760
  %5284 = vmatpush.msra.mxu0 %v5283
  %v5285 = vand.u32 %v182, 4294901760
  %5286 = vmatpush.msra.mxu0 %v5285
  %v5287 = vand.u32 %v180, 4294901760
  %5288 = vmatpush.msra.mxu0 %v5287
  %v5289 = vand.u32 %v178, 4294901760
  %5290 = vmatpush.msra.mxu0 %v5289
  %v5291 = vand.u32 %v176, 4294901760
  %5292 = vmatpush.msra.mxu0 %v5291
  %v5293 = vand.u32 %v174, 4294901760
  %5294 = vmatpush.msra.mxu0 %v5293
  %v5295 = vand.u32 %v32, 4294901760
  %v5296 = vsub.f32 %v32, %v5295
  %v5297 = vand.u32 %v5296, 4294901760
  %v5298 = vsub.f32 %v5296, %v5297
  %v5299 = vand.u32 %v5298, 4294901760
  %5300 = vmatmul.f32.gmra.mxu0 %v5299
  %v5301 = vpop.f32.mrf.mxu0
  %v5302 = vadd.f32 %v5233, %v5301
  %v5303 = vand.u32 %v38, 4294901760
  %v5304 = vsub.f32 %v38, %v5303
  %v5305 = vand.u32 %v5304, 4294901760
  %v5306 = vsub.f32 %v5304, %v5305
  %v5307 = vand.u32 %v5306, 4294901760
  %5308 = vmatmul.f32.gmra.mxu0 %v5307
  %v5309 = vpop.f32.mrf.mxu0
  %v5310 = vadd.f32 %v5237, %v5309
  %v5311 = vand.u32 %v44, 4294901760
  %v5312 = vsub.f32 %v44, %v5311
  %v5313 = vand.u32 %v5312, 4294901760
  %v5314 = vsub.f32 %v5312, %v5313
  %v5315 = vand.u32 %v5314, 4294901760
  %5316 = vmatmul.f32.gmra.mxu0 %v5315
  %v5317 = vpop.f32.mrf.mxu0
  %v5318 = vadd.f32 %v5241, %v5317
  %v5319 = vand.u32 %v50, 4294901760
  %v5320 = vsub.f32 %v50, %v5319
  %v5321 = vand.u32 %v5320, 4294901760
  %v5322 = vsub.f32 %v5320, %v5321
  %v5323 = vand.u32 %v5322, 4294901760
  %5324 = vmatmul.f32.gmra.mxu0 %v5323
  %v5325 = vpop.f32.mrf.mxu0
  %v5326 = vadd.f32 %v5245, %v5325
  %v5327 = vand.u32 %v56, 4294901760
  %v5328 = vsub.f32 %v56, %v5327
  %v5329 = vand.u32 %v5328, 4294901760
  %v5330 = vsub.f32 %v5328, %v5329
  %v5331 = vand.u32 %v5330, 4294901760
  %5332 = vmatmul.f32.gmra.mxu0 %v5331
  %v5333 = vpop.f32.mrf.mxu0
  %v5334 = vadd.f32 %v5249, %v5333
  %v5335 = vand.u32 %v62, 4294901760
  %v5336 = vsub.f32 %v62, %v5335
  %v5337 = vand.u32 %v5336, 4294901760
  %v5338 = vsub.f32 %v5336, %v5337
  %v5339 = vand.u32 %v5338, 4294901760
  %5340 = vmatmul.f32.gmra.mxu0 %v5339
  %v5341 = vpop.f32.mrf.mxu0
  %v5342 = vadd.f32 %v5253, %v5341
  %v5343 = vand.u32 %v68, 4294901760
  %v5344 = vsub.f32 %v68, %v5343
  %v5345 = vand.u32 %v5344, 4294901760
  %v5346 = vsub.f32 %v5344, %v5345
  %v5347 = vand.u32 %v5346, 4294901760
  %5348 = vmatmul.f32.gmra.mxu0 %v5347
  %v5349 = vpop.f32.mrf.mxu0
  %v5350 = vadd.f32 %v5257, %v5349
  %v5351 = vand.u32 %v74, 4294901760
  %v5352 = vsub.f32 %v74, %v5351
  %v5353 = vand.u32 %v5352, 4294901760
  %v5354 = vsub.f32 %v5352, %v5353
  %v5355 = vand.u32 %v5354, 4294901760
  %5356 = vmatmul.f32.gmra.mxu0 %v5355
  %v5357 = vpop.f32.mrf.mxu0
  %v5358 = vadd.f32 %v5261, %v5357
  %5359 = vdwg.mxu0
  %v5360 = vand.u32 %v204, 4294901760
  %v5361 = vsub.f32 %v204, %v5360
  %v5362 = vand.u32 %v5361, 4294901760
  %v5363 = vsub.f32 %v5361, %v5362
  %v5364 = vand.u32 %v5363, 4294901760
  %5365 = vmatpush.msra.mxu0 %v5364
  %v5366 = vand.u32 %v202, 4294901760
  %v5367 = vsub.f32 %v202, %v5366
  %v5368 = vand.u32 %v5367, 4294901760
  %v5369 = vsub.f32 %v5367, %v5368
  %v5370 = vand.u32 %v5369, 4294901760
  %5371 = vmatpush.msra.mxu0 %v5370
  %v5372 = vand.u32 %v200, 4294901760
  %v5373 = vsub.f32 %v200, %v5372
  %v5374 = vand.u32 %v5373, 4294901760
  %v5375 = vsub.f32 %v5373, %v5374
  %v5376 = vand.u32 %v5375, 4294901760
  %5377 = vmatpush.msra.mxu0 %v5376
  %v5378 = vand.u32 %v198, 4294901760
  %v5379 = vsub.f32 %v198, %v5378
  %v5380 = vand.u32 %v5379, 4294901760
  %v5381 = vsub.f32 %v5379, %v5380
  %v5382 = vand.u32 %v5381, 4294901760
  %5383 = vmatpush.msra.mxu0 %v5382
  %v5384 = vand.u32 %v196, 4294901760
  %v5385 = vsub.f32 %v196, %v5384
  %v5386 = vand.u32 %v5385, 4294901760
  %v5387 = vsub.f32 %v5385, %v5386
  %v5388 = vand.u32 %v5387, 4294901760
  %5389 = vmatpush.msra.mxu0 %v5388
  %v5390 = vand.u32 %v194, 4294901760
  %v5391 = vsub.f32 %v194, %v5390
  %v5392 = vand.u32 %v5391, 4294901760
  %v5393 = vsub.f32 %v5391, %v5392
  %v5394 = vand.u32 %v5393, 4294901760
  %5395 = vmatpush.msra.mxu0 %v5394
  %v5396 = vand.u32 %v192, 4294901760
  %v5397 = vsub.f32 %v192, %v5396
  %v5398 = vand.u32 %v5397, 4294901760
  %v5399 = vsub.f32 %v5397, %v5398
  %v5400 = vand.u32 %v5399, 4294901760
  %5401 = vmatpush.msra.mxu0 %v5400
  %v5402 = vand.u32 %v190, 4294901760
  %v5403 = vsub.f32 %v190, %v5402
  %v5404 = vand.u32 %v5403, 4294901760
  %v5405 = vsub.f32 %v5403, %v5404
  %v5406 = vand.u32 %v5405, 4294901760
  %5407 = vmatpush.msra.mxu0 %v5406
  %v5408 = vand.u32 %v188, 4294901760
  %v5409 = vsub.f32 %v188, %v5408
  %v5410 = vand.u32 %v5409, 4294901760
  %v5411 = vsub.f32 %v5409, %v5410
  %v5412 = vand.u32 %v5411, 4294901760
  %5413 = vmatpush.msra.mxu0 %v5412
  %v5414 = vand.u32 %v186, 4294901760
  %v5415 = vsub.f32 %v186, %v5414
  %v5416 = vand.u32 %v5415, 4294901760
  %v5417 = vsub.f32 %v5415, %v5416
  %v5418 = vand.u32 %v5417, 4294901760
  %5419 = vmatpush.msra.mxu0 %v5418
  %v5420 = vand.u32 %v184, 4294901760
  %v5421 = vsub.f32 %v184, %v5420
  %v5422 = vand.u32 %v5421, 4294901760
  %v5423 = vsub.f32 %v5421, %v5422
  %v5424 = vand.u32 %v5423, 4294901760
  %5425 = vmatpush.msra.mxu0 %v5424
  %v5426 = vand.u32 %v182, 4294901760
  %v5427 = vsub.f32 %v182, %v5426
  %v5428 = vand.u32 %v5427, 4294901760
  %v5429 = vsub.f32 %v5427, %v5428
  %v5430 = vand.u32 %v5429, 4294901760
  %5431 = vmatpush.msra.mxu0 %v5430
  %v5432 = vand.u32 %v180, 4294901760
  %v5433 = vsub.f32 %v180, %v5432
  %v5434 = vand.u32 %v5433, 4294901760
  %v5435 = vsub.f32 %v5433, %v5434
  %v5436 = vand.u32 %v5435, 4294901760
  %5437 = vmatpush.msra.mxu0 %v5436
  %v5438 = vand.u32 %v178, 4294901760
  %v5439 = vsub.f32 %v178, %v5438
  %v5440 = vand.u32 %v5439, 4294901760
  %v5441 = vsub.f32 %v5439, %v5440
  %v5442 = vand.u32 %v5441, 4294901760
  %5443 = vmatpush.msra.mxu0 %v5442
  %v5444 = vand.u32 %v176, 4294901760
  %v5445 = vsub.f32 %v176, %v5444
  %v5446 = vand.u32 %v5445, 4294901760
  %v5447 = vsub.f32 %v5445, %v5446
  %v5448 = vand.u32 %v5447, 4294901760
  %5449 = vmatpush.msra.mxu0 %v5448
  %v5450 = vand.u32 %v174, 4294901760
  %v5451 = vsub.f32 %v174, %v5450
  %v5452 = vand.u32 %v5451, 4294901760
  %v5453 = vsub.f32 %v5451, %v5452
  %v5454 = vand.u32 %v5453, 4294901760
  %5455 = vmatpush.msra.mxu0 %v5454
  %v5456 = vand.u32 %v32, 4294901760
  %5457 = vmatmul.f32.gmra.mxu0 %v5456
  %v5458 = vpop.f32.mrf.mxu0
  %v5459 = vadd.f32 %v5302, %v5458
  %v5460 = vand.u32 %v38, 4294901760
  %5461 = vmatmul.f32.gmra.mxu0 %v5460
  %v5462 = vpop.f32.mrf.mxu0
  %v5463 = vadd.f32 %v5310, %v5462
  %v5464 = vand.u32 %v44, 4294901760
  %5465 = vmatmul.f32.gmra.mxu0 %v5464
  %v5466 = vpop.f32.mrf.mxu0
  %v5467 = vadd.f32 %v5318, %v5466
  %v5468 = vand.u32 %v50, 4294901760
  %5469 = vmatmul.f32.gmra.mxu0 %v5468
  %v5470 = vpop.f32.mrf.mxu0
  %v5471 = vadd.f32 %v5326, %v5470
  %v5472 = vand.u32 %v56, 4294901760
  %5473 = vmatmul.f32.gmra.mxu0 %v5472
  %v5474 = vpop.f32.mrf.mxu0
  %v5475 = vadd.f32 %v5334, %v5474
  %v5476 = vand.u32 %v62, 4294901760
  %5477 = vmatmul.f32.gmra.mxu0 %v5476
  %v5478 = vpop.f32.mrf.mxu0
  %v5479 = vadd.f32 %v5342, %v5478
  %v5480 = vand.u32 %v68, 4294901760
  %5481 = vmatmul.f32.gmra.mxu0 %v5480
  %v5482 = vpop.f32.mrf.mxu0
  %v5483 = vadd.f32 %v5350, %v5482
  %v5484 = vand.u32 %v74, 4294901760
  %5485 = vmatmul.f32.gmra.mxu0 %v5484
  %v5486 = vpop.f32.mrf.mxu0
  %v5487 = vadd.f32 %v5358, %v5486
  %5488 = vdwg.mxu0
  %v5489 = vand.u32 %v204, 4294901760
  %v5490 = vsub.f32 %v204, %v5489
  %5491 = vmatpush.msra.mxu0 %v5490
  %v5492 = vand.u32 %v202, 4294901760
  %v5493 = vsub.f32 %v202, %v5492
  %5494 = vmatpush.msra.mxu0 %v5493
  %v5495 = vand.u32 %v200, 4294901760
  %v5496 = vsub.f32 %v200, %v5495
  %5497 = vmatpush.msra.mxu0 %v5496
  %v5498 = vand.u32 %v198, 4294901760
  %v5499 = vsub.f32 %v198, %v5498
  %5500 = vmatpush.msra.mxu0 %v5499
  %v5501 = vand.u32 %v196, 4294901760
  %v5502 = vsub.f32 %v196, %v5501
  %5503 = vmatpush.msra.mxu0 %v5502
  %v5504 = vand.u32 %v194, 4294901760
  %v5505 = vsub.f32 %v194, %v5504
  %5506 = vmatpush.msra.mxu0 %v5505
  %v5507 = vand.u32 %v192, 4294901760
  %v5508 = vsub.f32 %v192, %v5507
  %5509 = vmatpush.msra.mxu0 %v5508
  %v5510 = vand.u32 %v190, 4294901760
  %v5511 = vsub.f32 %v190, %v5510
  %5512 = vmatpush.msra.mxu0 %v5511
  %v5513 = vand.u32 %v188, 4294901760
  %v5514 = vsub.f32 %v188, %v5513
  %5515 = vmatpush.msra.mxu0 %v5514
  %v5516 = vand.u32 %v186, 4294901760
  %v5517 = vsub.f32 %v186, %v5516
  %5518 = vmatpush.msra.mxu0 %v5517
  %v5519 = vand.u32 %v184, 4294901760
  %v5520 = vsub.f32 %v184, %v5519
  %5521 = vmatpush.msra.mxu0 %v5520
  %v5522 = vand.u32 %v182, 4294901760
  %v5523 = vsub.f32 %v182, %v5522
  %5524 = vmatpush.msra.mxu0 %v5523
  %v5525 = vand.u32 %v180, 4294901760
  %v5526 = vsub.f32 %v180, %v5525
  %5527 = vmatpush.msra.mxu0 %v5526
  %v5528 = vand.u32 %v178, 4294901760
  %v5529 = vsub.f32 %v178, %v5528
  %5530 = vmatpush.msra.mxu0 %v5529
  %v5531 = vand.u32 %v176, 4294901760
  %v5532 = vsub.f32 %v176, %v5531
  %5533 = vmatpush.msra.mxu0 %v5532
  %v5534 = vand.u32 %v174, 4294901760
  %v5535 = vsub.f32 %v174, %v5534
  %5536 = vmatpush.msra.mxu0 %v5535
  %v5537 = vand.u32 %v32, 4294901760
  %v5538 = vsub.f32 %v32, %v5537
  %5539 = vmatmul.f32.gmra.mxu0 %v5538
  %v5540 = vpop.f32.mrf.mxu0
  %v5541 = vadd.f32 %v5459, %v5540
  %v5542 = vand.u32 %v38, 4294901760
  %v5543 = vsub.f32 %v38, %v5542
  %5544 = vmatmul.f32.gmra.mxu0 %v5543
  %v5545 = vpop.f32.mrf.mxu0
  %v5546 = vadd.f32 %v5463, %v5545
  %v5547 = vand.u32 %v44, 4294901760
  %v5548 = vsub.f32 %v44, %v5547
  %5549 = vmatmul.f32.gmra.mxu0 %v5548
  %v5550 = vpop.f32.mrf.mxu0
  %v5551 = vadd.f32 %v5467, %v5550
  %v5552 = vand.u32 %v50, 4294901760
  %v5553 = vsub.f32 %v50, %v5552
  %5554 = vmatmul.f32.gmra.mxu0 %v5553
  %v5555 = vpop.f32.mrf.mxu0
  %v5556 = vadd.f32 %v5471, %v5555
  %v5557 = vand.u32 %v56, 4294901760
  %v5558 = vsub.f32 %v56, %v5557
  %5559 = vmatmul.f32.gmra.mxu0 %v5558
  %v5560 = vpop.f32.mrf.mxu0
  %v5561 = vadd.f32 %v5475, %v5560
  %v5562 = vand.u32 %v62, 4294901760
  %v5563 = vsub.f32 %v62, %v5562
  %5564 = vmatmul.f32.gmra.mxu0 %v5563
  %v5565 = vpop.f32.mrf.mxu0
  %v5566 = vadd.f32 %v5479, %v5565
  %v5567 = vand.u32 %v68, 4294901760
  %v5568 = vsub.f32 %v68, %v5567
  %5569 = vmatmul.f32.gmra.mxu0 %v5568
  %v5570 = vpop.f32.mrf.mxu0
  %v5571 = vadd.f32 %v5483, %v5570
  %v5572 = vand.u32 %v74, 4294901760
  %v5573 = vsub.f32 %v74, %v5572
  %5574 = vmatmul.f32.gmra.mxu0 %v5573
  %v5575 = vpop.f32.mrf.mxu0
  %v5576 = vadd.f32 %v5487, %v5575
  %5577 = vdwg.mxu0
  %v5578 = vand.u32 %v204, 4294901760
  %5579 = vmatpush.msra.mxu0 %v5578
  %v5580 = vand.u32 %v202, 4294901760
  %5581 = vmatpush.msra.mxu0 %v5580
  %v5582 = vand.u32 %v200, 4294901760
  %5583 = vmatpush.msra.mxu0 %v5582
  %v5584 = vand.u32 %v198, 4294901760
  %5585 = vmatpush.msra.mxu0 %v5584
  %v5586 = vand.u32 %v196, 4294901760
  %5587 = vmatpush.msra.mxu0 %v5586
  %v5588 = vand.u32 %v194, 4294901760
  %5589 = vmatpush.msra.mxu0 %v5588
  %v5590 = vand.u32 %v192, 4294901760
  %5591 = vmatpush.msra.mxu0 %v5590
  %v5592 = vand.u32 %v190, 4294901760
  %5593 = vmatpush.msra.mxu0 %v5592
  %v5594 = vand.u32 %v188, 4294901760
  %5595 = vmatpush.msra.mxu0 %v5594
  %v5596 = vand.u32 %v186, 4294901760
  %5597 = vmatpush.msra.mxu0 %v5596
  %v5598 = vand.u32 %v184, 4294901760
  %5599 = vmatpush.msra.mxu0 %v5598
  %v5600 = vand.u32 %v182, 4294901760
  %5601 = vmatpush.msra.mxu0 %v5600
  %v5602 = vand.u32 %v180, 4294901760
  %5603 = vmatpush.msra.mxu0 %v5602
  %v5604 = vand.u32 %v178, 4294901760
  %5605 = vmatpush.msra.mxu0 %v5604
  %v5606 = vand.u32 %v176, 4294901760
  %5607 = vmatpush.msra.mxu0 %v5606
  %v5608 = vand.u32 %v174, 4294901760
  %5609 = vmatpush.msra.mxu0 %v5608
  %v5610 = vand.u32 %v32, 4294901760
  %v5611 = vsub.f32 %v32, %v5610
  %v5612 = vand.u32 %v5611, 4294901760
  %5613 = vmatmul.f32.gmra.mxu0 %v5612
  %v5614 = vpop.f32.mrf.mxu0
  %v5615 = vadd.f32 %v5541, %v5614
  %v5616 = vand.u32 %v38, 4294901760
  %v5617 = vsub.f32 %v38, %v5616
  %v5618 = vand.u32 %v5617, 4294901760
  %5619 = vmatmul.f32.gmra.mxu0 %v5618
  %v5620 = vpop.f32.mrf.mxu0
  %v5621 = vadd.f32 %v5546, %v5620
  %v5622 = vand.u32 %v44, 4294901760
  %v5623 = vsub.f32 %v44, %v5622
  %v5624 = vand.u32 %v5623, 4294901760
  %5625 = vmatmul.f32.gmra.mxu0 %v5624
  %v5626 = vpop.f32.mrf.mxu0
  %v5627 = vadd.f32 %v5551, %v5626
  %v5628 = vand.u32 %v50, 4294901760
  %v5629 = vsub.f32 %v50, %v5628
  %v5630 = vand.u32 %v5629, 4294901760
  %5631 = vmatmul.f32.gmra.mxu0 %v5630
  %v5632 = vpop.f32.mrf.mxu0
  %v5633 = vadd.f32 %v5556, %v5632
  %v5634 = vand.u32 %v56, 4294901760
  %v5635 = vsub.f32 %v56, %v5634
  %v5636 = vand.u32 %v5635, 4294901760
  %5637 = vmatmul.f32.gmra.mxu0 %v5636
  %v5638 = vpop.f32.mrf.mxu0
  %v5639 = vadd.f32 %v5561, %v5638
  %v5640 = vand.u32 %v62, 4294901760
  %v5641 = vsub.f32 %v62, %v5640
  %v5642 = vand.u32 %v5641, 4294901760
  %5643 = vmatmul.f32.gmra.mxu0 %v5642
  %v5644 = vpop.f32.mrf.mxu0
  %v5645 = vadd.f32 %v5566, %v5644
  %v5646 = vand.u32 %v68, 4294901760
  %v5647 = vsub.f32 %v68, %v5646
  %v5648 = vand.u32 %v5647, 4294901760
  %5649 = vmatmul.f32.gmra.mxu0 %v5648
  %v5650 = vpop.f32.mrf.mxu0
  %v5651 = vadd.f32 %v5571, %v5650
  %v5652 = vand.u32 %v74, 4294901760
  %v5653 = vsub.f32 %v74, %v5652
  %v5654 = vand.u32 %v5653, 4294901760
  %5655 = vmatmul.f32.gmra.mxu0 %v5654
  %v5656 = vpop.f32.mrf.mxu0
  %v5657 = vadd.f32 %v5576, %v5656
  %5658 = vdwg.mxu0
  %v5659 = vand.u32 %v204, 4294901760
  %v5660 = vsub.f32 %v204, %v5659
  %v5661 = vand.u32 %v5660, 4294901760
  %5662 = vmatpush.msra.mxu0 %v5661
  %v5663 = vand.u32 %v202, 4294901760
  %v5664 = vsub.f32 %v202, %v5663
  %v5665 = vand.u32 %v5664, 4294901760
  %5666 = vmatpush.msra.mxu0 %v5665
  %v5667 = vand.u32 %v200, 4294901760
  %v5668 = vsub.f32 %v200, %v5667
  %v5669 = vand.u32 %v5668, 4294901760
  %5670 = vmatpush.msra.mxu0 %v5669
  %v5671 = vand.u32 %v198, 4294901760
  %v5672 = vsub.f32 %v198, %v5671
  %v5673 = vand.u32 %v5672, 4294901760
  %5674 = vmatpush.msra.mxu0 %v5673
  %v5675 = vand.u32 %v196, 4294901760
  %v5676 = vsub.f32 %v196, %v5675
  %v5677 = vand.u32 %v5676, 4294901760
  %5678 = vmatpush.msra.mxu0 %v5677
  %v5679 = vand.u32 %v194, 4294901760
  %v5680 = vsub.f32 %v194, %v5679
  %v5681 = vand.u32 %v5680, 4294901760
  %5682 = vmatpush.msra.mxu0 %v5681
  %v5683 = vand.u32 %v192, 4294901760
  %v5684 = vsub.f32 %v192, %v5683
  %v5685 = vand.u32 %v5684, 4294901760
  %5686 = vmatpush.msra.mxu0 %v5685
  %v5687 = vand.u32 %v190, 4294901760
  %v5688 = vsub.f32 %v190, %v5687
  %v5689 = vand.u32 %v5688, 4294901760
  %5690 = vmatpush.msra.mxu0 %v5689
  %v5691 = vand.u32 %v188, 4294901760
  %v5692 = vsub.f32 %v188, %v5691
  %v5693 = vand.u32 %v5692, 4294901760
  %5694 = vmatpush.msra.mxu0 %v5693
  %v5695 = vand.u32 %v186, 4294901760
  %v5696 = vsub.f32 %v186, %v5695
  %v5697 = vand.u32 %v5696, 4294901760
  %5698 = vmatpush.msra.mxu0 %v5697
  %v5699 = vand.u32 %v184, 4294901760
  %v5700 = vsub.f32 %v184, %v5699
  %v5701 = vand.u32 %v5700, 4294901760
  %5702 = vmatpush.msra.mxu0 %v5701
  %v5703 = vand.u32 %v182, 4294901760
  %v5704 = vsub.f32 %v182, %v5703
  %v5705 = vand.u32 %v5704, 4294901760
  %5706 = vmatpush.msra.mxu0 %v5705
  %v5707 = vand.u32 %v180, 4294901760
  %v5708 = vsub.f32 %v180, %v5707
  %v5709 = vand.u32 %v5708, 4294901760
  %5710 = vmatpush.msra.mxu0 %v5709
  %v5711 = vand.u32 %v178, 4294901760
  %v5712 = vsub.f32 %v178, %v5711
  %v5713 = vand.u32 %v5712, 4294901760
  %5714 = vmatpush.msra.mxu0 %v5713
  %v5715 = vand.u32 %v176, 4294901760
  %v5716 = vsub.f32 %v176, %v5715
  %v5717 = vand.u32 %v5716, 4294901760
  %5718 = vmatpush.msra.mxu0 %v5717
  %v5719 = vand.u32 %v174, 4294901760
  %v5720 = vsub.f32 %v174, %v5719
  %v5721 = vand.u32 %v5720, 4294901760
  %5722 = vmatpush.msra.mxu0 %v5721
  %v5723 = vand.u32 %v32, 4294901760
  %5724 = vmatmul.f32.gmra.mxu0 %v5723
  %v5725 = vpop.f32.mrf.mxu0
  %v5726 = vadd.f32 %v5615, %v5725
  %v5727 = vand.u32 %v38, 4294901760
  %5728 = vmatmul.f32.gmra.mxu0 %v5727
  %v5729 = vpop.f32.mrf.mxu0
  %v5730 = vadd.f32 %v5621, %v5729
  %v5731 = vand.u32 %v44, 4294901760
  %5732 = vmatmul.f32.gmra.mxu0 %v5731
  %v5733 = vpop.f32.mrf.mxu0
  %v5734 = vadd.f32 %v5627, %v5733
  %v5735 = vand.u32 %v50, 4294901760
  %5736 = vmatmul.f32.gmra.mxu0 %v5735
  %v5737 = vpop.f32.mrf.mxu0
  %v5738 = vadd.f32 %v5633, %v5737
  %v5739 = vand.u32 %v56, 4294901760
  %5740 = vmatmul.f32.gmra.mxu0 %v5739
  %v5741 = vpop.f32.mrf.mxu0
  %v5742 = vadd.f32 %v5639, %v5741
  %v5743 = vand.u32 %v62, 4294901760
  %5744 = vmatmul.f32.gmra.mxu0 %v5743
  %v5745 = vpop.f32.mrf.mxu0
  %v5746 = vadd.f32 %v5645, %v5745
  %v5747 = vand.u32 %v68, 4294901760
  %5748 = vmatmul.f32.gmra.mxu0 %v5747
  %v5749 = vpop.f32.mrf.mxu0
  %v5750 = vadd.f32 %v5651, %v5749
  %v5751 = vand.u32 %v74, 4294901760
  %5752 = vmatmul.f32.gmra.mxu0 %v5751
  %v5753 = vpop.f32.mrf.mxu0
  %v5754 = vadd.f32 %v5657, %v5753
  %5755 = vdwg.mxu0
  %v5756 = vand.u32 %v204, 4294901760
  %5757 = vmatpush.msra.mxu0 %v5756
  %v5758 = vand.u32 %v202, 4294901760
  %5759 = vmatpush.msra.mxu0 %v5758
  %v5760 = vand.u32 %v200, 4294901760
  %5761 = vmatpush.msra.mxu0 %v5760
  %v5762 = vand.u32 %v198, 4294901760
  %5763 = vmatpush.msra.mxu0 %v5762
  %v5764 = vand.u32 %v196, 4294901760
  %5765 = vmatpush.msra.mxu0 %v5764
  %v5766 = vand.u32 %v194, 4294901760
  %5767 = vmatpush.msra.mxu0 %v5766
  %v5768 = vand.u32 %v192, 4294901760
  %5769 = vmatpush.msra.mxu0 %v5768
  %v5770 = vand.u32 %v190, 4294901760
  %5771 = vmatpush.msra.mxu0 %v5770
  %v5772 = vand.u32 %v188, 4294901760
  %5773 = vmatpush.msra.mxu0 %v5772
  %v5774 = vand.u32 %v186, 4294901760
  %5775 = vmatpush.msra.mxu0 %v5774
  %v5776 = vand.u32 %v184, 4294901760
  %5777 = vmatpush.msra.mxu0 %v5776
  %v5778 = vand.u32 %v182, 4294901760
  %5779 = vmatpush.msra.mxu0 %v5778
  %v5780 = vand.u32 %v180, 4294901760
  %5781 = vmatpush.msra.mxu0 %v5780
  %v5782 = vand.u32 %v178, 4294901760
  %5783 = vmatpush.msra.mxu0 %v5782
  %v5784 = vand.u32 %v176, 4294901760
  %5785 = vmatpush.msra.mxu0 %v5784
  %v5786 = vand.u32 %v174, 4294901760
  %5787 = vmatpush.msra.mxu0 %v5786
  %v5788 = vand.u32 %v32, 4294901760
  %5789 = vmatmul.f32.gmra.mxu0 %v5788
  %v5790 = vpop.f32.mrf.mxu0
  %v5791 = vadd.f32 %v5726, %v5790
  %v5792 = vand.u32 %v38, 4294901760
  %5793 = vmatmul.f32.gmra.mxu0 %v5792
  %v5794 = vpop.f32.mrf.mxu0
  %v5795 = vadd.f32 %v5730, %v5794
  %v5796 = vand.u32 %v44, 4294901760
  %5797 = vmatmul.f32.gmra.mxu0 %v5796
  %v5798 = vpop.f32.mrf.mxu0
  %v5799 = vadd.f32 %v5734, %v5798
  %v5800 = vand.u32 %v50, 4294901760
  %5801 = vmatmul.f32.gmra.mxu0 %v5800
  %v5802 = vpop.f32.mrf.mxu0
  %v5803 = vadd.f32 %v5738, %v5802
  %v5804 = vand.u32 %v56, 4294901760
  %5805 = vmatmul.f32.gmra.mxu0 %v5804
  %v5806 = vpop.f32.mrf.mxu0
  %v5807 = vadd.f32 %v5742, %v5806
  %v5808 = vand.u32 %v62, 4294901760
  %5809 = vmatmul.f32.gmra.mxu0 %v5808
  %v5810 = vpop.f32.mrf.mxu0
  %v5811 = vadd.f32 %v5746, %v5810
  %v5812 = vand.u32 %v68, 4294901760
  %5813 = vmatmul.f32.gmra.mxu0 %v5812
  %v5814 = vpop.f32.mrf.mxu0
  %v5815 = vadd.f32 %v5750, %v5814
  %v5816 = vand.u32 %v74, 4294901760
  %5817 = vmatmul.f32.gmra.mxu0 %v5816
  %v5818 = vpop.f32.mrf.mxu0
  %v5819 = vadd.f32 %v5754, %v5818
  %5820 = vdwg.mxu0
  %v5821 = vand.u32 %v236, 4294901760
  %5822 = vmatpush.msra.mxu0 %v5821
  %v5823 = vand.u32 %v234, 4294901760
  %5824 = vmatpush.msra.mxu0 %v5823
  %v5825 = vand.u32 %v232, 4294901760
  %5826 = vmatpush.msra.mxu0 %v5825
  %v5827 = vand.u32 %v230, 4294901760
  %5828 = vmatpush.msra.mxu0 %v5827
  %v5829 = vand.u32 %v228, 4294901760
  %5830 = vmatpush.msra.mxu0 %v5829
  %v5831 = vand.u32 %v226, 4294901760
  %5832 = vmatpush.msra.mxu0 %v5831
  %v5833 = vand.u32 %v224, 4294901760
  %5834 = vmatpush.msra.mxu0 %v5833
  %v5835 = vand.u32 %v222, 4294901760
  %5836 = vmatpush.msra.mxu0 %v5835
  %v5837 = vand.u32 %v220, 4294901760
  %5838 = vmatpush.msra.mxu0 %v5837
  %v5839 = vand.u32 %v218, 4294901760
  %5840 = vmatpush.msra.mxu0 %v5839
  %v5841 = vand.u32 %v216, 4294901760
  %5842 = vmatpush.msra.mxu0 %v5841
  %v5843 = vand.u32 %v214, 4294901760
  %5844 = vmatpush.msra.mxu0 %v5843
  %v5845 = vand.u32 %v212, 4294901760
  %5846 = vmatpush.msra.mxu0 %v5845
  %v5847 = vand.u32 %v210, 4294901760
  %5848 = vmatpush.msra.mxu0 %v5847
  %v5849 = vand.u32 %v208, 4294901760
  %5850 = vmatpush.msra.mxu0 %v5849
  %v5851 = vand.u32 %v206, 4294901760
  %5852 = vmatpush.msra.mxu0 %v5851
  %v5853 = vand.u32 %v33, 4294901760
  %v5854 = vsub.f32 %v33, %v5853
  %v5855 = vand.u32 %v5854, 4294901760
  %v5856 = vsub.f32 %v5854, %v5855
  %v5857 = vand.u32 %v5856, 4294901760
  %5858 = vmatmul.f32.gmra.mxu0 %v5857
  %v5859 = vpop.f32.mrf.mxu0
  %v5860 = vadd.f32 %v5791, %v5859
  %v5861 = vand.u32 %v39, 4294901760
  %v5862 = vsub.f32 %v39, %v5861
  %v5863 = vand.u32 %v5862, 4294901760
  %v5864 = vsub.f32 %v5862, %v5863
  %v5865 = vand.u32 %v5864, 4294901760
  %5866 = vmatmul.f32.gmra.mxu0 %v5865
  %v5867 = vpop.f32.mrf.mxu0
  %v5868 = vadd.f32 %v5795, %v5867
  %v5869 = vand.u32 %v45, 4294901760
  %v5870 = vsub.f32 %v45, %v5869
  %v5871 = vand.u32 %v5870, 4294901760
  %v5872 = vsub.f32 %v5870, %v5871
  %v5873 = vand.u32 %v5872, 4294901760
  %5874 = vmatmul.f32.gmra.mxu0 %v5873
  %v5875 = vpop.f32.mrf.mxu0
  %v5876 = vadd.f32 %v5799, %v5875
  %v5877 = vand.u32 %v51, 4294901760
  %v5878 = vsub.f32 %v51, %v5877
  %v5879 = vand.u32 %v5878, 4294901760
  %v5880 = vsub.f32 %v5878, %v5879
  %v5881 = vand.u32 %v5880, 4294901760
  %5882 = vmatmul.f32.gmra.mxu0 %v5881
  %v5883 = vpop.f32.mrf.mxu0
  %v5884 = vadd.f32 %v5803, %v5883
  %v5885 = vand.u32 %v57, 4294901760
  %v5886 = vsub.f32 %v57, %v5885
  %v5887 = vand.u32 %v5886, 4294901760
  %v5888 = vsub.f32 %v5886, %v5887
  %v5889 = vand.u32 %v5888, 4294901760
  %5890 = vmatmul.f32.gmra.mxu0 %v5889
  %v5891 = vpop.f32.mrf.mxu0
  %v5892 = vadd.f32 %v5807, %v5891
  %v5893 = vand.u32 %v63, 4294901760
  %v5894 = vsub.f32 %v63, %v5893
  %v5895 = vand.u32 %v5894, 4294901760
  %v5896 = vsub.f32 %v5894, %v5895
  %v5897 = vand.u32 %v5896, 4294901760
  %5898 = vmatmul.f32.gmra.mxu0 %v5897
  %v5899 = vpop.f32.mrf.mxu0
  %v5900 = vadd.f32 %v5811, %v5899
  %v5901 = vand.u32 %v69, 4294901760
  %v5902 = vsub.f32 %v69, %v5901
  %v5903 = vand.u32 %v5902, 4294901760
  %v5904 = vsub.f32 %v5902, %v5903
  %v5905 = vand.u32 %v5904, 4294901760
  %5906 = vmatmul.f32.gmra.mxu0 %v5905
  %v5907 = vpop.f32.mrf.mxu0
  %v5908 = vadd.f32 %v5815, %v5907
  %v5909 = vand.u32 %v75, 4294901760
  %v5910 = vsub.f32 %v75, %v5909
  %v5911 = vand.u32 %v5910, 4294901760
  %v5912 = vsub.f32 %v5910, %v5911
  %v5913 = vand.u32 %v5912, 4294901760
  %5914 = vmatmul.f32.gmra.mxu0 %v5913
  %v5915 = vpop.f32.mrf.mxu0
  %v5916 = vadd.f32 %v5819, %v5915
  %5917 = vdwg.mxu0
  %v5918 = vand.u32 %v236, 4294901760
  %v5919 = vsub.f32 %v236, %v5918
  %v5920 = vand.u32 %v5919, 4294901760
  %v5921 = vsub.f32 %v5919, %v5920
  %v5922 = vand.u32 %v5921, 4294901760
  %5923 = vmatpush.msra.mxu0 %v5922
  %v5924 = vand.u32 %v234, 4294901760
  %v5925 = vsub.f32 %v234, %v5924
  %v5926 = vand.u32 %v5925, 4294901760
  %v5927 = vsub.f32 %v5925, %v5926
  %v5928 = vand.u32 %v5927, 4294901760
  %5929 = vmatpush.msra.mxu0 %v5928
  %v5930 = vand.u32 %v232, 4294901760
  %v5931 = vsub.f32 %v232, %v5930
  %v5932 = vand.u32 %v5931, 4294901760
  %v5933 = vsub.f32 %v5931, %v5932
  %v5934 = vand.u32 %v5933, 4294901760
  %5935 = vmatpush.msra.mxu0 %v5934
  %v5936 = vand.u32 %v230, 4294901760
  %v5937 = vsub.f32 %v230, %v5936
  %v5938 = vand.u32 %v5937, 4294901760
  %v5939 = vsub.f32 %v5937, %v5938
  %v5940 = vand.u32 %v5939, 4294901760
  %5941 = vmatpush.msra.mxu0 %v5940
  %v5942 = vand.u32 %v228, 4294901760
  %v5943 = vsub.f32 %v228, %v5942
  %v5944 = vand.u32 %v5943, 4294901760
  %v5945 = vsub.f32 %v5943, %v5944
  %v5946 = vand.u32 %v5945, 4294901760
  %5947 = vmatpush.msra.mxu0 %v5946
  %v5948 = vand.u32 %v226, 4294901760
  %v5949 = vsub.f32 %v226, %v5948
  %v5950 = vand.u32 %v5949, 4294901760
  %v5951 = vsub.f32 %v5949, %v5950
  %v5952 = vand.u32 %v5951, 4294901760
  %5953 = vmatpush.msra.mxu0 %v5952
  %v5954 = vand.u32 %v224, 4294901760
  %v5955 = vsub.f32 %v224, %v5954
  %v5956 = vand.u32 %v5955, 4294901760
  %v5957 = vsub.f32 %v5955, %v5956
  %v5958 = vand.u32 %v5957, 4294901760
  %5959 = vmatpush.msra.mxu0 %v5958
  %v5960 = vand.u32 %v222, 4294901760
  %v5961 = vsub.f32 %v222, %v5960
  %v5962 = vand.u32 %v5961, 4294901760
  %v5963 = vsub.f32 %v5961, %v5962
  %v5964 = vand.u32 %v5963, 4294901760
  %5965 = vmatpush.msra.mxu0 %v5964
  %v5966 = vand.u32 %v220, 4294901760
  %v5967 = vsub.f32 %v220, %v5966
  %v5968 = vand.u32 %v5967, 4294901760
  %v5969 = vsub.f32 %v5967, %v5968
  %v5970 = vand.u32 %v5969, 4294901760
  %5971 = vmatpush.msra.mxu0 %v5970
  %v5972 = vand.u32 %v218, 4294901760
  %v5973 = vsub.f32 %v218, %v5972
  %v5974 = vand.u32 %v5973, 4294901760
  %v5975 = vsub.f32 %v5973, %v5974
  %v5976 = vand.u32 %v5975, 4294901760
  %5977 = vmatpush.msra.mxu0 %v5976
  %v5978 = vand.u32 %v216, 4294901760
  %v5979 = vsub.f32 %v216, %v5978
  %v5980 = vand.u32 %v5979, 4294901760
  %v5981 = vsub.f32 %v5979, %v5980
  %v5982 = vand.u32 %v5981, 4294901760
  %5983 = vmatpush.msra.mxu0 %v5982
  %v5984 = vand.u32 %v214, 4294901760
  %v5985 = vsub.f32 %v214, %v5984
  %v5986 = vand.u32 %v5985, 4294901760
  %v5987 = vsub.f32 %v5985, %v5986
  %v5988 = vand.u32 %v5987, 4294901760
  %5989 = vmatpush.msra.mxu0 %v5988
  %v5990 = vand.u32 %v212, 4294901760
  %v5991 = vsub.f32 %v212, %v5990
  %v5992 = vand.u32 %v5991, 4294901760
  %v5993 = vsub.f32 %v5991, %v5992
  %v5994 = vand.u32 %v5993, 4294901760
  %5995 = vmatpush.msra.mxu0 %v5994
  %v5996 = vand.u32 %v210, 4294901760
  %v5997 = vsub.f32 %v210, %v5996
  %v5998 = vand.u32 %v5997, 4294901760
  %v5999 = vsub.f32 %v5997, %v5998
  %v6000 = vand.u32 %v5999, 4294901760
  %6001 = vmatpush.msra.mxu0 %v6000
  %v6002 = vand.u32 %v208, 4294901760
  %v6003 = vsub.f32 %v208, %v6002
  %v6004 = vand.u32 %v6003, 4294901760
  %v6005 = vsub.f32 %v6003, %v6004
  %v6006 = vand.u32 %v6005, 4294901760
  %6007 = vmatpush.msra.mxu0 %v6006
  %v6008 = vand.u32 %v206, 4294901760
  %v6009 = vsub.f32 %v206, %v6008
  %v6010 = vand.u32 %v6009, 4294901760
  %v6011 = vsub.f32 %v6009, %v6010
  %v6012 = vand.u32 %v6011, 4294901760
  %6013 = vmatpush.msra.mxu0 %v6012
  %v6014 = vand.u32 %v33, 4294901760
  %6015 = vmatmul.f32.gmra.mxu0 %v6014
  %v6016 = vpop.f32.mrf.mxu0
  %v6017 = vadd.f32 %v5860, %v6016
  %v6018 = vand.u32 %v39, 4294901760
  %6019 = vmatmul.f32.gmra.mxu0 %v6018
  %v6020 = vpop.f32.mrf.mxu0
  %v6021 = vadd.f32 %v5868, %v6020
  %v6022 = vand.u32 %v45, 4294901760
  %6023 = vmatmul.f32.gmra.mxu0 %v6022
  %v6024 = vpop.f32.mrf.mxu0
  %v6025 = vadd.f32 %v5876, %v6024
  %v6026 = vand.u32 %v51, 4294901760
  %6027 = vmatmul.f32.gmra.mxu0 %v6026
  %v6028 = vpop.f32.mrf.mxu0
  %v6029 = vadd.f32 %v5884, %v6028
  %v6030 = vand.u32 %v57, 4294901760
  %6031 = vmatmul.f32.gmra.mxu0 %v6030
  %v6032 = vpop.f32.mrf.mxu0
  %v6033 = vadd.f32 %v5892, %v6032
  %v6034 = vand.u32 %v63, 4294901760
  %6035 = vmatmul.f32.gmra.mxu0 %v6034
  %v6036 = vpop.f32.mrf.mxu0
  %v6037 = vadd.f32 %v5900, %v6036
  %v6038 = vand.u32 %v69, 4294901760
  %6039 = vmatmul.f32.gmra.mxu0 %v6038
  %v6040 = vpop.f32.mrf.mxu0
  %v6041 = vadd.f32 %v5908, %v6040
  %v6042 = vand.u32 %v75, 4294901760
  %6043 = vmatmul.f32.gmra.mxu0 %v6042
  %v6044 = vpop.f32.mrf.mxu0
  %v6045 = vadd.f32 %v5916, %v6044
  %6046 = vdwg.mxu0
  %v6047 = vand.u32 %v236, 4294901760
  %v6048 = vsub.f32 %v236, %v6047
  %6049 = vmatpush.msra.mxu0 %v6048
  %v6050 = vand.u32 %v234, 4294901760
  %v6051 = vsub.f32 %v234, %v6050
  %6052 = vmatpush.msra.mxu0 %v6051
  %v6053 = vand.u32 %v232, 4294901760
  %v6054 = vsub.f32 %v232, %v6053
  %6055 = vmatpush.msra.mxu0 %v6054
  %v6056 = vand.u32 %v230, 4294901760
  %v6057 = vsub.f32 %v230, %v6056
  %6058 = vmatpush.msra.mxu0 %v6057
  %v6059 = vand.u32 %v228, 4294901760
  %v6060 = vsub.f32 %v228, %v6059
  %6061 = vmatpush.msra.mxu0 %v6060
  %v6062 = vand.u32 %v226, 4294901760
  %v6063 = vsub.f32 %v226, %v6062
  %6064 = vmatpush.msra.mxu0 %v6063
  %v6065 = vand.u32 %v224, 4294901760
  %v6066 = vsub.f32 %v224, %v6065
  %6067 = vmatpush.msra.mxu0 %v6066
  %v6068 = vand.u32 %v222, 4294901760
  %v6069 = vsub.f32 %v222, %v6068
  %6070 = vmatpush.msra.mxu0 %v6069
  %v6071 = vand.u32 %v220, 4294901760
  %v6072 = vsub.f32 %v220, %v6071
  %6073 = vmatpush.msra.mxu0 %v6072
  %v6074 = vand.u32 %v218, 4294901760
  %v6075 = vsub.f32 %v218, %v6074
  %6076 = vmatpush.msra.mxu0 %v6075
  %v6077 = vand.u32 %v216, 4294901760
  %v6078 = vsub.f32 %v216, %v6077
  %6079 = vmatpush.msra.mxu0 %v6078
  %v6080 = vand.u32 %v214, 4294901760
  %v6081 = vsub.f32 %v214, %v6080
  %6082 = vmatpush.msra.mxu0 %v6081
  %v6083 = vand.u32 %v212, 4294901760
  %v6084 = vsub.f32 %v212, %v6083
  %6085 = vmatpush.msra.mxu0 %v6084
  %v6086 = vand.u32 %v210, 4294901760
  %v6087 = vsub.f32 %v210, %v6086
  %6088 = vmatpush.msra.mxu0 %v6087
  %v6089 = vand.u32 %v208, 4294901760
  %v6090 = vsub.f32 %v208, %v6089
  %6091 = vmatpush.msra.mxu0 %v6090
  %v6092 = vand.u32 %v206, 4294901760
  %v6093 = vsub.f32 %v206, %v6092
  %6094 = vmatpush.msra.mxu0 %v6093
  %v6095 = vand.u32 %v33, 4294901760
  %v6096 = vsub.f32 %v33, %v6095
  %6097 = vmatmul.f32.gmra.mxu0 %v6096
  %v6098 = vpop.f32.mrf.mxu0
  %v6099 = vadd.f32 %v6017, %v6098
  %v6100 = vand.u32 %v39, 4294901760
  %v6101 = vsub.f32 %v39, %v6100
  %6102 = vmatmul.f32.gmra.mxu0 %v6101
  %v6103 = vpop.f32.mrf.mxu0
  %v6104 = vadd.f32 %v6021, %v6103
  %v6105 = vand.u32 %v45, 4294901760
  %v6106 = vsub.f32 %v45, %v6105
  %6107 = vmatmul.f32.gmra.mxu0 %v6106
  %v6108 = vpop.f32.mrf.mxu0
  %v6109 = vadd.f32 %v6025, %v6108
  %v6110 = vand.u32 %v51, 4294901760
  %v6111 = vsub.f32 %v51, %v6110
  %6112 = vmatmul.f32.gmra.mxu0 %v6111
  %v6113 = vpop.f32.mrf.mxu0
  %v6114 = vadd.f32 %v6029, %v6113
  %v6115 = vand.u32 %v57, 4294901760
  %v6116 = vsub.f32 %v57, %v6115
  %6117 = vmatmul.f32.gmra.mxu0 %v6116
  %v6118 = vpop.f32.mrf.mxu0
  %v6119 = vadd.f32 %v6033, %v6118
  %v6120 = vand.u32 %v63, 4294901760
  %v6121 = vsub.f32 %v63, %v6120
  %6122 = vmatmul.f32.gmra.mxu0 %v6121
  %v6123 = vpop.f32.mrf.mxu0
  %v6124 = vadd.f32 %v6037, %v6123
  %v6125 = vand.u32 %v69, 4294901760
  %v6126 = vsub.f32 %v69, %v6125
  %6127 = vmatmul.f32.gmra.mxu0 %v6126
  %v6128 = vpop.f32.mrf.mxu0
  %v6129 = vadd.f32 %v6041, %v6128
  %v6130 = vand.u32 %v75, 4294901760
  %v6131 = vsub.f32 %v75, %v6130
  %6132 = vmatmul.f32.gmra.mxu0 %v6131
  %v6133 = vpop.f32.mrf.mxu0
  %v6134 = vadd.f32 %v6045, %v6133
  %6135 = vdwg.mxu0
  %v6136 = vand.u32 %v236, 4294901760
  %6137 = vmatpush.msra.mxu0 %v6136
  %v6138 = vand.u32 %v234, 4294901760
  %6139 = vmatpush.msra.mxu0 %v6138
  %v6140 = vand.u32 %v232, 4294901760
  %6141 = vmatpush.msra.mxu0 %v6140
  %v6142 = vand.u32 %v230, 4294901760
  %6143 = vmatpush.msra.mxu0 %v6142
  %v6144 = vand.u32 %v228, 4294901760
  %6145 = vmatpush.msra.mxu0 %v6144
  %v6146 = vand.u32 %v226, 4294901760
  %6147 = vmatpush.msra.mxu0 %v6146
  %v6148 = vand.u32 %v224, 4294901760
  %6149 = vmatpush.msra.mxu0 %v6148
  %v6150 = vand.u32 %v222, 4294901760
  %6151 = vmatpush.msra.mxu0 %v6150
  %v6152 = vand.u32 %v220, 4294901760
  %6153 = vmatpush.msra.mxu0 %v6152
  %v6154 = vand.u32 %v218, 4294901760
  %6155 = vmatpush.msra.mxu0 %v6154
  %v6156 = vand.u32 %v216, 4294901760
  %6157 = vmatpush.msra.mxu0 %v6156
  %v6158 = vand.u32 %v214, 4294901760
  %6159 = vmatpush.msra.mxu0 %v6158
  %v6160 = vand.u32 %v212, 4294901760
  %6161 = vmatpush.msra.mxu0 %v6160
  %v6162 = vand.u32 %v210, 4294901760
  %6163 = vmatpush.msra.mxu0 %v6162
  %v6164 = vand.u32 %v208, 4294901760
  %6165 = vmatpush.msra.mxu0 %v6164
  %v6166 = vand.u32 %v206, 4294901760
  %6167 = vmatpush.msra.mxu0 %v6166
  %v6168 = vand.u32 %v33, 4294901760
  %v6169 = vsub.f32 %v33, %v6168
  %v6170 = vand.u32 %v6169, 4294901760
  %6171 = vmatmul.f32.gmra.mxu0 %v6170
  %v6172 = vpop.f32.mrf.mxu0
  %v6173 = vadd.f32 %v6099, %v6172
  %v6174 = vand.u32 %v39, 4294901760
  %v6175 = vsub.f32 %v39, %v6174
  %v6176 = vand.u32 %v6175, 4294901760
  %6177 = vmatmul.f32.gmra.mxu0 %v6176
  %v6178 = vpop.f32.mrf.mxu0
  %v6179 = vadd.f32 %v6104, %v6178
  %v6180 = vand.u32 %v45, 4294901760
  %v6181 = vsub.f32 %v45, %v6180
  %v6182 = vand.u32 %v6181, 4294901760
  %6183 = vmatmul.f32.gmra.mxu0 %v6182
  %v6184 = vpop.f32.mrf.mxu0
  %v6185 = vadd.f32 %v6109, %v6184
  %v6186 = vand.u32 %v51, 4294901760
  %v6187 = vsub.f32 %v51, %v6186
  %v6188 = vand.u32 %v6187, 4294901760
  %6189 = vmatmul.f32.gmra.mxu0 %v6188
  %v6190 = vpop.f32.mrf.mxu0
  %v6191 = vadd.f32 %v6114, %v6190
  %v6192 = vand.u32 %v57, 4294901760
  %v6193 = vsub.f32 %v57, %v6192
  %v6194 = vand.u32 %v6193, 4294901760
  %6195 = vmatmul.f32.gmra.mxu0 %v6194
  %v6196 = vpop.f32.mrf.mxu0
  %v6197 = vadd.f32 %v6119, %v6196
  %v6198 = vand.u32 %v63, 4294901760
  %v6199 = vsub.f32 %v63, %v6198
  %v6200 = vand.u32 %v6199, 4294901760
  %6201 = vmatmul.f32.gmra.mxu0 %v6200
  %v6202 = vpop.f32.mrf.mxu0
  %v6203 = vadd.f32 %v6124, %v6202
  %v6204 = vand.u32 %v69, 4294901760
  %v6205 = vsub.f32 %v69, %v6204
  %v6206 = vand.u32 %v6205, 4294901760
  %6207 = vmatmul.f32.gmra.mxu0 %v6206
  %v6208 = vpop.f32.mrf.mxu0
  %v6209 = vadd.f32 %v6129, %v6208
  %v6210 = vand.u32 %v75, 4294901760
  %v6211 = vsub.f32 %v75, %v6210
  %v6212 = vand.u32 %v6211, 4294901760
  %6213 = vmatmul.f32.gmra.mxu0 %v6212
  %v6214 = vpop.f32.mrf.mxu0
  %v6215 = vadd.f32 %v6134, %v6214
  %6216 = vdwg.mxu0
  %v6217 = vand.u32 %v236, 4294901760
  %v6218 = vsub.f32 %v236, %v6217
  %v6219 = vand.u32 %v6218, 4294901760
  %6220 = vmatpush.msra.mxu0 %v6219
  %v6221 = vand.u32 %v234, 4294901760
  %v6222 = vsub.f32 %v234, %v6221
  %v6223 = vand.u32 %v6222, 4294901760
  %6224 = vmatpush.msra.mxu0 %v6223
  %v6225 = vand.u32 %v232, 4294901760
  %v6226 = vsub.f32 %v232, %v6225
  %v6227 = vand.u32 %v6226, 4294901760
  %6228 = vmatpush.msra.mxu0 %v6227
  %v6229 = vand.u32 %v230, 4294901760
  %v6230 = vsub.f32 %v230, %v6229
  %v6231 = vand.u32 %v6230, 4294901760
  %6232 = vmatpush.msra.mxu0 %v6231
  %v6233 = vand.u32 %v228, 4294901760
  %v6234 = vsub.f32 %v228, %v6233
  %v6235 = vand.u32 %v6234, 4294901760
  %6236 = vmatpush.msra.mxu0 %v6235
  %v6237 = vand.u32 %v226, 4294901760
  %v6238 = vsub.f32 %v226, %v6237
  %v6239 = vand.u32 %v6238, 4294901760
  %6240 = vmatpush.msra.mxu0 %v6239
  %v6241 = vand.u32 %v224, 4294901760
  %v6242 = vsub.f32 %v224, %v6241
  %v6243 = vand.u32 %v6242, 4294901760
  %6244 = vmatpush.msra.mxu0 %v6243
  %v6245 = vand.u32 %v222, 4294901760
  %v6246 = vsub.f32 %v222, %v6245
  %v6247 = vand.u32 %v6246, 4294901760
  %6248 = vmatpush.msra.mxu0 %v6247
  %v6249 = vand.u32 %v220, 4294901760
  %v6250 = vsub.f32 %v220, %v6249
  %v6251 = vand.u32 %v6250, 4294901760
  %6252 = vmatpush.msra.mxu0 %v6251
  %v6253 = vand.u32 %v218, 4294901760
  %v6254 = vsub.f32 %v218, %v6253
  %v6255 = vand.u32 %v6254, 4294901760
  %6256 = vmatpush.msra.mxu0 %v6255
  %v6257 = vand.u32 %v216, 4294901760
  %v6258 = vsub.f32 %v216, %v6257
  %v6259 = vand.u32 %v6258, 4294901760
  %6260 = vmatpush.msra.mxu0 %v6259
  %v6261 = vand.u32 %v214, 4294901760
  %v6262 = vsub.f32 %v214, %v6261
  %v6263 = vand.u32 %v6262, 4294901760
  %6264 = vmatpush.msra.mxu0 %v6263
  %v6265 = vand.u32 %v212, 4294901760
  %v6266 = vsub.f32 %v212, %v6265
  %v6267 = vand.u32 %v6266, 4294901760
  %6268 = vmatpush.msra.mxu0 %v6267
  %v6269 = vand.u32 %v210, 4294901760
  %v6270 = vsub.f32 %v210, %v6269
  %v6271 = vand.u32 %v6270, 4294901760
  %6272 = vmatpush.msra.mxu0 %v6271
  %v6273 = vand.u32 %v208, 4294901760
  %v6274 = vsub.f32 %v208, %v6273
  %v6275 = vand.u32 %v6274, 4294901760
  %6276 = vmatpush.msra.mxu0 %v6275
  %v6277 = vand.u32 %v206, 4294901760
  %v6278 = vsub.f32 %v206, %v6277
  %v6279 = vand.u32 %v6278, 4294901760
  %6280 = vmatpush.msra.mxu0 %v6279
  %v6281 = vand.u32 %v33, 4294901760
  %6282 = vmatmul.f32.gmra.mxu0 %v6281
  %v6283 = vpop.f32.mrf.mxu0
  %v6284 = vadd.f32 %v6173, %v6283
  %v6285 = vand.u32 %v39, 4294901760
  %6286 = vmatmul.f32.gmra.mxu0 %v6285
  %v6287 = vpop.f32.mrf.mxu0
  %v6288 = vadd.f32 %v6179, %v6287
  %v6289 = vand.u32 %v45, 4294901760
  %6290 = vmatmul.f32.gmra.mxu0 %v6289
  %v6291 = vpop.f32.mrf.mxu0
  %v6292 = vadd.f32 %v6185, %v6291
  %v6293 = vand.u32 %v51, 4294901760
  %6294 = vmatmul.f32.gmra.mxu0 %v6293
  %v6295 = vpop.f32.mrf.mxu0
  %v6296 = vadd.f32 %v6191, %v6295
  %v6297 = vand.u32 %v57, 4294901760
  %6298 = vmatmul.f32.gmra.mxu0 %v6297
  %v6299 = vpop.f32.mrf.mxu0
  %v6300 = vadd.f32 %v6197, %v6299
  %v6301 = vand.u32 %v63, 4294901760
  %6302 = vmatmul.f32.gmra.mxu0 %v6301
  %v6303 = vpop.f32.mrf.mxu0
  %v6304 = vadd.f32 %v6203, %v6303
  %v6305 = vand.u32 %v69, 4294901760
  %6306 = vmatmul.f32.gmra.mxu0 %v6305
  %v6307 = vpop.f32.mrf.mxu0
  %v6308 = vadd.f32 %v6209, %v6307
  %v6309 = vand.u32 %v75, 4294901760
  %6310 = vmatmul.f32.gmra.mxu0 %v6309
  %v6311 = vpop.f32.mrf.mxu0
  %v6312 = vadd.f32 %v6215, %v6311
  %6313 = vdwg.mxu0
  %v6314 = vand.u32 %v236, 4294901760
  %6315 = vmatpush.msra.mxu0 %v6314
  %v6316 = vand.u32 %v234, 4294901760
  %6317 = vmatpush.msra.mxu0 %v6316
  %v6318 = vand.u32 %v232, 4294901760
  %6319 = vmatpush.msra.mxu0 %v6318
  %v6320 = vand.u32 %v230, 4294901760
  %6321 = vmatpush.msra.mxu0 %v6320
  %v6322 = vand.u32 %v228, 4294901760
  %6323 = vmatpush.msra.mxu0 %v6322
  %v6324 = vand.u32 %v226, 4294901760
  %6325 = vmatpush.msra.mxu0 %v6324
  %v6326 = vand.u32 %v224, 4294901760
  %6327 = vmatpush.msra.mxu0 %v6326
  %v6328 = vand.u32 %v222, 4294901760
  %6329 = vmatpush.msra.mxu0 %v6328
  %v6330 = vand.u32 %v220, 4294901760
  %6331 = vmatpush.msra.mxu0 %v6330
  %v6332 = vand.u32 %v218, 4294901760
  %6333 = vmatpush.msra.mxu0 %v6332
  %v6334 = vand.u32 %v216, 4294901760
  %6335 = vmatpush.msra.mxu0 %v6334
  %v6336 = vand.u32 %v214, 4294901760
  %6337 = vmatpush.msra.mxu0 %v6336
  %v6338 = vand.u32 %v212, 4294901760
  %6339 = vmatpush.msra.mxu0 %v6338
  %v6340 = vand.u32 %v210, 4294901760
  %6341 = vmatpush.msra.mxu0 %v6340
  %v6342 = vand.u32 %v208, 4294901760
  %6343 = vmatpush.msra.mxu0 %v6342
  %v6344 = vand.u32 %v206, 4294901760
  %6345 = vmatpush.msra.mxu0 %v6344
  %v6346 = vand.u32 %v33, 4294901760
  %6347 = vmatmul.f32.gmra.mxu0 %v6346
  %v6348 = vpop.f32.mrf.mxu0
  %v6349 = vadd.f32 %v6284, %v6348
  %v6350 = vand.u32 %v39, 4294901760
  %6351 = vmatmul.f32.gmra.mxu0 %v6350
  %v6352 = vpop.f32.mrf.mxu0
  %v6353 = vadd.f32 %v6288, %v6352
  %v6354 = vand.u32 %v45, 4294901760
  %6355 = vmatmul.f32.gmra.mxu0 %v6354
  %v6356 = vpop.f32.mrf.mxu0
  %v6357 = vadd.f32 %v6292, %v6356
  %v6358 = vand.u32 %v51, 4294901760
  %6359 = vmatmul.f32.gmra.mxu0 %v6358
  %v6360 = vpop.f32.mrf.mxu0
  %v6361 = vadd.f32 %v6296, %v6360
  %v6362 = vand.u32 %v57, 4294901760
  %6363 = vmatmul.f32.gmra.mxu0 %v6362
  %v6364 = vpop.f32.mrf.mxu0
  %v6365 = vadd.f32 %v6300, %v6364
  %v6366 = vand.u32 %v63, 4294901760
  %6367 = vmatmul.f32.gmra.mxu0 %v6366
  %v6368 = vpop.f32.mrf.mxu0
  %v6369 = vadd.f32 %v6304, %v6368
  %v6370 = vand.u32 %v69, 4294901760
  %6371 = vmatmul.f32.gmra.mxu0 %v6370
  %v6372 = vpop.f32.mrf.mxu0
  %v6373 = vadd.f32 %v6308, %v6372
  %v6374 = vand.u32 %v75, 4294901760
  %6375 = vmatmul.f32.gmra.mxu0 %v6374
  %v6376 = vpop.f32.mrf.mxu0
  %v6377 = vadd.f32 %v6312, %v6376
  %6378 = vdwg.mxu0
  %6379 = vmatpush.msra.mxu0 0.0
  %6380 = vmatpush.msra.mxu0 0.0
  %6381 = vmatpush.msra.mxu0 0.0
  %6382 = vmatpush.msra.mxu0 0.0
  %v6383 = vand.u32 %v291, 4294901760
  %6384 = vmatpush.msra.mxu0 %v6383
  %v6385 = vand.u32 %v258, 4294901760
  %6386 = vmatpush.msra.mxu0 %v6385
  %v6387 = vand.u32 %v256, 4294901760
  %6388 = vmatpush.msra.mxu0 %v6387
  %v6389 = vand.u32 %v254, 4294901760
  %6390 = vmatpush.msra.mxu0 %v6389
  %v6391 = vand.u32 %v252, 4294901760
  %6392 = vmatpush.msra.mxu0 %v6391
  %v6393 = vand.u32 %v250, 4294901760
  %6394 = vmatpush.msra.mxu0 %v6393
  %v6395 = vand.u32 %v248, 4294901760
  %6396 = vmatpush.msra.mxu0 %v6395
  %v6397 = vand.u32 %v246, 4294901760
  %6398 = vmatpush.msra.mxu0 %v6397
  %v6399 = vand.u32 %v244, 4294901760
  %6400 = vmatpush.msra.mxu0 %v6399
  %v6401 = vand.u32 %v242, 4294901760
  %6402 = vmatpush.msra.mxu0 %v6401
  %v6403 = vand.u32 %v240, 4294901760
  %6404 = vmatpush.msra.mxu0 %v6403
  %v6405 = vand.u32 %v238, 4294901760
  %6406 = vmatpush.msra.mxu0 %v6405
  %v6407 = vand.u32 %v263, 4294901760
  %v6408 = vsub.f32 %v263, %v6407
  %v6409 = vand.u32 %v6408, 4294901760
  %v6410 = vsub.f32 %v6408, %v6409
  %v6411 = vand.u32 %v6410, 4294901760
  %6412 = vmatmul.f32.gmra.mxu0 %v6411
  %v6413 = vpop.f32.mrf.mxu0
  %v6414 = vadd.f32 %v6349, %v6413
  %v6415 = vand.u32 %v266, 4294901760
  %v6416 = vsub.f32 %v266, %v6415
  %v6417 = vand.u32 %v6416, 4294901760
  %v6418 = vsub.f32 %v6416, %v6417
  %v6419 = vand.u32 %v6418, 4294901760
  %6420 = vmatmul.f32.gmra.mxu0 %v6419
  %v6421 = vpop.f32.mrf.mxu0
  %v6422 = vadd.f32 %v6353, %v6421
  %v6423 = vand.u32 %v269, 4294901760
  %v6424 = vsub.f32 %v269, %v6423
  %v6425 = vand.u32 %v6424, 4294901760
  %v6426 = vsub.f32 %v6424, %v6425
  %v6427 = vand.u32 %v6426, 4294901760
  %6428 = vmatmul.f32.gmra.mxu0 %v6427
  %v6429 = vpop.f32.mrf.mxu0
  %v6430 = vadd.f32 %v6357, %v6429
  %v6431 = vand.u32 %v272, 4294901760
  %v6432 = vsub.f32 %v272, %v6431
  %v6433 = vand.u32 %v6432, 4294901760
  %v6434 = vsub.f32 %v6432, %v6433
  %v6435 = vand.u32 %v6434, 4294901760
  %6436 = vmatmul.f32.gmra.mxu0 %v6435
  %v6437 = vpop.f32.mrf.mxu0
  %v6438 = vadd.f32 %v6361, %v6437
  %v6439 = vand.u32 %v275, 4294901760
  %v6440 = vsub.f32 %v275, %v6439
  %v6441 = vand.u32 %v6440, 4294901760
  %v6442 = vsub.f32 %v6440, %v6441
  %v6443 = vand.u32 %v6442, 4294901760
  %6444 = vmatmul.f32.gmra.mxu0 %v6443
  %v6445 = vpop.f32.mrf.mxu0
  %v6446 = vadd.f32 %v6365, %v6445
  %v6447 = vand.u32 %v278, 4294901760
  %v6448 = vsub.f32 %v278, %v6447
  %v6449 = vand.u32 %v6448, 4294901760
  %v6450 = vsub.f32 %v6448, %v6449
  %v6451 = vand.u32 %v6450, 4294901760
  %6452 = vmatmul.f32.gmra.mxu0 %v6451
  %v6453 = vpop.f32.mrf.mxu0
  %v6454 = vadd.f32 %v6369, %v6453
  %v6455 = vand.u32 %v281, 4294901760
  %v6456 = vsub.f32 %v281, %v6455
  %v6457 = vand.u32 %v6456, 4294901760
  %v6458 = vsub.f32 %v6456, %v6457
  %v6459 = vand.u32 %v6458, 4294901760
  %6460 = vmatmul.f32.gmra.mxu0 %v6459
  %v6461 = vpop.f32.mrf.mxu0
  %v6462 = vadd.f32 %v6373, %v6461
  %v6463 = vand.u32 %v284, 4294901760
  %v6464 = vsub.f32 %v284, %v6463
  %v6465 = vand.u32 %v6464, 4294901760
  %v6466 = vsub.f32 %v6464, %v6465
  %v6467 = vand.u32 %v6466, 4294901760
  %6468 = vmatmul.f32.gmra.mxu0 %v6467
  %v6469 = vpop.f32.mrf.mxu0
  %v6470 = vadd.f32 %v6377, %v6469
  %6471 = vdwg.mxu0
  %6472 = vmatpush.msra.mxu0 0.0
  %6473 = vmatpush.msra.mxu0 0.0
  %6474 = vmatpush.msra.mxu0 0.0
  %6475 = vmatpush.msra.mxu0 0.0
  %v6476 = vand.u32 %v291, 4294901760
  %v6477 = vsub.f32 %v291, %v6476
  %v6478 = vand.u32 %v6477, 4294901760
  %v6479 = vsub.f32 %v6477, %v6478
  %v6480 = vand.u32 %v6479, 4294901760
  %6481 = vmatpush.msra.mxu0 %v6480
  %v6482 = vand.u32 %v258, 4294901760
  %v6483 = vsub.f32 %v258, %v6482
  %v6484 = vand.u32 %v6483, 4294901760
  %v6485 = vsub.f32 %v6483, %v6484
  %v6486 = vand.u32 %v6485, 4294901760
  %6487 = vmatpush.msra.mxu0 %v6486
  %v6488 = vand.u32 %v256, 4294901760
  %v6489 = vsub.f32 %v256, %v6488
  %v6490 = vand.u32 %v6489, 4294901760
  %v6491 = vsub.f32 %v6489, %v6490
  %v6492 = vand.u32 %v6491, 4294901760
  %6493 = vmatpush.msra.mxu0 %v6492
  %v6494 = vand.u32 %v254, 4294901760
  %v6495 = vsub.f32 %v254, %v6494
  %v6496 = vand.u32 %v6495, 4294901760
  %v6497 = vsub.f32 %v6495, %v6496
  %v6498 = vand.u32 %v6497, 4294901760
  %6499 = vmatpush.msra.mxu0 %v6498
  %v6500 = vand.u32 %v252, 4294901760
  %v6501 = vsub.f32 %v252, %v6500
  %v6502 = vand.u32 %v6501, 4294901760
  %v6503 = vsub.f32 %v6501, %v6502
  %v6504 = vand.u32 %v6503, 4294901760
  %6505 = vmatpush.msra.mxu0 %v6504
  %v6506 = vand.u32 %v250, 4294901760
  %v6507 = vsub.f32 %v250, %v6506
  %v6508 = vand.u32 %v6507, 4294901760
  %v6509 = vsub.f32 %v6507, %v6508
  %v6510 = vand.u32 %v6509, 4294901760
  %6511 = vmatpush.msra.mxu0 %v6510
  %v6512 = vand.u32 %v248, 4294901760
  %v6513 = vsub.f32 %v248, %v6512
  %v6514 = vand.u32 %v6513, 4294901760
  %v6515 = vsub.f32 %v6513, %v6514
  %v6516 = vand.u32 %v6515, 4294901760
  %6517 = vmatpush.msra.mxu0 %v6516
  %v6518 = vand.u32 %v246, 4294901760
  %v6519 = vsub.f32 %v246, %v6518
  %v6520 = vand.u32 %v6519, 4294901760
  %v6521 = vsub.f32 %v6519, %v6520
  %v6522 = vand.u32 %v6521, 4294901760
  %6523 = vmatpush.msra.mxu0 %v6522
  %v6524 = vand.u32 %v244, 4294901760
  %v6525 = vsub.f32 %v244, %v6524
  %v6526 = vand.u32 %v6525, 4294901760
  %v6527 = vsub.f32 %v6525, %v6526
  %v6528 = vand.u32 %v6527, 4294901760
  %6529 = vmatpush.msra.mxu0 %v6528
  %v6530 = vand.u32 %v242, 4294901760
  %v6531 = vsub.f32 %v242, %v6530
  %v6532 = vand.u32 %v6531, 4294901760
  %v6533 = vsub.f32 %v6531, %v6532
  %v6534 = vand.u32 %v6533, 4294901760
  %6535 = vmatpush.msra.mxu0 %v6534
  %v6536 = vand.u32 %v240, 4294901760
  %v6537 = vsub.f32 %v240, %v6536
  %v6538 = vand.u32 %v6537, 4294901760
  %v6539 = vsub.f32 %v6537, %v6538
  %v6540 = vand.u32 %v6539, 4294901760
  %6541 = vmatpush.msra.mxu0 %v6540
  %v6542 = vand.u32 %v238, 4294901760
  %v6543 = vsub.f32 %v238, %v6542
  %v6544 = vand.u32 %v6543, 4294901760
  %v6545 = vsub.f32 %v6543, %v6544
  %v6546 = vand.u32 %v6545, 4294901760
  %6547 = vmatpush.msra.mxu0 %v6546
  %v6548 = vand.u32 %v263, 4294901760
  %6549 = vmatmul.f32.gmra.mxu0 %v6548
  %v6550 = vpop.f32.mrf.mxu0
  %v6551 = vadd.f32 %v6414, %v6550
  %v6552 = vand.u32 %v266, 4294901760
  %6553 = vmatmul.f32.gmra.mxu0 %v6552
  %v6554 = vpop.f32.mrf.mxu0
  %v6555 = vadd.f32 %v6422, %v6554
  %v6556 = vand.u32 %v269, 4294901760
  %6557 = vmatmul.f32.gmra.mxu0 %v6556
  %v6558 = vpop.f32.mrf.mxu0
  %v6559 = vadd.f32 %v6430, %v6558
  %v6560 = vand.u32 %v272, 4294901760
  %6561 = vmatmul.f32.gmra.mxu0 %v6560
  %v6562 = vpop.f32.mrf.mxu0
  %v6563 = vadd.f32 %v6438, %v6562
  %v6564 = vand.u32 %v275, 4294901760
  %6565 = vmatmul.f32.gmra.mxu0 %v6564
  %v6566 = vpop.f32.mrf.mxu0
  %v6567 = vadd.f32 %v6446, %v6566
  %v6568 = vand.u32 %v278, 4294901760
  %6569 = vmatmul.f32.gmra.mxu0 %v6568
  %v6570 = vpop.f32.mrf.mxu0
  %v6571 = vadd.f32 %v6454, %v6570
  %v6572 = vand.u32 %v281, 4294901760
  %6573 = vmatmul.f32.gmra.mxu0 %v6572
  %v6574 = vpop.f32.mrf.mxu0
  %v6575 = vadd.f32 %v6462, %v6574
  %v6576 = vand.u32 %v284, 4294901760
  %6577 = vmatmul.f32.gmra.mxu0 %v6576
  %v6578 = vpop.f32.mrf.mxu0
  %v6579 = vadd.f32 %v6470, %v6578
  %6580 = vdwg.mxu0
  %6581 = vmatpush.msra.mxu0 0.0
  %6582 = vmatpush.msra.mxu0 0.0
  %6583 = vmatpush.msra.mxu0 0.0
  %6584 = vmatpush.msra.mxu0 0.0
  %v6585 = vand.u32 %v291, 4294901760
  %v6586 = vsub.f32 %v291, %v6585
  %6587 = vmatpush.msra.mxu0 %v6586
  %v6588 = vand.u32 %v258, 4294901760
  %v6589 = vsub.f32 %v258, %v6588
  %6590 = vmatpush.msra.mxu0 %v6589
  %v6591 = vand.u32 %v256, 4294901760
  %v6592 = vsub.f32 %v256, %v6591
  %6593 = vmatpush.msra.mxu0 %v6592
  %v6594 = vand.u32 %v254, 4294901760
  %v6595 = vsub.f32 %v254, %v6594
  %6596 = vmatpush.msra.mxu0 %v6595
  %v6597 = vand.u32 %v252, 4294901760
  %v6598 = vsub.f32 %v252, %v6597
  %6599 = vmatpush.msra.mxu0 %v6598
  %v6600 = vand.u32 %v250, 4294901760
  %v6601 = vsub.f32 %v250, %v6600
  %6602 = vmatpush.msra.mxu0 %v6601
  %v6603 = vand.u32 %v248, 4294901760
  %v6604 = vsub.f32 %v248, %v6603
  %6605 = vmatpush.msra.mxu0 %v6604
  %v6606 = vand.u32 %v246, 4294901760
  %v6607 = vsub.f32 %v246, %v6606
  %6608 = vmatpush.msra.mxu0 %v6607
  %v6609 = vand.u32 %v244, 4294901760
  %v6610 = vsub.f32 %v244, %v6609
  %6611 = vmatpush.msra.mxu0 %v6610
  %v6612 = vand.u32 %v242, 4294901760
  %v6613 = vsub.f32 %v242, %v6612
  %6614 = vmatpush.msra.mxu0 %v6613
  %v6615 = vand.u32 %v240, 4294901760
  %v6616 = vsub.f32 %v240, %v6615
  %6617 = vmatpush.msra.mxu0 %v6616
  %v6618 = vand.u32 %v238, 4294901760
  %v6619 = vsub.f32 %v238, %v6618
  %6620 = vmatpush.msra.mxu0 %v6619
  %v6621 = vand.u32 %v263, 4294901760
  %v6622 = vsub.f32 %v263, %v6621
  %6623 = vmatmul.f32.gmra.mxu0 %v6622
  %v6624 = vpop.f32.mrf.mxu0
  %v6625 = vadd.f32 %v6551, %v6624
  %v6626 = vand.u32 %v266, 4294901760
  %v6627 = vsub.f32 %v266, %v6626
  %6628 = vmatmul.f32.gmra.mxu0 %v6627
  %v6629 = vpop.f32.mrf.mxu0
  %v6630 = vadd.f32 %v6555, %v6629
  %v6631 = vand.u32 %v269, 4294901760
  %v6632 = vsub.f32 %v269, %v6631
  %6633 = vmatmul.f32.gmra.mxu0 %v6632
  %v6634 = vpop.f32.mrf.mxu0
  %v6635 = vadd.f32 %v6559, %v6634
  %v6636 = vand.u32 %v272, 4294901760
  %v6637 = vsub.f32 %v272, %v6636
  %6638 = vmatmul.f32.gmra.mxu0 %v6637
  %v6639 = vpop.f32.mrf.mxu0
  %v6640 = vadd.f32 %v6563, %v6639
  %v6641 = vand.u32 %v275, 4294901760
  %v6642 = vsub.f32 %v275, %v6641
  %6643 = vmatmul.f32.gmra.mxu0 %v6642
  %v6644 = vpop.f32.mrf.mxu0
  %v6645 = vadd.f32 %v6567, %v6644
  %v6646 = vand.u32 %v278, 4294901760
  %v6647 = vsub.f32 %v278, %v6646
  %6648 = vmatmul.f32.gmra.mxu0 %v6647
  %v6649 = vpop.f32.mrf.mxu0
  %v6650 = vadd.f32 %v6571, %v6649
  %v6651 = vand.u32 %v281, 4294901760
  %v6652 = vsub.f32 %v281, %v6651
  %6653 = vmatmul.f32.gmra.mxu0 %v6652
  %v6654 = vpop.f32.mrf.mxu0
  %v6655 = vadd.f32 %v6575, %v6654
  %v6656 = vand.u32 %v284, 4294901760
  %v6657 = vsub.f32 %v284, %v6656
  %6658 = vmatmul.f32.gmra.mxu0 %v6657
  %v6659 = vpop.f32.mrf.mxu0
  %v6660 = vadd.f32 %v6579, %v6659
  %6661 = vdwg.mxu0
  %6662 = vmatpush.msra.mxu0 0.0
  %6663 = vmatpush.msra.mxu0 0.0
  %6664 = vmatpush.msra.mxu0 0.0
  %6665 = vmatpush.msra.mxu0 0.0
  %v6666 = vand.u32 %v291, 4294901760
  %6667 = vmatpush.msra.mxu0 %v6666
  %v6668 = vand.u32 %v258, 4294901760
  %6669 = vmatpush.msra.mxu0 %v6668
  %v6670 = vand.u32 %v256, 4294901760
  %6671 = vmatpush.msra.mxu0 %v6670
  %v6672 = vand.u32 %v254, 4294901760
  %6673 = vmatpush.msra.mxu0 %v6672
  %v6674 = vand.u32 %v252, 4294901760
  %6675 = vmatpush.msra.mxu0 %v6674
  %v6676 = vand.u32 %v250, 4294901760
  %6677 = vmatpush.msra.mxu0 %v6676
  %v6678 = vand.u32 %v248, 4294901760
  %6679 = vmatpush.msra.mxu0 %v6678
  %v6680 = vand.u32 %v246, 4294901760
  %6681 = vmatpush.msra.mxu0 %v6680
  %v6682 = vand.u32 %v244, 4294901760
  %6683 = vmatpush.msra.mxu0 %v6682
  %v6684 = vand.u32 %v242, 4294901760
  %6685 = vmatpush.msra.mxu0 %v6684
  %v6686 = vand.u32 %v240, 4294901760
  %6687 = vmatpush.msra.mxu0 %v6686
  %v6688 = vand.u32 %v238, 4294901760
  %6689 = vmatpush.msra.mxu0 %v6688
  %v6690 = vand.u32 %v263, 4294901760
  %v6691 = vsub.f32 %v263, %v6690
  %v6692 = vand.u32 %v6691, 4294901760
  %6693 = vmatmul.f32.gmra.mxu0 %v6692
  %v6694 = vpop.f32.mrf.mxu0
  %v6695 = vadd.f32 %v6625, %v6694
  %v6696 = vand.u32 %v266, 4294901760
  %v6697 = vsub.f32 %v266, %v6696
  %v6698 = vand.u32 %v6697, 4294901760
  %6699 = vmatmul.f32.gmra.mxu0 %v6698
  %v6700 = vpop.f32.mrf.mxu0
  %v6701 = vadd.f32 %v6630, %v6700
  %v6702 = vand.u32 %v269, 4294901760
  %v6703 = vsub.f32 %v269, %v6702
  %v6704 = vand.u32 %v6703, 4294901760
  %6705 = vmatmul.f32.gmra.mxu0 %v6704
  %v6706 = vpop.f32.mrf.mxu0
  %v6707 = vadd.f32 %v6635, %v6706
  %v6708 = vand.u32 %v272, 4294901760
  %v6709 = vsub.f32 %v272, %v6708
  %v6710 = vand.u32 %v6709, 4294901760
  %6711 = vmatmul.f32.gmra.mxu0 %v6710
  %v6712 = vpop.f32.mrf.mxu0
  %v6713 = vadd.f32 %v6640, %v6712
  %v6714 = vand.u32 %v275, 4294901760
  %v6715 = vsub.f32 %v275, %v6714
  %v6716 = vand.u32 %v6715, 4294901760
  %6717 = vmatmul.f32.gmra.mxu0 %v6716
  %v6718 = vpop.f32.mrf.mxu0
  %v6719 = vadd.f32 %v6645, %v6718
  %v6720 = vand.u32 %v278, 4294901760
  %v6721 = vsub.f32 %v278, %v6720
  %v6722 = vand.u32 %v6721, 4294901760
  %6723 = vmatmul.f32.gmra.mxu0 %v6722
  %v6724 = vpop.f32.mrf.mxu0
  %v6725 = vadd.f32 %v6650, %v6724
  %v6726 = vand.u32 %v281, 4294901760
  %v6727 = vsub.f32 %v281, %v6726
  %v6728 = vand.u32 %v6727, 4294901760
  %6729 = vmatmul.f32.gmra.mxu0 %v6728
  %v6730 = vpop.f32.mrf.mxu0
  %v6731 = vadd.f32 %v6655, %v6730
  %v6732 = vand.u32 %v284, 4294901760
  %v6733 = vsub.f32 %v284, %v6732
  %v6734 = vand.u32 %v6733, 4294901760
  %6735 = vmatmul.f32.gmra.mxu0 %v6734
  %v6736 = vpop.f32.mrf.mxu0
  %v6737 = vadd.f32 %v6660, %v6736
  %6738 = vdwg.mxu0
  %6739 = vmatpush.msra.mxu0 0.0
  %6740 = vmatpush.msra.mxu0 0.0
  %6741 = vmatpush.msra.mxu0 0.0
  %6742 = vmatpush.msra.mxu0 0.0
  %v6743 = vand.u32 %v291, 4294901760
  %v6744 = vsub.f32 %v291, %v6743
  %v6745 = vand.u32 %v6744, 4294901760
  %6746 = vmatpush.msra.mxu0 %v6745
  %v6747 = vand.u32 %v258, 4294901760
  %v6748 = vsub.f32 %v258, %v6747
  %v6749 = vand.u32 %v6748, 4294901760
  %6750 = vmatpush.msra.mxu0 %v6749
  %v6751 = vand.u32 %v256, 4294901760
  %v6752 = vsub.f32 %v256, %v6751
  %v6753 = vand.u32 %v6752, 4294901760
  %6754 = vmatpush.msra.mxu0 %v6753
  %v6755 = vand.u32 %v254, 4294901760
  %v6756 = vsub.f32 %v254, %v6755
  %v6757 = vand.u32 %v6756, 4294901760
  %6758 = vmatpush.msra.mxu0 %v6757
  %v6759 = vand.u32 %v252, 4294901760
  %v6760 = vsub.f32 %v252, %v6759
  %v6761 = vand.u32 %v6760, 4294901760
  %6762 = vmatpush.msra.mxu0 %v6761
  %v6763 = vand.u32 %v250, 4294901760
  %v6764 = vsub.f32 %v250, %v6763
  %v6765 = vand.u32 %v6764, 4294901760
  %6766 = vmatpush.msra.mxu0 %v6765
  %v6767 = vand.u32 %v248, 4294901760
  %v6768 = vsub.f32 %v248, %v6767
  %v6769 = vand.u32 %v6768, 4294901760
  %6770 = vmatpush.msra.mxu0 %v6769
  %v6771 = vand.u32 %v246, 4294901760
  %v6772 = vsub.f32 %v246, %v6771
  %v6773 = vand.u32 %v6772, 4294901760
  %6774 = vmatpush.msra.mxu0 %v6773
  %v6775 = vand.u32 %v244, 4294901760
  %v6776 = vsub.f32 %v244, %v6775
  %v6777 = vand.u32 %v6776, 4294901760
  %6778 = vmatpush.msra.mxu0 %v6777
  %v6779 = vand.u32 %v242, 4294901760
  %v6780 = vsub.f32 %v242, %v6779
  %v6781 = vand.u32 %v6780, 4294901760
  %6782 = vmatpush.msra.mxu0 %v6781
  %v6783 = vand.u32 %v240, 4294901760
  %v6784 = vsub.f32 %v240, %v6783
  %v6785 = vand.u32 %v6784, 4294901760
  %6786 = vmatpush.msra.mxu0 %v6785
  %v6787 = vand.u32 %v238, 4294901760
  %v6788 = vsub.f32 %v238, %v6787
  %v6789 = vand.u32 %v6788, 4294901760
  %6790 = vmatpush.msra.mxu0 %v6789
  %v6791 = vand.u32 %v263, 4294901760
  %6792 = vmatmul.f32.gmra.mxu0 %v6791
  %v6793 = vpop.f32.mrf.mxu0
  %v6794 = vadd.f32 %v6695, %v6793
  %v6795 = vand.u32 %v266, 4294901760
  %6796 = vmatmul.f32.gmra.mxu0 %v6795
  %v6797 = vpop.f32.mrf.mxu0
  %v6798 = vadd.f32 %v6701, %v6797
  %v6799 = vand.u32 %v269, 4294901760
  %6800 = vmatmul.f32.gmra.mxu0 %v6799
  %v6801 = vpop.f32.mrf.mxu0
  %v6802 = vadd.f32 %v6707, %v6801
  %v6803 = vand.u32 %v272, 4294901760
  %6804 = vmatmul.f32.gmra.mxu0 %v6803
  %v6805 = vpop.f32.mrf.mxu0
  %v6806 = vadd.f32 %v6713, %v6805
  %v6807 = vand.u32 %v275, 4294901760
  %6808 = vmatmul.f32.gmra.mxu0 %v6807
  %v6809 = vpop.f32.mrf.mxu0
  %v6810 = vadd.f32 %v6719, %v6809
  %v6811 = vand.u32 %v278, 4294901760
  %6812 = vmatmul.f32.gmra.mxu0 %v6811
  %v6813 = vpop.f32.mrf.mxu0
  %v6814 = vadd.f32 %v6725, %v6813
  %v6815 = vand.u32 %v281, 4294901760
  %6816 = vmatmul.f32.gmra.mxu0 %v6815
  %v6817 = vpop.f32.mrf.mxu0
  %v6818 = vadd.f32 %v6731, %v6817
  %v6819 = vand.u32 %v284, 4294901760
  %6820 = vmatmul.f32.gmra.mxu0 %v6819
  %v6821 = vpop.f32.mrf.mxu0
  %v6822 = vadd.f32 %v6737, %v6821
  %6823 = vdwg.mxu0
  %6824 = vmatpush.msra.mxu0 0.0
  %6825 = vmatpush.msra.mxu0 0.0
  %6826 = vmatpush.msra.mxu0 0.0
  %6827 = vmatpush.msra.mxu0 0.0
  %v6828 = vand.u32 %v291, 4294901760
  %6829 = vmatpush.msra.mxu0 %v6828
  %v6830 = vand.u32 %v258, 4294901760
  %6831 = vmatpush.msra.mxu0 %v6830
  %v6832 = vand.u32 %v256, 4294901760
  %6833 = vmatpush.msra.mxu0 %v6832
  %v6834 = vand.u32 %v254, 4294901760
  %6835 = vmatpush.msra.mxu0 %v6834
  %v6836 = vand.u32 %v252, 4294901760
  %6837 = vmatpush.msra.mxu0 %v6836
  %v6838 = vand.u32 %v250, 4294901760
  %6839 = vmatpush.msra.mxu0 %v6838
  %v6840 = vand.u32 %v248, 4294901760
  %6841 = vmatpush.msra.mxu0 %v6840
  %v6842 = vand.u32 %v246, 4294901760
  %6843 = vmatpush.msra.mxu0 %v6842
  %v6844 = vand.u32 %v244, 4294901760
  %6845 = vmatpush.msra.mxu0 %v6844
  %v6846 = vand.u32 %v242, 4294901760
  %6847 = vmatpush.msra.mxu0 %v6846
  %v6848 = vand.u32 %v240, 4294901760
  %6849 = vmatpush.msra.mxu0 %v6848
  %v6850 = vand.u32 %v238, 4294901760
  %6851 = vmatpush.msra.mxu0 %v6850
  %v6852 = vand.u32 %v263, 4294901760
  %6853 = vmatmul.f32.gmra.mxu0 %v6852
  %v6854 = vpop.f32.mrf.mxu0
  %v6855 = vadd.f32 %v6794, %v6854
  %v6856 = vand.u32 %v266, 4294901760
  %6857 = vmatmul.f32.gmra.mxu0 %v6856
  %v6858 = vpop.f32.mrf.mxu0
  %v6859 = vadd.f32 %v6798, %v6858
  %v6860 = vand.u32 %v269, 4294901760
  %6861 = vmatmul.f32.gmra.mxu0 %v6860
  %v6862 = vpop.f32.mrf.mxu0
  %v6863 = vadd.f32 %v6802, %v6862
  %v6864 = vand.u32 %v272, 4294901760
  %6865 = vmatmul.f32.gmra.mxu0 %v6864
  %v6866 = vpop.f32.mrf.mxu0
  %v6867 = vadd.f32 %v6806, %v6866
  %v6868 = vand.u32 %v275, 4294901760
  %6869 = vmatmul.f32.gmra.mxu0 %v6868
  %v6870 = vpop.f32.mrf.mxu0
  %v6871 = vadd.f32 %v6810, %v6870
  %v6872 = vand.u32 %v278, 4294901760
  %6873 = vmatmul.f32.gmra.mxu0 %v6872
  %v6874 = vpop.f32.mrf.mxu0
  %v6875 = vadd.f32 %v6814, %v6874
  %v6876 = vand.u32 %v281, 4294901760
  %6877 = vmatmul.f32.gmra.mxu0 %v6876
  %v6878 = vpop.f32.mrf.mxu0
  %v6879 = vadd.f32 %v6818, %v6878
  %v6880 = vand.u32 %v284, 4294901760
  %6881 = vmatmul.f32.gmra.mxu0 %v6880
  %v6882 = vpop.f32.mrf.mxu0
  %v6883 = vadd.f32 %v6822, %v6882
  %6884 = vdwg.mxu0
  %v6885 = vmax.f32 %v3559, %v3563
  %v6886 = vmax.f32 %v6855, %v6859
  %v6887 = vmax.f32 %v6885, %v3567
  %v6888 = vmax.f32 %v6886, %v6863
  %v6889 = vmax.f32 %v6887, %v3571
  %v6890 = vmax.f32 %v6888, %v6867
  %v6891 = vmax.f32 %v6889, %v3575
  %v6892 = vmax.f32 %v6890, %v6871
  %v6893 = vmax.f32 %v6891, %v3579
  %v6894 = vmax.f32 %v6892, %v6875
  %v6895 = vmax.f32 %v6893, %v3583
  %v6896 = vmax.f32 %v6894, %v6879
  %v6897 = vmax.f32 %v6895, %v3587
  %v6898 = vmax.f32 %v6896, %v6883
  %v6899 = vld [vmem:[%s2] sm:$0x3]
  %v6901 = vperm.slane %v6899, 0
  %v6902 = vperm.slane %v6899, 1
  %v6905 = vadd.f32 %v6897, %v6901
  %v6906 = vadd.f32 %v6898, %v6902
  %v6907 = vld [vmem:[%s3] sm:$0xff]
  %v6908 = vld [vmem:[%s3 + $0x8] sm:$0xff]
  %v6909 = vld [vmem:[%s3 + $0x10] sm:$0xff]
  %v6910 = vld [vmem:[%s3 + $0x18] sm:$0xff]
  %v6911 = vld [vmem:[%s3 + $0x20] sm:$0xff]
  %v6912 = vld [vmem:[%s3 + $0x28] sm:$0xff]
  %v6913 = vld [vmem:[%s3 + $0x30] sm:$0xff]
  %v6914 = vld [vmem:[%s3 + $0x38] sm:$0xff]
  %v6915 = vld [vmem:[%s3 + $0x40] sm:$0xff]
  %v6916 = vld [vmem:[%s3 + $0x48] sm:$0xff]
  %v6917 = vld [vmem:[%s3 + $0x50] sm:$0xff]
  %v6918 = vld [vmem:[%s3 + $0x58] sm:$0xff]
  %v6919 = vld [vmem:[%s3 + $0x60] sm:$0xff]
  %v6920 = vld [vmem:[%s3 + $0x68] sm:$0xff]
  %v6921 = vld [vmem:[%s3 + $0x70] sm:$0xff]
  %v6922 = vld [vmem:[%s3 + $0x78] sm:$0xff]
  %v6923 = vld [vmem:[%s3 + $0x80] sm:$0xff]
  %v6924 = vld [vmem:[%s3 + $0x88] sm:$0xff]
  %v6925 = vld [vmem:[%s3 + $0x90] sm:$0xff]
  %v6926 = vld [vmem:[%s3 + $0x98] sm:$0xff]
  %v6927 = vld [vmem:[%s3 + $0xa0] sm:$0xff]
  %v6928 = vld [vmem:[%s3 + $0xa8] sm:$0xff]
  %v6929 = vld [vmem:[%s3 + $0xb0] sm:$0xff]
  %v6930 = vld [vmem:[%s3 + $0xb8] sm:$0xff]
  %v6931 = vld [vmem:[%s3 + $0xc0] sm:$0xff]
  %v6932 = vld [vmem:[%s3 + $0xc8] sm:$0xff]
  %v6933 = vld [vmem:[%s3 + $0xd0] sm:$0xff]
  %v6934 = vld [vmem:[%s4] sm:$0x1]
  %v6936 = vperm.slane %v6934, 0
  %vm6938 = vcmask 719872
  %v6940 = vsel %vm6938, %v6906, 0
  %v6942 = vand.u32 %v6922, 4294901760
  %6943 = vmatpush.msra.mxu0 %v6942
  %v6944 = vand.u32 %v6921, 4294901760
  %6945 = vmatpush.msra.mxu0 %v6944
  %v6946 = vand.u32 %v6920, 4294901760
  %6947 = vmatpush.msra.mxu0 %v6946
  %v6948 = vand.u32 %v6919, 4294901760
  %6949 = vmatpush.msra.mxu0 %v6948
  %v6950 = vand.u32 %v6918, 4294901760
  %6951 = vmatpush.msra.mxu0 %v6950
  %v6952 = vand.u32 %v6917, 4294901760
  %6953 = vmatpush.msra.mxu0 %v6952
  %v6954 = vand.u32 %v6916, 4294901760
  %6955 = vmatpush.msra.mxu0 %v6954
  %v6956 = vand.u32 %v6915, 4294901760
  %6957 = vmatpush.msra.mxu0 %v6956
  %v6958 = vand.u32 %v6914, 4294901760
  %6959 = vmatpush.msra.mxu0 %v6958
  %v6960 = vand.u32 %v6913, 4294901760
  %6961 = vmatpush.msra.mxu0 %v6960
  %v6962 = vand.u32 %v6912, 4294901760
  %6963 = vmatpush.msra.mxu0 %v6962
  %v6964 = vand.u32 %v6911, 4294901760
  %6965 = vmatpush.msra.mxu0 %v6964
  %v6966 = vand.u32 %v6910, 4294901760
  %6967 = vmatpush.msra.mxu0 %v6966
  %v6968 = vand.u32 %v6909, 4294901760
  %6969 = vmatpush.msra.mxu0 %v6968
  %v6970 = vand.u32 %v6908, 4294901760
  %6971 = vmatpush.msra.mxu0 %v6970
  %v6972 = vand.u32 %v6907, 4294901760
  %6973 = vmatpush.msra.mxu0 %v6972
  %v6974 = vand.u32 %v6905, 4294901760
  %v6975 = vsub.f32 %v6905, %v6974
  %v6976 = vand.u32 %v6975, 4294901760
  %v6977 = vsub.f32 %v6975, %v6976
  %v6978 = vand.u32 %v6977, 4294901760
  %6979 = vmatmul.f32.gmra.mxu0 %v6978
  %v6980 = vpop.f32.mrf.mxu0
  %v6981 = vadd.f32 %v6936, %v6980
  %6982 = vdwg.mxu0
  %v6983 = vand.u32 %v6922, 4294901760
  %v6984 = vsub.f32 %v6922, %v6983
  %v6985 = vand.u32 %v6984, 4294901760
  %v6986 = vsub.f32 %v6984, %v6985
  %v6987 = vand.u32 %v6986, 4294901760
  %6988 = vmatpush.msra.mxu0 %v6987
  %v6989 = vand.u32 %v6921, 4294901760
  %v6990 = vsub.f32 %v6921, %v6989
  %v6991 = vand.u32 %v6990, 4294901760
  %v6992 = vsub.f32 %v6990, %v6991
  %v6993 = vand.u32 %v6992, 4294901760
  %6994 = vmatpush.msra.mxu0 %v6993
  %v6995 = vand.u32 %v6920, 4294901760
  %v6996 = vsub.f32 %v6920, %v6995
  %v6997 = vand.u32 %v6996, 4294901760
  %v6998 = vsub.f32 %v6996, %v6997
  %v6999 = vand.u32 %v6998, 4294901760
  %7000 = vmatpush.msra.mxu0 %v6999
  %v7001 = vand.u32 %v6919, 4294901760
  %v7002 = vsub.f32 %v6919, %v7001
  %v7003 = vand.u32 %v7002, 4294901760
  %v7004 = vsub.f32 %v7002, %v7003
  %v7005 = vand.u32 %v7004, 4294901760
  %7006 = vmatpush.msra.mxu0 %v7005
  %v7007 = vand.u32 %v6918, 4294901760
  %v7008 = vsub.f32 %v6918, %v7007
  %v7009 = vand.u32 %v7008, 4294901760
  %v7010 = vsub.f32 %v7008, %v7009
  %v7011 = vand.u32 %v7010, 4294901760
  %7012 = vmatpush.msra.mxu0 %v7011
  %v7013 = vand.u32 %v6917, 4294901760
  %v7014 = vsub.f32 %v6917, %v7013
  %v7015 = vand.u32 %v7014, 4294901760
  %v7016 = vsub.f32 %v7014, %v7015
  %v7017 = vand.u32 %v7016, 4294901760
  %7018 = vmatpush.msra.mxu0 %v7017
  %v7019 = vand.u32 %v6916, 4294901760
  %v7020 = vsub.f32 %v6916, %v7019
  %v7021 = vand.u32 %v7020, 4294901760
  %v7022 = vsub.f32 %v7020, %v7021
  %v7023 = vand.u32 %v7022, 4294901760
  %7024 = vmatpush.msra.mxu0 %v7023
  %v7025 = vand.u32 %v6915, 4294901760
  %v7026 = vsub.f32 %v6915, %v7025
  %v7027 = vand.u32 %v7026, 4294901760
  %v7028 = vsub.f32 %v7026, %v7027
  %v7029 = vand.u32 %v7028, 4294901760
  %7030 = vmatpush.msra.mxu0 %v7029
  %v7031 = vand.u32 %v6914, 4294901760
  %v7032 = vsub.f32 %v6914, %v7031
  %v7033 = vand.u32 %v7032, 4294901760
  %v7034 = vsub.f32 %v7032, %v7033
  %v7035 = vand.u32 %v7034, 4294901760
  %7036 = vmatpush.msra.mxu0 %v7035
  %v7037 = vand.u32 %v6913, 4294901760
  %v7038 = vsub.f32 %v6913, %v7037
  %v7039 = vand.u32 %v7038, 4294901760
  %v7040 = vsub.f32 %v7038, %v7039
  %v7041 = vand.u32 %v7040, 4294901760
  %7042 = vmatpush.msra.mxu0 %v7041
  %v7043 = vand.u32 %v6912, 4294901760
  %v7044 = vsub.f32 %v6912, %v7043
  %v7045 = vand.u32 %v7044, 4294901760
  %v7046 = vsub.f32 %v7044, %v7045
  %v7047 = vand.u32 %v7046, 4294901760
  %7048 = vmatpush.msra.mxu0 %v7047
  %v7049 = vand.u32 %v6911, 4294901760
  %v7050 = vsub.f32 %v6911, %v7049
  %v7051 = vand.u32 %v7050, 4294901760
  %v7052 = vsub.f32 %v7050, %v7051
  %v7053 = vand.u32 %v7052, 4294901760
  %7054 = vmatpush.msra.mxu0 %v7053
  %v7055 = vand.u32 %v6910, 4294901760
  %v7056 = vsub.f32 %v6910, %v7055
  %v7057 = vand.u32 %v7056, 4294901760
  %v7058 = vsub.f32 %v7056, %v7057
  %v7059 = vand.u32 %v7058, 4294901760
  %7060 = vmatpush.msra.mxu0 %v7059
  %v7061 = vand.u32 %v6909, 4294901760
  %v7062 = vsub.f32 %v6909, %v7061
  %v7063 = vand.u32 %v7062, 4294901760
  %v7064 = vsub.f32 %v7062, %v7063
  %v7065 = vand.u32 %v7064, 4294901760
  %7066 = vmatpush.msra.mxu0 %v7065
  %v7067 = vand.u32 %v6908, 4294901760
  %v7068 = vsub.f32 %v6908, %v7067
  %v7069 = vand.u32 %v7068, 4294901760
  %v7070 = vsub.f32 %v7068, %v7069
  %v7071 = vand.u32 %v7070, 4294901760
  %7072 = vmatpush.msra.mxu0 %v7071
  %v7073 = vand.u32 %v6907, 4294901760
  %v7074 = vsub.f32 %v6907, %v7073
  %v7075 = vand.u32 %v7074, 4294901760
  %v7076 = vsub.f32 %v7074, %v7075
  %v7077 = vand.u32 %v7076, 4294901760
  %7078 = vmatpush.msra.mxu0 %v7077
  %v7079 = vand.u32 %v6905, 4294901760
  %7080 = vmatmul.f32.gmra.mxu0 %v7079
  %v7081 = vpop.f32.mrf.mxu0
  %v7082 = vadd.f32 %v6981, %v7081
  %7083 = vdwg.mxu0
  %v7084 = vand.u32 %v6922, 4294901760
  %v7085 = vsub.f32 %v6922, %v7084
  %7086 = vmatpush.msra.mxu0 %v7085
  %v7087 = vand.u32 %v6921, 4294901760
  %v7088 = vsub.f32 %v6921, %v7087
  %7089 = vmatpush.msra.mxu0 %v7088
  %v7090 = vand.u32 %v6920, 4294901760
  %v7091 = vsub.f32 %v6920, %v7090
  %7092 = vmatpush.msra.mxu0 %v7091
  %v7093 = vand.u32 %v6919, 4294901760
  %v7094 = vsub.f32 %v6919, %v7093
  %7095 = vmatpush.msra.mxu0 %v7094
  %v7096 = vand.u32 %v6918, 4294901760
  %v7097 = vsub.f32 %v6918, %v7096
  %7098 = vmatpush.msra.mxu0 %v7097
  %v7099 = vand.u32 %v6917, 4294901760
  %v7100 = vsub.f32 %v6917, %v7099
  %7101 = vmatpush.msra.mxu0 %v7100
  %v7102 = vand.u32 %v6916, 4294901760
  %v7103 = vsub.f32 %v6916, %v7102
  %7104 = vmatpush.msra.mxu0 %v7103
  %v7105 = vand.u32 %v6915, 4294901760
  %v7106 = vsub.f32 %v6915, %v7105
  %7107 = vmatpush.msra.mxu0 %v7106
  %v7108 = vand.u32 %v6914, 4294901760
  %v7109 = vsub.f32 %v6914, %v7108
  %7110 = vmatpush.msra.mxu0 %v7109
  %v7111 = vand.u32 %v6913, 4294901760
  %v7112 = vsub.f32 %v6913, %v7111
  %7113 = vmatpush.msra.mxu0 %v7112
  %v7114 = vand.u32 %v6912, 4294901760
  %v7115 = vsub.f32 %v6912, %v7114
  %7116 = vmatpush.msra.mxu0 %v7115
  %v7117 = vand.u32 %v6911, 4294901760
  %v7118 = vsub.f32 %v6911, %v7117
  %7119 = vmatpush.msra.mxu0 %v7118
  %v7120 = vand.u32 %v6910, 4294901760
  %v7121 = vsub.f32 %v6910, %v7120
  %7122 = vmatpush.msra.mxu0 %v7121
  %v7123 = vand.u32 %v6909, 4294901760
  %v7124 = vsub.f32 %v6909, %v7123
  %7125 = vmatpush.msra.mxu0 %v7124
  %v7126 = vand.u32 %v6908, 4294901760
  %v7127 = vsub.f32 %v6908, %v7126
  %7128 = vmatpush.msra.mxu0 %v7127
  %v7129 = vand.u32 %v6907, 4294901760
  %v7130 = vsub.f32 %v6907, %v7129
  %7131 = vmatpush.msra.mxu0 %v7130
  %v7132 = vand.u32 %v6905, 4294901760
  %v7133 = vsub.f32 %v6905, %v7132
  %7134 = vmatmul.f32.gmra.mxu0 %v7133
  %v7135 = vpop.f32.mrf.mxu0
  %v7136 = vadd.f32 %v7082, %v7135
  %7137 = vdwg.mxu0
  %v7138 = vand.u32 %v6922, 4294901760
  %7139 = vmatpush.msra.mxu0 %v7138
  %v7140 = vand.u32 %v6921, 4294901760
  %7141 = vmatpush.msra.mxu0 %v7140
  %v7142 = vand.u32 %v6920, 4294901760
  %7143 = vmatpush.msra.mxu0 %v7142
  %v7144 = vand.u32 %v6919, 4294901760
  %7145 = vmatpush.msra.mxu0 %v7144
  %v7146 = vand.u32 %v6918, 4294901760
  %7147 = vmatpush.msra.mxu0 %v7146
  %v7148 = vand.u32 %v6917, 4294901760
  %7149 = vmatpush.msra.mxu0 %v7148
  %v7150 = vand.u32 %v6916, 4294901760
  %7151 = vmatpush.msra.mxu0 %v7150
  %v7152 = vand.u32 %v6915, 4294901760
  %7153 = vmatpush.msra.mxu0 %v7152
  %v7154 = vand.u32 %v6914, 4294901760
  %7155 = vmatpush.msra.mxu0 %v7154
  %v7156 = vand.u32 %v6913, 4294901760
  %7157 = vmatpush.msra.mxu0 %v7156
  %v7158 = vand.u32 %v6912, 4294901760
  %7159 = vmatpush.msra.mxu0 %v7158
  %v7160 = vand.u32 %v6911, 4294901760
  %7161 = vmatpush.msra.mxu0 %v7160
  %v7162 = vand.u32 %v6910, 4294901760
  %7163 = vmatpush.msra.mxu0 %v7162
  %v7164 = vand.u32 %v6909, 4294901760
  %7165 = vmatpush.msra.mxu0 %v7164
  %v7166 = vand.u32 %v6908, 4294901760
  %7167 = vmatpush.msra.mxu0 %v7166
  %v7168 = vand.u32 %v6907, 4294901760
  %7169 = vmatpush.msra.mxu0 %v7168
  %v7170 = vand.u32 %v6905, 4294901760
  %v7171 = vsub.f32 %v6905, %v7170
  %v7172 = vand.u32 %v7171, 4294901760
  %7173 = vmatmul.f32.gmra.mxu0 %v7172
  %v7174 = vpop.f32.mrf.mxu0
  %v7175 = vadd.f32 %v7136, %v7174
  %7176 = vdwg.mxu0
  %v7177 = vand.u32 %v6922, 4294901760
  %v7178 = vsub.f32 %v6922, %v7177
  %v7179 = vand.u32 %v7178, 4294901760
  %7180 = vmatpush.msra.mxu0 %v7179
  %v7181 = vand.u32 %v6921, 4294901760
  %v7182 = vsub.f32 %v6921, %v7181
  %v7183 = vand.u32 %v7182, 4294901760
  %7184 = vmatpush.msra.mxu0 %v7183
  %v7185 = vand.u32 %v6920, 4294901760
  %v7186 = vsub.f32 %v6920, %v7185
  %v7187 = vand.u32 %v7186, 4294901760
  %7188 = vmatpush.msra.mxu0 %v7187
  %v7189 = vand.u32 %v6919, 4294901760
  %v7190 = vsub.f32 %v6919, %v7189
  %v7191 = vand.u32 %v7190, 4294901760
  %7192 = vmatpush.msra.mxu0 %v7191
  %v7193 = vand.u32 %v6918, 4294901760
  %v7194 = vsub.f32 %v6918, %v7193
  %v7195 = vand.u32 %v7194, 4294901760
  %7196 = vmatpush.msra.mxu0 %v7195
  %v7197 = vand.u32 %v6917, 4294901760
  %v7198 = vsub.f32 %v6917, %v7197
  %v7199 = vand.u32 %v7198, 4294901760
  %7200 = vmatpush.msra.mxu0 %v7199
  %v7201 = vand.u32 %v6916, 4294901760
  %v7202 = vsub.f32 %v6916, %v7201
  %v7203 = vand.u32 %v7202, 4294901760
  %7204 = vmatpush.msra.mxu0 %v7203
  %v7205 = vand.u32 %v6915, 4294901760
  %v7206 = vsub.f32 %v6915, %v7205
  %v7207 = vand.u32 %v7206, 4294901760
  %7208 = vmatpush.msra.mxu0 %v7207
  %v7209 = vand.u32 %v6914, 4294901760
  %v7210 = vsub.f32 %v6914, %v7209
  %v7211 = vand.u32 %v7210, 4294901760
  %7212 = vmatpush.msra.mxu0 %v7211
  %v7213 = vand.u32 %v6913, 4294901760
  %v7214 = vsub.f32 %v6913, %v7213
  %v7215 = vand.u32 %v7214, 4294901760
  %7216 = vmatpush.msra.mxu0 %v7215
  %v7217 = vand.u32 %v6912, 4294901760
  %v7218 = vsub.f32 %v6912, %v7217
  %v7219 = vand.u32 %v7218, 4294901760
  %7220 = vmatpush.msra.mxu0 %v7219
  %v7221 = vand.u32 %v6911, 4294901760
  %v7222 = vsub.f32 %v6911, %v7221
  %v7223 = vand.u32 %v7222, 4294901760
  %7224 = vmatpush.msra.mxu0 %v7223
  %v7225 = vand.u32 %v6910, 4294901760
  %v7226 = vsub.f32 %v6910, %v7225
  %v7227 = vand.u32 %v7226, 4294901760
  %7228 = vmatpush.msra.mxu0 %v7227
  %v7229 = vand.u32 %v6909, 4294901760
  %v7230 = vsub.f32 %v6909, %v7229
  %v7231 = vand.u32 %v7230, 4294901760
  %7232 = vmatpush.msra.mxu0 %v7231
  %v7233 = vand.u32 %v6908, 4294901760
  %v7234 = vsub.f32 %v6908, %v7233
  %v7235 = vand.u32 %v7234, 4294901760
  %7236 = vmatpush.msra.mxu0 %v7235
  %v7237 = vand.u32 %v6907, 4294901760
  %v7238 = vsub.f32 %v6907, %v7237
  %v7239 = vand.u32 %v7238, 4294901760
  %7240 = vmatpush.msra.mxu0 %v7239
  %v7241 = vand.u32 %v6905, 4294901760
  %7242 = vmatmul.f32.gmra.mxu0 %v7241
  %v7243 = vpop.f32.mrf.mxu0
  %v7244 = vadd.f32 %v7175, %v7243
  %7245 = vdwg.mxu0
  %v7246 = vand.u32 %v6922, 4294901760
  %7247 = vmatpush.msra.mxu0 %v7246
  %v7248 = vand.u32 %v6921, 4294901760
  %7249 = vmatpush.msra.mxu0 %v7248
  %v7250 = vand.u32 %v6920, 4294901760
  %7251 = vmatpush.msra.mxu0 %v7250
  %v7252 = vand.u32 %v6919, 4294901760
  %7253 = vmatpush.msra.mxu0 %v7252
  %v7254 = vand.u32 %v6918, 4294901760
  %7255 = vmatpush.msra.mxu0 %v7254
  %v7256 = vand.u32 %v6917, 4294901760
  %7257 = vmatpush.msra.mxu0 %v7256
  %v7258 = vand.u32 %v6916, 4294901760
  %7259 = vmatpush.msra.mxu0 %v7258
  %v7260 = vand.u32 %v6915, 4294901760
  %7261 = vmatpush.msra.mxu0 %v7260
  %v7262 = vand.u32 %v6914, 4294901760
  %7263 = vmatpush.msra.mxu0 %v7262
  %v7264 = vand.u32 %v6913, 4294901760
  %7265 = vmatpush.msra.mxu0 %v7264
  %v7266 = vand.u32 %v6912, 4294901760
  %7267 = vmatpush.msra.mxu0 %v7266
  %v7268 = vand.u32 %v6911, 4294901760
  %7269 = vmatpush.msra.mxu0 %v7268
  %v7270 = vand.u32 %v6910, 4294901760
  %7271 = vmatpush.msra.mxu0 %v7270
  %v7272 = vand.u32 %v6909, 4294901760
  %7273 = vmatpush.msra.mxu0 %v7272
  %v7274 = vand.u32 %v6908, 4294901760
  %7275 = vmatpush.msra.mxu0 %v7274
  %v7276 = vand.u32 %v6907, 4294901760
  %7277 = vmatpush.msra.mxu0 %v7276
  %v7278 = vand.u32 %v6905, 4294901760
  %7279 = vmatmul.f32.gmra.mxu0 %v7278
  %v7280 = vpop.f32.mrf.mxu0
  %v7281 = vadd.f32 %v7244, %v7280
  %7282 = vdwg.mxu0
  %7283 = vmatpush.msra.mxu0 0.0
  %7284 = vmatpush.msra.mxu0 0.0
  %7285 = vmatpush.msra.mxu0 0.0
  %7286 = vmatpush.msra.mxu0 0.0
  %7287 = vmatpush.msra.mxu0 0.0
  %v7288 = vand.u32 %v6933, 4294901760
  %7289 = vmatpush.msra.mxu0 %v7288
  %v7290 = vand.u32 %v6932, 4294901760
  %7291 = vmatpush.msra.mxu0 %v7290
  %v7292 = vand.u32 %v6931, 4294901760
  %7293 = vmatpush.msra.mxu0 %v7292
  %v7294 = vand.u32 %v6930, 4294901760
  %7295 = vmatpush.msra.mxu0 %v7294
  %v7296 = vand.u32 %v6929, 4294901760
  %7297 = vmatpush.msra.mxu0 %v7296
  %v7298 = vand.u32 %v6928, 4294901760
  %7299 = vmatpush.msra.mxu0 %v7298
  %v7300 = vand.u32 %v6927, 4294901760
  %7301 = vmatpush.msra.mxu0 %v7300
  %v7302 = vand.u32 %v6926, 4294901760
  %7303 = vmatpush.msra.mxu0 %v7302
  %v7304 = vand.u32 %v6925, 4294901760
  %7305 = vmatpush.msra.mxu0 %v7304
  %v7306 = vand.u32 %v6924, 4294901760
  %7307 = vmatpush.msra.mxu0 %v7306
  %v7308 = vand.u32 %v6923, 4294901760
  %7309 = vmatpush.msra.mxu0 %v7308
  %v7310 = vand.u32 %v6940, 4294901760
  %v7311 = vsub.f32 %v6940, %v7310
  %v7312 = vand.u32 %v7311, 4294901760
  %v7313 = vsub.f32 %v7311, %v7312
  %v7314 = vand.u32 %v7313, 4294901760
  %7315 = vmatmul.f32.gmra.mxu0 %v7314
  %v7316 = vpop.f32.mrf.mxu0
  %v7317 = vadd.f32 %v7281, %v7316
  %7318 = vdwg.mxu0
  %7319 = vmatpush.msra.mxu0 0.0
  %7320 = vmatpush.msra.mxu0 0.0
  %7321 = vmatpush.msra.mxu0 0.0
  %7322 = vmatpush.msra.mxu0 0.0
  %7323 = vmatpush.msra.mxu0 0.0
  %v7324 = vand.u32 %v6933, 4294901760
  %v7325 = vsub.f32 %v6933, %v7324
  %v7326 = vand.u32 %v7325, 4294901760
  %v7327 = vsub.f32 %v7325, %v7326
  %v7328 = vand.u32 %v7327, 4294901760
  %7329 = vmatpush.msra.mxu0 %v7328
  %v7330 = vand.u32 %v6932, 4294901760
  %v7331 = vsub.f32 %v6932, %v7330
  %v7332 = vand.u32 %v7331, 4294901760
  %v7333 = vsub.f32 %v7331, %v7332
  %v7334 = vand.u32 %v7333, 4294901760
  %7335 = vmatpush.msra.mxu0 %v7334
  %v7336 = vand.u32 %v6931, 4294901760
  %v7337 = vsub.f32 %v6931, %v7336
  %v7338 = vand.u32 %v7337, 4294901760
  %v7339 = vsub.f32 %v7337, %v7338
  %v7340 = vand.u32 %v7339, 4294901760
  %7341 = vmatpush.msra.mxu0 %v7340
  %v7342 = vand.u32 %v6930, 4294901760
  %v7343 = vsub.f32 %v6930, %v7342
  %v7344 = vand.u32 %v7343, 4294901760
  %v7345 = vsub.f32 %v7343, %v7344
  %v7346 = vand.u32 %v7345, 4294901760
  %7347 = vmatpush.msra.mxu0 %v7346
  %v7348 = vand.u32 %v6929, 4294901760
  %v7349 = vsub.f32 %v6929, %v7348
  %v7350 = vand.u32 %v7349, 4294901760
  %v7351 = vsub.f32 %v7349, %v7350
  %v7352 = vand.u32 %v7351, 4294901760
  %7353 = vmatpush.msra.mxu0 %v7352
  %v7354 = vand.u32 %v6928, 4294901760
  %v7355 = vsub.f32 %v6928, %v7354
  %v7356 = vand.u32 %v7355, 4294901760
  %v7357 = vsub.f32 %v7355, %v7356
  %v7358 = vand.u32 %v7357, 4294901760
  %7359 = vmatpush.msra.mxu0 %v7358
  %v7360 = vand.u32 %v6927, 4294901760
  %v7361 = vsub.f32 %v6927, %v7360
  %v7362 = vand.u32 %v7361, 4294901760
  %v7363 = vsub.f32 %v7361, %v7362
  %v7364 = vand.u32 %v7363, 4294901760
  %7365 = vmatpush.msra.mxu0 %v7364
  %v7366 = vand.u32 %v6926, 4294901760
  %v7367 = vsub.f32 %v6926, %v7366
  %v7368 = vand.u32 %v7367, 4294901760
  %v7369 = vsub.f32 %v7367, %v7368
  %v7370 = vand.u32 %v7369, 4294901760
  %7371 = vmatpush.msra.mxu0 %v7370
  %v7372 = vand.u32 %v6925, 4294901760
  %v7373 = vsub.f32 %v6925, %v7372
  %v7374 = vand.u32 %v7373, 4294901760
  %v7375 = vsub.f32 %v7373, %v7374
  %v7376 = vand.u32 %v7375, 4294901760
  %7377 = vmatpush.msra.mxu0 %v7376
  %v7378 = vand.u32 %v6924, 4294901760
  %v7379 = vsub.f32 %v6924, %v7378
  %v7380 = vand.u32 %v7379, 4294901760
  %v7381 = vsub.f32 %v7379, %v7380
  %v7382 = vand.u32 %v7381, 4294901760
  %7383 = vmatpush.msra.mxu0 %v7382
  %v7384 = vand.u32 %v6923, 4294901760
  %v7385 = vsub.f32 %v6923, %v7384
  %v7386 = vand.u32 %v7385, 4294901760
  %v7387 = vsub.f32 %v7385, %v7386
  %v7388 = vand.u32 %v7387, 4294901760
  %7389 = vmatpush.msra.mxu0 %v7388
  %v7390 = vand.u32 %v6940, 4294901760
  %7391 = vmatmul.f32.gmra.mxu0 %v7390
  %v7392 = vpop.f32.mrf.mxu0
  %v7393 = vadd.f32 %v7317, %v7392
  %7394 = vdwg.mxu0
  %7395 = vmatpush.msra.mxu0 0.0
  %7396 = vmatpush.msra.mxu0 0.0
  %7397 = vmatpush.msra.mxu0 0.0
  %7398 = vmatpush.msra.mxu0 0.0
  %7399 = vmatpush.msra.mxu0 0.0
  %v7400 = vand.u32 %v6933, 4294901760
  %v7401 = vsub.f32 %v6933, %v7400
  %7402 = vmatpush.msra.mxu0 %v7401
  %v7403 = vand.u32 %v6932, 4294901760
  %v7404 = vsub.f32 %v6932, %v7403
  %7405 = vmatpush.msra.mxu0 %v7404
  %v7406 = vand.u32 %v6931, 4294901760
  %v7407 = vsub.f32 %v6931, %v7406
  %7408 = vmatpush.msra.mxu0 %v7407
  %v7409 = vand.u32 %v6930, 4294901760
  %v7410 = vsub.f32 %v6930, %v7409
  %7411 = vmatpush.msra.mxu0 %v7410
  %v7412 = vand.u32 %v6929, 4294901760
  %v7413 = vsub.f32 %v6929, %v7412
  %7414 = vmatpush.msra.mxu0 %v7413
  %v7415 = vand.u32 %v6928, 4294901760
  %v7416 = vsub.f32 %v6928, %v7415
  %7417 = vmatpush.msra.mxu0 %v7416
  %v7418 = vand.u32 %v6927, 4294901760
  %v7419 = vsub.f32 %v6927, %v7418
  %7420 = vmatpush.msra.mxu0 %v7419
  %v7421 = vand.u32 %v6926, 4294901760
  %v7422 = vsub.f32 %v6926, %v7421
  %7423 = vmatpush.msra.mxu0 %v7422
  %v7424 = vand.u32 %v6925, 4294901760
  %v7425 = vsub.f32 %v6925, %v7424
  %7426 = vmatpush.msra.mxu0 %v7425
  %v7427 = vand.u32 %v6924, 4294901760
  %v7428 = vsub.f32 %v6924, %v7427
  %7429 = vmatpush.msra.mxu0 %v7428
  %v7430 = vand.u32 %v6923, 4294901760
  %v7431 = vsub.f32 %v6923, %v7430
  %7432 = vmatpush.msra.mxu0 %v7431
  %v7433 = vand.u32 %v6940, 4294901760
  %v7434 = vsub.f32 %v6940, %v7433
  %7435 = vmatmul.f32.gmra.mxu0 %v7434
  %v7436 = vpop.f32.mrf.mxu0
  %v7437 = vadd.f32 %v7393, %v7436
  %7438 = vdwg.mxu0
  %7439 = vmatpush.msra.mxu0 0.0
  %7440 = vmatpush.msra.mxu0 0.0
  %7441 = vmatpush.msra.mxu0 0.0
  %7442 = vmatpush.msra.mxu0 0.0
  %7443 = vmatpush.msra.mxu0 0.0
  %v7444 = vand.u32 %v6933, 4294901760
  %7445 = vmatpush.msra.mxu0 %v7444
  %v7446 = vand.u32 %v6932, 4294901760
  %7447 = vmatpush.msra.mxu0 %v7446
  %v7448 = vand.u32 %v6931, 4294901760
  %7449 = vmatpush.msra.mxu0 %v7448
  %v7450 = vand.u32 %v6930, 4294901760
  %7451 = vmatpush.msra.mxu0 %v7450
  %v7452 = vand.u32 %v6929, 4294901760
  %7453 = vmatpush.msra.mxu0 %v7452
  %v7454 = vand.u32 %v6928, 4294901760
  %7455 = vmatpush.msra.mxu0 %v7454
  %v7456 = vand.u32 %v6927, 4294901760
  %7457 = vmatpush.msra.mxu0 %v7456
  %v7458 = vand.u32 %v6926, 4294901760
  %7459 = vmatpush.msra.mxu0 %v7458
  %v7460 = vand.u32 %v6925, 4294901760
  %7461 = vmatpush.msra.mxu0 %v7460
  %v7462 = vand.u32 %v6924, 4294901760
  %7463 = vmatpush.msra.mxu0 %v7462
  %v7464 = vand.u32 %v6923, 4294901760
  %7465 = vmatpush.msra.mxu0 %v7464
  %v7466 = vand.u32 %v6940, 4294901760
  %v7467 = vsub.f32 %v6940, %v7466
  %v7468 = vand.u32 %v7467, 4294901760
  %7469 = vmatmul.f32.gmra.mxu0 %v7468
  %v7470 = vpop.f32.mrf.mxu0
  %v7471 = vadd.f32 %v7437, %v7470
  %7472 = vdwg.mxu0
  %7473 = vmatpush.msra.mxu0 0.0
  %7474 = vmatpush.msra.mxu0 0.0
  %7475 = vmatpush.msra.mxu0 0.0
  %7476 = vmatpush.msra.mxu0 0.0
  %7477 = vmatpush.msra.mxu0 0.0
  %v7478 = vand.u32 %v6933, 4294901760
  %v7479 = vsub.f32 %v6933, %v7478
  %v7480 = vand.u32 %v7479, 4294901760
  %7481 = vmatpush.msra.mxu0 %v7480
  %v7482 = vand.u32 %v6932, 4294901760
  %v7483 = vsub.f32 %v6932, %v7482
  %v7484 = vand.u32 %v7483, 4294901760
  %7485 = vmatpush.msra.mxu0 %v7484
  %v7486 = vand.u32 %v6931, 4294901760
  %v7487 = vsub.f32 %v6931, %v7486
  %v7488 = vand.u32 %v7487, 4294901760
  %7489 = vmatpush.msra.mxu0 %v7488
  %v7490 = vand.u32 %v6930, 4294901760
  %v7491 = vsub.f32 %v6930, %v7490
  %v7492 = vand.u32 %v7491, 4294901760
  %7493 = vmatpush.msra.mxu0 %v7492
  %v7494 = vand.u32 %v6929, 4294901760
  %v7495 = vsub.f32 %v6929, %v7494
  %v7496 = vand.u32 %v7495, 4294901760
  %7497 = vmatpush.msra.mxu0 %v7496
  %v7498 = vand.u32 %v6928, 4294901760
  %v7499 = vsub.f32 %v6928, %v7498
  %v7500 = vand.u32 %v7499, 4294901760
  %7501 = vmatpush.msra.mxu0 %v7500
  %v7502 = vand.u32 %v6927, 4294901760
  %v7503 = vsub.f32 %v6927, %v7502
  %v7504 = vand.u32 %v7503, 4294901760
  %7505 = vmatpush.msra.mxu0 %v7504
  %v7506 = vand.u32 %v6926, 4294901760
  %v7507 = vsub.f32 %v6926, %v7506
  %v7508 = vand.u32 %v7507, 4294901760
  %7509 = vmatpush.msra.mxu0 %v7508
  %v7510 = vand.u32 %v6925, 4294901760
  %v7511 = vsub.f32 %v6925, %v7510
  %v7512 = vand.u32 %v7511, 4294901760
  %7513 = vmatpush.msra.mxu0 %v7512
  %v7514 = vand.u32 %v6924, 4294901760
  %v7515 = vsub.f32 %v6924, %v7514
  %v7516 = vand.u32 %v7515, 4294901760
  %7517 = vmatpush.msra.mxu0 %v7516
  %v7518 = vand.u32 %v6923, 4294901760
  %v7519 = vsub.f32 %v6923, %v7518
  %v7520 = vand.u32 %v7519, 4294901760
  %7521 = vmatpush.msra.mxu0 %v7520
  %v7522 = vand.u32 %v6940, 4294901760
  %7523 = vmatmul.f32.gmra.mxu0 %v7522
  %v7524 = vpop.f32.mrf.mxu0
  %v7525 = vadd.f32 %v7471, %v7524
  %7526 = vdwg.mxu0
  %7527 = vmatpush.msra.mxu0 0.0
  %7528 = vmatpush.msra.mxu0 0.0
  %7529 = vmatpush.msra.mxu0 0.0
  %7530 = vmatpush.msra.mxu0 0.0
  %7531 = vmatpush.msra.mxu0 0.0
  %v7532 = vand.u32 %v6933, 4294901760
  %7533 = vmatpush.msra.mxu0 %v7532
  %v7534 = vand.u32 %v6932, 4294901760
  %7535 = vmatpush.msra.mxu0 %v7534
  %v7536 = vand.u32 %v6931, 4294901760
  %7537 = vmatpush.msra.mxu0 %v7536
  %v7538 = vand.u32 %v6930, 4294901760
  %7539 = vmatpush.msra.mxu0 %v7538
  %v7540 = vand.u32 %v6929, 4294901760
  %7541 = vmatpush.msra.mxu0 %v7540
  %v7542 = vand.u32 %v6928, 4294901760
  %7543 = vmatpush.msra.mxu0 %v7542
  %v7544 = vand.u32 %v6927, 4294901760
  %7545 = vmatpush.msra.mxu0 %v7544
  %v7546 = vand.u32 %v6926, 4294901760
  %7547 = vmatpush.msra.mxu0 %v7546
  %v7548 = vand.u32 %v6925, 4294901760
  %7549 = vmatpush.msra.mxu0 %v7548
  %v7550 = vand.u32 %v6924, 4294901760
  %7551 = vmatpush.msra.mxu0 %v7550
  %v7552 = vand.u32 %v6923, 4294901760
  %7553 = vmatpush.msra.mxu0 %v7552
  %v7554 = vand.u32 %v6940, 4294901760
  %7555 = vmatmul.f32.gmra.mxu0 %v7554
  %v7556 = vpop.f32.mrf.mxu0
  %v7557 = vadd.f32 %v7525, %v7556
  %7558 = vdwg.mxu0
  %v7559 = vld [vmem:[%s5] sm:$0xff]
  %v7560 = vld [vmem:[%s5 + $0x8] sm:$0xff]
  %vm7561 = vcmask 130048
  %v7563 = vsel %vm7561, 0.0, 0
  %7565 = vmatpush.msra.mxu0 0.0
  %7566 = vmatpush.msra.mxu0 0.0
  %7567 = vmatpush.msra.mxu0 0.0
  %7568 = vmatpush.msra.mxu0 0.0
  %7569 = vmatpush.msra.mxu0 0.0
  %7570 = vmatpush.msra.mxu0 0.0
  %7571 = vmatpush.msra.mxu0 0.0
  %7572 = vmatpush.msra.mxu0 0.0
  %7573 = vmatpush.msra.mxu0 0.0
  %7574 = vmatpush.msra.mxu0 0.0
  %7575 = vmatpush.msra.mxu0 0.0
  %7576 = vmatpush.msra.mxu0 0.0
  %7577 = vmatpush.msra.mxu0 0.0
  %7578 = vmatpush.msra.mxu0 0.0
  %7579 = vmatpush.msra.mxu0 %v7560
  %7580 = vmatpush.msra.mxu0 %v7559
  %7581 = vmatmul.f32.gmra.mxu0 %v7563
  %v7582 = vpop.f32.mrf.mxu0
  %v7583 = vadd.f32 0.0, %v7582
  %7584 = vdwg.mxu0
  %v7585 = vadd.f32 %v7557, %v7583
  %v7586 = vmul.f32 %v7585, 0.5
  %v7587 = vtanh.pop %v7586
  %v7588 = vmul.f32 %v7587, 0.5
  %v7589 = vadd.f32 %v7588, 0.5
  %v7590 = vtanh.pop %v7585
  %v7591 = vmul.f32 %v7589, 0.0
  %7593 = vrot.lane.b32.xlu0 %v7590, 96
  %v7594 = vpop.permute.xlu0 %7593
  %v7596 = vmul.f32 %v7589, %v7594
  %7598 = vrot.lane.b32.xlu0 %v7596, 16
  %v7599 = vpop.permute.xlu0 %7598
  %v7601 = vadd.f32 %v7591, %v7599
  %v7602 = vtanh.pop %v7601
  %7604 = vrot.lane.b32.xlu0 %v7602, 32
  %v7605 = vpop.permute.xlu0 %7604
  %v7607 = vmul.f32 %v7589, %v7605
  %7609 = vrot.lane.b32.xlu0 %v7607, 80
  %v7610 = vpop.permute.xlu0 %7609
  %v7611 = vsel %vm7561, %v7610, 0
  %7613 = vmatpush.msra.mxu0 0.0
  %7614 = vmatpush.msra.mxu0 0.0
  %7615 = vmatpush.msra.mxu0 0.0
  %7616 = vmatpush.msra.mxu0 0.0
  %7617 = vmatpush.msra.mxu0 0.0
  %7618 = vmatpush.msra.mxu0 0.0
  %7619 = vmatpush.msra.mxu0 0.0
  %7620 = vmatpush.msra.mxu0 0.0
  %7621 = vmatpush.msra.mxu0 0.0
  %7622 = vmatpush.msra.mxu0 0.0
  %7623 = vmatpush.msra.mxu0 0.0
  %7624 = vmatpush.msra.mxu0 0.0
  %7625 = vmatpush.msra.mxu0 0.0
  %7626 = vmatpush.msra.mxu0 0.0
  %7627 = vmatpush.msra.mxu0 %v7560
  %7628 = vmatpush.msra.mxu0 %v7559
  %7629 = vmatmul.f32.gmra.mxu0 %v7611
  %v7630 = vpop.f32.mrf.mxu0
  %v7631 = vadd.f32 0.0, %v7630
  %7632 = vdwg.mxu0
  %v7634 = vrot.slane %v7631, 6
  %v7636 = vadd.f32 %v7557, %v7634
  %v7637 = vmul.f32 %v7636, 0.5
  %v7638 = vtanh.pop %v7637
  %v7639 = vmul.f32 %v7638, 0.5
  %v7640 = vadd.f32 %v7639, 0.5
  %v7641 = vtanh.pop %v7636
  %v7643 = vrot.slane %v7601, 6
  %v7645 = vmul.f32 %v7640, %v7643
  %7647 = vrot.lane.b32.xlu0 %v7641, 96
  %v7648 = vpop.permute.xlu0 %7647
  %v7650 = vmul.f32 %v7640, %v7648
  %7652 = vrot.lane.b32.xlu0 %v7650, 16
  %v7653 = vpop.permute.xlu0 %7652
  %v7655 = vadd.f32 %v7645, %v7653
  %v7656 = vtanh.pop %v7655
  %7658 = vrot.lane.b32.xlu0 %v7656, 32
  %v7659 = vpop.permute.xlu0 %7658
  %v7661 = vmul.f32 %v7640, %v7659
  %v7663 = vrot.slane %v7661, 2
  %7664 = vrot.lane.b32.xlu0 %v7663, 80
  %v7665 = vpop.permute.xlu0 %7664
  %v7666 = vsel %vm7561, %v7665, 0
  %7668 = vmatpush.msra.mxu0 0.0
  %7669 = vmatpush.msra.mxu0 0.0
  %7670 = vmatpush.msra.mxu0 0.0
  %7671 = vmatpush.msra.mxu0 0.0
  %7672 = vmatpush.msra.mxu0 0.0
  %7673 = vmatpush.msra.mxu0 0.0
  %7674 = vmatpush.msra.mxu0 0.0
  %7675 = vmatpush.msra.mxu0 0.0
  %7676 = vmatpush.msra.mxu0 0.0
  %7677 = vmatpush.msra.mxu0 0.0
  %7678 = vmatpush.msra.mxu0 0.0
  %7679 = vmatpush.msra.mxu0 0.0
  %7680 = vmatpush.msra.mxu0 0.0
  %7681 = vmatpush.msra.mxu0 0.0
  %7682 = vmatpush.msra.mxu0 %v7560
  %7683 = vmatpush.msra.mxu0 %v7559
  %7684 = vmatmul.f32.gmra.mxu0 %v7666
  %v7685 = vpop.f32.mrf.mxu0
  %v7686 = vadd.f32 0.0, %v7685
  %7687 = vdwg.mxu0
  %v7689 = vrot.slane %v7686, 4
  %v7691 = vadd.f32 %v7557, %v7689
  %v7692 = vmul.f32 %v7691, 0.5
  %v7693 = vtanh.pop %v7692
  %v7694 = vmul.f32 %v7693, 0.5
  %v7695 = vadd.f32 %v7694, 0.5
  %v7696 = vtanh.pop %v7691
  %v7698 = vrot.slane %v7655, 6
  %v7700 = vmul.f32 %v7695, %v7698
  %7702 = vrot.lane.b32.xlu0 %v7696, 96
  %v7703 = vpop.permute.xlu0 %7702
  %v7705 = vmul.f32 %v7695, %v7703
  %7707 = vrot.lane.b32.xlu0 %v7705, 16
  %v7708 = vpop.permute.xlu0 %7707
  %v7710 = vadd.f32 %v7700, %v7708
  %v7711 = vtanh.pop %v7710
  %7713 = vrot.lane.b32.xlu0 %v7711, 32
  %v7714 = vpop.permute.xlu0 %7713
  %v7716 = vmul.f32 %v7695, %v7714
  %v7717 = vld [vmem:[%s6] sm:$0xff]
  %v7718 = vld [vmem:[%s6 + $0x8] sm:$0xff]
  %v7719 = vld [vmem:[%s7] sm:$0x1]
  %v7721 = vperm.slane %v7719, 0
  %v7724 = vrot.slane %v7716, 4
  %7725 = vrot.lane.b32.xlu0 %v7724, 80
  %v7726 = vpop.permute.xlu0 %7725
  %v7727 = vsel %vm7561, %v7726, 0
  %7729 = vmatpush.msra.mxu0 0.0
  %7730 = vmatpush.msra.mxu0 0.0
  %7731 = vmatpush.msra.mxu0 0.0
  %7732 = vmatpush.msra.mxu0 0.0
  %7733 = vmatpush.msra.mxu0 0.0
  %7734 = vmatpush.msra.mxu0 0.0
  %7735 = vmatpush.msra.mxu0 0.0
  %7736 = vmatpush.msra.mxu0 0.0
  %7737 = vmatpush.msra.mxu0 0.0
  %7738 = vmatpush.msra.mxu0 0.0
  %7739 = vmatpush.msra.mxu0 0.0
  %7740 = vmatpush.msra.mxu0 0.0
  %7741 = vmatpush.msra.mxu0 0.0
  %7742 = vmatpush.msra.mxu0 0.0
  %v7743 = vand.u32 %v7718, 4294901760
  %7744 = vmatpush.msra.mxu0 %v7743
  %v7745 = vand.u32 %v7717, 4294901760
  %7746 = vmatpush.msra.mxu0 %v7745
  %v7747 = vand.u32 %v7727, 4294901760
  %v7748 = vsub.f32 %v7727, %v7747
  %v7749 = vand.u32 %v7748, 4294901760
  %v7750 = vsub.f32 %v7748, %v7749
  %v7751 = vand.u32 %v7750, 4294901760
  %7752 = vmatmul.f32.gmra.mxu0 %v7751
  %v7753 = vpop.f32.mrf.mxu0
  %v7754 = vadd.f32 %v7721, %v7753
  %7755 = vdwg.mxu0
  %7756 = vmatpush.msra.mxu0 0.0
  %7757 = vmatpush.msra.mxu0 0.0
  %7758 = vmatpush.msra.mxu0 0.0
  %7759 = vmatpush.msra.mxu0 0.0
  %7760 = vmatpush.msra.mxu0 0.0
  %7761 = vmatpush.msra.mxu0 0.0
  %7762 = vmatpush.msra.mxu0 0.0
  %7763 = vmatpush.msra.mxu0 0.0
  %7764 = vmatpush.msra.mxu0 0.0
  %7765 = vmatpush.msra.mxu0 0.0
  %7766 = vmatpush.msra.mxu0 0.0
  %7767 = vmatpush.msra.mxu0 0.0
  %7768 = vmatpush.msra.mxu0 0.0
  %7769 = vmatpush.msra.mxu0 0.0
  %v7770 = vand.u32 %v7718, 4294901760
  %v7771 = vsub.f32 %v7718, %v7770
  %v7772 = vand.u32 %v7771, 4294901760
  %v7773 = vsub.f32 %v7771, %v7772
  %v7774 = vand.u32 %v7773, 4294901760
  %7775 = vmatpush.msra.mxu0 %v7774
  %v7776 = vand.u32 %v7717, 4294901760
  %v7777 = vsub.f32 %v7717, %v7776
  %v7778 = vand.u32 %v7777, 4294901760
  %v7779 = vsub.f32 %v7777, %v7778
  %v7780 = vand.u32 %v7779, 4294901760
  %7781 = vmatpush.msra.mxu0 %v7780
  %v7782 = vand.u32 %v7727, 4294901760
  %7783 = vmatmul.f32.gmra.mxu0 %v7782
  %v7784 = vpop.f32.mrf.mxu0
  %v7785 = vadd.f32 %v7754, %v7784
  %7786 = vdwg.mxu0
  %7787 = vmatpush.msra.mxu0 0.0
  %7788 = vmatpush.msra.mxu0 0.0
  %7789 = vmatpush.msra.mxu0 0.0
  %7790 = vmatpush.msra.mxu0 0.0
  %7791 = vmatpush.msra.mxu0 0.0
  %7792 = vmatpush.msra.mxu0 0.0
  %7793 = vmatpush.msra.mxu0 0.0
  %7794 = vmatpush.msra.mxu0 0.0
  %7795 = vmatpush.msra.mxu0 0.0
  %7796 = vmatpush.msra.mxu0 0.0
  %7797 = vmatpush.msra.mxu0 0.0
  %7798 = vmatpush.msra.mxu0 0.0
  %7799 = vmatpush.msra.mxu0 0.0
  %7800 = vmatpush.msra.mxu0 0.0
  %v7801 = vand.u32 %v7718, 4294901760
  %v7802 = vsub.f32 %v7718, %v7801
  %7803 = vmatpush.msra.mxu0 %v7802
  %v7804 = vand.u32 %v7717, 4294901760
  %v7805 = vsub.f32 %v7717, %v7804
  %7806 = vmatpush.msra.mxu0 %v7805
  %v7807 = vand.u32 %v7727, 4294901760
  %v7808 = vsub.f32 %v7727, %v7807
  %7809 = vmatmul.f32.gmra.mxu0 %v7808
  %v7810 = vpop.f32.mrf.mxu0
  %v7811 = vadd.f32 %v7785, %v7810
  %7812 = vdwg.mxu0
  %7813 = vmatpush.msra.mxu0 0.0
  %7814 = vmatpush.msra.mxu0 0.0
  %7815 = vmatpush.msra.mxu0 0.0
  %7816 = vmatpush.msra.mxu0 0.0
  %7817 = vmatpush.msra.mxu0 0.0
  %7818 = vmatpush.msra.mxu0 0.0
  %7819 = vmatpush.msra.mxu0 0.0
  %7820 = vmatpush.msra.mxu0 0.0
  %7821 = vmatpush.msra.mxu0 0.0
  %7822 = vmatpush.msra.mxu0 0.0
  %7823 = vmatpush.msra.mxu0 0.0
  %7824 = vmatpush.msra.mxu0 0.0
  %7825 = vmatpush.msra.mxu0 0.0
  %7826 = vmatpush.msra.mxu0 0.0
  %v7827 = vand.u32 %v7718, 4294901760
  %7828 = vmatpush.msra.mxu0 %v7827
  %v7829 = vand.u32 %v7717, 4294901760
  %7830 = vmatpush.msra.mxu0 %v7829
  %v7831 = vand.u32 %v7727, 4294901760
  %v7832 = vsub.f32 %v7727, %v7831
  %v7833 = vand.u32 %v7832, 4294901760
  %7834 = vmatmul.f32.gmra.mxu0 %v7833
  %v7835 = vpop.f32.mrf.mxu0
  %v7836 = vadd.f32 %v7811, %v7835
  %7837 = vdwg.mxu0
  %7838 = vmatpush.msra.mxu0 0.0
  %7839 = vmatpush.msra.mxu0 0.0
  %7840 = vmatpush.msra.mxu0 0.0
  %7841 = vmatpush.msra.mxu0 0.0
  %7842 = vmatpush.msra.mxu0 0.0
  %7843 = vmatpush.msra.mxu0 0.0
  %7844 = vmatpush.msra.mxu0 0.0
  %7845 = vmatpush.msra.mxu0 0.0
  %7846 = vmatpush.msra.mxu0 0.0
  %7847 = vmatpush.msra.mxu0 0.0
  %7848 = vmatpush.msra.mxu0 0.0
  %7849 = vmatpush.msra.mxu0 0.0
  %7850 = vmatpush.msra.mxu0 0.0
  %7851 = vmatpush.msra.mxu0 0.0
  %v7852 = vand.u32 %v7718, 4294901760
  %v7853 = vsub.f32 %v7718, %v7852
  %v7854 = vand.u32 %v7853, 4294901760
  %7855 = vmatpush.msra.mxu0 %v7854
  %v7856 = vand.u32 %v7717, 4294901760
  %v7857 = vsub.f32 %v7717, %v7856
  %v7858 = vand.u32 %v7857, 4294901760
  %7859 = vmatpush.msra.mxu0 %v7858
  %v7860 = vand.u32 %v7727, 4294901760
  %7861 = vmatmul.f32.gmra.mxu0 %v7860
  %v7862 = vpop.f32.mrf.mxu0
  %v7863 = vadd.f32 %v7836, %v7862
  %7864 = vdwg.mxu0
  %7865 = vmatpush.msra.mxu0 0.0
  %7866 = vmatpush.msra.mxu0 0.0
  %7867 = vmatpush.msra.mxu0 0.0
  %7868 = vmatpush.msra.mxu0 0.0
  %7869 = vmatpush.msra.mxu0 0.0
  %7870 = vmatpush.msra.mxu0 0.0
  %7871 = vmatpush.msra.mxu0 0.0
  %7872 = vmatpush.msra.mxu0 0.0
  %7873 = vmatpush.msra.mxu0 0.0
  %7874 = vmatpush.msra.mxu0 0.0
  %7875 = vmatpush.msra.mxu0 0.0
  %7876 = vmatpush.msra.mxu0 0.0
  %7877 = vmatpush.msra.mxu0 0.0
  %7878 = vmatpush.msra.mxu0 0.0
  %v7879 = vand.u32 %v7718, 4294901760
  %7880 = vmatpush.msra.mxu0 %v7879
  %v7881 = vand.u32 %v7717, 4294901760
  %7882 = vmatpush.msra.mxu0 %v7881
  %v7883 = vand.u32 %v7727, 4294901760
  %7884 = vmatmul.f32.gmra.mxu0 %v7883
  %v7885 = vpop.f32.mrf.mxu0
  %v7886 = vadd.f32 %v7863, %v7885
  %7887 = vdwg.mxu0
  %v7888 = vmul.f32 %v7886, 0.5
  %v7889 = vtanh.pop %v7888
  %v7890 = vmul.f32 %v7889, 0.5
  %v7891 = vadd.f32 %v7890, 0.5
  %7892 = vst [vmem:[%s8] sm:$0x3] %v7891
  // Predicated region
  $region34: #{forward.1} parent=0 // pred_check
    _
  $region35: #{forward.1} parent=0 // pred_check_branch
    %7894 = sbr.rel (0) target = $region37
  $region36: #{forward.1} parent=0 // pred_region
    _
  $region37: #{forward.1} parent=0 // pred_fallthru
    _
  // Predicated region
  $region38: #{forward.1} parent=0 // pred_check
    _
  $region39: #{forward.1} parent=0 // pred_check_branch
    %7896 = sbr.rel (0) target = $region41
  $region40: #{forward.1} parent=0 // pred_region
    _
  $region41: #{forward.1} parent=0 // pred_fallthru
    _

</llo_original>
